<compile_context>
chip_gen: v7x
topology: tpu7x:2x2x1
jax: 0.10.0
libtpu: 0.0.40
codegen_flags: <defaults>
</compile_context>

<pallas_src>
import math
from functools import partial

import numpy as np
import jax
import jax.numpy as jnp
from jax.experimental import pallas as pl
from jax.experimental.pallas import tpu as pltpu

LRELU_SLOPE = 0.2
EPS = 1e-8
SQRT2 = 2.0 ** 0.5

_VMEM_LIMIT = None
_BUFFERED1 = None


def _vmem_limit():
    # Generation-aware scoped-VMEM limit (v5e/v6e: 128 MiB, v7x: 64 MiB).
    global _VMEM_LIMIT
    if _VMEM_LIMIT is None:
        cap = 64 * 1024 * 1024
        try:
            cap = int(getattr(pltpu.get_tpu_info(), "vmem_capacity_bytes", cap))
        except Exception:
            pass
        _VMEM_LIMIT = max(32 * 1024 * 1024, min(int(cap * 0.8), 100 * 1024 * 1024))
    return _VMEM_LIMIT


def _cp(dims=None):
    if dims is None:
        return pltpu.CompilerParams(vmem_limit_bytes=_vmem_limit())
    return pltpu.CompilerParams(dimension_semantics=dims,
                                vmem_limit_bytes=_vmem_limit())


def _buffered1_ok():
    """Probe whether pipeline_mode=pl.Buffered(1) is supported on this JAX;
    fall back to default double-buffering for constants otherwise."""
    global _BUFFERED1
    if _BUFFERED1 is None:
        try:
            def k(a_ref, o_ref):
                o_ref[...] = a_ref[...]
            spec = pl.BlockSpec((8, 128), lambda i: (0, 0),
                                pipeline_mode=pl.Buffered(1))
            out = pl.pallas_call(
                k, out_shape=jax.ShapeDtypeStruct((8, 128), jnp.float32),
                grid=(2,), in_specs=[spec],
                out_specs=pl.BlockSpec((8, 128), lambda i: (0, 0)),
            )(jnp.ones((8, 128), jnp.float32))
            jax.block_until_ready(out)
            _BUFFERED1 = True
        except Exception:
            _BUFFERED1 = False
    return _BUFFERED1


def _const_spec(shape):
    """Full-array block, constant index map, single-buffered when available."""
    nd = len(shape)
    idx = lambda b, t, _nd=nd: (0,) * _nd
    if _buffered1_ok():
        return pl.BlockSpec(shape, idx, pipeline_mode=pl.Buffered(1))
    return pl.BlockSpec(shape, idx)


def _pick_tile_h(H, W, Cin, Cout, D, S, has_csft, has_rgb, has_skip):
    """Largest power-of-two row tile whose real per-tile VMEM footprint
    (streamed blocks x pipeline buffers + resident constants + f32 work
    temporaries) fits the generation-specific budget."""
    budget = int(_vmem_limit() * 0.7)
    const_b = (9 * Cin * Cout * 2 + Cin * Cout * 4 + S * Cin * 4
               + Cin * 4 + Cout * 4 + 2 * S * 4)
    if has_rgb:
        const_b += Cout * D * 2 + S * Cout * 4 + Cout * 4 + D * 4
    per_row = 3 * W * Cin * 2            # x window: 2 DMA slots + premod scratch (bf16)
    per_row += 2 * W * Cout * 2          # out tile, double-buffered bf16
    per_row += 2 * W * 4                 # noise tile f32
    per_row += 3 * W * Cout * 4          # f32 accumulator / epilogue temporaries
    if has_csft:
        per_row += 2 * 2 * W * Cout * 2  # scale + shift, bf16, double-buffered
    if has_rgb:
        per_row += 2 * W * D * 4
    if has_skip:
        per_row += 2 * W * D * 4
    fixed = const_b + 3 * (2 * W + 2) * Cin * 2 + (1 << 20)   # halo + slack
    th = H
    while (th > 1 and th % 2 == 0 and ((th // 2) * W) % 8 == 0
           and fixed + th * per_row > budget):
        th //= 2
    return th


# ----------------------------------------------------------------------------
# Pallas kernels
# ----------------------------------------------------------------------------
def style_mlp_kernel(x_ref, w_ref, b_ref, o_ref, *, num_mlp):
    x = x_ref[...]                                                 # (B, F) f32
    # NormStyleCode: x * rsqrt(mean(x^2, dim=1) + 1e-8)
    x = x * jax.lax.rsqrt(jnp.mean(x * x, axis=1, keepdims=True) + EPS)
    for i in range(num_mlp):
        x = jnp.dot(x.astype(jnp.bfloat16), w_ref[i],
                    preferred_element_type=jnp.float32) + b_ref[i]
        x = jnp.where(x >= 0, x, LRELU_SLOPE * x)                  # LeakyReLU(0.2)
    o_ref[...] = x


def make_styleconv_kernel(TILE_H, W, T, has_csft, has_rgb, has_skip):
    """Fused StyleConv (+ optional CSFT, + optional ToRGB) kernel factory."""
    TILE_HW = TILE_H * W
    L_T = TILE_HW + 2 * W + 2            # (TILE_H+2) rows + 1 elem each end

    def kernel(*refs):
        it = iter(refs)
        x_hbm = next(it)         # (B, HW + 2W + 2, Cin) bf16, HBM (pl.ANY)
        w_ref = next(it)         # (9, Cin, Cout)  bf16  taps (ky*3+kx)
        w2_ref = next(it)        # (Cin, Cout)     f32   sum_k w_k^2 (from bf16 taps)
        style_ref = next(it)     # (1, S)          f32
        modw_ref = next(it)      # (S, Cin)        f32
        modb_ref = next(it)      # (1, Cin)        f32
        noise_ref = next(it)     # (TILE_HW, 1)    f32   (noise_weight pre-folded)
        bias_ref = next(it)      # (1, Cout)       f32
        if has_csft:
            csc_ref = next(it)   # (1, TILE_HW, Cout) bf16  CSFT scale
            csh_ref = next(it)   # (1, TILE_HW, Cout) bf16  CSFT shift
        if has_rgb:
            rw_ref = next(it)    # (Cout, D)       bf16
            rmodw_ref = next(it)  # (S, Cout)      f32
            rmodb_ref = next(it)  # (1, Cout)      f32
            rbias_ref = next(it)  # (1, D)         f32
            if has_skip:
                skip_ref = next(it)  # (1, TILE_HW, D) f32
        out_ref = next(it)       # (1, TILE_HW, Cout) bf16
        if has_rgb:
            rgb_ref = next(it)   # (1, TILE_HW, D) f32
        xbuf = next(it)          # VMEM (2, L_T, Cin) bf16  double-buffered x window
        xm_ref = next(it)        # VMEM (L_T, Cin)   bf16   pre-modulated window
        sem = next(it)           # DMA sem (2,)
        mod_sc = next(it)        # VMEM (1, Cin) bf16
        dscale_sc = next(it)     # VMEM (1, Cout) f32  (demod * sqrt(2))
        if has_rgb:
            rmod_sc = next(it)   # VMEM (1, Cout) f32

        b = pl.program_id(0)
        t = pl.program_id(1)
        slot = t % 2
        Cout = w_ref.shape[2]

        def copy_desc(tt, s):
            return pltpu.make_async_copy(
                x_hbm.at[b, pl.ds(tt * TILE_HW, L_T), :], xbuf.at[s], sem.at[s])

        # --- per-batch work, hoisted out of the row-tile loop -----------------
        @pl.when(t == 0)
        def _():
            copy_desc(0, 0).start()            # first tile's DMA overlaps the math below
            style = style_ref[...]
            mod = jnp.dot(style, modw_ref[...],
                          preferred_element_type=jnp.float32) + modb_ref[...]   # (1, Cin)
            mod_b16 = mod.astype(jnp.bfloat16)
            mod_sc[...] = mod_b16
            mf = mod_b16.astype(jnp.float32)
            # rsqrt(sum_{k,ci}(w*mod)^2 + eps) == rsqrt(mod^2 @ sum_k w_k^2 + eps)
            demod = jax.lax.rsqrt(
                jnp.dot(mf * mf, w2_ref[...],
                        preferred_element_type=jnp.float32) + EPS)              # (1, Cout)
            dscale_sc[...] = demod * SQRT2
            if has_rgb:
                rmod_sc[...] = jnp.dot(style, rmodw_ref[...],
                                       preferred_element_type=jnp.float32) + rmodb_ref[...]

        # --- manual double-buffered streaming of the x window -----------------
        if T > 1:
            @pl.when(t + 1 < T)
            def _():
                copy_desc(t + 1, 1 - slot).start()
        copy_desc(t, slot).wait()

        # pre-modulate the whole window ONCE (instead of 9x inside the tap loop)
        xm_ref[...] = xbuf[slot] * mod_sc[...]

        # --- 3x3 conv as 9 shifted matmuls (in-kernel im2col) -----------------
        # The HBM plane is flat-padded with W+1 zeros at each end, so every tap
        # is a contiguous window; the left/right image-border wrap is zeroed by
        # the column masks below (W is asserted to be a power of two).
        col = jax.lax.broadcasted_iota(jnp.int32, (TILE_HW, 1), 0) & (W - 1)
        not_left = col != 0
        not_right = col != (W - 1)

        acc = jnp.zeros((TILE_HW, Cout), jnp.float32)
        for ky in range(3):
            for kx in range(3):
                xs = xm_ref[pl.ds(ky * W + kx, TILE_HW), :]        # (TILE_HW, Cin) bf16
                if kx == 0:
                    xs = jnp.where(not_left, xs, 0.0)
                elif kx == 2:
                    xs = jnp.where(not_right, xs, 0.0)
                acc = acc + jnp.dot(xs, w_ref[ky * 3 + kx],
                                    preferred_element_type=jnp.float32)

        # --- StyleConv epilogue (f32) ------------------------------------------
        y = acc * dscale_sc[...]                   # demodulate, * sqrt(2)
        y = y + noise_ref[...]                     # noise injection (weight folded)
        y = y + bias_ref[...]                      # per-channel bias
        y = jnp.where(y >= 0, y, LRELU_SLOPE * y)  # LeakyReLU(0.2)
        if has_csft:
            y = y * csc_ref[0] + csh_ref[0]        # CSFT: out * scale + shift
        out_ref[0] = y.astype(out_ref.dtype)

        # --- fused ToRGB: modulated (no demod) 1x1 conv + bias + skip ----------
        if has_rgb:
            rgb = jnp.dot((y * rmod_sc[...]).astype(jnp.bfloat16), rw_ref[...],
                          preferred_element_type=jnp.float32)      # (TILE_HW, D)
            rgb = rgb + rbias_ref[...]
            if has_skip:
                rgb = rgb + skip_ref[0]
            rgb_ref[0] = rgb

    return kernel


# ----------------------------------------------------------------------------
# Kernel wrappers
# ----------------------------------------------------------------------------
def run_style_mlp(styles, mlp_w, mlp_b):
    B, F = styles.shape
    return pl.pallas_call(
        partial(style_mlp_kernel, num_mlp=mlp_w.shape[0]),
        out_shape=jax.ShapeDtypeStruct((B, F), jnp.float32),
        compiler_params=_cp(),
    )(styles, mlp_w, mlp_b)


def run_styleconv(scp, x_flat, H, W, style, noise_flat,
                  cond=None, rgbp=None, skip_flat=None):
    """Fused StyleConv (+ optional CSFT, + optional ToRGB). Returns (out, rgb|None)."""
    B, HW, Cin = x_flat.shape
    assert HW == H * W
    assert (W & (W - 1)) == 0, "W must be a power of two (column-mask trick)"
    mc = scp['modconv']
    assert mc['k'] == 3
    Cout = mc['cout']
    S = style.shape[1]
    has_csft = cond is not None
    has_rgb = rgbp is not None
    has_skip = skip_flat is not None
    assert (not has_skip) or has_rgb
    if has_csft:
        assert cond[0].shape[-1] == Cout and cond[1].shape[-1] == Cout
    D = rgbp['modconv']['cout'] if has_rgb else 0

    TILE_H = _pick_tile_h(H, W, Cin, Cout, D, S, has_csft, has_rgb, has_skip)
    T = H // TILE_H
    TILE_HW = TILE_H * W
    L_T = TILE_HW + 2 * W + 2

    # Flat zero pad of W+1 elements at each end == 1 top/bottom pad row plus the
    # 1-element wrap guard (single host copy; borders handled by in-kernel masks).
    x_pad = jnp.pad(x_flat.astype(jnp.bfloat16), ((0, 0), (W + 1, W + 1), (0, 0)))
    # Fold the scalar noise-injection weight into the noise buffer (host, tiny).
    noise_w = (noise_flat * scp['noise_weight']).astype(jnp.float32)

    inputs = [x_pad, mc['w'], mc['w2sum'], style, mc['mod_w'], mc['mod_b'],
              noise_w, scp['bias']]
    in_specs = [
        pl.BlockSpec(memory_space=pl.ANY),                          # x: manual DMA
        _const_spec((9, Cin, Cout)),
        _const_spec((Cin, Cout)),
        pl.BlockSpec((1, S), lambda b, t: (b, 0)),
        _const_spec((S, Cin)),
        _const_spec((1, Cin)),
        pl.BlockSpec((TILE_HW, 1), lambda b, t: (t, 0)),
        _const_spec((1, Cout)),
    ]
    if has_csft:
        inputs += [cond[0], cond[1]]
        cspec = pl.BlockSpec((1, TILE_HW, Cout), lambda b, t: (b, t, 0))
        in_specs += [cspec, cspec]
    if has_rgb:
        rmc = rgbp['modconv']
        inputs += [rmc['w'], rmc['mod_w'], rmc['mod_b'], rgbp['bias']]
        in_specs += [_const_spec((Cout, D)), _const_spec((S, Cout)),
                     _const_spec((1, Cout)), _const_spec((1, D))]
        if has_skip:
            inputs += [skip_flat]
            in_specs += [pl.BlockSpec((1, TILE_HW, D), lambda b, t: (b, t, 0))]

    if has_rgb:
        out_shape = (jax.ShapeDtypeStruct((B, HW, Cout), jnp.bfloat16),
                     jax.ShapeDtypeStruct((B, HW, D), jnp.float32))
        out_specs = (pl.BlockSpec((1, TILE_HW, Cout), lambda b, t: (b, t, 0)),
                     pl.BlockSpec((1, TILE_HW, D), lambda b, t: (b, t, 0)))
    else:
        out_shape = jax.ShapeDtypeStruct((B, HW, Cout), jnp.bfloat16)
        out_specs = pl.BlockSpec((1, TILE_HW, Cout), lambda b, t: (b, t, 0))

    scratch = [pltpu.VMEM((2, L_T, Cin), jnp.bfloat16),   # x window, 2 DMA slots
               pltpu.VMEM((L_T, Cin), jnp.bfloat16),      # pre-modulated window
               pltpu.SemaphoreType.DMA((2,)),
               pltpu.VMEM((1, Cin), jnp.bfloat16),        # mod
               pltpu.VMEM((1, Cout), jnp.float32)]        # demod * sqrt(2)
    if has_rgb:
        scratch.append(pltpu.VMEM((1, Cout), jnp.float32))  # rgb modulation

    kernel = make_styleconv_kernel(TILE_H, W, T, has_csft, has_rgb, has_skip)
    res = pl.pallas_call(
        kernel,
        out_shape=out_shape,
        grid=(B, T),
        in_specs=in_specs,
        out_specs=out_specs,
        scratch_shapes=scratch,
        compiler_params=_cp(("parallel", "arbitrary")),
    )(*inputs)
    if has_rgb:
        return res[0], res[1]
    return res, None


# ----------------------------------------------------------------------------
# Plain-JAX glue (data movement only)
# ----------------------------------------------------------------------------
def _upsample_matrix(n):
    # Exact F.interpolate(scale_factor=2, mode='bilinear', align_corners=False)
    j = np.arange(2 * n)
    src = (j + 0.5) / 2.0 - 0.5
    lo = np.floor(src).astype(np.int64)
    w_hi = src - lo
    w_lo = 1.0 - w_hi
    lo_c = np.clip(lo, 0, n - 1)
    hi_c = np.clip(lo + 1, 0, n - 1)
    U = np.zeros((2 * n, n), dtype=np.float32)
    np.add.at(U, (j, lo_c), w_lo)
    np.add.at(U, (j, hi_c), w_hi)
    return jnp.asarray(U)


def upsample2x(x_nhwc, out_dtype=jnp.float32):
    # TODO(synk): fuse this bilinear 2x upsample into the conv-input DMA path to
    #             remove one full-activation HBM round trip per upsample layer.
    _, H, W, _ = x_nhwc.shape
    Uh = _upsample_matrix(H)
    Uw = _upsample_matrix(W)
    y = jnp.einsum('ph,bhwc,qw->bpqc', Uh, x_nhwc.astype(jnp.float32), Uw)
    return y.astype(out_dtype)


# ----------------------------------------------------------------------------
# Parameter init (deterministic, shapes follow the PyTorch module)
# ----------------------------------------------------------------------------
def init_params(key, out_size, out_dim=3, num_style_feat=512, num_mlp=8):
    channels = {4: 512, 8: 512, 16: 512, 32: 512, 64: 256,
                128: 128, 256: 64, 512: 32, 1024: 16}
    log_size = int(math.log2(out_size))
    num_layers = (log_size - 2) * 2 + 1

    keys = iter(jax.random.split(key, 512))
    nk = lambda: next(keys)

    def styleconv_params(cin, cout):
        w = jax.random.normal(nk(), (cout, cin, 3, 3), jnp.float32) / math.sqrt(cin * 9)
        w_taps = jnp.transpose(w, (2, 3, 1, 0)).reshape(9, cin, cout)   # (ky*3+kx, cin, cout)
        w_b16 = w_taps.astype(jnp.bfloat16)
        return {
            'modconv': {
                'w': w_b16,
                # demodulation consistent with the bf16 conv taps (review note)
                'w2sum': jnp.sum(w_b16.astype(jnp.float32) ** 2, axis=0),   # (cin, cout) f32
                'mod_w': jax.random.normal(nk(), (num_style_feat, cin), jnp.float32)
                         / math.sqrt(num_style_feat),
                'mod_b': jnp.ones((1, cin), jnp.float32),               # bias_fill=1
                'k': 3, 'cin': cin, 'cout': cout},
            # torch init is 0; nonzero deterministic value for a meaningful test
            'noise_weight': 0.1 + 0.05 * jax.random.uniform(nk(), (1,), jnp.float32),
            'bias': 0.01 * jax.random.normal(nk(), (1, cout), jnp.float32),
        }

    def torgb_params(cin):
        w = jax.random.normal(nk(), (out_dim, cin, 1, 1), jnp.float32) / math.sqrt(cin)
        return {
            'modconv': {
                'w': jnp.transpose(w, (2, 3, 1, 0)).reshape(cin, out_dim).astype(jnp.bfloat16),
                'mod_w': jax.random.normal(nk(), (num_style_feat, cin), jnp.float32)
                         / math.sqrt(num_style_feat),
                'mod_b': jnp.ones((1, cin), jnp.float32),
                'k': 1, 'cin': cin, 'cout': out_dim},
            'bias': 0.01 * jax.random.normal(nk(), (1, out_dim), jnp.float32),
        }

    p = {}
    p['mlp_w'] = (jax.random.normal(nk(), (num_mlp, num_style_feat, num_style_feat),
                                    jnp.float32) / math.sqrt(num_style_feat)
                  ).astype(jnp.bfloat16)
    p['mlp_b'] = jnp.zeros((num_mlp, 1, num_style_feat), jnp.float32)
    p['const'] = jax.random.normal(nk(), (1, 4, 4, channels[4]), jnp.float32)
    p['style_conv1'] = styleconv_params(channels[4], channels[4])
    p['to_rgb1'] = torgb_params(channels[4])

    p['style_convs'] = []
    p['to_rgbs'] = []
    cin = channels[4]
    for i in range(3, log_size + 1):
        cout = channels[2 ** i]
        p['style_convs'].append(styleconv_params(cin, cout))   # upsample conv
        p['style_convs'].append(styleconv_params(cout, cout))  # plain conv
        p['to_rgbs'].append(torgb_params(cout))
        cin = cout

    # registered noise buffers (randomize_noise=False path), flattened (HW, 1)
    p['noises'] = []
    for layer_idx in range(num_layers):
        res = 2 ** ((layer_idx + 5) // 2)
        p['noises'].append(jax.random.normal(nk(), (res * res, 1), jnp.float32))
    return p


# ----------------------------------------------------------------------------
# Forward pass
# ----------------------------------------------------------------------------
def forward(params, styles, conditions_nchw):
    """styles: (B, num_style_feat); conditions: list of NCHW arrays. Returns NCHW image."""
    B = styles.shape[0]
    # styles = style_mlp(styles); 2-D styles => latent[:, k] == styles for all k
    latent = run_style_mlp(styles, params['mlp_w'], params['mlp_b'])
    conds = []
    for c in conditions_nchw:
        _, C, Hc, Wc = c.shape
        # CSFT scale/shift streamed in bf16 (review: halve cond HBM/VMEM traffic)
        conds.append(jnp.transpose(c, (0, 2, 3, 1)).reshape(B, Hc * Wc, C)
                     .astype(jnp.bfloat16))

    C4 = params['const'].shape[-1]
    H = W = 4
    out = jnp.broadcast_to(params['const'], (B, H, W, C4)) \
             .reshape(B, H * W, C4).astype(jnp.bfloat16)          # ConstantInput
    # style_conv1 + to_rgb1 fused (no skip, no CSFT)
    out, skip = run_styleconv(params['style_conv1'], out, H, W, latent,
                              params['noises'][0], rgbp=params['to_rgb1'])

    i = 1
    for conv1_p, conv2_p, rgb_p in zip(params['style_convs'][0::2],
                                       params['style_convs'][1::2],
                                       params['to_rgbs']):
        x_up = upsample2x(out.reshape(B, H, W, -1), jnp.bfloat16)
        H, W = 2 * H, 2 * W
        x_up = x_up.reshape(B, H * W, -1)
        cond = (conds[i - 1], conds[i]) if i < len(conds) else None
        # upsample-conv (+ fused CSFT when conditions are present)
        out, _ = run_styleconv(conv1_p, x_up, H, W, latent,
                               params['noises'][i], cond=cond)
        # plain conv + fused ToRGB (with bilinearly upsampled skip)
        skip_up = upsample2x(skip.reshape(B, H // 2, W // 2, -1),
                             jnp.float32).reshape(B, H * W, -1)
        out, skip = run_styleconv(conv2_p, out, H, W, latent,
                                  params['noises'][i + 1],
                                  rgbp=rgb_p, skip_flat=skip_up)
        i += 2

    img = skip.reshape(B, H, W, -1)
    # TODO(synk): emit rgb lane-dense as (B, D, HW) in-kernel to avoid masked
    #             vst and this final host transpose.
    return jnp.transpose(img, (0, 3, 1, 2)).astype(jnp.float32)    # NCHW like PyTorch


# ----------------------------------------------------------------------------
if __name__ == "__main__":
    out_size = 8          # log_size=3 -> one upsample stage; channels stay 512
    out_dim = 3
    num_style_feat = 512
    num_mlp = 8
    B = 2

    key = jax.random.PRNGKey(0)
    k_param, k_style, k_c0, k_c1 = jax.random.split(key, 4)
    params = init_params(k_param, out_size, out_dim, num_style_feat, num_mlp)

    styles = jax.random.normal(k_style, (B, num_style_feat), jnp.float32)
    # CSFT conditions (scale, shift) at the 8x8 / 512-channel level, NCHW
    conditions = [
        1.0 + 0.1 * jax.random.normal(k_c0, (B, 512, 8, 8), jnp.float32),
        0.1 * jax.random.normal(k_c1, (B, 512, 8, 8), jnp.float32),
    ]

    image = forward(params, styles, conditions)
    image = jax.block_until_ready(image)
    assert image.shape == (B, out_dim, out_size, out_size), image.shape
    assert bool(jnp.all(jnp.isfinite(image)))
    print("KERNEL_OK")
</pallas_src>

<mosaic_0001>
module attributes {stable_mosaic.version = 11 : i64} {
  func.func @style_mlp_kernel(%arg0: memref<2x512xf32, #tpu.memory_space<vmem>>, %arg1: memref<8x512x512xbf16, #tpu.memory_space<vmem>>, %arg2: memref<8x1x512xf32, #tpu.memory_space<vmem>>, %arg3: memref<2x512xf32, #tpu.memory_space<vmem>>) attributes {dimension_semantics = [], scalar_prefetch = 0 : i64, scratch_operands = 0 : i64, tpu.core_type = #tpu.core_type<tc>} {
    %c0 = arith.constant 0 : index
    %c0_0 = arith.constant 0 : index
    %0 = vector.load %arg0[%c0, %c0_0] : memref<2x512xf32, #tpu.memory_space<vmem>>, vector<2x512xf32>
    %1 = arith.mulf %0, %0 : vector<2x512xf32>
    %cst = arith.constant dense<0.000000e+00> : vector<2xf32>
    %2 = vector.multi_reduction <add>, %1, %cst [1] : vector<2x512xf32> to vector<2xf32>
    %3 = vector.shape_cast %2 : vector<2xf32> to vector<2x1xf32>
    %cst_1 = arith.constant 5.120000e+02 : f32
    %4 = vector.broadcast %cst_1 : f32 to vector<2x1xf32>
    %5 = arith.divf %3, %4 : vector<2x1xf32>
    %cst_2 = arith.constant 9.99999993E-9 : f32
    %6 = vector.broadcast %cst_2 : f32 to vector<2x1xf32>
    %7 = arith.addf %5, %6 : vector<2x1xf32>
    %8 = math.rsqrt %7 : vector<2x1xf32>
    %9 = vector.broadcast %8 : vector<2x1xf32> to vector<2x512xf32>
    %10 = arith.mulf %0, %9 : vector<2x512xf32>
    %11 = arith.truncf %10 : vector<2x512xf32> to vector<2x512xbf16>
    %c0_3 = arith.constant 0 : index
    %c0_4 = arith.constant 0 : index
    %c0_5 = arith.constant 0 : index
    %12 = vector.load %arg1[%c0_3, %c0_4, %c0_5] : memref<8x512x512xbf16, #tpu.memory_space<vmem>>, vector<1x512x512xbf16>
    %13 = vector.shape_cast %12 : vector<1x512x512xbf16> to vector<512x512xbf16>
    %cst_6 = arith.constant dense<0.000000e+00> : vector<2x512xf32>
    %14 = tpu.matmul %11, %13, %cst_6 {dimension_numbers = #tpu.dot_dimension_numbers<[1], [0], [0], [1], [0, 0, 1, 1], [], []>} : vector<2x512xbf16>, vector<512x512xbf16>, vector<2x512xf32> -> vector<2x512xf32>
    %c0_7 = arith.constant 0 : index
    %c0_8 = arith.constant 0 : index
    %c0_9 = arith.constant 0 : index
    %15 = vector.load %arg2[%c0_7, %c0_8, %c0_9] : memref<8x1x512xf32, #tpu.memory_space<vmem>>, vector<1x1x512xf32>
    %16 = vector.shape_cast %15 : vector<1x1x512xf32> to vector<1x512xf32>
    %17 = vector.broadcast %16 : vector<1x512xf32> to vector<2x512xf32>
    %18 = arith.addf %14, %17 : vector<2x512xf32>
    %cst_10 = arith.constant 0.000000e+00 : f32
    %19 = vector.broadcast %cst_10 : f32 to vector<2x512xf32>
    %20 = arith.cmpf oge, %18, %19 : vector<2x512xf32>
    %cst_11 = arith.constant 2.000000e-01 : f32
    %21 = vector.broadcast %cst_11 : f32 to vector<2x512xf32>
    %22 = arith.mulf %21, %18 : vector<2x512xf32>
    %23 = arith.select %20, %18, %22 : vector<2x512xi1>, vector<2x512xf32>
    %24 = arith.truncf %23 : vector<2x512xf32> to vector<2x512xbf16>
    %c1 = arith.constant 1 : index
    %c0_12 = arith.constant 0 : index
    %c0_13 = arith.constant 0 : index
    %25 = vector.load %arg1[%c1, %c0_12, %c0_13] : memref<8x512x512xbf16, #tpu.memory_space<vmem>>, vector<1x512x512xbf16>
    %26 = vector.shape_cast %25 : vector<1x512x512xbf16> to vector<512x512xbf16>
    %cst_14 = arith.constant dense<0.000000e+00> : vector<2x512xf32>
    %27 = tpu.matmul %24, %26, %cst_14 {dimension_numbers = #tpu.dot_dimension_numbers<[1], [0], [0], [1], [0, 0, 1, 1], [], []>} : vector<2x512xbf16>, vector<512x512xbf16>, vector<2x512xf32> -> vector<2x512xf32>
    %c1_15 = arith.constant 1 : index
    %c0_16 = arith.constant 0 : index
    %c0_17 = arith.constant 0 : index
    %28 = vector.load %arg2[%c1_15, %c0_16, %c0_17] : memref<8x1x512xf32, #tpu.memory_space<vmem>>, vector<1x1x512xf32>
    %29 = vector.shape_cast %28 : vector<1x1x512xf32> to vector<1x512xf32>
    %30 = vector.broadcast %29 : vector<1x512xf32> to vector<2x512xf32>
    %31 = arith.addf %27, %30 : vector<2x512xf32>
    %cst_18 = arith.constant 0.000000e+00 : f32
    %32 = vector.broadcast %cst_18 : f32 to vector<2x512xf32>
    %33 = arith.cmpf oge, %31, %32 : vector<2x512xf32>
    %cst_19 = arith.constant 2.000000e-01 : f32
    %34 = vector.broadcast %cst_19 : f32 to vector<2x512xf32>
    %35 = arith.mulf %34, %31 : vector<2x512xf32>
    %36 = arith.select %33, %31, %35 : vector<2x512xi1>, vector<2x512xf32>
    %37 = arith.truncf %36 : vector<2x512xf32> to vector<2x512xbf16>
    %c2 = arith.constant 2 : index
    %c0_20 = arith.constant 0 : index
    %c0_21 = arith.constant 0 : index
    %38 = vector.load %arg1[%c2, %c0_20, %c0_21] : memref<8x512x512xbf16, #tpu.memory_space<vmem>>, vector<1x512x512xbf16>
    %39 = vector.shape_cast %38 : vector<1x512x512xbf16> to vector<512x512xbf16>
    %cst_22 = arith.constant dense<0.000000e+00> : vector<2x512xf32>
    %40 = tpu.matmul %37, %39, %cst_22 {dimension_numbers = #tpu.dot_dimension_numbers<[1], [0], [0], [1], [0, 0, 1, 1], [], []>} : vector<2x512xbf16>, vector<512x512xbf16>, vector<2x512xf32> -> vector<2x512xf32>
    %c2_23 = arith.constant 2 : index
    %c0_24 = arith.constant 0 : index
    %c0_25 = arith.constant 0 : index
    %41 = vector.load %arg2[%c2_23, %c0_24, %c0_25] : memref<8x1x512xf32, #tpu.memory_space<vmem>>, vector<1x1x512xf32>
    %42 = vector.shape_cast %41 : vector<1x1x512xf32> to vector<1x512xf32>
    %43 = vector.broadcast %42 : vector<1x512xf32> to vector<2x512xf32>
    %44 = arith.addf %40, %43 : vector<2x512xf32>
    %cst_26 = arith.constant 0.000000e+00 : f32
    %45 = vector.broadcast %cst_26 : f32 to vector<2x512xf32>
    %46 = arith.cmpf oge, %44, %45 : vector<2x512xf32>
    %cst_27 = arith.constant 2.000000e-01 : f32
    %47 = vector.broadcast %cst_27 : f32 to vector<2x512xf32>
    %48 = arith.mulf %47, %44 : vector<2x512xf32>
    %49 = arith.select %46, %44, %48 : vector<2x512xi1>, vector<2x512xf32>
    %50 = arith.truncf %49 : vector<2x512xf32> to vector<2x512xbf16>
    %c3 = arith.constant 3 : index
    %c0_28 = arith.constant 0 : index
    %c0_29 = arith.constant 0 : index
    %51 = vector.load %arg1[%c3, %c0_28, %c0_29] : memref<8x512x512xbf16, #tpu.memory_space<vmem>>, vector<1x512x512xbf16>
    %52 = vector.shape_cast %51 : vector<1x512x512xbf16> to vector<512x512xbf16>
    %cst_30 = arith.constant dense<0.000000e+00> : vector<2x512xf32>
    %53 = tpu.matmul %50, %52, %cst_30 {dimension_numbers = #tpu.dot_dimension_numbers<[1], [0], [0], [1], [0, 0, 1, 1], [], []>} : vector<2x512xbf16>, vector<512x512xbf16>, vector<2x512xf32> -> vector<2x512xf32>
    %c3_31 = arith.constant 3 : index
    %c0_32 = arith.constant 0 : index
    %c0_33 = arith.constant 0 : index
    %54 = vector.load %arg2[%c3_31, %c0_32, %c0_33] : memref<8x1x512xf32, #tpu.memory_space<vmem>>, vector<1x1x512xf32>
    %55 = vector.shape_cast %54 : vector<1x1x512xf32> to vector<1x512xf32>
    %56 = vector.broadcast %55 : vector<1x512xf32> to vector<2x512xf32>
    %57 = arith.addf %53, %56 : vector<2x512xf32>
    %cst_34 = arith.constant 0.000000e+00 : f32
    %58 = vector.broadcast %cst_34 : f32 to vector<2x512xf32>
    %59 = arith.cmpf oge, %57, %58 : vector<2x512xf32>
    %cst_35 = arith.constant 2.000000e-01 : f32
    %60 = vector.broadcast %cst_35 : f32 to vector<2x512xf32>
    %61 = arith.mulf %60, %57 : vector<2x512xf32>
    %62 = arith.select %59, %57, %61 : vector<2x512xi1>, vector<2x512xf32>
    %63 = arith.truncf %62 : vector<2x512xf32> to vector<2x512xbf16>
    %c4 = arith.constant 4 : index
    %c0_36 = arith.constant 0 : index
    %c0_37 = arith.constant 0 : index
    %64 = vector.load %arg1[%c4, %c0_36, %c0_37] : memref<8x512x512xbf16, #tpu.memory_space<vmem>>, vector<1x512x512xbf16>
    %65 = vector.shape_cast %64 : vector<1x512x512xbf16> to vector<512x512xbf16>
    %cst_38 = arith.constant dense<0.000000e+00> : vector<2x512xf32>
    %66 = tpu.matmul %63, %65, %cst_38 {dimension_numbers = #tpu.dot_dimension_numbers<[1], [0], [0], [1], [0, 0, 1, 1], [], []>} : vector<2x512xbf16>, vector<512x512xbf16>, vector<2x512xf32> -> vector<2x512xf32>
    %c4_39 = arith.constant 4 : index
    %c0_40 = arith.constant 0 : index
    %c0_41 = arith.constant 0 : index
    %67 = vector.load %arg2[%c4_39, %c0_40, %c0_41] : memref<8x1x512xf32, #tpu.memory_space<vmem>>, vector<1x1x512xf32>
    %68 = vector.shape_cast %67 : vector<1x1x512xf32> to vector<1x512xf32>
    %69 = vector.broadcast %68 : vector<1x512xf32> to vector<2x512xf32>
    %70 = arith.addf %66, %69 : vector<2x512xf32>
    %cst_42 = arith.constant 0.000000e+00 : f32
    %71 = vector.broadcast %cst_42 : f32 to vector<2x512xf32>
    %72 = arith.cmpf oge, %70, %71 : vector<2x512xf32>
    %cst_43 = arith.constant 2.000000e-01 : f32
    %73 = vector.broadcast %cst_43 : f32 to vector<2x512xf32>
    %74 = arith.mulf %73, %70 : vector<2x512xf32>
    %75 = arith.select %72, %70, %74 : vector<2x512xi1>, vector<2x512xf32>
    %76 = arith.truncf %75 : vector<2x512xf32> to vector<2x512xbf16>
    %c5 = arith.constant 5 : index
    %c0_44 = arith.constant 0 : index
    %c0_45 = arith.constant 0 : index
    %77 = vector.load %arg1[%c5, %c0_44, %c0_45] : memref<8x512x512xbf16, #tpu.memory_space<vmem>>, vector<1x512x512xbf16>
    %78 = vector.shape_cast %77 : vector<1x512x512xbf16> to vector<512x512xbf16>
    %cst_46 = arith.constant dense<0.000000e+00> : vector<2x512xf32>
    %79 = tpu.matmul %76, %78, %cst_46 {dimension_numbers = #tpu.dot_dimension_numbers<[1], [0], [0], [1], [0, 0, 1, 1], [], []>} : vector<2x512xbf16>, vector<512x512xbf16>, vector<2x512xf32> -> vector<2x512xf32>
    %c5_47 = arith.constant 5 : index
    %c0_48 = arith.constant 0 : index
    %c0_49 = arith.constant 0 : index
    %80 = vector.load %arg2[%c5_47, %c0_48, %c0_49] : memref<8x1x512xf32, #tpu.memory_space<vmem>>, vector<1x1x512xf32>
    %81 = vector.shape_cast %80 : vector<1x1x512xf32> to vector<1x512xf32>
    %82 = vector.broadcast %81 : vector<1x512xf32> to vector<2x512xf32>
    %83 = arith.addf %79, %82 : vector<2x512xf32>
    %cst_50 = arith.constant 0.000000e+00 : f32
    %84 = vector.broadcast %cst_50 : f32 to vector<2x512xf32>
    %85 = arith.cmpf oge, %83, %84 : vector<2x512xf32>
    %cst_51 = arith.constant 2.000000e-01 : f32
    %86 = vector.broadcast %cst_51 : f32 to vector<2x512xf32>
    %87 = arith.mulf %86, %83 : vector<2x512xf32>
    %88 = arith.select %85, %83, %87 : vector<2x512xi1>, vector<2x512xf32>
    %89 = arith.truncf %88 : vector<2x512xf32> to vector<2x512xbf16>
    %c6 = arith.constant 6 : index
    %c0_52 = arith.constant 0 : index
    %c0_53 = arith.constant 0 : index
    %90 = vector.load %arg1[%c6, %c0_52, %c0_53] : memref<8x512x512xbf16, #tpu.memory_space<vmem>>, vector<1x512x512xbf16>
    %91 = vector.shape_cast %90 : vector<1x512x512xbf16> to vector<512x512xbf16>
    %cst_54 = arith.constant dense<0.000000e+00> : vector<2x512xf32>
    %92 = tpu.matmul %89, %91, %cst_54 {dimension_numbers = #tpu.dot_dimension_numbers<[1], [0], [0], [1], [0, 0, 1, 1], [], []>} : vector<2x512xbf16>, vector<512x512xbf16>, vector<2x512xf32> -> vector<2x512xf32>
    %c6_55 = arith.constant 6 : index
    %c0_56 = arith.constant 0 : index
    %c0_57 = arith.constant 0 : index
    %93 = vector.load %arg2[%c6_55, %c0_56, %c0_57] : memref<8x1x512xf32, #tpu.memory_space<vmem>>, vector<1x1x512xf32>
    %94 = vector.shape_cast %93 : vector<1x1x512xf32> to vector<1x512xf32>
    %95 = vector.broadcast %94 : vector<1x512xf32> to vector<2x512xf32>
    %96 = arith.addf %92, %95 : vector<2x512xf32>
    %cst_58 = arith.constant 0.000000e+00 : f32
    %97 = vector.broadcast %cst_58 : f32 to vector<2x512xf32>
    %98 = arith.cmpf oge, %96, %97 : vector<2x512xf32>
    %cst_59 = arith.constant 2.000000e-01 : f32
    %99 = vector.broadcast %cst_59 : f32 to vector<2x512xf32>
    %100 = arith.mulf %99, %96 : vector<2x512xf32>
    %101 = arith.select %98, %96, %100 : vector<2x512xi1>, vector<2x512xf32>
    %102 = arith.truncf %101 : vector<2x512xf32> to vector<2x512xbf16>
    %c7 = arith.constant 7 : index
    %c0_60 = arith.constant 0 : index
    %c0_61 = arith.constant 0 : index
    %103 = vector.load %arg1[%c7, %c0_60, %c0_61] : memref<8x512x512xbf16, #tpu.memory_space<vmem>>, vector<1x512x512xbf16>
    %104 = vector.shape_cast %103 : vector<1x512x512xbf16> to vector<512x512xbf16>
    %cst_62 = arith.constant dense<0.000000e+00> : vector<2x512xf32>
    %105 = tpu.matmul %102, %104, %cst_62 {dimension_numbers = #tpu.dot_dimension_numbers<[1], [0], [0], [1], [0, 0, 1, 1], [], []>} : vector<2x512xbf16>, vector<512x512xbf16>, vector<2x512xf32> -> vector<2x512xf32>
    %c7_63 = arith.constant 7 : index
    %c0_64 = arith.constant 0 : index
    %c0_65 = arith.constant 0 : index
    %106 = vector.load %arg2[%c7_63, %c0_64, %c0_65] : memref<8x1x512xf32, #tpu.memory_space<vmem>>, vector<1x1x512xf32>
    %107 = vector.shape_cast %106 : vector<1x1x512xf32> to vector<1x512xf32>
    %108 = vector.broadcast %107 : vector<1x512xf32> to vector<2x512xf32>
    %109 = arith.addf %105, %108 : vector<2x512xf32>
    %cst_66 = arith.constant 0.000000e+00 : f32
    %110 = vector.broadcast %cst_66 : f32 to vector<2x512xf32>
    %111 = arith.cmpf oge, %109, %110 : vector<2x512xf32>
    %cst_67 = arith.constant 2.000000e-01 : f32
    %112 = vector.broadcast %cst_67 : f32 to vector<2x512xf32>
    %113 = arith.mulf %112, %109 : vector<2x512xf32>
    %114 = arith.select %111, %109, %113 : vector<2x512xi1>, vector<2x512xf32>
    %c0_68 = arith.constant 0 : index
    %c0_69 = arith.constant 0 : index
    %115 = vector.load %arg3[%c0_68, %c0_69] : memref<2x512xf32, #tpu.memory_space<vmem>>, vector<2x512xf32>
    tpu.vector_store %arg3[%c0_68, %c0_69], %114 {strides = array<i32>} : memref<2x512xf32, #tpu.memory_space<vmem>>, vector<2x512xf32>,
    return
  }
}

</mosaic_0001>

<llo_original>
// kernel: tpu_custom_call.1
$region0: #{tpu_custom_call.1}
  #allocation0 [shape = 'u32[]', space=smem, size = 0x4, offset = 0x4, fixed_abs, tag = 'smem constant byte address 0x4 - core index']
  #allocation1 [shape = 'u32[144,128]{1,0:T(1,128)}', space=vmem, size = 0x12000, scoped, tag = 'internal scratch']
  %s0 = inlined_call_operand.hbm [shape: f32[2,512], index: 0, kind: input, shape index: {}]
  %s1 = inlined_call_operand.hbm [shape: bf16[8,512,512], index: 1, kind: input, shape index: {}]
  %s2 = inlined_call_operand.hbm [shape: f32[8,1,512], index: 2, kind: input, shape index: {}]
  %s3 = inlined_call_operand.hbm [shape: f32[2,512], index: 3, kind: output, shape index: {}]
  %s4 = sld [smem:[#allocation0]]
  $region34: #{tpu_custom_call.1} parent=0
    _
  %s6 = ssub.s32 1, %s4
  %s7 = scalar_select 0, %s6, %s4
  $region1: #{tpu_custom_call.1} parent=0
    #allocation2 [shape = 'u8[4096]{0}', space=vmem, size = 0x1000, scoped, tag = 'input window, operand 0, single buffered']
    #allocation3 [shape = 's32[1]{0}', space=sflag, size = 0x4, scoped, tag = 'scoped memory for tpu_custom_call.1']
    #allocation4 [shape = 's32[1]{0}', space=sflag, size = 0x4, scoped, tag = 'scoped memory for tpu_custom_call.1']
    #allocation5 [shape = 'u8[4194304]{0}', space=vmem, size = 0x400000, scoped, tag = 'input window, operand 1, single buffered']
    #allocation6 [shape = 's32[1]{0}', space=sflag, size = 0x4, scoped, tag = 'scoped memory for tpu_custom_call.1']
    #allocation7 [shape = 'u8[16384]{0}', space=vmem, size = 0x4000, scoped, tag = 'input window, operand 2, single buffered']
    #allocation8 [shape = 'u8[4096]{0}', space=vmem, size = 0x1000, scoped, tag = 'output window, operand 0, single buffered']
    %8 = vsyncpa [#allocation3], 0
    %9 = vsyncpa [#allocation6], 0
    %10 = vsyncpa [#allocation4], 0
    // Predicated region
    $region2: #{tpu_custom_call.1} parent=1 // pred_check
      _
    $region3: #{tpu_custom_call.1} parent=1 // pred_check_branch
      %12 = sbr.rel (0) target = $region5
    $region4: #{tpu_custom_call.1} parent=1 // pred_region
      %s14 = ssub.s32 128, 128
      %15 = vsyncadd [#allocation3], %s14
      %s17 = sshll.u32 [#allocation2], 4
      %s18 = int_to_ptr.vmem [resolvable:$true] %s17
      %20 = dma.hbm_to_vmem [thread:$0]  %s0, 128, %s18, [#allocation3]
    $region5: #{tpu_custom_call.1} parent=1 // pred_fallthru
      _
    // Predicated region
    $region6: #{tpu_custom_call.1} parent=1 // pred_check
      _
    $region7: #{tpu_custom_call.1} parent=1 // pred_check_branch
      %22 = sbr.rel (0) target = $region9
    $region8: #{tpu_custom_call.1} parent=1 // pred_region
      %s24 = ssub.s32 131072, 131072
      %25 = vsyncadd [#allocation6], %s24
      %s26 = sshll.u32 [#allocation5], 4
      %s27 = int_to_ptr.vmem [resolvable:$true] %s26
      %32 = dma.hbm_to_vmem [thread:$0]  %s1, 131072, %s27, [#allocation6], 256, 256, 16
    $region9: #{tpu_custom_call.1} parent=1 // pred_fallthru
      _
    // Predicated region
    $region10: #{tpu_custom_call.1} parent=1 // pred_check
      _
    $region11: #{tpu_custom_call.1} parent=1 // pred_check_branch
      %34 = sbr.rel (0) target = $region13
    $region12: #{tpu_custom_call.1} parent=1 // pred_region
      %s36 = ssub.s32 512, 512
      %37 = vsyncadd [#allocation6], %s36
      %s38 = sshll.u32 [#allocation7], 4
      %s39 = int_to_ptr.vmem [resolvable:$true] %s38
      %44 = dma.hbm_to_vmem [thread:$0]  %s2, 512, %s39, [#allocation6], 64, 64, 4
    $region13: #{tpu_custom_call.1} parent=1 // pred_fallthru
      _
    // Predicated region
    $region14: #{tpu_custom_call.1} parent=1 // pred_check
      _
    $region15: #{tpu_custom_call.1} parent=1 // pred_check_branch
      %46 = sbr.rel (0) target = $region17
    $region16: #{tpu_custom_call.1} parent=1 // pred_region
      %47 = dma.done [#allocation3], 128
    $region17: #{tpu_custom_call.1} parent=1 // pred_fallthru
      _
    // Predicated region
    $region18: #{tpu_custom_call.1} parent=1 // pred_check
      _
    $region19: #{tpu_custom_call.1} parent=1 // pred_check_branch
      %49 = sbr.rel (0) target = $region21
    $region20: #{tpu_custom_call.1} parent=1 // pred_region
      %50 = dma.done [#allocation6], 131072
    $region21: #{tpu_custom_call.1} parent=1 // pred_fallthru
      _
    // Predicated region
    $region22: #{tpu_custom_call.1} parent=1 // pred_check
      _
    $region23: #{tpu_custom_call.1} parent=1 // pred_check_branch
      %52 = sbr.rel (0) target = $region25
    $region24: #{tpu_custom_call.1} parent=1 // pred_region
      %53 = dma.done [#allocation6], 512
    $region25: #{tpu_custom_call.1} parent=1 // pred_fallthru
      _
    %v54 = vld [vmem:[#allocation2] sm:$0xff]
    %v55 = vmul.f32 %v54, %v54
    %v57 = vcombine.high %v55, %v55
    %v59 = vunpack.c.l.s4 1983009808
    %v60 = vunpack.c.0.s8 %v59
    %v61 = vlaneseq
    %v62 = vshrl.u32 %v61, 7
    %v63 = vsub.s32 %v60, %v62
    %v64 = vrot.slane %v55, %v63
    %v66 = vunpack.c.l.s4 1983009808
    %v67 = vunpack.c.0.s8 %v66
    %v68 = vlaneseq
    %v69 = vshrl.u32 %v68, 7
    %v70 = vsub.s32 %v67, %v69
    %v71 = vrot.slane %v57, %v70
    %v72 = vcombine.high %v64, %v64
    %v73 = vcombine.high %v71, %v71
    %vm78 = vcmask 1041408
    %v79 = vsel %vm78, %v64, 0.0
    %v80 = vsel %vm78, %v72, 0.0
    %v81 = vadd.f32 %v79, %v80
    %v82 = vsel %vm78, %v71, 0.0
    %v83 = vadd.f32 %v81, %v82
    %v84 = vsel %vm78, %v73, 0.0
    %v85 = vadd.f32 %v83, %v84
    %86 = vadd.xlane.f32.xlu0 %v85
    %v87 = vpop.xlane.xlu0 %86
    %v88 = vrcp.pop 512.0
    %v89 = vmul.f32 %v87, %v88
    %v90 = vadd.f32 %v89, 1e-08
    %v91 = vrsqrt.pop %v90
    %v94 = vunpack.c.l.s4 269488144
    %v95 = vunpack.c.0.s8 %v94
    %v96 = vlaneseq
    %v97 = vshrl.u32 %v96, 7
    %v98 = vsub.s32 %v95, %v97
    %v99 = vrot.slane %v91, %v98
    %v101 = vmul.f32 %v54, %v99
    %v103 = vcombine.high %v101, %v101
    %v105 = vunpack.c.l.s4 1983009808
    %v106 = vunpack.c.0.s8 %v105
    %v107 = vlaneseq
    %v108 = vshrl.u32 %v107, 7
    %v109 = vsub.s32 %v106, %v108
    %v110 = vrot.slane %v101, %v109
    %v112 = vunpack.c.l.s4 1983009808
    %v113 = vunpack.c.0.s8 %v112
    %v114 = vlaneseq
    %v115 = vshrl.u32 %v114, 7
    %v116 = vsub.s32 %v113, %v115
    %v117 = vrot.slane %v103, %v116
    %v118 = vcombine.high %v110, %v110
    %v119 = vcombine.high %v117, %v117
    %v124 = vpack.c.bf16 %v110, %v110
    %v125 = vpack.c.bf16 %v118, %v118
    %v126 = vpack.c.bf16 %v117, %v117
    %v127 = vpack.c.bf16 %v119, %v119
    %v128 = vld [vmem:[#allocation5] sm:$0xff]
    %v129 = vld [vmem:[#allocation5 + $0x8] sm:$0xff]
    %v130 = vld [vmem:[#allocation5 + $0x10] sm:$0xff]
    %v131 = vld [vmem:[#allocation5 + $0x18] sm:$0xff]
    %v132 = vld [vmem:[#allocation5 + $0x20] sm:$0xff]
    %v133 = vld [vmem:[#allocation5 + $0x28] sm:$0xff]
    %v134 = vld [vmem:[#allocation5 + $0x30] sm:$0xff]
    %v135 = vld [vmem:[#allocation5 + $0x38] sm:$0xff]
    %v136 = vld [vmem:[#allocation5 + $0x40] sm:$0xff]
    %v137 = vld [vmem:[#allocation5 + $0x48] sm:$0xff]
    %v138 = vld [vmem:[#allocation5 + $0x50] sm:$0xff]
    %v139 = vld [vmem:[#allocation5 + $0x58] sm:$0xff]
    %v140 = vld [vmem:[#allocation5 + $0x60] sm:$0xff]
    %v141 = vld [vmem:[#allocation5 + $0x68] sm:$0xff]
    %v142 = vld [vmem:[#allocation5 + $0x70] sm:$0xff]
    %v143 = vld [vmem:[#allocation5 + $0x78] sm:$0xff]
    %v144 = vld [vmem:[#allocation5 + $0x80] sm:$0xff]
    %v145 = vld [vmem:[#allocation5 + $0x88] sm:$0xff]
    %v146 = vld [vmem:[#allocation5 + $0x90] sm:$0xff]
    %v147 = vld [vmem:[#allocation5 + $0x98] sm:$0xff]
    %v148 = vld [vmem:[#allocation5 + $0xa0] sm:$0xff]
    %v149 = vld [vmem:[#allocation5 + $0xa8] sm:$0xff]
    %v150 = vld [vmem:[#allocation5 + $0xb0] sm:$0xff]
    %v151 = vld [vmem:[#allocation5 + $0xb8] sm:$0xff]
    %v152 = vld [vmem:[#allocation5 + $0xc0] sm:$0xff]
    %v153 = vld [vmem:[#allocation5 + $0xc8] sm:$0xff]
    %v154 = vld [vmem:[#allocation5 + $0xd0] sm:$0xff]
    %v155 = vld [vmem:[#allocation5 + $0xd8] sm:$0xff]
    %v156 = vld [vmem:[#allocation5 + $0xe0] sm:$0xff]
    %v157 = vld [vmem:[#allocation5 + $0xe8] sm:$0xff]
    %v158 = vld [vmem:[#allocation5 + $0xf0] sm:$0xff]
    %v159 = vld [vmem:[#allocation5 + $0xf8] sm:$0xff]
    %v160 = vld [vmem:[#allocation5 + $0x100] sm:$0xff]
    %v161 = vld [vmem:[#allocation5 + $0x108] sm:$0xff]
    %v162 = vld [vmem:[#allocation5 + $0x110] sm:$0xff]
    %v163 = vld [vmem:[#allocation5 + $0x118] sm:$0xff]
    %v164 = vld [vmem:[#allocation5 + $0x120] sm:$0xff]
    %v165 = vld [vmem:[#allocation5 + $0x128] sm:$0xff]
    %v166 = vld [vmem:[#allocation5 + $0x130] sm:$0xff]
    %v167 = vld [vmem:[#allocation5 + $0x138] sm:$0xff]
    %v168 = vld [vmem:[#allocation5 + $0x140] sm:$0xff]
    %v169 = vld [vmem:[#allocation5 + $0x148] sm:$0xff]
    %v170 = vld [vmem:[#allocation5 + $0x150] sm:$0xff]
    %v171 = vld [vmem:[#allocation5 + $0x158] sm:$0xff]
    %v172 = vld [vmem:[#allocation5 + $0x160] sm:$0xff]
    %v173 = vld [vmem:[#allocation5 + $0x168] sm:$0xff]
    %v174 = vld [vmem:[#allocation5 + $0x170] sm:$0xff]
    %v175 = vld [vmem:[#allocation5 + $0x178] sm:$0xff]
    %v176 = vld [vmem:[#allocation5 + $0x180] sm:$0xff]
    %v177 = vld [vmem:[#allocation5 + $0x188] sm:$0xff]
    %v178 = vld [vmem:[#allocation5 + $0x190] sm:$0xff]
    %v179 = vld [vmem:[#allocation5 + $0x198] sm:$0xff]
    %v180 = vld [vmem:[#allocation5 + $0x1a0] sm:$0xff]
    %v181 = vld [vmem:[#allocation5 + $0x1a8] sm:$0xff]
    %v182 = vld [vmem:[#allocation5 + $0x1b0] sm:$0xff]
    %v183 = vld [vmem:[#allocation5 + $0x1b8] sm:$0xff]
    %v184 = vld [vmem:[#allocation5 + $0x1c0] sm:$0xff]
    %v185 = vld [vmem:[#allocation5 + $0x1c8] sm:$0xff]
    %v186 = vld [vmem:[#allocation5 + $0x1d0] sm:$0xff]
    %v187 = vld [vmem:[#allocation5 + $0x1d8] sm:$0xff]
    %v188 = vld [vmem:[#allocation5 + $0x1e0] sm:$0xff]
    %v189 = vld [vmem:[#allocation5 + $0x1e8] sm:$0xff]
    %v190 = vld [vmem:[#allocation5 + $0x1f0] sm:$0xff]
    %v191 = vld [vmem:[#allocation5 + $0x1f8] sm:$0xff]
    %v192 = vld [vmem:[#allocation5 + $0x200] sm:$0xff]
    %v193 = vld [vmem:[#allocation5 + $0x208] sm:$0xff]
    %v194 = vld [vmem:[#allocation5 + $0x210] sm:$0xff]
    %v195 = vld [vmem:[#allocation5 + $0x218] sm:$0xff]
    %v196 = vld [vmem:[#allocation5 + $0x220] sm:$0xff]
    %v197 = vld [vmem:[#allocation5 + $0x228] sm:$0xff]
    %v198 = vld [vmem:[#allocation5 + $0x230] sm:$0xff]
    %v199 = vld [vmem:[#allocation5 + $0x238] sm:$0xff]
    %v200 = vld [vmem:[#allocation5 + $0x240] sm:$0xff]
    %v201 = vld [vmem:[#allocation5 + $0x248] sm:$0xff]
    %v202 = vld [vmem:[#allocation5 + $0x250] sm:$0xff]
    %v203 = vld [vmem:[#allocation5 + $0x258] sm:$0xff]
    %v204 = vld [vmem:[#allocation5 + $0x260] sm:$0xff]
    %v205 = vld [vmem:[#allocation5 + $0x268] sm:$0xff]
    %v206 = vld [vmem:[#allocation5 + $0x270] sm:$0xff]
    %v207 = vld [vmem:[#allocation5 + $0x278] sm:$0xff]
    %v208 = vld [vmem:[#allocation5 + $0x280] sm:$0xff]
    %v209 = vld [vmem:[#allocation5 + $0x288] sm:$0xff]
    %v210 = vld [vmem:[#allocation5 + $0x290] sm:$0xff]
    %v211 = vld [vmem:[#allocation5 + $0x298] sm:$0xff]
    %v212 = vld [vmem:[#allocation5 + $0x2a0] sm:$0xff]
    %v213 = vld [vmem:[#allocation5 + $0x2a8] sm:$0xff]
    %v214 = vld [vmem:[#allocation5 + $0x2b0] sm:$0xff]
    %v215 = vld [vmem:[#allocation5 + $0x2b8] sm:$0xff]
    %v216 = vld [vmem:[#allocation5 + $0x2c0] sm:$0xff]
    %v217 = vld [vmem:[#allocation5 + $0x2c8] sm:$0xff]
    %v218 = vld [vmem:[#allocation5 + $0x2d0] sm:$0xff]
    %v219 = vld [vmem:[#allocation5 + $0x2d8] sm:$0xff]
    %v220 = vld [vmem:[#allocation5 + $0x2e0] sm:$0xff]
    %v221 = vld [vmem:[#allocation5 + $0x2e8] sm:$0xff]
    %v222 = vld [vmem:[#allocation5 + $0x2f0] sm:$0xff]
    %v223 = vld [vmem:[#allocation5 + $0x2f8] sm:$0xff]
    %v224 = vld [vmem:[#allocation5 + $0x300] sm:$0xff]
    %v225 = vld [vmem:[#allocation5 + $0x308] sm:$0xff]
    %v226 = vld [vmem:[#allocation5 + $0x310] sm:$0xff]
    %v227 = vld [vmem:[#allocation5 + $0x318] sm:$0xff]
    %v228 = vld [vmem:[#allocation5 + $0x320] sm:$0xff]
    %v229 = vld [vmem:[#allocation5 + $0x328] sm:$0xff]
    %v230 = vld [vmem:[#allocation5 + $0x330] sm:$0xff]
    %v231 = vld [vmem:[#allocation5 + $0x338] sm:$0xff]
    %v232 = vld [vmem:[#allocation5 + $0x340] sm:$0xff]
    %v233 = vld [vmem:[#allocation5 + $0x348] sm:$0xff]
    %v234 = vld [vmem:[#allocation5 + $0x350] sm:$0xff]
    %v235 = vld [vmem:[#allocation5 + $0x358] sm:$0xff]
    %v236 = vld [vmem:[#allocation5 + $0x360] sm:$0xff]
    %v237 = vld [vmem:[#allocation5 + $0x368] sm:$0xff]
    %v238 = vld [vmem:[#allocation5 + $0x370] sm:$0xff]
    %v239 = vld [vmem:[#allocation5 + $0x378] sm:$0xff]
    %v240 = vld [vmem:[#allocation5 + $0x380] sm:$0xff]
    %v241 = vld [vmem:[#allocation5 + $0x388] sm:$0xff]
    %v242 = vld [vmem:[#allocation5 + $0x390] sm:$0xff]
    %v243 = vld [vmem:[#allocation5 + $0x398] sm:$0xff]
    %v244 = vld [vmem:[#allocation5 + $0x3a0] sm:$0xff]
    %v245 = vld [vmem:[#allocation5 + $0x3a8] sm:$0xff]
    %v246 = vld [vmem:[#allocation5 + $0x3b0] sm:$0xff]
    %v247 = vld [vmem:[#allocation5 + $0x3b8] sm:$0xff]
    %v248 = vld [vmem:[#allocation5 + $0x3c0] sm:$0xff]
    %v249 = vld [vmem:[#allocation5 + $0x3c8] sm:$0xff]
    %v250 = vld [vmem:[#allocation5 + $0x3d0] sm:$0xff]
    %v251 = vld [vmem:[#allocation5 + $0x3d8] sm:$0xff]
    %v252 = vld [vmem:[#allocation5 + $0x3e0] sm:$0xff]
    %v253 = vld [vmem:[#allocation5 + $0x3e8] sm:$0xff]
    %v254 = vld [vmem:[#allocation5 + $0x3f0] sm:$0xff]
    %v255 = vld [vmem:[#allocation5 + $0x3f8] sm:$0xff]
    %v256 = vld [vmem:[#allocation7] sm:$0xf]
    %v258 = vlaneseq
    %v259 = vshrl.u32 %v258, 7
    %v260 = vsub.s32 0, %v259
    %v261 = vrot.slane %v256, %v260
    %v262 = vlaneseq
    %v263 = vshrl.u32 %v262, 7
    %v264 = vsub.s32 1, %v263
    %v265 = vrot.slane %v256, %v264
    %v266 = vlaneseq
    %v267 = vshrl.u32 %v266, 7
    %v268 = vsub.s32 2, %v267
    %v269 = vrot.slane %v256, %v268
    %v270 = vlaneseq
    %v271 = vshrl.u32 %v270, 7
    %v272 = vsub.s32 3, %v271
    %v273 = vrot.slane %v256, %v272
    %v406 = vunpack.c.l.b16 %v128
    %v407 = vunpack.c.h.b16 %v128
    %v408 = vunpack.c.l.b16 %v129
    %v409 = vunpack.c.h.b16 %v129
    %v410 = vunpack.c.l.b16 %v130
    %v411 = vunpack.c.h.b16 %v130
    %v412 = vunpack.c.l.b16 %v131
    %v413 = vunpack.c.h.b16 %v131
    %v414 = vunpack.c.l.b16 %v132
    %v415 = vunpack.c.h.b16 %v132
    %v416 = vunpack.c.l.b16 %v133
    %v417 = vunpack.c.h.b16 %v133
    %v418 = vunpack.c.l.b16 %v134
    %v419 = vunpack.c.h.b16 %v134
    %v420 = vunpack.c.l.b16 %v135
    %v421 = vunpack.c.h.b16 %v135
    %v422 = vunpack.c.l.b16 %v136
    %v423 = vunpack.c.h.b16 %v136
    %v424 = vunpack.c.l.b16 %v137
    %v425 = vunpack.c.h.b16 %v137
    %v426 = vunpack.c.l.b16 %v138
    %v427 = vunpack.c.h.b16 %v138
    %v428 = vunpack.c.l.b16 %v139
    %v429 = vunpack.c.h.b16 %v139
    %v430 = vunpack.c.l.b16 %v140
    %v431 = vunpack.c.h.b16 %v140
    %v432 = vunpack.c.l.b16 %v141
    %v433 = vunpack.c.h.b16 %v141
    %v434 = vunpack.c.l.b16 %v142
    %v435 = vunpack.c.h.b16 %v142
    %v436 = vunpack.c.l.b16 %v143
    %v437 = vunpack.c.h.b16 %v143
    %v438 = vunpack.c.l.b16 %v144
    %v439 = vunpack.c.h.b16 %v144
    %v440 = vunpack.c.l.b16 %v145
    %v441 = vunpack.c.h.b16 %v145
    %v442 = vunpack.c.l.b16 %v146
    %v443 = vunpack.c.h.b16 %v146
    %v444 = vunpack.c.l.b16 %v147
    %v445 = vunpack.c.h.b16 %v147
    %v446 = vunpack.c.l.b16 %v148
    %v447 = vunpack.c.h.b16 %v148
    %v448 = vunpack.c.l.b16 %v149
    %v449 = vunpack.c.h.b16 %v149
    %v450 = vunpack.c.l.b16 %v150
    %v451 = vunpack.c.h.b16 %v150
    %v452 = vunpack.c.l.b16 %v151
    %v453 = vunpack.c.h.b16 %v151
    %v454 = vunpack.c.l.b16 %v152
    %v455 = vunpack.c.h.b16 %v152
    %v456 = vunpack.c.l.b16 %v153
    %v457 = vunpack.c.h.b16 %v153
    %v458 = vunpack.c.l.b16 %v154
    %v459 = vunpack.c.h.b16 %v154
    %v460 = vunpack.c.l.b16 %v155
    %v461 = vunpack.c.h.b16 %v155
    %v462 = vunpack.c.l.b16 %v156
    %v463 = vunpack.c.h.b16 %v156
    %v464 = vunpack.c.l.b16 %v157
    %v465 = vunpack.c.h.b16 %v157
    %v466 = vunpack.c.l.b16 %v158
    %v467 = vunpack.c.h.b16 %v158
    %v468 = vunpack.c.l.b16 %v159
    %v469 = vunpack.c.h.b16 %v159
    %v470 = vunpack.c.l.b16 %v160
    %v471 = vunpack.c.h.b16 %v160
    %v472 = vunpack.c.l.b16 %v161
    %v473 = vunpack.c.h.b16 %v161
    %v474 = vunpack.c.l.b16 %v162
    %v475 = vunpack.c.h.b16 %v162
    %v476 = vunpack.c.l.b16 %v163
    %v477 = vunpack.c.h.b16 %v163
    %v478 = vunpack.c.l.b16 %v164
    %v479 = vunpack.c.h.b16 %v164
    %v480 = vunpack.c.l.b16 %v165
    %v481 = vunpack.c.h.b16 %v165
    %v482 = vunpack.c.l.b16 %v166
    %v483 = vunpack.c.h.b16 %v166
    %v484 = vunpack.c.l.b16 %v167
    %v485 = vunpack.c.h.b16 %v167
    %v486 = vunpack.c.l.b16 %v168
    %v487 = vunpack.c.h.b16 %v168
    %v488 = vunpack.c.l.b16 %v169
    %v489 = vunpack.c.h.b16 %v169
    %v490 = vunpack.c.l.b16 %v170
    %v491 = vunpack.c.h.b16 %v170
    %v492 = vunpack.c.l.b16 %v171
    %v493 = vunpack.c.h.b16 %v171
    %v494 = vunpack.c.l.b16 %v172
    %v495 = vunpack.c.h.b16 %v172
    %v496 = vunpack.c.l.b16 %v173
    %v497 = vunpack.c.h.b16 %v173
    %v498 = vunpack.c.l.b16 %v174
    %v499 = vunpack.c.h.b16 %v174
    %v500 = vunpack.c.l.b16 %v175
    %v501 = vunpack.c.h.b16 %v175
    %v502 = vunpack.c.l.b16 %v176
    %v503 = vunpack.c.h.b16 %v176
    %v504 = vunpack.c.l.b16 %v177
    %v505 = vunpack.c.h.b16 %v177
    %v506 = vunpack.c.l.b16 %v178
    %v507 = vunpack.c.h.b16 %v178
    %v508 = vunpack.c.l.b16 %v179
    %v509 = vunpack.c.h.b16 %v179
    %v510 = vunpack.c.l.b16 %v180
    %v511 = vunpack.c.h.b16 %v180
    %v512 = vunpack.c.l.b16 %v181
    %v513 = vunpack.c.h.b16 %v181
    %v514 = vunpack.c.l.b16 %v182
    %v515 = vunpack.c.h.b16 %v182
    %v516 = vunpack.c.l.b16 %v183
    %v517 = vunpack.c.h.b16 %v183
    %v518 = vunpack.c.l.b16 %v184
    %v519 = vunpack.c.h.b16 %v184
    %v520 = vunpack.c.l.b16 %v185
    %v521 = vunpack.c.h.b16 %v185
    %v522 = vunpack.c.l.b16 %v186
    %v523 = vunpack.c.h.b16 %v186
    %v524 = vunpack.c.l.b16 %v187
    %v525 = vunpack.c.h.b16 %v187
    %v526 = vunpack.c.l.b16 %v188
    %v527 = vunpack.c.h.b16 %v188
    %v528 = vunpack.c.l.b16 %v189
    %v529 = vunpack.c.h.b16 %v189
    %v530 = vunpack.c.l.b16 %v190
    %v531 = vunpack.c.h.b16 %v190
    %v532 = vunpack.c.l.b16 %v191
    %v533 = vunpack.c.h.b16 %v191
    %v534 = vunpack.c.l.b16 %v192
    %v535 = vunpack.c.h.b16 %v192
    %v536 = vunpack.c.l.b16 %v193
    %v537 = vunpack.c.h.b16 %v193
    %v538 = vunpack.c.l.b16 %v194
    %v539 = vunpack.c.h.b16 %v194
    %v540 = vunpack.c.l.b16 %v195
    %v541 = vunpack.c.h.b16 %v195
    %v542 = vunpack.c.l.b16 %v196
    %v543 = vunpack.c.h.b16 %v196
    %v544 = vunpack.c.l.b16 %v197
    %v545 = vunpack.c.h.b16 %v197
    %v546 = vunpack.c.l.b16 %v198
    %v547 = vunpack.c.h.b16 %v198
    %v548 = vunpack.c.l.b16 %v199
    %v549 = vunpack.c.h.b16 %v199
    %v550 = vunpack.c.l.b16 %v200
    %v551 = vunpack.c.h.b16 %v200
    %v552 = vunpack.c.l.b16 %v201
    %v553 = vunpack.c.h.b16 %v201
    %v554 = vunpack.c.l.b16 %v202
    %v555 = vunpack.c.h.b16 %v202
    %v556 = vunpack.c.l.b16 %v203
    %v557 = vunpack.c.h.b16 %v203
    %v558 = vunpack.c.l.b16 %v204
    %v559 = vunpack.c.h.b16 %v204
    %v560 = vunpack.c.l.b16 %v205
    %v561 = vunpack.c.h.b16 %v205
    %v562 = vunpack.c.l.b16 %v206
    %v563 = vunpack.c.h.b16 %v206
    %v564 = vunpack.c.l.b16 %v207
    %v565 = vunpack.c.h.b16 %v207
    %v566 = vunpack.c.l.b16 %v208
    %v567 = vunpack.c.h.b16 %v208
    %v568 = vunpack.c.l.b16 %v209
    %v569 = vunpack.c.h.b16 %v209
    %v570 = vunpack.c.l.b16 %v210
    %v571 = vunpack.c.h.b16 %v210
    %v572 = vunpack.c.l.b16 %v211
    %v573 = vunpack.c.h.b16 %v211
    %v574 = vunpack.c.l.b16 %v212
    %v575 = vunpack.c.h.b16 %v212
    %v576 = vunpack.c.l.b16 %v213
    %v577 = vunpack.c.h.b16 %v213
    %v578 = vunpack.c.l.b16 %v214
    %v579 = vunpack.c.h.b16 %v214
    %v580 = vunpack.c.l.b16 %v215
    %v581 = vunpack.c.h.b16 %v215
    %v582 = vunpack.c.l.b16 %v216
    %v583 = vunpack.c.h.b16 %v216
    %v584 = vunpack.c.l.b16 %v217
    %v585 = vunpack.c.h.b16 %v217
    %v586 = vunpack.c.l.b16 %v218
    %v587 = vunpack.c.h.b16 %v218
    %v588 = vunpack.c.l.b16 %v219
    %v589 = vunpack.c.h.b16 %v219
    %v590 = vunpack.c.l.b16 %v220
    %v591 = vunpack.c.h.b16 %v220
    %v592 = vunpack.c.l.b16 %v221
    %v593 = vunpack.c.h.b16 %v221
    %v594 = vunpack.c.l.b16 %v222
    %v595 = vunpack.c.h.b16 %v222
    %v596 = vunpack.c.l.b16 %v223
    %v597 = vunpack.c.h.b16 %v223
    %v598 = vunpack.c.l.b16 %v224
    %v599 = vunpack.c.h.b16 %v224
    %v600 = vunpack.c.l.b16 %v225
    %v601 = vunpack.c.h.b16 %v225
    %v602 = vunpack.c.l.b16 %v226
    %v603 = vunpack.c.h.b16 %v226
    %v604 = vunpack.c.l.b16 %v227
    %v605 = vunpack.c.h.b16 %v227
    %v606 = vunpack.c.l.b16 %v228
    %v607 = vunpack.c.h.b16 %v228
    %v608 = vunpack.c.l.b16 %v229
    %v609 = vunpack.c.h.b16 %v229
    %v610 = vunpack.c.l.b16 %v230
    %v611 = vunpack.c.h.b16 %v230
    %v612 = vunpack.c.l.b16 %v231
    %v613 = vunpack.c.h.b16 %v231
    %v614 = vunpack.c.l.b16 %v232
    %v615 = vunpack.c.h.b16 %v232
    %v616 = vunpack.c.l.b16 %v233
    %v617 = vunpack.c.h.b16 %v233
    %v618 = vunpack.c.l.b16 %v234
    %v619 = vunpack.c.h.b16 %v234
    %v620 = vunpack.c.l.b16 %v235
    %v621 = vunpack.c.h.b16 %v235
    %v622 = vunpack.c.l.b16 %v236
    %v623 = vunpack.c.h.b16 %v236
    %v624 = vunpack.c.l.b16 %v237
    %v625 = vunpack.c.h.b16 %v237
    %v626 = vunpack.c.l.b16 %v238
    %v627 = vunpack.c.h.b16 %v238
    %v628 = vunpack.c.l.b16 %v239
    %v629 = vunpack.c.h.b16 %v239
    %v630 = vunpack.c.l.b16 %v240
    %v631 = vunpack.c.h.b16 %v240
    %v632 = vunpack.c.l.b16 %v241
    %v633 = vunpack.c.h.b16 %v241
    %v634 = vunpack.c.l.b16 %v242
    %v635 = vunpack.c.h.b16 %v242
    %v636 = vunpack.c.l.b16 %v243
    %v637 = vunpack.c.h.b16 %v243
    %v638 = vunpack.c.l.b16 %v244
    %v639 = vunpack.c.h.b16 %v244
    %v640 = vunpack.c.l.b16 %v245
    %v641 = vunpack.c.h.b16 %v245
    %v642 = vunpack.c.l.b16 %v246
    %v643 = vunpack.c.h.b16 %v246
    %v644 = vunpack.c.l.b16 %v247
    %v645 = vunpack.c.h.b16 %v247
    %v646 = vunpack.c.l.b16 %v248
    %v647 = vunpack.c.h.b16 %v248
    %v648 = vunpack.c.l.b16 %v249
    %v649 = vunpack.c.h.b16 %v249
    %v650 = vunpack.c.l.b16 %v250
    %v651 = vunpack.c.h.b16 %v250
    %v652 = vunpack.c.l.b16 %v251
    %v653 = vunpack.c.h.b16 %v251
    %v654 = vunpack.c.l.b16 %v252
    %v655 = vunpack.c.h.b16 %v252
    %v656 = vunpack.c.l.b16 %v253
    %v657 = vunpack.c.h.b16 %v253
    %v658 = vunpack.c.l.b16 %v254
    %v659 = vunpack.c.h.b16 %v254
    %v660 = vunpack.c.l.b16 %v255
    %v661 = vunpack.c.h.b16 %v255
    %v662 = vpack.c.b16 %v410, %v406
    %v663 = vpack.c.b16 %v411, %v407
    %v664 = vpack.c.b16 %v412, %v408
    %v665 = vpack.c.b16 %v413, %v409
    %v666 = vpack.c.b16 %v418, %v414
    %v667 = vpack.c.b16 %v419, %v415
    %v668 = vpack.c.b16 %v420, %v416
    %v669 = vpack.c.b16 %v421, %v417
    %v670 = vpack.c.b16 %v426, %v422
    %v671 = vpack.c.b16 %v427, %v423
    %v672 = vpack.c.b16 %v428, %v424
    %v673 = vpack.c.b16 %v429, %v425
    %v674 = vpack.c.b16 %v434, %v430
    %v675 = vpack.c.b16 %v435, %v431
    %v676 = vpack.c.b16 %v436, %v432
    %v677 = vpack.c.b16 %v437, %v433
    %v678 = vpack.c.b16 %v442, %v438
    %v679 = vpack.c.b16 %v443, %v439
    %v680 = vpack.c.b16 %v444, %v440
    %v681 = vpack.c.b16 %v445, %v441
    %v682 = vpack.c.b16 %v450, %v446
    %v683 = vpack.c.b16 %v451, %v447
    %v684 = vpack.c.b16 %v452, %v448
    %v685 = vpack.c.b16 %v453, %v449
    %v686 = vpack.c.b16 %v458, %v454
    %v687 = vpack.c.b16 %v459, %v455
    %v688 = vpack.c.b16 %v460, %v456
    %v689 = vpack.c.b16 %v461, %v457
    %v690 = vpack.c.b16 %v466, %v462
    %v691 = vpack.c.b16 %v467, %v463
    %v692 = vpack.c.b16 %v468, %v464
    %v693 = vpack.c.b16 %v469, %v465
    %v694 = vpack.c.b16 %v474, %v470
    %v695 = vpack.c.b16 %v475, %v471
    %v696 = vpack.c.b16 %v476, %v472
    %v697 = vpack.c.b16 %v477, %v473
    %v698 = vpack.c.b16 %v482, %v478
    %v699 = vpack.c.b16 %v483, %v479
    %v700 = vpack.c.b16 %v484, %v480
    %v701 = vpack.c.b16 %v485, %v481
    %v702 = vpack.c.b16 %v490, %v486
    %v703 = vpack.c.b16 %v491, %v487
    %v704 = vpack.c.b16 %v492, %v488
    %v705 = vpack.c.b16 %v493, %v489
    %v706 = vpack.c.b16 %v498, %v494
    %v707 = vpack.c.b16 %v499, %v495
    %v708 = vpack.c.b16 %v500, %v496
    %v709 = vpack.c.b16 %v501, %v497
    %v710 = vpack.c.b16 %v506, %v502
    %v711 = vpack.c.b16 %v507, %v503
    %v712 = vpack.c.b16 %v508, %v504
    %v713 = vpack.c.b16 %v509, %v505
    %v714 = vpack.c.b16 %v514, %v510
    %v715 = vpack.c.b16 %v515, %v511
    %v716 = vpack.c.b16 %v516, %v512
    %v717 = vpack.c.b16 %v517, %v513
    %v718 = vpack.c.b16 %v522, %v518
    %v719 = vpack.c.b16 %v523, %v519
    %v720 = vpack.c.b16 %v524, %v520
    %v721 = vpack.c.b16 %v525, %v521
    %v722 = vpack.c.b16 %v530, %v526
    %v723 = vpack.c.b16 %v531, %v527
    %v724 = vpack.c.b16 %v532, %v528
    %v725 = vpack.c.b16 %v533, %v529
    %v726 = vpack.c.b16 %v538, %v534
    %v727 = vpack.c.b16 %v539, %v535
    %v728 = vpack.c.b16 %v540, %v536
    %v729 = vpack.c.b16 %v541, %v537
    %v730 = vpack.c.b16 %v546, %v542
    %v731 = vpack.c.b16 %v547, %v543
    %v732 = vpack.c.b16 %v548, %v544
    %v733 = vpack.c.b16 %v549, %v545
    %v734 = vpack.c.b16 %v554, %v550
    %v735 = vpack.c.b16 %v555, %v551
    %v736 = vpack.c.b16 %v556, %v552
    %v737 = vpack.c.b16 %v557, %v553
    %v738 = vpack.c.b16 %v562, %v558
    %v739 = vpack.c.b16 %v563, %v559
    %v740 = vpack.c.b16 %v564, %v560
    %v741 = vpack.c.b16 %v565, %v561
    %v742 = vpack.c.b16 %v570, %v566
    %v743 = vpack.c.b16 %v571, %v567
    %v744 = vpack.c.b16 %v572, %v568
    %v745 = vpack.c.b16 %v573, %v569
    %v746 = vpack.c.b16 %v578, %v574
    %v747 = vpack.c.b16 %v579, %v575
    %v748 = vpack.c.b16 %v580, %v576
    %v749 = vpack.c.b16 %v581, %v577
    %v750 = vpack.c.b16 %v586, %v582
    %v751 = vpack.c.b16 %v587, %v583
    %v752 = vpack.c.b16 %v588, %v584
    %v753 = vpack.c.b16 %v589, %v585
    %v754 = vpack.c.b16 %v594, %v590
    %v755 = vpack.c.b16 %v595, %v591
    %v756 = vpack.c.b16 %v596, %v592
    %v757 = vpack.c.b16 %v597, %v593
    %v758 = vpack.c.b16 %v602, %v598
    %v759 = vpack.c.b16 %v603, %v599
    %v760 = vpack.c.b16 %v604, %v600
    %v761 = vpack.c.b16 %v605, %v601
    %v762 = vpack.c.b16 %v610, %v606
    %v763 = vpack.c.b16 %v611, %v607
    %v764 = vpack.c.b16 %v612, %v608
    %v765 = vpack.c.b16 %v613, %v609
    %v766 = vpack.c.b16 %v618, %v614
    %v767 = vpack.c.b16 %v619, %v615
    %v768 = vpack.c.b16 %v620, %v616
    %v769 = vpack.c.b16 %v621, %v617
    %v770 = vpack.c.b16 %v626, %v622
    %v771 = vpack.c.b16 %v627, %v623
    %v772 = vpack.c.b16 %v628, %v624
    %v773 = vpack.c.b16 %v629, %v625
    %v774 = vpack.c.b16 %v634, %v630
    %v775 = vpack.c.b16 %v635, %v631
    %v776 = vpack.c.b16 %v636, %v632
    %v777 = vpack.c.b16 %v637, %v633
    %v778 = vpack.c.b16 %v642, %v638
    %v779 = vpack.c.b16 %v643, %v639
    %v780 = vpack.c.b16 %v644, %v640
    %v781 = vpack.c.b16 %v645, %v641
    %v782 = vpack.c.b16 %v650, %v646
    %v783 = vpack.c.b16 %v651, %v647
    %v784 = vpack.c.b16 %v652, %v648
    %v785 = vpack.c.b16 %v653, %v649
    %v786 = vpack.c.b16 %v658, %v654
    %v787 = vpack.c.b16 %v659, %v655
    %v788 = vpack.c.b16 %v660, %v656
    %v789 = vpack.c.b16 %v661, %v657
    %918 = vmatprep.subr.bf16.mxu0 %v663
    %919 = vmatpush1.bf16.msra.mxu0 %v662
    %920 = vmatprep.subr.bf16.mxu0 %v667
    %921 = vmatpush1.bf16.msra.mxu0 %v666
    %922 = vmatprep.subr.bf16.mxu0 %v671
    %923 = vmatpush1.bf16.msra.mxu0 %v670
    %924 = vmatprep.subr.bf16.mxu0 %v675
    %925 = vmatpush1.bf16.msra.mxu0 %v674
    %926 = vmatprep.subr.bf16.mxu0 %v679
    %927 = vmatpush1.bf16.msra.mxu0 %v678
    %928 = vmatprep.subr.bf16.mxu0 %v683
    %929 = vmatpush1.bf16.msra.mxu0 %v682
    %930 = vmatprep.subr.bf16.mxu0 %v687
    %931 = vmatpush1.bf16.msra.mxu0 %v686
    %932 = vmatprep.subr.bf16.mxu0 %v691
    %933 = vmatpush1.bf16.msra.mxu0 %v690
    %934 = vmatprep.subr.bf16.mxu0 %v695
    %935 = vmatpush1.bf16.msra.mxu0 %v694
    %936 = vmatprep.subr.bf16.mxu0 %v699
    %937 = vmatpush1.bf16.msra.mxu0 %v698
    %938 = vmatprep.subr.bf16.mxu0 %v703
    %939 = vmatpush1.bf16.msra.mxu0 %v702
    %940 = vmatprep.subr.bf16.mxu0 %v707
    %941 = vmatpush1.bf16.msra.mxu0 %v706
    %942 = vmatprep.subr.bf16.mxu0 %v711
    %943 = vmatpush1.bf16.msra.mxu0 %v710
    %944 = vmatprep.subr.bf16.mxu0 %v715
    %945 = vmatpush1.bf16.msra.mxu0 %v714
    %946 = vmatprep.subr.bf16.mxu0 %v719
    %947 = vmatpush1.bf16.msra.mxu0 %v718
    %948 = vmatprep.subr.bf16.mxu0 %v723
    %949 = vmatpush1.bf16.msra.mxu0 %v722
    %950 = vmatprep.mubr.bf16.mxu0 %v125
    %951 = vmatmul.mubr.bf16.gmra.mrb[0].mxu0 %v124
    %v952 = vpop.f32.mrb[0].mxu0
    %v953 = vadd.f32 %v261, %v952
    %v954 = vpop.f32.mrb[0].mxu0
    %v955 = vadd.f32 %v265, %v954
    %v956 = vpop.f32.mrb[0].mxu0
    %v957 = vpop.f32.mrb[0].mxu0
    %958 = vdwg.mxu0
    %959 = vmatprep.subr.bf16.mxu0 %v727
    %960 = vmatpush1.bf16.msra.mxu0 %v726
    %961 = vmatprep.subr.bf16.mxu0 %v731
    %962 = vmatpush1.bf16.msra.mxu0 %v730
    %963 = vmatprep.subr.bf16.mxu0 %v735
    %964 = vmatpush1.bf16.msra.mxu0 %v734
    %965 = vmatprep.subr.bf16.mxu0 %v739
    %966 = vmatpush1.bf16.msra.mxu0 %v738
    %967 = vmatprep.subr.bf16.mxu0 %v743
    %968 = vmatpush1.bf16.msra.mxu0 %v742
    %969 = vmatprep.subr.bf16.mxu0 %v747
    %970 = vmatpush1.bf16.msra.mxu0 %v746
    %971 = vmatprep.subr.bf16.mxu0 %v751
    %972 = vmatpush1.bf16.msra.mxu0 %v750
    %973 = vmatprep.subr.bf16.mxu0 %v755
    %974 = vmatpush1.bf16.msra.mxu0 %v754
    %975 = vmatprep.subr.bf16.mxu0 %v759
    %976 = vmatpush1.bf16.msra.mxu0 %v758
    %977 = vmatprep.subr.bf16.mxu0 %v763
    %978 = vmatpush1.bf16.msra.mxu0 %v762
    %979 = vmatprep.subr.bf16.mxu0 %v767
    %980 = vmatpush1.bf16.msra.mxu0 %v766
    %981 = vmatprep.subr.bf16.mxu0 %v771
    %982 = vmatpush1.bf16.msra.mxu0 %v770
    %983 = vmatprep.subr.bf16.mxu0 %v775
    %984 = vmatpush1.bf16.msra.mxu0 %v774
    %985 = vmatprep.subr.bf16.mxu0 %v779
    %986 = vmatpush1.bf16.msra.mxu0 %v778
    %987 = vmatprep.subr.bf16.mxu0 %v783
    %988 = vmatpush1.bf16.msra.mxu0 %v782
    %989 = vmatprep.subr.bf16.mxu0 %v787
    %990 = vmatpush1.bf16.msra.mxu0 %v786
    %991 = vmatprep.mubr.bf16.mxu0 %v127
    %992 = vmatmul.mubr.bf16.gmra.mrb[0].mxu0 %v126
    %v993 = vpop.f32.mrb[0].mxu0
    %v994 = vadd.f32 %v953, %v993
    %v995 = vpop.f32.mrb[0].mxu0
    %v996 = vadd.f32 %v955, %v995
    %v997 = vpop.f32.mrb[0].mxu0
    %v998 = vpop.f32.mrb[0].mxu0
    %999 = vdwg.mxu0
    %1000 = vmatprep.subr.bf16.mxu0 %v665
    %1001 = vmatpush1.bf16.msra.mxu0 %v664
    %1002 = vmatprep.subr.bf16.mxu0 %v669
    %1003 = vmatpush1.bf16.msra.mxu0 %v668
    %1004 = vmatprep.subr.bf16.mxu0 %v673
    %1005 = vmatpush1.bf16.msra.mxu0 %v672
    %1006 = vmatprep.subr.bf16.mxu0 %v677
    %1007 = vmatpush1.bf16.msra.mxu0 %v676
    %1008 = vmatprep.subr.bf16.mxu0 %v681
    %1009 = vmatpush1.bf16.msra.mxu0 %v680
    %1010 = vmatprep.subr.bf16.mxu0 %v685
    %1011 = vmatpush1.bf16.msra.mxu0 %v684
    %1012 = vmatprep.subr.bf16.mxu0 %v689
    %1013 = vmatpush1.bf16.msra.mxu0 %v688
    %1014 = vmatprep.subr.bf16.mxu0 %v693
    %1015 = vmatpush1.bf16.msra.mxu0 %v692
    %1016 = vmatprep.subr.bf16.mxu0 %v697
    %1017 = vmatpush1.bf16.msra.mxu0 %v696
    %1018 = vmatprep.subr.bf16.mxu0 %v701
    %1019 = vmatpush1.bf16.msra.mxu0 %v700
    %1020 = vmatprep.subr.bf16.mxu0 %v705
    %1021 = vmatpush1.bf16.msra.mxu0 %v704
    %1022 = vmatprep.subr.bf16.mxu0 %v709
    %1023 = vmatpush1.bf16.msra.mxu0 %v708
    %1024 = vmatprep.subr.bf16.mxu0 %v713
    %1025 = vmatpush1.bf16.msra.mxu0 %v712
    %1026 = vmatprep.subr.bf16.mxu0 %v717
    %1027 = vmatpush1.bf16.msra.mxu0 %v716
    %1028 = vmatprep.subr.bf16.mxu0 %v721
    %1029 = vmatpush1.bf16.msra.mxu0 %v720
    %1030 = vmatprep.subr.bf16.mxu0 %v725
    %1031 = vmatpush1.bf16.msra.mxu0 %v724
    %1032 = vmatprep.mubr.bf16.mxu0 %v125
    %1033 = vmatmul.mubr.bf16.gmra.mrb[0].mxu0 %v124
    %v1034 = vpop.f32.mrb[0].mxu0
    %v1035 = vadd.f32 %v269, %v1034
    %v1036 = vpop.f32.mrb[0].mxu0
    %v1037 = vadd.f32 %v273, %v1036
    %v1038 = vpop.f32.mrb[0].mxu0
    %v1039 = vpop.f32.mrb[0].mxu0
    %1040 = vdwg.mxu0
    %1041 = vmatprep.subr.bf16.mxu0 %v729
    %1042 = vmatpush1.bf16.msra.mxu0 %v728
    %1043 = vmatprep.subr.bf16.mxu0 %v733
    %1044 = vmatpush1.bf16.msra.mxu0 %v732
    %1045 = vmatprep.subr.bf16.mxu0 %v737
    %1046 = vmatpush1.bf16.msra.mxu0 %v736
    %1047 = vmatprep.subr.bf16.mxu0 %v741
    %1048 = vmatpush1.bf16.msra.mxu0 %v740
    %1049 = vmatprep.subr.bf16.mxu0 %v745
    %1050 = vmatpush1.bf16.msra.mxu0 %v744
    %1051 = vmatprep.subr.bf16.mxu0 %v749
    %1052 = vmatpush1.bf16.msra.mxu0 %v748
    %1053 = vmatprep.subr.bf16.mxu0 %v753
    %1054 = vmatpush1.bf16.msra.mxu0 %v752
    %1055 = vmatprep.subr.bf16.mxu0 %v757
    %1056 = vmatpush1.bf16.msra.mxu0 %v756
    %1057 = vmatprep.subr.bf16.mxu0 %v761
    %1058 = vmatpush1.bf16.msra.mxu0 %v760
    %1059 = vmatprep.subr.bf16.mxu0 %v765
    %1060 = vmatpush1.bf16.msra.mxu0 %v764
    %1061 = vmatprep.subr.bf16.mxu0 %v769
    %1062 = vmatpush1.bf16.msra.mxu0 %v768
    %1063 = vmatprep.subr.bf16.mxu0 %v773
    %1064 = vmatpush1.bf16.msra.mxu0 %v772
    %1065 = vmatprep.subr.bf16.mxu0 %v777
    %1066 = vmatpush1.bf16.msra.mxu0 %v776
    %1067 = vmatprep.subr.bf16.mxu0 %v781
    %1068 = vmatpush1.bf16.msra.mxu0 %v780
    %1069 = vmatprep.subr.bf16.mxu0 %v785
    %1070 = vmatpush1.bf16.msra.mxu0 %v784
    %1071 = vmatprep.subr.bf16.mxu0 %v789
    %1072 = vmatpush1.bf16.msra.mxu0 %v788
    %1073 = vmatprep.mubr.bf16.mxu0 %v127
    %1074 = vmatmul.mubr.bf16.gmra.mrb[0].mxu0 %v126
    %v1075 = vpop.f32.mrb[0].mxu0
    %v1076 = vadd.f32 %v1035, %v1075
    %v1077 = vpop.f32.mrb[0].mxu0
    %v1078 = vadd.f32 %v1037, %v1077
    %v1079 = vpop.f32.mrb[0].mxu0
    %v1080 = vpop.f32.mrb[0].mxu0
    %1081 = vdwg.mxu0
    %vm1082 = vcmp.ge.f32.partialorder %v994, 0.0
    %vm1083 = vcmp.ge.f32.partialorder %v996, 0.0
    %vm1084 = vcmp.ge.f32.partialorder %v1076, 0.0
    %vm1085 = vcmp.ge.f32.partialorder %v1078, 0.0
    %v1086 = vmul.f32 %v994, 0.2
    %v1087 = vmul.f32 %v996, 0.2
    %v1088 = vmul.f32 %v1076, 0.2
    %v1089 = vmul.f32 %v1078, 0.2
    %v1090 = vsel %vm1082, %v994, %v1086
    %v1091 = vsel %vm1083, %v996, %v1087
    %v1092 = vsel %vm1084, %v1076, %v1088
    %v1093 = vsel %vm1085, %v1078, %v1089
    %v1094 = vpack.c.bf16 %v1090, %v1090
    %v1095 = vpack.c.bf16 %v1091, %v1091
    %v1096 = vpack.c.bf16 %v1092, %v1092
    %v1097 = vpack.c.bf16 %v1093, %v1093
    %s1098 = scalar_lea.vmem [#allocation5], 1024
    %v1099 = vld [vmem:[%s1098] sm:$0xff]
    %v1100 = vld [vmem:[%s1098 + $0x8] sm:$0xff]
    %v1101 = vld [vmem:[%s1098 + $0x10] sm:$0xff]
    %v1102 = vld [vmem:[%s1098 + $0x18] sm:$0xff]
    %v1103 = vld [vmem:[%s1098 + $0x20] sm:$0xff]
    %v1104 = vld [vmem:[%s1098 + $0x28] sm:$0xff]
    %v1105 = vld [vmem:[%s1098 + $0x30] sm:$0xff]
    %v1106 = vld [vmem:[%s1098 + $0x38] sm:$0xff]
    %v1107 = vld [vmem:[%s1098 + $0x40] sm:$0xff]
    %v1108 = vld [vmem:[%s1098 + $0x48] sm:$0xff]
    %v1109 = vld [vmem:[%s1098 + $0x50] sm:$0xff]
    %v1110 = vld [vmem:[%s1098 + $0x58] sm:$0xff]
    %v1111 = vld [vmem:[%s1098 + $0x60] sm:$0xff]
    %v1112 = vld [vmem:[%s1098 + $0x68] sm:$0xff]
    %v1113 = vld [vmem:[%s1098 + $0x70] sm:$0xff]
    %v1114 = vld [vmem:[%s1098 + $0x78] sm:$0xff]
    %v1115 = vld [vmem:[%s1098 + $0x80] sm:$0xff]
    %v1116 = vld [vmem:[%s1098 + $0x88] sm:$0xff]
    %v1117 = vld [vmem:[%s1098 + $0x90] sm:$0xff]
    %v1118 = vld [vmem:[%s1098 + $0x98] sm:$0xff]
    %v1119 = vld [vmem:[%s1098 + $0xa0] sm:$0xff]
    %v1120 = vld [vmem:[%s1098 + $0xa8] sm:$0xff]
    %v1121 = vld [vmem:[%s1098 + $0xb0] sm:$0xff]
    %v1122 = vld [vmem:[%s1098 + $0xb8] sm:$0xff]
    %v1123 = vld [vmem:[%s1098 + $0xc0] sm:$0xff]
    %v1124 = vld [vmem:[%s1098 + $0xc8] sm:$0xff]
    %v1125 = vld [vmem:[%s1098 + $0xd0] sm:$0xff]
    %v1126 = vld [vmem:[%s1098 + $0xd8] sm:$0xff]
    %v1127 = vld [vmem:[%s1098 + $0xe0] sm:$0xff]
    %v1128 = vld [vmem:[%s1098 + $0xe8] sm:$0xff]
    %v1129 = vld [vmem:[%s1098 + $0xf0] sm:$0xff]
    %v1130 = vld [vmem:[%s1098 + $0xf8] sm:$0xff]
    %v1131 = vld [vmem:[%s1098 + $0x100] sm:$0xff]
    %v1132 = vld [vmem:[%s1098 + $0x108] sm:$0xff]
    %v1133 = vld [vmem:[%s1098 + $0x110] sm:$0xff]
    %v1134 = vld [vmem:[%s1098 + $0x118] sm:$0xff]
    %v1135 = vld [vmem:[%s1098 + $0x120] sm:$0xff]
    %v1136 = vld [vmem:[%s1098 + $0x128] sm:$0xff]
    %v1137 = vld [vmem:[%s1098 + $0x130] sm:$0xff]
    %v1138 = vld [vmem:[%s1098 + $0x138] sm:$0xff]
    %v1139 = vld [vmem:[%s1098 + $0x140] sm:$0xff]
    %v1140 = vld [vmem:[%s1098 + $0x148] sm:$0xff]
    %v1141 = vld [vmem:[%s1098 + $0x150] sm:$0xff]
    %v1142 = vld [vmem:[%s1098 + $0x158] sm:$0xff]
    %v1143 = vld [vmem:[%s1098 + $0x160] sm:$0xff]
    %v1144 = vld [vmem:[%s1098 + $0x168] sm:$0xff]
    %v1145 = vld [vmem:[%s1098 + $0x170] sm:$0xff]
    %v1146 = vld [vmem:[%s1098 + $0x178] sm:$0xff]
    %v1147 = vld [vmem:[%s1098 + $0x180] sm:$0xff]
    %v1148 = vld [vmem:[%s1098 + $0x188] sm:$0xff]
    %v1149 = vld [vmem:[%s1098 + $0x190] sm:$0xff]
    %v1150 = vld [vmem:[%s1098 + $0x198] sm:$0xff]
    %v1151 = vld [vmem:[%s1098 + $0x1a0] sm:$0xff]
    %v1152 = vld [vmem:[%s1098 + $0x1a8] sm:$0xff]
    %v1153 = vld [vmem:[%s1098 + $0x1b0] sm:$0xff]
    %v1154 = vld [vmem:[%s1098 + $0x1b8] sm:$0xff]
    %v1155 = vld [vmem:[%s1098 + $0x1c0] sm:$0xff]
    %v1156 = vld [vmem:[%s1098 + $0x1c8] sm:$0xff]
    %v1157 = vld [vmem:[%s1098 + $0x1d0] sm:$0xff]
    %v1158 = vld [vmem:[%s1098 + $0x1d8] sm:$0xff]
    %v1159 = vld [vmem:[%s1098 + $0x1e0] sm:$0xff]
    %v1160 = vld [vmem:[%s1098 + $0x1e8] sm:$0xff]
    %v1161 = vld [vmem:[%s1098 + $0x1f0] sm:$0xff]
    %v1162 = vld [vmem:[%s1098 + $0x1f8] sm:$0xff]
    %v1163 = vld [vmem:[%s1098 + $0x200] sm:$0xff]
    %v1164 = vld [vmem:[%s1098 + $0x208] sm:$0xff]
    %v1165 = vld [vmem:[%s1098 + $0x210] sm:$0xff]
    %v1166 = vld [vmem:[%s1098 + $0x218] sm:$0xff]
    %v1167 = vld [vmem:[%s1098 + $0x220] sm:$0xff]
    %v1168 = vld [vmem:[%s1098 + $0x228] sm:$0xff]
    %v1169 = vld [vmem:[%s1098 + $0x230] sm:$0xff]
    %v1170 = vld [vmem:[%s1098 + $0x238] sm:$0xff]
    %v1171 = vld [vmem:[%s1098 + $0x240] sm:$0xff]
    %v1172 = vld [vmem:[%s1098 + $0x248] sm:$0xff]
    %v1173 = vld [vmem:[%s1098 + $0x250] sm:$0xff]
    %v1174 = vld [vmem:[%s1098 + $0x258] sm:$0xff]
    %v1175 = vld [vmem:[%s1098 + $0x260] sm:$0xff]
    %v1176 = vld [vmem:[%s1098 + $0x268] sm:$0xff]
    %v1177 = vld [vmem:[%s1098 + $0x270] sm:$0xff]
    %v1178 = vld [vmem:[%s1098 + $0x278] sm:$0xff]
    %v1179 = vld [vmem:[%s1098 + $0x280] sm:$0xff]
    %v1180 = vld [vmem:[%s1098 + $0x288] sm:$0xff]
    %v1181 = vld [vmem:[%s1098 + $0x290] sm:$0xff]
    %v1182 = vld [vmem:[%s1098 + $0x298] sm:$0xff]
    %v1183 = vld [vmem:[%s1098 + $0x2a0] sm:$0xff]
    %v1184 = vld [vmem:[%s1098 + $0x2a8] sm:$0xff]
    %v1185 = vld [vmem:[%s1098 + $0x2b0] sm:$0xff]
    %v1186 = vld [vmem:[%s1098 + $0x2b8] sm:$0xff]
    %v1187 = vld [vmem:[%s1098 + $0x2c0] sm:$0xff]
    %v1188 = vld [vmem:[%s1098 + $0x2c8] sm:$0xff]
    %v1189 = vld [vmem:[%s1098 + $0x2d0] sm:$0xff]
    %v1190 = vld [vmem:[%s1098 + $0x2d8] sm:$0xff]
    %v1191 = vld [vmem:[%s1098 + $0x2e0] sm:$0xff]
    %v1192 = vld [vmem:[%s1098 + $0x2e8] sm:$0xff]
    %v1193 = vld [vmem:[%s1098 + $0x2f0] sm:$0xff]
    %v1194 = vld [vmem:[%s1098 + $0x2f8] sm:$0xff]
    %v1195 = vld [vmem:[%s1098 + $0x300] sm:$0xff]
    %v1196 = vld [vmem:[%s1098 + $0x308] sm:$0xff]
    %v1197 = vld [vmem:[%s1098 + $0x310] sm:$0xff]
    %v1198 = vld [vmem:[%s1098 + $0x318] sm:$0xff]
    %v1199 = vld [vmem:[%s1098 + $0x320] sm:$0xff]
    %v1200 = vld [vmem:[%s1098 + $0x328] sm:$0xff]
    %v1201 = vld [vmem:[%s1098 + $0x330] sm:$0xff]
    %v1202 = vld [vmem:[%s1098 + $0x338] sm:$0xff]
    %v1203 = vld [vmem:[%s1098 + $0x340] sm:$0xff]
    %v1204 = vld [vmem:[%s1098 + $0x348] sm:$0xff]
    %v1205 = vld [vmem:[%s1098 + $0x350] sm:$0xff]
    %v1206 = vld [vmem:[%s1098 + $0x358] sm:$0xff]
    %v1207 = vld [vmem:[%s1098 + $0x360] sm:$0xff]
    %v1208 = vld [vmem:[%s1098 + $0x368] sm:$0xff]
    %v1209 = vld [vmem:[%s1098 + $0x370] sm:$0xff]
    %v1210 = vld [vmem:[%s1098 + $0x378] sm:$0xff]
    %v1211 = vld [vmem:[%s1098 + $0x380] sm:$0xff]
    %v1212 = vld [vmem:[%s1098 + $0x388] sm:$0xff]
    %v1213 = vld [vmem:[%s1098 + $0x390] sm:$0xff]
    %v1214 = vld [vmem:[%s1098 + $0x398] sm:$0xff]
    %v1215 = vld [vmem:[%s1098 + $0x3a0] sm:$0xff]
    %v1216 = vld [vmem:[%s1098 + $0x3a8] sm:$0xff]
    %v1217 = vld [vmem:[%s1098 + $0x3b0] sm:$0xff]
    %v1218 = vld [vmem:[%s1098 + $0x3b8] sm:$0xff]
    %v1219 = vld [vmem:[%s1098 + $0x3c0] sm:$0xff]
    %v1220 = vld [vmem:[%s1098 + $0x3c8] sm:$0xff]
    %v1221 = vld [vmem:[%s1098 + $0x3d0] sm:$0xff]
    %v1222 = vld [vmem:[%s1098 + $0x3d8] sm:$0xff]
    %v1223 = vld [vmem:[%s1098 + $0x3e0] sm:$0xff]
    %v1224 = vld [vmem:[%s1098 + $0x3e8] sm:$0xff]
    %v1225 = vld [vmem:[%s1098 + $0x3f0] sm:$0xff]
    %v1226 = vld [vmem:[%s1098 + $0x3f8] sm:$0xff]
    %s1227 = scalar_lea.vmem [#allocation7], 4
    %v1228 = vld [vmem:[%s1227] sm:$0xf]
    %v1230 = vlaneseq
    %v1231 = vshrl.u32 %v1230, 7
    %v1232 = vsub.s32 0, %v1231
    %v1233 = vrot.slane %v1228, %v1232
    %v1234 = vlaneseq
    %v1235 = vshrl.u32 %v1234, 7
    %v1236 = vsub.s32 1, %v1235
    %v1237 = vrot.slane %v1228, %v1236
    %v1238 = vlaneseq
    %v1239 = vshrl.u32 %v1238, 7
    %v1240 = vsub.s32 2, %v1239
    %v1241 = vrot.slane %v1228, %v1240
    %v1242 = vlaneseq
    %v1243 = vshrl.u32 %v1242, 7
    %v1244 = vsub.s32 3, %v1243
    %v1245 = vrot.slane %v1228, %v1244
    %v1378 = vunpack.c.l.b16 %v1099
    %v1379 = vunpack.c.h.b16 %v1099
    %v1380 = vunpack.c.l.b16 %v1100
    %v1381 = vunpack.c.h.b16 %v1100
    %v1382 = vunpack.c.l.b16 %v1101
    %v1383 = vunpack.c.h.b16 %v1101
    %v1384 = vunpack.c.l.b16 %v1102
    %v1385 = vunpack.c.h.b16 %v1102
    %v1386 = vunpack.c.l.b16 %v1103
    %v1387 = vunpack.c.h.b16 %v1103
    %v1388 = vunpack.c.l.b16 %v1104
    %v1389 = vunpack.c.h.b16 %v1104
    %v1390 = vunpack.c.l.b16 %v1105
    %v1391 = vunpack.c.h.b16 %v1105
    %v1392 = vunpack.c.l.b16 %v1106
    %v1393 = vunpack.c.h.b16 %v1106
    %v1394 = vunpack.c.l.b16 %v1107
    %v1395 = vunpack.c.h.b16 %v1107
    %v1396 = vunpack.c.l.b16 %v1108
    %v1397 = vunpack.c.h.b16 %v1108
    %v1398 = vunpack.c.l.b16 %v1109
    %v1399 = vunpack.c.h.b16 %v1109
    %v1400 = vunpack.c.l.b16 %v1110
    %v1401 = vunpack.c.h.b16 %v1110
    %v1402 = vunpack.c.l.b16 %v1111
    %v1403 = vunpack.c.h.b16 %v1111
    %v1404 = vunpack.c.l.b16 %v1112
    %v1405 = vunpack.c.h.b16 %v1112
    %v1406 = vunpack.c.l.b16 %v1113
    %v1407 = vunpack.c.h.b16 %v1113
    %v1408 = vunpack.c.l.b16 %v1114
    %v1409 = vunpack.c.h.b16 %v1114
    %v1410 = vunpack.c.l.b16 %v1115
    %v1411 = vunpack.c.h.b16 %v1115
    %v1412 = vunpack.c.l.b16 %v1116
    %v1413 = vunpack.c.h.b16 %v1116
    %v1414 = vunpack.c.l.b16 %v1117
    %v1415 = vunpack.c.h.b16 %v1117
    %v1416 = vunpack.c.l.b16 %v1118
    %v1417 = vunpack.c.h.b16 %v1118
    %v1418 = vunpack.c.l.b16 %v1119
    %v1419 = vunpack.c.h.b16 %v1119
    %v1420 = vunpack.c.l.b16 %v1120
    %v1421 = vunpack.c.h.b16 %v1120
    %v1422 = vunpack.c.l.b16 %v1121
    %v1423 = vunpack.c.h.b16 %v1121
    %v1424 = vunpack.c.l.b16 %v1122
    %v1425 = vunpack.c.h.b16 %v1122
    %v1426 = vunpack.c.l.b16 %v1123
    %v1427 = vunpack.c.h.b16 %v1123
    %v1428 = vunpack.c.l.b16 %v1124
    %v1429 = vunpack.c.h.b16 %v1124
    %v1430 = vunpack.c.l.b16 %v1125
    %v1431 = vunpack.c.h.b16 %v1125
    %v1432 = vunpack.c.l.b16 %v1126
    %v1433 = vunpack.c.h.b16 %v1126
    %v1434 = vunpack.c.l.b16 %v1127
    %v1435 = vunpack.c.h.b16 %v1127
    %v1436 = vunpack.c.l.b16 %v1128
    %v1437 = vunpack.c.h.b16 %v1128
    %v1438 = vunpack.c.l.b16 %v1129
    %v1439 = vunpack.c.h.b16 %v1129
    %v1440 = vunpack.c.l.b16 %v1130
    %v1441 = vunpack.c.h.b16 %v1130
    %v1442 = vunpack.c.l.b16 %v1131
    %v1443 = vunpack.c.h.b16 %v1131
    %v1444 = vunpack.c.l.b16 %v1132
    %v1445 = vunpack.c.h.b16 %v1132
    %v1446 = vunpack.c.l.b16 %v1133
    %v1447 = vunpack.c.h.b16 %v1133
    %v1448 = vunpack.c.l.b16 %v1134
    %v1449 = vunpack.c.h.b16 %v1134
    %v1450 = vunpack.c.l.b16 %v1135
    %v1451 = vunpack.c.h.b16 %v1135
    %v1452 = vunpack.c.l.b16 %v1136
    %v1453 = vunpack.c.h.b16 %v1136
    %v1454 = vunpack.c.l.b16 %v1137
    %v1455 = vunpack.c.h.b16 %v1137
    %v1456 = vunpack.c.l.b16 %v1138
    %v1457 = vunpack.c.h.b16 %v1138
    %v1458 = vunpack.c.l.b16 %v1139
    %v1459 = vunpack.c.h.b16 %v1139
    %v1460 = vunpack.c.l.b16 %v1140
    %v1461 = vunpack.c.h.b16 %v1140
    %v1462 = vunpack.c.l.b16 %v1141
    %v1463 = vunpack.c.h.b16 %v1141
    %v1464 = vunpack.c.l.b16 %v1142
    %v1465 = vunpack.c.h.b16 %v1142
    %v1466 = vunpack.c.l.b16 %v1143
    %v1467 = vunpack.c.h.b16 %v1143
    %v1468 = vunpack.c.l.b16 %v1144
    %v1469 = vunpack.c.h.b16 %v1144
    %v1470 = vunpack.c.l.b16 %v1145
    %v1471 = vunpack.c.h.b16 %v1145
    %v1472 = vunpack.c.l.b16 %v1146
    %v1473 = vunpack.c.h.b16 %v1146
    %v1474 = vunpack.c.l.b16 %v1147
    %v1475 = vunpack.c.h.b16 %v1147
    %v1476 = vunpack.c.l.b16 %v1148
    %v1477 = vunpack.c.h.b16 %v1148
    %v1478 = vunpack.c.l.b16 %v1149
    %v1479 = vunpack.c.h.b16 %v1149
    %v1480 = vunpack.c.l.b16 %v1150
    %v1481 = vunpack.c.h.b16 %v1150
    %v1482 = vunpack.c.l.b16 %v1151
    %v1483 = vunpack.c.h.b16 %v1151
    %v1484 = vunpack.c.l.b16 %v1152
    %v1485 = vunpack.c.h.b16 %v1152
    %v1486 = vunpack.c.l.b16 %v1153
    %v1487 = vunpack.c.h.b16 %v1153
    %v1488 = vunpack.c.l.b16 %v1154
    %v1489 = vunpack.c.h.b16 %v1154
    %v1490 = vunpack.c.l.b16 %v1155
    %v1491 = vunpack.c.h.b16 %v1155
    %v1492 = vunpack.c.l.b16 %v1156
    %v1493 = vunpack.c.h.b16 %v1156
    %v1494 = vunpack.c.l.b16 %v1157
    %v1495 = vunpack.c.h.b16 %v1157
    %v1496 = vunpack.c.l.b16 %v1158
    %v1497 = vunpack.c.h.b16 %v1158
    %v1498 = vunpack.c.l.b16 %v1159
    %v1499 = vunpack.c.h.b16 %v1159
    %v1500 = vunpack.c.l.b16 %v1160
    %v1501 = vunpack.c.h.b16 %v1160
    %v1502 = vunpack.c.l.b16 %v1161
    %v1503 = vunpack.c.h.b16 %v1161
    %v1504 = vunpack.c.l.b16 %v1162
    %v1505 = vunpack.c.h.b16 %v1162
    %v1506 = vunpack.c.l.b16 %v1163
    %v1507 = vunpack.c.h.b16 %v1163
    %v1508 = vunpack.c.l.b16 %v1164
    %v1509 = vunpack.c.h.b16 %v1164
    %v1510 = vunpack.c.l.b16 %v1165
    %v1511 = vunpack.c.h.b16 %v1165
    %v1512 = vunpack.c.l.b16 %v1166
    %v1513 = vunpack.c.h.b16 %v1166
    %v1514 = vunpack.c.l.b16 %v1167
    %v1515 = vunpack.c.h.b16 %v1167
    %v1516 = vunpack.c.l.b16 %v1168
    %v1517 = vunpack.c.h.b16 %v1168
    %v1518 = vunpack.c.l.b16 %v1169
    %v1519 = vunpack.c.h.b16 %v1169
    %v1520 = vunpack.c.l.b16 %v1170
    %v1521 = vunpack.c.h.b16 %v1170
    %v1522 = vunpack.c.l.b16 %v1171
    %v1523 = vunpack.c.h.b16 %v1171
    %v1524 = vunpack.c.l.b16 %v1172
    %v1525 = vunpack.c.h.b16 %v1172
    %v1526 = vunpack.c.l.b16 %v1173
    %v1527 = vunpack.c.h.b16 %v1173
    %v1528 = vunpack.c.l.b16 %v1174
    %v1529 = vunpack.c.h.b16 %v1174
    %v1530 = vunpack.c.l.b16 %v1175
    %v1531 = vunpack.c.h.b16 %v1175
    %v1532 = vunpack.c.l.b16 %v1176
    %v1533 = vunpack.c.h.b16 %v1176
    %v1534 = vunpack.c.l.b16 %v1177
    %v1535 = vunpack.c.h.b16 %v1177
    %v1536 = vunpack.c.l.b16 %v1178
    %v1537 = vunpack.c.h.b16 %v1178
    %v1538 = vunpack.c.l.b16 %v1179
    %v1539 = vunpack.c.h.b16 %v1179
    %v1540 = vunpack.c.l.b16 %v1180
    %v1541 = vunpack.c.h.b16 %v1180
    %v1542 = vunpack.c.l.b16 %v1181
    %v1543 = vunpack.c.h.b16 %v1181
    %v1544 = vunpack.c.l.b16 %v1182
    %v1545 = vunpack.c.h.b16 %v1182
    %v1546 = vunpack.c.l.b16 %v1183
    %v1547 = vunpack.c.h.b16 %v1183
    %v1548 = vunpack.c.l.b16 %v1184
    %v1549 = vunpack.c.h.b16 %v1184
    %v1550 = vunpack.c.l.b16 %v1185
    %v1551 = vunpack.c.h.b16 %v1185
    %v1552 = vunpack.c.l.b16 %v1186
    %v1553 = vunpack.c.h.b16 %v1186
    %v1554 = vunpack.c.l.b16 %v1187
    %v1555 = vunpack.c.h.b16 %v1187
    %v1556 = vunpack.c.l.b16 %v1188
    %v1557 = vunpack.c.h.b16 %v1188
    %v1558 = vunpack.c.l.b16 %v1189
    %v1559 = vunpack.c.h.b16 %v1189
    %v1560 = vunpack.c.l.b16 %v1190
    %v1561 = vunpack.c.h.b16 %v1190
    %v1562 = vunpack.c.l.b16 %v1191
    %v1563 = vunpack.c.h.b16 %v1191
    %v1564 = vunpack.c.l.b16 %v1192
    %v1565 = vunpack.c.h.b16 %v1192
    %v1566 = vunpack.c.l.b16 %v1193
    %v1567 = vunpack.c.h.b16 %v1193
    %v1568 = vunpack.c.l.b16 %v1194
    %v1569 = vunpack.c.h.b16 %v1194
    %v1570 = vunpack.c.l.b16 %v1195
    %v1571 = vunpack.c.h.b16 %v1195
    %v1572 = vunpack.c.l.b16 %v1196
    %v1573 = vunpack.c.h.b16 %v1196
    %v1574 = vunpack.c.l.b16 %v1197
    %v1575 = vunpack.c.h.b16 %v1197
    %v1576 = vunpack.c.l.b16 %v1198
    %v1577 = vunpack.c.h.b16 %v1198
    %v1578 = vunpack.c.l.b16 %v1199
    %v1579 = vunpack.c.h.b16 %v1199
    %v1580 = vunpack.c.l.b16 %v1200
    %v1581 = vunpack.c.h.b16 %v1200
    %v1582 = vunpack.c.l.b16 %v1201
    %v1583 = vunpack.c.h.b16 %v1201
    %v1584 = vunpack.c.l.b16 %v1202
    %v1585 = vunpack.c.h.b16 %v1202
    %v1586 = vunpack.c.l.b16 %v1203
    %v1587 = vunpack.c.h.b16 %v1203
    %v1588 = vunpack.c.l.b16 %v1204
    %v1589 = vunpack.c.h.b16 %v1204
    %v1590 = vunpack.c.l.b16 %v1205
    %v1591 = vunpack.c.h.b16 %v1205
    %v1592 = vunpack.c.l.b16 %v1206
    %v1593 = vunpack.c.h.b16 %v1206
    %v1594 = vunpack.c.l.b16 %v1207
    %v1595 = vunpack.c.h.b16 %v1207
    %v1596 = vunpack.c.l.b16 %v1208
    %v1597 = vunpack.c.h.b16 %v1208
    %v1598 = vunpack.c.l.b16 %v1209
    %v1599 = vunpack.c.h.b16 %v1209
    %v1600 = vunpack.c.l.b16 %v1210
    %v1601 = vunpack.c.h.b16 %v1210
    %v1602 = vunpack.c.l.b16 %v1211
    %v1603 = vunpack.c.h.b16 %v1211
    %v1604 = vunpack.c.l.b16 %v1212
    %v1605 = vunpack.c.h.b16 %v1212
    %v1606 = vunpack.c.l.b16 %v1213
    %v1607 = vunpack.c.h.b16 %v1213
    %v1608 = vunpack.c.l.b16 %v1214
    %v1609 = vunpack.c.h.b16 %v1214
    %v1610 = vunpack.c.l.b16 %v1215
    %v1611 = vunpack.c.h.b16 %v1215
    %v1612 = vunpack.c.l.b16 %v1216
    %v1613 = vunpack.c.h.b16 %v1216
    %v1614 = vunpack.c.l.b16 %v1217
    %v1615 = vunpack.c.h.b16 %v1217
    %v1616 = vunpack.c.l.b16 %v1218
    %v1617 = vunpack.c.h.b16 %v1218
    %v1618 = vunpack.c.l.b16 %v1219
    %v1619 = vunpack.c.h.b16 %v1219
    %v1620 = vunpack.c.l.b16 %v1220
    %v1621 = vunpack.c.h.b16 %v1220
    %v1622 = vunpack.c.l.b16 %v1221
    %v1623 = vunpack.c.h.b16 %v1221
    %v1624 = vunpack.c.l.b16 %v1222
    %v1625 = vunpack.c.h.b16 %v1222
    %v1626 = vunpack.c.l.b16 %v1223
    %v1627 = vunpack.c.h.b16 %v1223
    %v1628 = vunpack.c.l.b16 %v1224
    %v1629 = vunpack.c.h.b16 %v1224
    %v1630 = vunpack.c.l.b16 %v1225
    %v1631 = vunpack.c.h.b16 %v1225
    %v1632 = vunpack.c.l.b16 %v1226
    %v1633 = vunpack.c.h.b16 %v1226
    %v1634 = vpack.c.b16 %v1382, %v1378
    %v1635 = vpack.c.b16 %v1383, %v1379
    %v1636 = vpack.c.b16 %v1384, %v1380
    %v1637 = vpack.c.b16 %v1385, %v1381
    %v1638 = vpack.c.b16 %v1390, %v1386
    %v1639 = vpack.c.b16 %v1391, %v1387
    %v1640 = vpack.c.b16 %v1392, %v1388
    %v1641 = vpack.c.b16 %v1393, %v1389
    %v1642 = vpack.c.b16 %v1398, %v1394
    %v1643 = vpack.c.b16 %v1399, %v1395
    %v1644 = vpack.c.b16 %v1400, %v1396
    %v1645 = vpack.c.b16 %v1401, %v1397
    %v1646 = vpack.c.b16 %v1406, %v1402
    %v1647 = vpack.c.b16 %v1407, %v1403
    %v1648 = vpack.c.b16 %v1408, %v1404
    %v1649 = vpack.c.b16 %v1409, %v1405
    %v1650 = vpack.c.b16 %v1414, %v1410
    %v1651 = vpack.c.b16 %v1415, %v1411
    %v1652 = vpack.c.b16 %v1416, %v1412
    %v1653 = vpack.c.b16 %v1417, %v1413
    %v1654 = vpack.c.b16 %v1422, %v1418
    %v1655 = vpack.c.b16 %v1423, %v1419
    %v1656 = vpack.c.b16 %v1424, %v1420
    %v1657 = vpack.c.b16 %v1425, %v1421
    %v1658 = vpack.c.b16 %v1430, %v1426
    %v1659 = vpack.c.b16 %v1431, %v1427
    %v1660 = vpack.c.b16 %v1432, %v1428
    %v1661 = vpack.c.b16 %v1433, %v1429
    %v1662 = vpack.c.b16 %v1438, %v1434
    %v1663 = vpack.c.b16 %v1439, %v1435
    %v1664 = vpack.c.b16 %v1440, %v1436
    %v1665 = vpack.c.b16 %v1441, %v1437
    %v1666 = vpack.c.b16 %v1446, %v1442
    %v1667 = vpack.c.b16 %v1447, %v1443
    %v1668 = vpack.c.b16 %v1448, %v1444
    %v1669 = vpack.c.b16 %v1449, %v1445
    %v1670 = vpack.c.b16 %v1454, %v1450
    %v1671 = vpack.c.b16 %v1455, %v1451
    %v1672 = vpack.c.b16 %v1456, %v1452
    %v1673 = vpack.c.b16 %v1457, %v1453
    %v1674 = vpack.c.b16 %v1462, %v1458
    %v1675 = vpack.c.b16 %v1463, %v1459
    %v1676 = vpack.c.b16 %v1464, %v1460
    %v1677 = vpack.c.b16 %v1465, %v1461
    %v1678 = vpack.c.b16 %v1470, %v1466
    %v1679 = vpack.c.b16 %v1471, %v1467
    %v1680 = vpack.c.b16 %v1472, %v1468
    %v1681 = vpack.c.b16 %v1473, %v1469
    %v1682 = vpack.c.b16 %v1478, %v1474
    %v1683 = vpack.c.b16 %v1479, %v1475
    %v1684 = vpack.c.b16 %v1480, %v1476
    %v1685 = vpack.c.b16 %v1481, %v1477
    %v1686 = vpack.c.b16 %v1486, %v1482
    %v1687 = vpack.c.b16 %v1487, %v1483
    %v1688 = vpack.c.b16 %v1488, %v1484
    %v1689 = vpack.c.b16 %v1489, %v1485
    %v1690 = vpack.c.b16 %v1494, %v1490
    %v1691 = vpack.c.b16 %v1495, %v1491
    %v1692 = vpack.c.b16 %v1496, %v1492
    %v1693 = vpack.c.b16 %v1497, %v1493
    %v1694 = vpack.c.b16 %v1502, %v1498
    %v1695 = vpack.c.b16 %v1503, %v1499
    %v1696 = vpack.c.b16 %v1504, %v1500
    %v1697 = vpack.c.b16 %v1505, %v1501
    %v1698 = vpack.c.b16 %v1510, %v1506
    %v1699 = vpack.c.b16 %v1511, %v1507
    %v1700 = vpack.c.b16 %v1512, %v1508
    %v1701 = vpack.c.b16 %v1513, %v1509
    %v1702 = vpack.c.b16 %v1518, %v1514
    %v1703 = vpack.c.b16 %v1519, %v1515
    %v1704 = vpack.c.b16 %v1520, %v1516
    %v1705 = vpack.c.b16 %v1521, %v1517
    %v1706 = vpack.c.b16 %v1526, %v1522
    %v1707 = vpack.c.b16 %v1527, %v1523
    %v1708 = vpack.c.b16 %v1528, %v1524
    %v1709 = vpack.c.b16 %v1529, %v1525
    %v1710 = vpack.c.b16 %v1534, %v1530
    %v1711 = vpack.c.b16 %v1535, %v1531
    %v1712 = vpack.c.b16 %v1536, %v1532
    %v1713 = vpack.c.b16 %v1537, %v1533
    %v1714 = vpack.c.b16 %v1542, %v1538
    %v1715 = vpack.c.b16 %v1543, %v1539
    %v1716 = vpack.c.b16 %v1544, %v1540
    %v1717 = vpack.c.b16 %v1545, %v1541
    %v1718 = vpack.c.b16 %v1550, %v1546
    %v1719 = vpack.c.b16 %v1551, %v1547
    %v1720 = vpack.c.b16 %v1552, %v1548
    %v1721 = vpack.c.b16 %v1553, %v1549
    %v1722 = vpack.c.b16 %v1558, %v1554
    %v1723 = vpack.c.b16 %v1559, %v1555
    %v1724 = vpack.c.b16 %v1560, %v1556
    %v1725 = vpack.c.b16 %v1561, %v1557
    %v1726 = vpack.c.b16 %v1566, %v1562
    %v1727 = vpack.c.b16 %v1567, %v1563
    %v1728 = vpack.c.b16 %v1568, %v1564
    %v1729 = vpack.c.b16 %v1569, %v1565
    %v1730 = vpack.c.b16 %v1574, %v1570
    %v1731 = vpack.c.b16 %v1575, %v1571
    %v1732 = vpack.c.b16 %v1576, %v1572
    %v1733 = vpack.c.b16 %v1577, %v1573
    %v1734 = vpack.c.b16 %v1582, %v1578
    %v1735 = vpack.c.b16 %v1583, %v1579
    %v1736 = vpack.c.b16 %v1584, %v1580
    %v1737 = vpack.c.b16 %v1585, %v1581
    %v1738 = vpack.c.b16 %v1590, %v1586
    %v1739 = vpack.c.b16 %v1591, %v1587
    %v1740 = vpack.c.b16 %v1592, %v1588
    %v1741 = vpack.c.b16 %v1593, %v1589
    %v1742 = vpack.c.b16 %v1598, %v1594
    %v1743 = vpack.c.b16 %v1599, %v1595
    %v1744 = vpack.c.b16 %v1600, %v1596
    %v1745 = vpack.c.b16 %v1601, %v1597
    %v1746 = vpack.c.b16 %v1606, %v1602
    %v1747 = vpack.c.b16 %v1607, %v1603
    %v1748 = vpack.c.b16 %v1608, %v1604
    %v1749 = vpack.c.b16 %v1609, %v1605
    %v1750 = vpack.c.b16 %v1614, %v1610
    %v1751 = vpack.c.b16 %v1615, %v1611
    %v1752 = vpack.c.b16 %v1616, %v1612
    %v1753 = vpack.c.b16 %v1617, %v1613
    %v1754 = vpack.c.b16 %v1622, %v1618
    %v1755 = vpack.c.b16 %v1623, %v1619
    %v1756 = vpack.c.b16 %v1624, %v1620
    %v1757 = vpack.c.b16 %v1625, %v1621
    %v1758 = vpack.c.b16 %v1630, %v1626
    %v1759 = vpack.c.b16 %v1631, %v1627
    %v1760 = vpack.c.b16 %v1632, %v1628
    %v1761 = vpack.c.b16 %v1633, %v1629
    %1890 = vmatprep.subr.bf16.mxu0 %v1635
    %1891 = vmatpush1.bf16.msra.mxu0 %v1634
    %1892 = vmatprep.subr.bf16.mxu0 %v1639
    %1893 = vmatpush1.bf16.msra.mxu0 %v1638
    %1894 = vmatprep.subr.bf16.mxu0 %v1643
    %1895 = vmatpush1.bf16.msra.mxu0 %v1642
    %1896 = vmatprep.subr.bf16.mxu0 %v1647
    %1897 = vmatpush1.bf16.msra.mxu0 %v1646
    %1898 = vmatprep.subr.bf16.mxu0 %v1651
    %1899 = vmatpush1.bf16.msra.mxu0 %v1650
    %1900 = vmatprep.subr.bf16.mxu0 %v1655
    %1901 = vmatpush1.bf16.msra.mxu0 %v1654
    %1902 = vmatprep.subr.bf16.mxu0 %v1659
    %1903 = vmatpush1.bf16.msra.mxu0 %v1658
    %1904 = vmatprep.subr.bf16.mxu0 %v1663
    %1905 = vmatpush1.bf16.msra.mxu0 %v1662
    %1906 = vmatprep.subr.bf16.mxu0 %v1667
    %1907 = vmatpush1.bf16.msra.mxu0 %v1666
    %1908 = vmatprep.subr.bf16.mxu0 %v1671
    %1909 = vmatpush1.bf16.msra.mxu0 %v1670
    %1910 = vmatprep.subr.bf16.mxu0 %v1675
    %1911 = vmatpush1.bf16.msra.mxu0 %v1674
    %1912 = vmatprep.subr.bf16.mxu0 %v1679
    %1913 = vmatpush1.bf16.msra.mxu0 %v1678
    %1914 = vmatprep.subr.bf16.mxu0 %v1683
    %1915 = vmatpush1.bf16.msra.mxu0 %v1682
    %1916 = vmatprep.subr.bf16.mxu0 %v1687
    %1917 = vmatpush1.bf16.msra.mxu0 %v1686
    %1918 = vmatprep.subr.bf16.mxu0 %v1691
    %1919 = vmatpush1.bf16.msra.mxu0 %v1690
    %1920 = vmatprep.subr.bf16.mxu0 %v1695
    %1921 = vmatpush1.bf16.msra.mxu0 %v1694
    %1922 = vmatprep.mubr.bf16.mxu0 %v1095
    %1923 = vmatmul.mubr.bf16.gmra.mrb[0].mxu0 %v1094
    %v1924 = vpop.f32.mrb[0].mxu0
    %v1925 = vadd.f32 %v1233, %v1924
    %v1926 = vpop.f32.mrb[0].mxu0
    %v1927 = vadd.f32 %v1237, %v1926
    %v1928 = vpop.f32.mrb[0].mxu0
    %v1929 = vpop.f32.mrb[0].mxu0
    %1930 = vdwg.mxu0
    %1931 = vmatprep.subr.bf16.mxu0 %v1699
    %1932 = vmatpush1.bf16.msra.mxu0 %v1698
    %1933 = vmatprep.subr.bf16.mxu0 %v1703
    %1934 = vmatpush1.bf16.msra.mxu0 %v1702
    %1935 = vmatprep.subr.bf16.mxu0 %v1707
    %1936 = vmatpush1.bf16.msra.mxu0 %v1706
    %1937 = vmatprep.subr.bf16.mxu0 %v1711
    %1938 = vmatpush1.bf16.msra.mxu0 %v1710
    %1939 = vmatprep.subr.bf16.mxu0 %v1715
    %1940 = vmatpush1.bf16.msra.mxu0 %v1714
    %1941 = vmatprep.subr.bf16.mxu0 %v1719
    %1942 = vmatpush1.bf16.msra.mxu0 %v1718
    %1943 = vmatprep.subr.bf16.mxu0 %v1723
    %1944 = vmatpush1.bf16.msra.mxu0 %v1722
    %1945 = vmatprep.subr.bf16.mxu0 %v1727
    %1946 = vmatpush1.bf16.msra.mxu0 %v1726
    %1947 = vmatprep.subr.bf16.mxu0 %v1731
    %1948 = vmatpush1.bf16.msra.mxu0 %v1730
    %1949 = vmatprep.subr.bf16.mxu0 %v1735
    %1950 = vmatpush1.bf16.msra.mxu0 %v1734
    %1951 = vmatprep.subr.bf16.mxu0 %v1739
    %1952 = vmatpush1.bf16.msra.mxu0 %v1738
    %1953 = vmatprep.subr.bf16.mxu0 %v1743
    %1954 = vmatpush1.bf16.msra.mxu0 %v1742
    %1955 = vmatprep.subr.bf16.mxu0 %v1747
    %1956 = vmatpush1.bf16.msra.mxu0 %v1746
    %1957 = vmatprep.subr.bf16.mxu0 %v1751
    %1958 = vmatpush1.bf16.msra.mxu0 %v1750
    %1959 = vmatprep.subr.bf16.mxu0 %v1755
    %1960 = vmatpush1.bf16.msra.mxu0 %v1754
    %1961 = vmatprep.subr.bf16.mxu0 %v1759
    %1962 = vmatpush1.bf16.msra.mxu0 %v1758
    %1963 = vmatprep.mubr.bf16.mxu0 %v1097
    %1964 = vmatmul.mubr.bf16.gmra.mrb[0].mxu0 %v1096
    %v1965 = vpop.f32.mrb[0].mxu0
    %v1966 = vadd.f32 %v1925, %v1965
    %v1967 = vpop.f32.mrb[0].mxu0
    %v1968 = vadd.f32 %v1927, %v1967
    %v1969 = vpop.f32.mrb[0].mxu0
    %v1970 = vpop.f32.mrb[0].mxu0
    %1971 = vdwg.mxu0
    %1972 = vmatprep.subr.bf16.mxu0 %v1637
    %1973 = vmatpush1.bf16.msra.mxu0 %v1636
    %1974 = vmatprep.subr.bf16.mxu0 %v1641
    %1975 = vmatpush1.bf16.msra.mxu0 %v1640
    %1976 = vmatprep.subr.bf16.mxu0 %v1645
    %1977 = vmatpush1.bf16.msra.mxu0 %v1644
    %1978 = vmatprep.subr.bf16.mxu0 %v1649
    %1979 = vmatpush1.bf16.msra.mxu0 %v1648
    %1980 = vmatprep.subr.bf16.mxu0 %v1653
    %1981 = vmatpush1.bf16.msra.mxu0 %v1652
    %1982 = vmatprep.subr.bf16.mxu0 %v1657
    %1983 = vmatpush1.bf16.msra.mxu0 %v1656
    %1984 = vmatprep.subr.bf16.mxu0 %v1661
    %1985 = vmatpush1.bf16.msra.mxu0 %v1660
    %1986 = vmatprep.subr.bf16.mxu0 %v1665
    %1987 = vmatpush1.bf16.msra.mxu0 %v1664
    %1988 = vmatprep.subr.bf16.mxu0 %v1669
    %1989 = vmatpush1.bf16.msra.mxu0 %v1668
    %1990 = vmatprep.subr.bf16.mxu0 %v1673
    %1991 = vmatpush1.bf16.msra.mxu0 %v1672
    %1992 = vmatprep.subr.bf16.mxu0 %v1677
    %1993 = vmatpush1.bf16.msra.mxu0 %v1676
    %1994 = vmatprep.subr.bf16.mxu0 %v1681
    %1995 = vmatpush1.bf16.msra.mxu0 %v1680
    %1996 = vmatprep.subr.bf16.mxu0 %v1685
    %1997 = vmatpush1.bf16.msra.mxu0 %v1684
    %1998 = vmatprep.subr.bf16.mxu0 %v1689
    %1999 = vmatpush1.bf16.msra.mxu0 %v1688
    %2000 = vmatprep.subr.bf16.mxu0 %v1693
    %2001 = vmatpush1.bf16.msra.mxu0 %v1692
    %2002 = vmatprep.subr.bf16.mxu0 %v1697
    %2003 = vmatpush1.bf16.msra.mxu0 %v1696
    %2004 = vmatprep.mubr.bf16.mxu0 %v1095
    %2005 = vmatmul.mubr.bf16.gmra.mrb[0].mxu0 %v1094
    %v2006 = vpop.f32.mrb[0].mxu0
    %v2007 = vadd.f32 %v1241, %v2006
    %v2008 = vpop.f32.mrb[0].mxu0
    %v2009 = vadd.f32 %v1245, %v2008
    %v2010 = vpop.f32.mrb[0].mxu0
    %v2011 = vpop.f32.mrb[0].mxu0
    %2012 = vdwg.mxu0
    %2013 = vmatprep.subr.bf16.mxu0 %v1701
    %2014 = vmatpush1.bf16.msra.mxu0 %v1700
    %2015 = vmatprep.subr.bf16.mxu0 %v1705
    %2016 = vmatpush1.bf16.msra.mxu0 %v1704
    %2017 = vmatprep.subr.bf16.mxu0 %v1709
    %2018 = vmatpush1.bf16.msra.mxu0 %v1708
    %2019 = vmatprep.subr.bf16.mxu0 %v1713
    %2020 = vmatpush1.bf16.msra.mxu0 %v1712
    %2021 = vmatprep.subr.bf16.mxu0 %v1717
    %2022 = vmatpush1.bf16.msra.mxu0 %v1716
    %2023 = vmatprep.subr.bf16.mxu0 %v1721
    %2024 = vmatpush1.bf16.msra.mxu0 %v1720
    %2025 = vmatprep.subr.bf16.mxu0 %v1725
    %2026 = vmatpush1.bf16.msra.mxu0 %v1724
    %2027 = vmatprep.subr.bf16.mxu0 %v1729
    %2028 = vmatpush1.bf16.msra.mxu0 %v1728
    %2029 = vmatprep.subr.bf16.mxu0 %v1733
    %2030 = vmatpush1.bf16.msra.mxu0 %v1732
    %2031 = vmatprep.subr.bf16.mxu0 %v1737
    %2032 = vmatpush1.bf16.msra.mxu0 %v1736
    %2033 = vmatprep.subr.bf16.mxu0 %v1741
    %2034 = vmatpush1.bf16.msra.mxu0 %v1740
    %2035 = vmatprep.subr.bf16.mxu0 %v1745
    %2036 = vmatpush1.bf16.msra.mxu0 %v1744
    %2037 = vmatprep.subr.bf16.mxu0 %v1749
    %2038 = vmatpush1.bf16.msra.mxu0 %v1748
    %2039 = vmatprep.subr.bf16.mxu0 %v1753
    %2040 = vmatpush1.bf16.msra.mxu0 %v1752
    %2041 = vmatprep.subr.bf16.mxu0 %v1757
    %2042 = vmatpush1.bf16.msra.mxu0 %v1756
    %2043 = vmatprep.subr.bf16.mxu0 %v1761
    %2044 = vmatpush1.bf16.msra.mxu0 %v1760
    %2045 = vmatprep.mubr.bf16.mxu0 %v1097
    %2046 = vmatmul.mubr.bf16.gmra.mrb[0].mxu0 %v1096
    %v2047 = vpop.f32.mrb[0].mxu0
    %v2048 = vadd.f32 %v2007, %v2047
    %v2049 = vpop.f32.mrb[0].mxu0
    %v2050 = vadd.f32 %v2009, %v2049
    %v2051 = vpop.f32.mrb[0].mxu0
    %v2052 = vpop.f32.mrb[0].mxu0
    %2053 = vdwg.mxu0
    %vm2054 = vcmp.ge.f32.partialorder %v1966, 0.0
    %vm2055 = vcmp.ge.f32.partialorder %v1968, 0.0
    %vm2056 = vcmp.ge.f32.partialorder %v2048, 0.0
    %vm2057 = vcmp.ge.f32.partialorder %v2050, 0.0
    %v2058 = vmul.f32 %v1966, 0.2
    %v2059 = vmul.f32 %v1968, 0.2
    %v2060 = vmul.f32 %v2048, 0.2
    %v2061 = vmul.f32 %v2050, 0.2
    %v2062 = vsel %vm2054, %v1966, %v2058
    %v2063 = vsel %vm2055, %v1968, %v2059
    %v2064 = vsel %vm2056, %v2048, %v2060
    %v2065 = vsel %vm2057, %v2050, %v2061
    %v2066 = vpack.c.bf16 %v2062, %v2062
    %v2067 = vpack.c.bf16 %v2063, %v2063
    %v2068 = vpack.c.bf16 %v2064, %v2064
    %v2069 = vpack.c.bf16 %v2065, %v2065
    %s2070 = scalar_lea.vmem [#allocation5], 2048
    %v2071 = vld [vmem:[%s2070] sm:$0xff]
    %v2072 = vld [vmem:[%s2070 + $0x8] sm:$0xff]
    %v2073 = vld [vmem:[%s2070 + $0x10] sm:$0xff]
    %v2074 = vld [vmem:[%s2070 + $0x18] sm:$0xff]
    %v2075 = vld [vmem:[%s2070 + $0x20] sm:$0xff]
    %v2076 = vld [vmem:[%s2070 + $0x28] sm:$0xff]
    %v2077 = vld [vmem:[%s2070 + $0x30] sm:$0xff]
    %v2078 = vld [vmem:[%s2070 + $0x38] sm:$0xff]
    %v2079 = vld [vmem:[%s2070 + $0x40] sm:$0xff]
    %v2080 = vld [vmem:[%s2070 + $0x48] sm:$0xff]
    %v2081 = vld [vmem:[%s2070 + $0x50] sm:$0xff]
    %v2082 = vld [vmem:[%s2070 + $0x58] sm:$0xff]
    %v2083 = vld [vmem:[%s2070 + $0x60] sm:$0xff]
    %v2084 = vld [vmem:[%s2070 + $0x68] sm:$0xff]
    %v2085 = vld [vmem:[%s2070 + $0x70] sm:$0xff]
    %v2086 = vld [vmem:[%s2070 + $0x78] sm:$0xff]
    %v2087 = vld [vmem:[%s2070 + $0x80] sm:$0xff]
    %v2088 = vld [vmem:[%s2070 + $0x88] sm:$0xff]
    %v2089 = vld [vmem:[%s2070 + $0x90] sm:$0xff]
    %v2090 = vld [vmem:[%s2070 + $0x98] sm:$0xff]
    %v2091 = vld [vmem:[%s2070 + $0xa0] sm:$0xff]
    %v2092 = vld [vmem:[%s2070 + $0xa8] sm:$0xff]
    %v2093 = vld [vmem:[%s2070 + $0xb0] sm:$0xff]
    %v2094 = vld [vmem:[%s2070 + $0xb8] sm:$0xff]
    %v2095 = vld [vmem:[%s2070 + $0xc0] sm:$0xff]
    %v2096 = vld [vmem:[%s2070 + $0xc8] sm:$0xff]
    %v2097 = vld [vmem:[%s2070 + $0xd0] sm:$0xff]
    %v2098 = vld [vmem:[%s2070 + $0xd8] sm:$0xff]
    %v2099 = vld [vmem:[%s2070 + $0xe0] sm:$0xff]
    %v2100 = vld [vmem:[%s2070 + $0xe8] sm:$0xff]
    %v2101 = vld [vmem:[%s2070 + $0xf0] sm:$0xff]
    %v2102 = vld [vmem:[%s2070 + $0xf8] sm:$0xff]
    %v2103 = vld [vmem:[%s2070 + $0x100] sm:$0xff]
    %v2104 = vld [vmem:[%s2070 + $0x108] sm:$0xff]
    %v2105 = vld [vmem:[%s2070 + $0x110] sm:$0xff]
    %v2106 = vld [vmem:[%s2070 + $0x118] sm:$0xff]
    %v2107 = vld [vmem:[%s2070 + $0x120] sm:$0xff]
    %v2108 = vld [vmem:[%s2070 + $0x128] sm:$0xff]
    %v2109 = vld [vmem:[%s2070 + $0x130] sm:$0xff]
    %v2110 = vld [vmem:[%s2070 + $0x138] sm:$0xff]
    %v2111 = vld [vmem:[%s2070 + $0x140] sm:$0xff]
    %v2112 = vld [vmem:[%s2070 + $0x148] sm:$0xff]
    %v2113 = vld [vmem:[%s2070 + $0x150] sm:$0xff]
    %v2114 = vld [vmem:[%s2070 + $0x158] sm:$0xff]
    %v2115 = vld [vmem:[%s2070 + $0x160] sm:$0xff]
    %v2116 = vld [vmem:[%s2070 + $0x168] sm:$0xff]
    %v2117 = vld [vmem:[%s2070 + $0x170] sm:$0xff]
    %v2118 = vld [vmem:[%s2070 + $0x178] sm:$0xff]
    %v2119 = vld [vmem:[%s2070 + $0x180] sm:$0xff]
    %v2120 = vld [vmem:[%s2070 + $0x188] sm:$0xff]
    %v2121 = vld [vmem:[%s2070 + $0x190] sm:$0xff]
    %v2122 = vld [vmem:[%s2070 + $0x198] sm:$0xff]
    %v2123 = vld [vmem:[%s2070 + $0x1a0] sm:$0xff]
    %v2124 = vld [vmem:[%s2070 + $0x1a8] sm:$0xff]
    %v2125 = vld [vmem:[%s2070 + $0x1b0] sm:$0xff]
    %v2126 = vld [vmem:[%s2070 + $0x1b8] sm:$0xff]
    %v2127 = vld [vmem:[%s2070 + $0x1c0] sm:$0xff]
    %v2128 = vld [vmem:[%s2070 + $0x1c8] sm:$0xff]
    %v2129 = vld [vmem:[%s2070 + $0x1d0] sm:$0xff]
    %v2130 = vld [vmem:[%s2070 + $0x1d8] sm:$0xff]
    %v2131 = vld [vmem:[%s2070 + $0x1e0] sm:$0xff]
    %v2132 = vld [vmem:[%s2070 + $0x1e8] sm:$0xff]
    %v2133 = vld [vmem:[%s2070 + $0x1f0] sm:$0xff]
    %v2134 = vld [vmem:[%s2070 + $0x1f8] sm:$0xff]
    %v2135 = vld [vmem:[%s2070 + $0x200] sm:$0xff]
    %v2136 = vld [vmem:[%s2070 + $0x208] sm:$0xff]
    %v2137 = vld [vmem:[%s2070 + $0x210] sm:$0xff]
    %v2138 = vld [vmem:[%s2070 + $0x218] sm:$0xff]
    %v2139 = vld [vmem:[%s2070 + $0x220] sm:$0xff]
    %v2140 = vld [vmem:[%s2070 + $0x228] sm:$0xff]
    %v2141 = vld [vmem:[%s2070 + $0x230] sm:$0xff]
    %v2142 = vld [vmem:[%s2070 + $0x238] sm:$0xff]
    %v2143 = vld [vmem:[%s2070 + $0x240] sm:$0xff]
    %v2144 = vld [vmem:[%s2070 + $0x248] sm:$0xff]
    %v2145 = vld [vmem:[%s2070 + $0x250] sm:$0xff]
    %v2146 = vld [vmem:[%s2070 + $0x258] sm:$0xff]
    %v2147 = vld [vmem:[%s2070 + $0x260] sm:$0xff]
    %v2148 = vld [vmem:[%s2070 + $0x268] sm:$0xff]
    %v2149 = vld [vmem:[%s2070 + $0x270] sm:$0xff]
    %v2150 = vld [vmem:[%s2070 + $0x278] sm:$0xff]
    %v2151 = vld [vmem:[%s2070 + $0x280] sm:$0xff]
    %v2152 = vld [vmem:[%s2070 + $0x288] sm:$0xff]
    %v2153 = vld [vmem:[%s2070 + $0x290] sm:$0xff]
    %v2154 = vld [vmem:[%s2070 + $0x298] sm:$0xff]
    %v2155 = vld [vmem:[%s2070 + $0x2a0] sm:$0xff]
    %v2156 = vld [vmem:[%s2070 + $0x2a8] sm:$0xff]
    %v2157 = vld [vmem:[%s2070 + $0x2b0] sm:$0xff]
    %v2158 = vld [vmem:[%s2070 + $0x2b8] sm:$0xff]
    %v2159 = vld [vmem:[%s2070 + $0x2c0] sm:$0xff]
    %v2160 = vld [vmem:[%s2070 + $0x2c8] sm:$0xff]
    %v2161 = vld [vmem:[%s2070 + $0x2d0] sm:$0xff]
    %v2162 = vld [vmem:[%s2070 + $0x2d8] sm:$0xff]
    %v2163 = vld [vmem:[%s2070 + $0x2e0] sm:$0xff]
    %v2164 = vld [vmem:[%s2070 + $0x2e8] sm:$0xff]
    %v2165 = vld [vmem:[%s2070 + $0x2f0] sm:$0xff]
    %v2166 = vld [vmem:[%s2070 + $0x2f8] sm:$0xff]
    %v2167 = vld [vmem:[%s2070 + $0x300] sm:$0xff]
    %v2168 = vld [vmem:[%s2070 + $0x308] sm:$0xff]
    %v2169 = vld [vmem:[%s2070 + $0x310] sm:$0xff]
    %v2170 = vld [vmem:[%s2070 + $0x318] sm:$0xff]
    %v2171 = vld [vmem:[%s2070 + $0x320] sm:$0xff]
    %v2172 = vld [vmem:[%s2070 + $0x328] sm:$0xff]
    %v2173 = vld [vmem:[%s2070 + $0x330] sm:$0xff]
    %v2174 = vld [vmem:[%s2070 + $0x338] sm:$0xff]
    %v2175 = vld [vmem:[%s2070 + $0x340] sm:$0xff]
    %v2176 = vld [vmem:[%s2070 + $0x348] sm:$0xff]
    %v2177 = vld [vmem:[%s2070 + $0x350] sm:$0xff]
    %v2178 = vld [vmem:[%s2070 + $0x358] sm:$0xff]
    %v2179 = vld [vmem:[%s2070 + $0x360] sm:$0xff]
    %v2180 = vld [vmem:[%s2070 + $0x368] sm:$0xff]
    %v2181 = vld [vmem:[%s2070 + $0x370] sm:$0xff]
    %v2182 = vld [vmem:[%s2070 + $0x378] sm:$0xff]
    %v2183 = vld [vmem:[%s2070 + $0x380] sm:$0xff]
    %v2184 = vld [vmem:[%s2070 + $0x388] sm:$0xff]
    %v2185 = vld [vmem:[%s2070 + $0x390] sm:$0xff]
    %v2186 = vld [vmem:[%s2070 + $0x398] sm:$0xff]
    %v2187 = vld [vmem:[%s2070 + $0x3a0] sm:$0xff]
    %v2188 = vld [vmem:[%s2070 + $0x3a8] sm:$0xff]
    %v2189 = vld [vmem:[%s2070 + $0x3b0] sm:$0xff]
    %v2190 = vld [vmem:[%s2070 + $0x3b8] sm:$0xff]
    %v2191 = vld [vmem:[%s2070 + $0x3c0] sm:$0xff]
    %v2192 = vld [vmem:[%s2070 + $0x3c8] sm:$0xff]
    %v2193 = vld [vmem:[%s2070 + $0x3d0] sm:$0xff]
    %v2194 = vld [vmem:[%s2070 + $0x3d8] sm:$0xff]
    %v2195 = vld [vmem:[%s2070 + $0x3e0] sm:$0xff]
    %v2196 = vld [vmem:[%s2070 + $0x3e8] sm:$0xff]
    %v2197 = vld [vmem:[%s2070 + $0x3f0] sm:$0xff]
    %v2198 = vld [vmem:[%s2070 + $0x3f8] sm:$0xff]
    %s2199 = scalar_lea.vmem [#allocation7], 8
    %v2200 = vld [vmem:[%s2199] sm:$0xf]
    %v2202 = vlaneseq
    %v2203 = vshrl.u32 %v2202, 7
    %v2204 = vsub.s32 0, %v2203
    %v2205 = vrot.slane %v2200, %v2204
    %v2206 = vlaneseq
    %v2207 = vshrl.u32 %v2206, 7
    %v2208 = vsub.s32 1, %v2207
    %v2209 = vrot.slane %v2200, %v2208
    %v2210 = vlaneseq
    %v2211 = vshrl.u32 %v2210, 7
    %v2212 = vsub.s32 2, %v2211
    %v2213 = vrot.slane %v2200, %v2212
    %v2214 = vlaneseq
    %v2215 = vshrl.u32 %v2214, 7
    %v2216 = vsub.s32 3, %v2215
    %v2217 = vrot.slane %v2200, %v2216
    %v2350 = vunpack.c.l.b16 %v2071
    %v2351 = vunpack.c.h.b16 %v2071
    %v2352 = vunpack.c.l.b16 %v2072
    %v2353 = vunpack.c.h.b16 %v2072
    %v2354 = vunpack.c.l.b16 %v2073
    %v2355 = vunpack.c.h.b16 %v2073
    %v2356 = vunpack.c.l.b16 %v2074
    %v2357 = vunpack.c.h.b16 %v2074
    %v2358 = vunpack.c.l.b16 %v2075
    %v2359 = vunpack.c.h.b16 %v2075
    %v2360 = vunpack.c.l.b16 %v2076
    %v2361 = vunpack.c.h.b16 %v2076
    %v2362 = vunpack.c.l.b16 %v2077
    %v2363 = vunpack.c.h.b16 %v2077
    %v2364 = vunpack.c.l.b16 %v2078
    %v2365 = vunpack.c.h.b16 %v2078
    %v2366 = vunpack.c.l.b16 %v2079
    %v2367 = vunpack.c.h.b16 %v2079
    %v2368 = vunpack.c.l.b16 %v2080
    %v2369 = vunpack.c.h.b16 %v2080
    %v2370 = vunpack.c.l.b16 %v2081
    %v2371 = vunpack.c.h.b16 %v2081
    %v2372 = vunpack.c.l.b16 %v2082
    %v2373 = vunpack.c.h.b16 %v2082
    %v2374 = vunpack.c.l.b16 %v2083
    %v2375 = vunpack.c.h.b16 %v2083
    %v2376 = vunpack.c.l.b16 %v2084
    %v2377 = vunpack.c.h.b16 %v2084
    %v2378 = vunpack.c.l.b16 %v2085
    %v2379 = vunpack.c.h.b16 %v2085
    %v2380 = vunpack.c.l.b16 %v2086
    %v2381 = vunpack.c.h.b16 %v2086
    %v2382 = vunpack.c.l.b16 %v2087
    %v2383 = vunpack.c.h.b16 %v2087
    %v2384 = vunpack.c.l.b16 %v2088
    %v2385 = vunpack.c.h.b16 %v2088
    %v2386 = vunpack.c.l.b16 %v2089
    %v2387 = vunpack.c.h.b16 %v2089
    %v2388 = vunpack.c.l.b16 %v2090
    %v2389 = vunpack.c.h.b16 %v2090
    %v2390 = vunpack.c.l.b16 %v2091
    %v2391 = vunpack.c.h.b16 %v2091
    %v2392 = vunpack.c.l.b16 %v2092
    %v2393 = vunpack.c.h.b16 %v2092
    %v2394 = vunpack.c.l.b16 %v2093
    %v2395 = vunpack.c.h.b16 %v2093
    %v2396 = vunpack.c.l.b16 %v2094
    %v2397 = vunpack.c.h.b16 %v2094
    %v2398 = vunpack.c.l.b16 %v2095
    %v2399 = vunpack.c.h.b16 %v2095
    %v2400 = vunpack.c.l.b16 %v2096
    %v2401 = vunpack.c.h.b16 %v2096
    %v2402 = vunpack.c.l.b16 %v2097
    %v2403 = vunpack.c.h.b16 %v2097
    %v2404 = vunpack.c.l.b16 %v2098
    %v2405 = vunpack.c.h.b16 %v2098
    %v2406 = vunpack.c.l.b16 %v2099
    %v2407 = vunpack.c.h.b16 %v2099
    %v2408 = vunpack.c.l.b16 %v2100
    %v2409 = vunpack.c.h.b16 %v2100
    %v2410 = vunpack.c.l.b16 %v2101
    %v2411 = vunpack.c.h.b16 %v2101
    %v2412 = vunpack.c.l.b16 %v2102
    %v2413 = vunpack.c.h.b16 %v2102
    %v2414 = vunpack.c.l.b16 %v2103
    %v2415 = vunpack.c.h.b16 %v2103
    %v2416 = vunpack.c.l.b16 %v2104
    %v2417 = vunpack.c.h.b16 %v2104
    %v2418 = vunpack.c.l.b16 %v2105
    %v2419 = vunpack.c.h.b16 %v2105
    %v2420 = vunpack.c.l.b16 %v2106
    %v2421 = vunpack.c.h.b16 %v2106
    %v2422 = vunpack.c.l.b16 %v2107
    %v2423 = vunpack.c.h.b16 %v2107
    %v2424 = vunpack.c.l.b16 %v2108
    %v2425 = vunpack.c.h.b16 %v2108
    %v2426 = vunpack.c.l.b16 %v2109
    %v2427 = vunpack.c.h.b16 %v2109
    %v2428 = vunpack.c.l.b16 %v2110
    %v2429 = vunpack.c.h.b16 %v2110
    %v2430 = vunpack.c.l.b16 %v2111
    %v2431 = vunpack.c.h.b16 %v2111
    %v2432 = vunpack.c.l.b16 %v2112
    %v2433 = vunpack.c.h.b16 %v2112
    %v2434 = vunpack.c.l.b16 %v2113
    %v2435 = vunpack.c.h.b16 %v2113
    %v2436 = vunpack.c.l.b16 %v2114
    %v2437 = vunpack.c.h.b16 %v2114
    %v2438 = vunpack.c.l.b16 %v2115
    %v2439 = vunpack.c.h.b16 %v2115
    %v2440 = vunpack.c.l.b16 %v2116
    %v2441 = vunpack.c.h.b16 %v2116
    %v2442 = vunpack.c.l.b16 %v2117
    %v2443 = vunpack.c.h.b16 %v2117
    %v2444 = vunpack.c.l.b16 %v2118
    %v2445 = vunpack.c.h.b16 %v2118
    %v2446 = vunpack.c.l.b16 %v2119
    %v2447 = vunpack.c.h.b16 %v2119
    %v2448 = vunpack.c.l.b16 %v2120
    %v2449 = vunpack.c.h.b16 %v2120
    %v2450 = vunpack.c.l.b16 %v2121
    %v2451 = vunpack.c.h.b16 %v2121
    %v2452 = vunpack.c.l.b16 %v2122
    %v2453 = vunpack.c.h.b16 %v2122
    %v2454 = vunpack.c.l.b16 %v2123
    %v2455 = vunpack.c.h.b16 %v2123
    %v2456 = vunpack.c.l.b16 %v2124
    %v2457 = vunpack.c.h.b16 %v2124
    %v2458 = vunpack.c.l.b16 %v2125
    %v2459 = vunpack.c.h.b16 %v2125
    %v2460 = vunpack.c.l.b16 %v2126
    %v2461 = vunpack.c.h.b16 %v2126
    %v2462 = vunpack.c.l.b16 %v2127
    %v2463 = vunpack.c.h.b16 %v2127
    %v2464 = vunpack.c.l.b16 %v2128
    %v2465 = vunpack.c.h.b16 %v2128
    %v2466 = vunpack.c.l.b16 %v2129
    %v2467 = vunpack.c.h.b16 %v2129
    %v2468 = vunpack.c.l.b16 %v2130
    %v2469 = vunpack.c.h.b16 %v2130
    %v2470 = vunpack.c.l.b16 %v2131
    %v2471 = vunpack.c.h.b16 %v2131
    %v2472 = vunpack.c.l.b16 %v2132
    %v2473 = vunpack.c.h.b16 %v2132
    %v2474 = vunpack.c.l.b16 %v2133
    %v2475 = vunpack.c.h.b16 %v2133
    %v2476 = vunpack.c.l.b16 %v2134
    %v2477 = vunpack.c.h.b16 %v2134
    %v2478 = vunpack.c.l.b16 %v2135
    %v2479 = vunpack.c.h.b16 %v2135
    %v2480 = vunpack.c.l.b16 %v2136
    %v2481 = vunpack.c.h.b16 %v2136
    %v2482 = vunpack.c.l.b16 %v2137
    %v2483 = vunpack.c.h.b16 %v2137
    %v2484 = vunpack.c.l.b16 %v2138
    %v2485 = vunpack.c.h.b16 %v2138
    %v2486 = vunpack.c.l.b16 %v2139
    %v2487 = vunpack.c.h.b16 %v2139
    %v2488 = vunpack.c.l.b16 %v2140
    %v2489 = vunpack.c.h.b16 %v2140
    %v2490 = vunpack.c.l.b16 %v2141
    %v2491 = vunpack.c.h.b16 %v2141
    %v2492 = vunpack.c.l.b16 %v2142
    %v2493 = vunpack.c.h.b16 %v2142
    %v2494 = vunpack.c.l.b16 %v2143
    %v2495 = vunpack.c.h.b16 %v2143
    %v2496 = vunpack.c.l.b16 %v2144
    %v2497 = vunpack.c.h.b16 %v2144
    %v2498 = vunpack.c.l.b16 %v2145
    %v2499 = vunpack.c.h.b16 %v2145
    %v2500 = vunpack.c.l.b16 %v2146
    %v2501 = vunpack.c.h.b16 %v2146
    %v2502 = vunpack.c.l.b16 %v2147
    %v2503 = vunpack.c.h.b16 %v2147
    %v2504 = vunpack.c.l.b16 %v2148
    %v2505 = vunpack.c.h.b16 %v2148
    %v2506 = vunpack.c.l.b16 %v2149
    %v2507 = vunpack.c.h.b16 %v2149
    %v2508 = vunpack.c.l.b16 %v2150
    %v2509 = vunpack.c.h.b16 %v2150
    %v2510 = vunpack.c.l.b16 %v2151
    %v2511 = vunpack.c.h.b16 %v2151
    %v2512 = vunpack.c.l.b16 %v2152
    %v2513 = vunpack.c.h.b16 %v2152
    %v2514 = vunpack.c.l.b16 %v2153
    %v2515 = vunpack.c.h.b16 %v2153
    %v2516 = vunpack.c.l.b16 %v2154
    %v2517 = vunpack.c.h.b16 %v2154
    %v2518 = vunpack.c.l.b16 %v2155
    %v2519 = vunpack.c.h.b16 %v2155
    %v2520 = vunpack.c.l.b16 %v2156
    %v2521 = vunpack.c.h.b16 %v2156
    %v2522 = vunpack.c.l.b16 %v2157
    %v2523 = vunpack.c.h.b16 %v2157
    %v2524 = vunpack.c.l.b16 %v2158
    %v2525 = vunpack.c.h.b16 %v2158
    %v2526 = vunpack.c.l.b16 %v2159
    %v2527 = vunpack.c.h.b16 %v2159
    %v2528 = vunpack.c.l.b16 %v2160
    %v2529 = vunpack.c.h.b16 %v2160
    %v2530 = vunpack.c.l.b16 %v2161
    %v2531 = vunpack.c.h.b16 %v2161
    %v2532 = vunpack.c.l.b16 %v2162
    %v2533 = vunpack.c.h.b16 %v2162
    %v2534 = vunpack.c.l.b16 %v2163
    %v2535 = vunpack.c.h.b16 %v2163
    %v2536 = vunpack.c.l.b16 %v2164
    %v2537 = vunpack.c.h.b16 %v2164
    %v2538 = vunpack.c.l.b16 %v2165
    %v2539 = vunpack.c.h.b16 %v2165
    %v2540 = vunpack.c.l.b16 %v2166
    %v2541 = vunpack.c.h.b16 %v2166
    %v2542 = vunpack.c.l.b16 %v2167
    %v2543 = vunpack.c.h.b16 %v2167
    %v2544 = vunpack.c.l.b16 %v2168
    %v2545 = vunpack.c.h.b16 %v2168
    %v2546 = vunpack.c.l.b16 %v2169
    %v2547 = vunpack.c.h.b16 %v2169
    %v2548 = vunpack.c.l.b16 %v2170
    %v2549 = vunpack.c.h.b16 %v2170
    %v2550 = vunpack.c.l.b16 %v2171
    %v2551 = vunpack.c.h.b16 %v2171
    %v2552 = vunpack.c.l.b16 %v2172
    %v2553 = vunpack.c.h.b16 %v2172
    %v2554 = vunpack.c.l.b16 %v2173
    %v2555 = vunpack.c.h.b16 %v2173
    %v2556 = vunpack.c.l.b16 %v2174
    %v2557 = vunpack.c.h.b16 %v2174
    %v2558 = vunpack.c.l.b16 %v2175
    %v2559 = vunpack.c.h.b16 %v2175
    %v2560 = vunpack.c.l.b16 %v2176
    %v2561 = vunpack.c.h.b16 %v2176
    %v2562 = vunpack.c.l.b16 %v2177
    %v2563 = vunpack.c.h.b16 %v2177
    %v2564 = vunpack.c.l.b16 %v2178
    %v2565 = vunpack.c.h.b16 %v2178
    %v2566 = vunpack.c.l.b16 %v2179
    %v2567 = vunpack.c.h.b16 %v2179
    %v2568 = vunpack.c.l.b16 %v2180
    %v2569 = vunpack.c.h.b16 %v2180
    %v2570 = vunpack.c.l.b16 %v2181
    %v2571 = vunpack.c.h.b16 %v2181
    %v2572 = vunpack.c.l.b16 %v2182
    %v2573 = vunpack.c.h.b16 %v2182
    %v2574 = vunpack.c.l.b16 %v2183
    %v2575 = vunpack.c.h.b16 %v2183
    %v2576 = vunpack.c.l.b16 %v2184
    %v2577 = vunpack.c.h.b16 %v2184
    %v2578 = vunpack.c.l.b16 %v2185
    %v2579 = vunpack.c.h.b16 %v2185
    %v2580 = vunpack.c.l.b16 %v2186
    %v2581 = vunpack.c.h.b16 %v2186
    %v2582 = vunpack.c.l.b16 %v2187
    %v2583 = vunpack.c.h.b16 %v2187
    %v2584 = vunpack.c.l.b16 %v2188
    %v2585 = vunpack.c.h.b16 %v2188
    %v2586 = vunpack.c.l.b16 %v2189
    %v2587 = vunpack.c.h.b16 %v2189
    %v2588 = vunpack.c.l.b16 %v2190
    %v2589 = vunpack.c.h.b16 %v2190
    %v2590 = vunpack.c.l.b16 %v2191
    %v2591 = vunpack.c.h.b16 %v2191
    %v2592 = vunpack.c.l.b16 %v2192
    %v2593 = vunpack.c.h.b16 %v2192
    %v2594 = vunpack.c.l.b16 %v2193
    %v2595 = vunpack.c.h.b16 %v2193
    %v2596 = vunpack.c.l.b16 %v2194
    %v2597 = vunpack.c.h.b16 %v2194
    %v2598 = vunpack.c.l.b16 %v2195
    %v2599 = vunpack.c.h.b16 %v2195
    %v2600 = vunpack.c.l.b16 %v2196
    %v2601 = vunpack.c.h.b16 %v2196
    %v2602 = vunpack.c.l.b16 %v2197
    %v2603 = vunpack.c.h.b16 %v2197
    %v2604 = vunpack.c.l.b16 %v2198
    %v2605 = vunpack.c.h.b16 %v2198
    %v2606 = vpack.c.b16 %v2354, %v2350
    %v2607 = vpack.c.b16 %v2355, %v2351
    %v2608 = vpack.c.b16 %v2356, %v2352
    %v2609 = vpack.c.b16 %v2357, %v2353
    %v2610 = vpack.c.b16 %v2362, %v2358
    %v2611 = vpack.c.b16 %v2363, %v2359
    %v2612 = vpack.c.b16 %v2364, %v2360
    %v2613 = vpack.c.b16 %v2365, %v2361
    %v2614 = vpack.c.b16 %v2370, %v2366
    %v2615 = vpack.c.b16 %v2371, %v2367
    %v2616 = vpack.c.b16 %v2372, %v2368
    %v2617 = vpack.c.b16 %v2373, %v2369
    %v2618 = vpack.c.b16 %v2378, %v2374
    %v2619 = vpack.c.b16 %v2379, %v2375
    %v2620 = vpack.c.b16 %v2380, %v2376
    %v2621 = vpack.c.b16 %v2381, %v2377
    %v2622 = vpack.c.b16 %v2386, %v2382
    %v2623 = vpack.c.b16 %v2387, %v2383
    %v2624 = vpack.c.b16 %v2388, %v2384
    %v2625 = vpack.c.b16 %v2389, %v2385
    %v2626 = vpack.c.b16 %v2394, %v2390
    %v2627 = vpack.c.b16 %v2395, %v2391
    %v2628 = vpack.c.b16 %v2396, %v2392
    %v2629 = vpack.c.b16 %v2397, %v2393
    %v2630 = vpack.c.b16 %v2402, %v2398
    %v2631 = vpack.c.b16 %v2403, %v2399
    %v2632 = vpack.c.b16 %v2404, %v2400
    %v2633 = vpack.c.b16 %v2405, %v2401
    %v2634 = vpack.c.b16 %v2410, %v2406
    %v2635 = vpack.c.b16 %v2411, %v2407
    %v2636 = vpack.c.b16 %v2412, %v2408
    %v2637 = vpack.c.b16 %v2413, %v2409
    %v2638 = vpack.c.b16 %v2418, %v2414
    %v2639 = vpack.c.b16 %v2419, %v2415
    %v2640 = vpack.c.b16 %v2420, %v2416
    %v2641 = vpack.c.b16 %v2421, %v2417
    %v2642 = vpack.c.b16 %v2426, %v2422
    %v2643 = vpack.c.b16 %v2427, %v2423
    %v2644 = vpack.c.b16 %v2428, %v2424
    %v2645 = vpack.c.b16 %v2429, %v2425
    %v2646 = vpack.c.b16 %v2434, %v2430
    %v2647 = vpack.c.b16 %v2435, %v2431
    %v2648 = vpack.c.b16 %v2436, %v2432
    %v2649 = vpack.c.b16 %v2437, %v2433
    %v2650 = vpack.c.b16 %v2442, %v2438
    %v2651 = vpack.c.b16 %v2443, %v2439
    %v2652 = vpack.c.b16 %v2444, %v2440
    %v2653 = vpack.c.b16 %v2445, %v2441
    %v2654 = vpack.c.b16 %v2450, %v2446
    %v2655 = vpack.c.b16 %v2451, %v2447
    %v2656 = vpack.c.b16 %v2452, %v2448
    %v2657 = vpack.c.b16 %v2453, %v2449
    %v2658 = vpack.c.b16 %v2458, %v2454
    %v2659 = vpack.c.b16 %v2459, %v2455
    %v2660 = vpack.c.b16 %v2460, %v2456
    %v2661 = vpack.c.b16 %v2461, %v2457
    %v2662 = vpack.c.b16 %v2466, %v2462
    %v2663 = vpack.c.b16 %v2467, %v2463
    %v2664 = vpack.c.b16 %v2468, %v2464
    %v2665 = vpack.c.b16 %v2469, %v2465
    %v2666 = vpack.c.b16 %v2474, %v2470
    %v2667 = vpack.c.b16 %v2475, %v2471
    %v2668 = vpack.c.b16 %v2476, %v2472
    %v2669 = vpack.c.b16 %v2477, %v2473
    %v2670 = vpack.c.b16 %v2482, %v2478
    %v2671 = vpack.c.b16 %v2483, %v2479
    %v2672 = vpack.c.b16 %v2484, %v2480
    %v2673 = vpack.c.b16 %v2485, %v2481
    %v2674 = vpack.c.b16 %v2490, %v2486
    %v2675 = vpack.c.b16 %v2491, %v2487
    %v2676 = vpack.c.b16 %v2492, %v2488
    %v2677 = vpack.c.b16 %v2493, %v2489
    %v2678 = vpack.c.b16 %v2498, %v2494
    %v2679 = vpack.c.b16 %v2499, %v2495
    %v2680 = vpack.c.b16 %v2500, %v2496
    %v2681 = vpack.c.b16 %v2501, %v2497
    %v2682 = vpack.c.b16 %v2506, %v2502
    %v2683 = vpack.c.b16 %v2507, %v2503
    %v2684 = vpack.c.b16 %v2508, %v2504
    %v2685 = vpack.c.b16 %v2509, %v2505
    %v2686 = vpack.c.b16 %v2514, %v2510
    %v2687 = vpack.c.b16 %v2515, %v2511
    %v2688 = vpack.c.b16 %v2516, %v2512
    %v2689 = vpack.c.b16 %v2517, %v2513
    %v2690 = vpack.c.b16 %v2522, %v2518
    %v2691 = vpack.c.b16 %v2523, %v2519
    %v2692 = vpack.c.b16 %v2524, %v2520
    %v2693 = vpack.c.b16 %v2525, %v2521
    %v2694 = vpack.c.b16 %v2530, %v2526
    %v2695 = vpack.c.b16 %v2531, %v2527
    %v2696 = vpack.c.b16 %v2532, %v2528
    %v2697 = vpack.c.b16 %v2533, %v2529
    %v2698 = vpack.c.b16 %v2538, %v2534
    %v2699 = vpack.c.b16 %v2539, %v2535
    %v2700 = vpack.c.b16 %v2540, %v2536
    %v2701 = vpack.c.b16 %v2541, %v2537
    %v2702 = vpack.c.b16 %v2546, %v2542
    %v2703 = vpack.c.b16 %v2547, %v2543
    %v2704 = vpack.c.b16 %v2548, %v2544
    %v2705 = vpack.c.b16 %v2549, %v2545
    %v2706 = vpack.c.b16 %v2554, %v2550
    %v2707 = vpack.c.b16 %v2555, %v2551
    %v2708 = vpack.c.b16 %v2556, %v2552
    %v2709 = vpack.c.b16 %v2557, %v2553
    %v2710 = vpack.c.b16 %v2562, %v2558
    %v2711 = vpack.c.b16 %v2563, %v2559
    %v2712 = vpack.c.b16 %v2564, %v2560
    %v2713 = vpack.c.b16 %v2565, %v2561
    %v2714 = vpack.c.b16 %v2570, %v2566
    %v2715 = vpack.c.b16 %v2571, %v2567
    %v2716 = vpack.c.b16 %v2572, %v2568
    %v2717 = vpack.c.b16 %v2573, %v2569
    %v2718 = vpack.c.b16 %v2578, %v2574
    %v2719 = vpack.c.b16 %v2579, %v2575
    %v2720 = vpack.c.b16 %v2580, %v2576
    %v2721 = vpack.c.b16 %v2581, %v2577
    %v2722 = vpack.c.b16 %v2586, %v2582
    %v2723 = vpack.c.b16 %v2587, %v2583
    %v2724 = vpack.c.b16 %v2588, %v2584
    %v2725 = vpack.c.b16 %v2589, %v2585
    %v2726 = vpack.c.b16 %v2594, %v2590
    %v2727 = vpack.c.b16 %v2595, %v2591
    %v2728 = vpack.c.b16 %v2596, %v2592
    %v2729 = vpack.c.b16 %v2597, %v2593
    %v2730 = vpack.c.b16 %v2602, %v2598
    %v2731 = vpack.c.b16 %v2603, %v2599
    %v2732 = vpack.c.b16 %v2604, %v2600
    %v2733 = vpack.c.b16 %v2605, %v2601
    %2862 = vmatprep.subr.bf16.mxu0 %v2607
    %2863 = vmatpush1.bf16.msra.mxu0 %v2606
    %2864 = vmatprep.subr.bf16.mxu0 %v2611
    %2865 = vmatpush1.bf16.msra.mxu0 %v2610
    %2866 = vmatprep.subr.bf16.mxu0 %v2615
    %2867 = vmatpush1.bf16.msra.mxu0 %v2614
    %2868 = vmatprep.subr.bf16.mxu0 %v2619
    %2869 = vmatpush1.bf16.msra.mxu0 %v2618
    %2870 = vmatprep.subr.bf16.mxu0 %v2623
    %2871 = vmatpush1.bf16.msra.mxu0 %v2622
    %2872 = vmatprep.subr.bf16.mxu0 %v2627
    %2873 = vmatpush1.bf16.msra.mxu0 %v2626
    %2874 = vmatprep.subr.bf16.mxu0 %v2631
    %2875 = vmatpush1.bf16.msra.mxu0 %v2630
    %2876 = vmatprep.subr.bf16.mxu0 %v2635
    %2877 = vmatpush1.bf16.msra.mxu0 %v2634
    %2878 = vmatprep.subr.bf16.mxu0 %v2639
    %2879 = vmatpush1.bf16.msra.mxu0 %v2638
    %2880 = vmatprep.subr.bf16.mxu0 %v2643
    %2881 = vmatpush1.bf16.msra.mxu0 %v2642
    %2882 = vmatprep.subr.bf16.mxu0 %v2647
    %2883 = vmatpush1.bf16.msra.mxu0 %v2646
    %2884 = vmatprep.subr.bf16.mxu0 %v2651
    %2885 = vmatpush1.bf16.msra.mxu0 %v2650
    %2886 = vmatprep.subr.bf16.mxu0 %v2655
    %2887 = vmatpush1.bf16.msra.mxu0 %v2654
    %2888 = vmatprep.subr.bf16.mxu0 %v2659
    %2889 = vmatpush1.bf16.msra.mxu0 %v2658
    %2890 = vmatprep.subr.bf16.mxu0 %v2663
    %2891 = vmatpush1.bf16.msra.mxu0 %v2662
    %2892 = vmatprep.subr.bf16.mxu0 %v2667
    %2893 = vmatpush1.bf16.msra.mxu0 %v2666
    %2894 = vmatprep.mubr.bf16.mxu0 %v2067
    %2895 = vmatmul.mubr.bf16.gmra.mrb[0].mxu0 %v2066
    %v2896 = vpop.f32.mrb[0].mxu0
    %v2897 = vadd.f32 %v2205, %v2896
    %v2898 = vpop.f32.mrb[0].mxu0
    %v2899 = vadd.f32 %v2209, %v2898
    %v2900 = vpop.f32.mrb[0].mxu0
    %v2901 = vpop.f32.mrb[0].mxu0
    %2902 = vdwg.mxu0
    %2903 = vmatprep.subr.bf16.mxu0 %v2671
    %2904 = vmatpush1.bf16.msra.mxu0 %v2670
    %2905 = vmatprep.subr.bf16.mxu0 %v2675
    %2906 = vmatpush1.bf16.msra.mxu0 %v2674
    %2907 = vmatprep.subr.bf16.mxu0 %v2679
    %2908 = vmatpush1.bf16.msra.mxu0 %v2678
    %2909 = vmatprep.subr.bf16.mxu0 %v2683
    %2910 = vmatpush1.bf16.msra.mxu0 %v2682
    %2911 = vmatprep.subr.bf16.mxu0 %v2687
    %2912 = vmatpush1.bf16.msra.mxu0 %v2686
    %2913 = vmatprep.subr.bf16.mxu0 %v2691
    %2914 = vmatpush1.bf16.msra.mxu0 %v2690
    %2915 = vmatprep.subr.bf16.mxu0 %v2695
    %2916 = vmatpush1.bf16.msra.mxu0 %v2694
    %2917 = vmatprep.subr.bf16.mxu0 %v2699
    %2918 = vmatpush1.bf16.msra.mxu0 %v2698
    %2919 = vmatprep.subr.bf16.mxu0 %v2703
    %2920 = vmatpush1.bf16.msra.mxu0 %v2702
    %2921 = vmatprep.subr.bf16.mxu0 %v2707
    %2922 = vmatpush1.bf16.msra.mxu0 %v2706
    %2923 = vmatprep.subr.bf16.mxu0 %v2711
    %2924 = vmatpush1.bf16.msra.mxu0 %v2710
    %2925 = vmatprep.subr.bf16.mxu0 %v2715
    %2926 = vmatpush1.bf16.msra.mxu0 %v2714
    %2927 = vmatprep.subr.bf16.mxu0 %v2719
    %2928 = vmatpush1.bf16.msra.mxu0 %v2718
    %2929 = vmatprep.subr.bf16.mxu0 %v2723
    %2930 = vmatpush1.bf16.msra.mxu0 %v2722
    %2931 = vmatprep.subr.bf16.mxu0 %v2727
    %2932 = vmatpush1.bf16.msra.mxu0 %v2726
    %2933 = vmatprep.subr.bf16.mxu0 %v2731
    %2934 = vmatpush1.bf16.msra.mxu0 %v2730
    %2935 = vmatprep.mubr.bf16.mxu0 %v2069
    %2936 = vmatmul.mubr.bf16.gmra.mrb[0].mxu0 %v2068
    %v2937 = vpop.f32.mrb[0].mxu0
    %v2938 = vadd.f32 %v2897, %v2937
    %v2939 = vpop.f32.mrb[0].mxu0
    %v2940 = vadd.f32 %v2899, %v2939
    %v2941 = vpop.f32.mrb[0].mxu0
    %v2942 = vpop.f32.mrb[0].mxu0
    %2943 = vdwg.mxu0
    %2944 = vmatprep.subr.bf16.mxu0 %v2609
    %2945 = vmatpush1.bf16.msra.mxu0 %v2608
    %2946 = vmatprep.subr.bf16.mxu0 %v2613
    %2947 = vmatpush1.bf16.msra.mxu0 %v2612
    %2948 = vmatprep.subr.bf16.mxu0 %v2617
    %2949 = vmatpush1.bf16.msra.mxu0 %v2616
    %2950 = vmatprep.subr.bf16.mxu0 %v2621
    %2951 = vmatpush1.bf16.msra.mxu0 %v2620
    %2952 = vmatprep.subr.bf16.mxu0 %v2625
    %2953 = vmatpush1.bf16.msra.mxu0 %v2624
    %2954 = vmatprep.subr.bf16.mxu0 %v2629
    %2955 = vmatpush1.bf16.msra.mxu0 %v2628
    %2956 = vmatprep.subr.bf16.mxu0 %v2633
    %2957 = vmatpush1.bf16.msra.mxu0 %v2632
    %2958 = vmatprep.subr.bf16.mxu0 %v2637
    %2959 = vmatpush1.bf16.msra.mxu0 %v2636
    %2960 = vmatprep.subr.bf16.mxu0 %v2641
    %2961 = vmatpush1.bf16.msra.mxu0 %v2640
    %2962 = vmatprep.subr.bf16.mxu0 %v2645
    %2963 = vmatpush1.bf16.msra.mxu0 %v2644
    %2964 = vmatprep.subr.bf16.mxu0 %v2649
    %2965 = vmatpush1.bf16.msra.mxu0 %v2648
    %2966 = vmatprep.subr.bf16.mxu0 %v2653
    %2967 = vmatpush1.bf16.msra.mxu0 %v2652
    %2968 = vmatprep.subr.bf16.mxu0 %v2657
    %2969 = vmatpush1.bf16.msra.mxu0 %v2656
    %2970 = vmatprep.subr.bf16.mxu0 %v2661
    %2971 = vmatpush1.bf16.msra.mxu0 %v2660
    %2972 = vmatprep.subr.bf16.mxu0 %v2665
    %2973 = vmatpush1.bf16.msra.mxu0 %v2664
    %2974 = vmatprep.subr.bf16.mxu0 %v2669
    %2975 = vmatpush1.bf16.msra.mxu0 %v2668
    %2976 = vmatprep.mubr.bf16.mxu0 %v2067
    %2977 = vmatmul.mubr.bf16.gmra.mrb[0].mxu0 %v2066
    %v2978 = vpop.f32.mrb[0].mxu0
    %v2979 = vadd.f32 %v2213, %v2978
    %v2980 = vpop.f32.mrb[0].mxu0
    %v2981 = vadd.f32 %v2217, %v2980
    %v2982 = vpop.f32.mrb[0].mxu0
    %v2983 = vpop.f32.mrb[0].mxu0
    %2984 = vdwg.mxu0
    %2985 = vmatprep.subr.bf16.mxu0 %v2673
    %2986 = vmatpush1.bf16.msra.mxu0 %v2672
    %2987 = vmatprep.subr.bf16.mxu0 %v2677
    %2988 = vmatpush1.bf16.msra.mxu0 %v2676
    %2989 = vmatprep.subr.bf16.mxu0 %v2681
    %2990 = vmatpush1.bf16.msra.mxu0 %v2680
    %2991 = vmatprep.subr.bf16.mxu0 %v2685
    %2992 = vmatpush1.bf16.msra.mxu0 %v2684
    %2993 = vmatprep.subr.bf16.mxu0 %v2689
    %2994 = vmatpush1.bf16.msra.mxu0 %v2688
    %2995 = vmatprep.subr.bf16.mxu0 %v2693
    %2996 = vmatpush1.bf16.msra.mxu0 %v2692
    %2997 = vmatprep.subr.bf16.mxu0 %v2697
    %2998 = vmatpush1.bf16.msra.mxu0 %v2696
    %2999 = vmatprep.subr.bf16.mxu0 %v2701
    %3000 = vmatpush1.bf16.msra.mxu0 %v2700
    %3001 = vmatprep.subr.bf16.mxu0 %v2705
    %3002 = vmatpush1.bf16.msra.mxu0 %v2704
    %3003 = vmatprep.subr.bf16.mxu0 %v2709
    %3004 = vmatpush1.bf16.msra.mxu0 %v2708
    %3005 = vmatprep.subr.bf16.mxu0 %v2713
    %3006 = vmatpush1.bf16.msra.mxu0 %v2712
    %3007 = vmatprep.subr.bf16.mxu0 %v2717
    %3008 = vmatpush1.bf16.msra.mxu0 %v2716
    %3009 = vmatprep.subr.bf16.mxu0 %v2721
    %3010 = vmatpush1.bf16.msra.mxu0 %v2720
    %3011 = vmatprep.subr.bf16.mxu0 %v2725
    %3012 = vmatpush1.bf16.msra.mxu0 %v2724
    %3013 = vmatprep.subr.bf16.mxu0 %v2729
    %3014 = vmatpush1.bf16.msra.mxu0 %v2728
    %3015 = vmatprep.subr.bf16.mxu0 %v2733
    %3016 = vmatpush1.bf16.msra.mxu0 %v2732
    %3017 = vmatprep.mubr.bf16.mxu0 %v2069
    %3018 = vmatmul.mubr.bf16.gmra.mrb[0].mxu0 %v2068
    %v3019 = vpop.f32.mrb[0].mxu0
    %v3020 = vadd.f32 %v2979, %v3019
    %v3021 = vpop.f32.mrb[0].mxu0
    %v3022 = vadd.f32 %v2981, %v3021
    %v3023 = vpop.f32.mrb[0].mxu0
    %v3024 = vpop.f32.mrb[0].mxu0
    %3025 = vdwg.mxu0
    %vm3026 = vcmp.ge.f32.partialorder %v2938, 0.0
    %vm3027 = vcmp.ge.f32.partialorder %v2940, 0.0
    %vm3028 = vcmp.ge.f32.partialorder %v3020, 0.0
    %vm3029 = vcmp.ge.f32.partialorder %v3022, 0.0
    %v3030 = vmul.f32 %v2938, 0.2
    %v3031 = vmul.f32 %v2940, 0.2
    %v3032 = vmul.f32 %v3020, 0.2
    %v3033 = vmul.f32 %v3022, 0.2
    %v3034 = vsel %vm3026, %v2938, %v3030
    %v3035 = vsel %vm3027, %v2940, %v3031
    %v3036 = vsel %vm3028, %v3020, %v3032
    %v3037 = vsel %vm3029, %v3022, %v3033
    %v3038 = vpack.c.bf16 %v3034, %v3034
    %v3039 = vpack.c.bf16 %v3035, %v3035
    %v3040 = vpack.c.bf16 %v3036, %v3036
    %v3041 = vpack.c.bf16 %v3037, %v3037
    %s3042 = scalar_lea.vmem [#allocation5], 3072
    %v3043 = vld [vmem:[%s3042] sm:$0xff]
    %v3044 = vld [vmem:[%s3042 + $0x8] sm:$0xff]
    %v3045 = vld [vmem:[%s3042 + $0x10] sm:$0xff]
    %v3046 = vld [vmem:[%s3042 + $0x18] sm:$0xff]
    %v3047 = vld [vmem:[%s3042 + $0x20] sm:$0xff]
    %v3048 = vld [vmem:[%s3042 + $0x28] sm:$0xff]
    %v3049 = vld [vmem:[%s3042 + $0x30] sm:$0xff]
    %v3050 = vld [vmem:[%s3042 + $0x38] sm:$0xff]
    %v3051 = vld [vmem:[%s3042 + $0x40] sm:$0xff]
    %v3052 = vld [vmem:[%s3042 + $0x48] sm:$0xff]
    %v3053 = vld [vmem:[%s3042 + $0x50] sm:$0xff]
    %v3054 = vld [vmem:[%s3042 + $0x58] sm:$0xff]
    %v3055 = vld [vmem:[%s3042 + $0x60] sm:$0xff]
    %v3056 = vld [vmem:[%s3042 + $0x68] sm:$0xff]
    %v3057 = vld [vmem:[%s3042 + $0x70] sm:$0xff]
    %v3058 = vld [vmem:[%s3042 + $0x78] sm:$0xff]
    %v3059 = vld [vmem:[%s3042 + $0x80] sm:$0xff]
    %v3060 = vld [vmem:[%s3042 + $0x88] sm:$0xff]
    %v3061 = vld [vmem:[%s3042 + $0x90] sm:$0xff]
    %v3062 = vld [vmem:[%s3042 + $0x98] sm:$0xff]
    %v3063 = vld [vmem:[%s3042 + $0xa0] sm:$0xff]
    %v3064 = vld [vmem:[%s3042 + $0xa8] sm:$0xff]
    %v3065 = vld [vmem:[%s3042 + $0xb0] sm:$0xff]
    %v3066 = vld [vmem:[%s3042 + $0xb8] sm:$0xff]
    %v3067 = vld [vmem:[%s3042 + $0xc0] sm:$0xff]
    %v3068 = vld [vmem:[%s3042 + $0xc8] sm:$0xff]
    %v3069 = vld [vmem:[%s3042 + $0xd0] sm:$0xff]
    %v3070 = vld [vmem:[%s3042 + $0xd8] sm:$0xff]
    %v3071 = vld [vmem:[%s3042 + $0xe0] sm:$0xff]
    %v3072 = vld [vmem:[%s3042 + $0xe8] sm:$0xff]
    %v3073 = vld [vmem:[%s3042 + $0xf0] sm:$0xff]
    %v3074 = vld [vmem:[%s3042 + $0xf8] sm:$0xff]
    %v3075 = vld [vmem:[%s3042 + $0x100] sm:$0xff]
    %v3076 = vld [vmem:[%s3042 + $0x108] sm:$0xff]
    %v3077 = vld [vmem:[%s3042 + $0x110] sm:$0xff]
    %v3078 = vld [vmem:[%s3042 + $0x118] sm:$0xff]
    %v3079 = vld [vmem:[%s3042 + $0x120] sm:$0xff]
    %v3080 = vld [vmem:[%s3042 + $0x128] sm:$0xff]
    %v3081 = vld [vmem:[%s3042 + $0x130] sm:$0xff]
    %v3082 = vld [vmem:[%s3042 + $0x138] sm:$0xff]
    %v3083 = vld [vmem:[%s3042 + $0x140] sm:$0xff]
    %v3084 = vld [vmem:[%s3042 + $0x148] sm:$0xff]
    %v3085 = vld [vmem:[%s3042 + $0x150] sm:$0xff]
    %v3086 = vld [vmem:[%s3042 + $0x158] sm:$0xff]
    %v3087 = vld [vmem:[%s3042 + $0x160] sm:$0xff]
    %v3088 = vld [vmem:[%s3042 + $0x168] sm:$0xff]
    %v3089 = vld [vmem:[%s3042 + $0x170] sm:$0xff]
    %v3090 = vld [vmem:[%s3042 + $0x178] sm:$0xff]
    %v3091 = vld [vmem:[%s3042 + $0x180] sm:$0xff]
    %v3092 = vld [vmem:[%s3042 + $0x188] sm:$0xff]
    %v3093 = vld [vmem:[%s3042 + $0x190] sm:$0xff]
    %v3094 = vld [vmem:[%s3042 + $0x198] sm:$0xff]
    %v3095 = vld [vmem:[%s3042 + $0x1a0] sm:$0xff]
    %v3096 = vld [vmem:[%s3042 + $0x1a8] sm:$0xff]
    %v3097 = vld [vmem:[%s3042 + $0x1b0] sm:$0xff]
    %v3098 = vld [vmem:[%s3042 + $0x1b8] sm:$0xff]
    %v3099 = vld [vmem:[%s3042 + $0x1c0] sm:$0xff]
    %v3100 = vld [vmem:[%s3042 + $0x1c8] sm:$0xff]
    %v3101 = vld [vmem:[%s3042 + $0x1d0] sm:$0xff]
    %v3102 = vld [vmem:[%s3042 + $0x1d8] sm:$0xff]
    %v3103 = vld [vmem:[%s3042 + $0x1e0] sm:$0xff]
    %v3104 = vld [vmem:[%s3042 + $0x1e8] sm:$0xff]
    %v3105 = vld [vmem:[%s3042 + $0x1f0] sm:$0xff]
    %v3106 = vld [vmem:[%s3042 + $0x1f8] sm:$0xff]
    %v3107 = vld [vmem:[%s3042 + $0x200] sm:$0xff]
    %v3108 = vld [vmem:[%s3042 + $0x208] sm:$0xff]
    %v3109 = vld [vmem:[%s3042 + $0x210] sm:$0xff]
    %v3110 = vld [vmem:[%s3042 + $0x218] sm:$0xff]
    %v3111 = vld [vmem:[%s3042 + $0x220] sm:$0xff]
    %v3112 = vld [vmem:[%s3042 + $0x228] sm:$0xff]
    %v3113 = vld [vmem:[%s3042 + $0x230] sm:$0xff]
    %v3114 = vld [vmem:[%s3042 + $0x238] sm:$0xff]
    %v3115 = vld [vmem:[%s3042 + $0x240] sm:$0xff]
    %v3116 = vld [vmem:[%s3042 + $0x248] sm:$0xff]
    %v3117 = vld [vmem:[%s3042 + $0x250] sm:$0xff]
    %v3118 = vld [vmem:[%s3042 + $0x258] sm:$0xff]
    %v3119 = vld [vmem:[%s3042 + $0x260] sm:$0xff]
    %v3120 = vld [vmem:[%s3042 + $0x268] sm:$0xff]
    %v3121 = vld [vmem:[%s3042 + $0x270] sm:$0xff]
    %v3122 = vld [vmem:[%s3042 + $0x278] sm:$0xff]
    %v3123 = vld [vmem:[%s3042 + $0x280] sm:$0xff]
    %v3124 = vld [vmem:[%s3042 + $0x288] sm:$0xff]
    %v3125 = vld [vmem:[%s3042 + $0x290] sm:$0xff]
    %v3126 = vld [vmem:[%s3042 + $0x298] sm:$0xff]
    %v3127 = vld [vmem:[%s3042 + $0x2a0] sm:$0xff]
    %v3128 = vld [vmem:[%s3042 + $0x2a8] sm:$0xff]
    %v3129 = vld [vmem:[%s3042 + $0x2b0] sm:$0xff]
    %v3130 = vld [vmem:[%s3042 + $0x2b8] sm:$0xff]
    %v3131 = vld [vmem:[%s3042 + $0x2c0] sm:$0xff]
    %v3132 = vld [vmem:[%s3042 + $0x2c8] sm:$0xff]
    %v3133 = vld [vmem:[%s3042 + $0x2d0] sm:$0xff]
    %v3134 = vld [vmem:[%s3042 + $0x2d8] sm:$0xff]
    %v3135 = vld [vmem:[%s3042 + $0x2e0] sm:$0xff]
    %v3136 = vld [vmem:[%s3042 + $0x2e8] sm:$0xff]
    %v3137 = vld [vmem:[%s3042 + $0x2f0] sm:$0xff]
    %v3138 = vld [vmem:[%s3042 + $0x2f8] sm:$0xff]
    %v3139 = vld [vmem:[%s3042 + $0x300] sm:$0xff]
    %v3140 = vld [vmem:[%s3042 + $0x308] sm:$0xff]
    %v3141 = vld [vmem:[%s3042 + $0x310] sm:$0xff]
    %v3142 = vld [vmem:[%s3042 + $0x318] sm:$0xff]
    %v3143 = vld [vmem:[%s3042 + $0x320] sm:$0xff]
    %v3144 = vld [vmem:[%s3042 + $0x328] sm:$0xff]
    %v3145 = vld [vmem:[%s3042 + $0x330] sm:$0xff]
    %v3146 = vld [vmem:[%s3042 + $0x338] sm:$0xff]
    %v3147 = vld [vmem:[%s3042 + $0x340] sm:$0xff]
    %v3148 = vld [vmem:[%s3042 + $0x348] sm:$0xff]
    %v3149 = vld [vmem:[%s3042 + $0x350] sm:$0xff]
    %v3150 = vld [vmem:[%s3042 + $0x358] sm:$0xff]
    %v3151 = vld [vmem:[%s3042 + $0x360] sm:$0xff]
    %v3152 = vld [vmem:[%s3042 + $0x368] sm:$0xff]
    %v3153 = vld [vmem:[%s3042 + $0x370] sm:$0xff]
    %v3154 = vld [vmem:[%s3042 + $0x378] sm:$0xff]
    %v3155 = vld [vmem:[%s3042 + $0x380] sm:$0xff]
    %v3156 = vld [vmem:[%s3042 + $0x388] sm:$0xff]
    %v3157 = vld [vmem:[%s3042 + $0x390] sm:$0xff]
    %v3158 = vld [vmem:[%s3042 + $0x398] sm:$0xff]
    %v3159 = vld [vmem:[%s3042 + $0x3a0] sm:$0xff]
    %v3160 = vld [vmem:[%s3042 + $0x3a8] sm:$0xff]
    %v3161 = vld [vmem:[%s3042 + $0x3b0] sm:$0xff]
    %v3162 = vld [vmem:[%s3042 + $0x3b8] sm:$0xff]
    %v3163 = vld [vmem:[%s3042 + $0x3c0] sm:$0xff]
    %v3164 = vld [vmem:[%s3042 + $0x3c8] sm:$0xff]
    %v3165 = vld [vmem:[%s3042 + $0x3d0] sm:$0xff]
    %v3166 = vld [vmem:[%s3042 + $0x3d8] sm:$0xff]
    %v3167 = vld [vmem:[%s3042 + $0x3e0] sm:$0xff]
    %v3168 = vld [vmem:[%s3042 + $0x3e8] sm:$0xff]
    %v3169 = vld [vmem:[%s3042 + $0x3f0] sm:$0xff]
    %v3170 = vld [vmem:[%s3042 + $0x3f8] sm:$0xff]
    %s3171 = scalar_lea.vmem [#allocation7], 12
    %v3172 = vld [vmem:[%s3171] sm:$0xf]
    %v3174 = vlaneseq
    %v3175 = vshrl.u32 %v3174, 7
    %v3176 = vsub.s32 0, %v3175
    %v3177 = vrot.slane %v3172, %v3176
    %v3178 = vlaneseq
    %v3179 = vshrl.u32 %v3178, 7
    %v3180 = vsub.s32 1, %v3179
    %v3181 = vrot.slane %v3172, %v3180
    %v3182 = vlaneseq
    %v3183 = vshrl.u32 %v3182, 7
    %v3184 = vsub.s32 2, %v3183
    %v3185 = vrot.slane %v3172, %v3184
    %v3186 = vlaneseq
    %v3187 = vshrl.u32 %v3186, 7
    %v3188 = vsub.s32 3, %v3187
    %v3189 = vrot.slane %v3172, %v3188
    %v3322 = vunpack.c.l.b16 %v3043
    %v3323 = vunpack.c.h.b16 %v3043
    %v3324 = vunpack.c.l.b16 %v3044
    %v3325 = vunpack.c.h.b16 %v3044
    %v3326 = vunpack.c.l.b16 %v3045
    %v3327 = vunpack.c.h.b16 %v3045
    %v3328 = vunpack.c.l.b16 %v3046
    %v3329 = vunpack.c.h.b16 %v3046
    %v3330 = vunpack.c.l.b16 %v3047
    %v3331 = vunpack.c.h.b16 %v3047
    %v3332 = vunpack.c.l.b16 %v3048
    %v3333 = vunpack.c.h.b16 %v3048
    %v3334 = vunpack.c.l.b16 %v3049
    %v3335 = vunpack.c.h.b16 %v3049
    %v3336 = vunpack.c.l.b16 %v3050
    %v3337 = vunpack.c.h.b16 %v3050
    %v3338 = vunpack.c.l.b16 %v3051
    %v3339 = vunpack.c.h.b16 %v3051
    %v3340 = vunpack.c.l.b16 %v3052
    %v3341 = vunpack.c.h.b16 %v3052
    %v3342 = vunpack.c.l.b16 %v3053
    %v3343 = vunpack.c.h.b16 %v3053
    %v3344 = vunpack.c.l.b16 %v3054
    %v3345 = vunpack.c.h.b16 %v3054
    %v3346 = vunpack.c.l.b16 %v3055
    %v3347 = vunpack.c.h.b16 %v3055
    %v3348 = vunpack.c.l.b16 %v3056
    %v3349 = vunpack.c.h.b16 %v3056
    %v3350 = vunpack.c.l.b16 %v3057
    %v3351 = vunpack.c.h.b16 %v3057
    %v3352 = vunpack.c.l.b16 %v3058
    %v3353 = vunpack.c.h.b16 %v3058
    %v3354 = vunpack.c.l.b16 %v3059
    %v3355 = vunpack.c.h.b16 %v3059
    %v3356 = vunpack.c.l.b16 %v3060
    %v3357 = vunpack.c.h.b16 %v3060
    %v3358 = vunpack.c.l.b16 %v3061
    %v3359 = vunpack.c.h.b16 %v3061
    %v3360 = vunpack.c.l.b16 %v3062
    %v3361 = vunpack.c.h.b16 %v3062
    %v3362 = vunpack.c.l.b16 %v3063
    %v3363 = vunpack.c.h.b16 %v3063
    %v3364 = vunpack.c.l.b16 %v3064
    %v3365 = vunpack.c.h.b16 %v3064
    %v3366 = vunpack.c.l.b16 %v3065
    %v3367 = vunpack.c.h.b16 %v3065
    %v3368 = vunpack.c.l.b16 %v3066
    %v3369 = vunpack.c.h.b16 %v3066
    %v3370 = vunpack.c.l.b16 %v3067
    %v3371 = vunpack.c.h.b16 %v3067
    %v3372 = vunpack.c.l.b16 %v3068
    %v3373 = vunpack.c.h.b16 %v3068
    %v3374 = vunpack.c.l.b16 %v3069
    %v3375 = vunpack.c.h.b16 %v3069
    %v3376 = vunpack.c.l.b16 %v3070
    %v3377 = vunpack.c.h.b16 %v3070
    %v3378 = vunpack.c.l.b16 %v3071
    %v3379 = vunpack.c.h.b16 %v3071
    %v3380 = vunpack.c.l.b16 %v3072
    %v3381 = vunpack.c.h.b16 %v3072
    %v3382 = vunpack.c.l.b16 %v3073
    %v3383 = vunpack.c.h.b16 %v3073
    %v3384 = vunpack.c.l.b16 %v3074
    %v3385 = vunpack.c.h.b16 %v3074
    %v3386 = vunpack.c.l.b16 %v3075
    %v3387 = vunpack.c.h.b16 %v3075
    %v3388 = vunpack.c.l.b16 %v3076
    %v3389 = vunpack.c.h.b16 %v3076
    %v3390 = vunpack.c.l.b16 %v3077
    %v3391 = vunpack.c.h.b16 %v3077
    %v3392 = vunpack.c.l.b16 %v3078
    %v3393 = vunpack.c.h.b16 %v3078
    %v3394 = vunpack.c.l.b16 %v3079
    %v3395 = vunpack.c.h.b16 %v3079
    %v3396 = vunpack.c.l.b16 %v3080
    %v3397 = vunpack.c.h.b16 %v3080
    %v3398 = vunpack.c.l.b16 %v3081
    %v3399 = vunpack.c.h.b16 %v3081
    %v3400 = vunpack.c.l.b16 %v3082
    %v3401 = vunpack.c.h.b16 %v3082
    %v3402 = vunpack.c.l.b16 %v3083
    %v3403 = vunpack.c.h.b16 %v3083
    %v3404 = vunpack.c.l.b16 %v3084
    %v3405 = vunpack.c.h.b16 %v3084
    %v3406 = vunpack.c.l.b16 %v3085
    %v3407 = vunpack.c.h.b16 %v3085
    %v3408 = vunpack.c.l.b16 %v3086
    %v3409 = vunpack.c.h.b16 %v3086
    %v3410 = vunpack.c.l.b16 %v3087
    %v3411 = vunpack.c.h.b16 %v3087
    %v3412 = vunpack.c.l.b16 %v3088
    %v3413 = vunpack.c.h.b16 %v3088
    %v3414 = vunpack.c.l.b16 %v3089
    %v3415 = vunpack.c.h.b16 %v3089
    %v3416 = vunpack.c.l.b16 %v3090
    %v3417 = vunpack.c.h.b16 %v3090
    %v3418 = vunpack.c.l.b16 %v3091
    %v3419 = vunpack.c.h.b16 %v3091
    %v3420 = vunpack.c.l.b16 %v3092
    %v3421 = vunpack.c.h.b16 %v3092
    %v3422 = vunpack.c.l.b16 %v3093
    %v3423 = vunpack.c.h.b16 %v3093
    %v3424 = vunpack.c.l.b16 %v3094
    %v3425 = vunpack.c.h.b16 %v3094
    %v3426 = vunpack.c.l.b16 %v3095
    %v3427 = vunpack.c.h.b16 %v3095
    %v3428 = vunpack.c.l.b16 %v3096
    %v3429 = vunpack.c.h.b16 %v3096
    %v3430 = vunpack.c.l.b16 %v3097
    %v3431 = vunpack.c.h.b16 %v3097
    %v3432 = vunpack.c.l.b16 %v3098
    %v3433 = vunpack.c.h.b16 %v3098
    %v3434 = vunpack.c.l.b16 %v3099
    %v3435 = vunpack.c.h.b16 %v3099
    %v3436 = vunpack.c.l.b16 %v3100
    %v3437 = vunpack.c.h.b16 %v3100
    %v3438 = vunpack.c.l.b16 %v3101
    %v3439 = vunpack.c.h.b16 %v3101
    %v3440 = vunpack.c.l.b16 %v3102
    %v3441 = vunpack.c.h.b16 %v3102
    %v3442 = vunpack.c.l.b16 %v3103
    %v3443 = vunpack.c.h.b16 %v3103
    %v3444 = vunpack.c.l.b16 %v3104
    %v3445 = vunpack.c.h.b16 %v3104
    %v3446 = vunpack.c.l.b16 %v3105
    %v3447 = vunpack.c.h.b16 %v3105
    %v3448 = vunpack.c.l.b16 %v3106
    %v3449 = vunpack.c.h.b16 %v3106
    %v3450 = vunpack.c.l.b16 %v3107
    %v3451 = vunpack.c.h.b16 %v3107
    %v3452 = vunpack.c.l.b16 %v3108
    %v3453 = vunpack.c.h.b16 %v3108
    %v3454 = vunpack.c.l.b16 %v3109
    %v3455 = vunpack.c.h.b16 %v3109
    %v3456 = vunpack.c.l.b16 %v3110
    %v3457 = vunpack.c.h.b16 %v3110
    %v3458 = vunpack.c.l.b16 %v3111
    %v3459 = vunpack.c.h.b16 %v3111
    %v3460 = vunpack.c.l.b16 %v3112
    %v3461 = vunpack.c.h.b16 %v3112
    %v3462 = vunpack.c.l.b16 %v3113
    %v3463 = vunpack.c.h.b16 %v3113
    %v3464 = vunpack.c.l.b16 %v3114
    %v3465 = vunpack.c.h.b16 %v3114
    %v3466 = vunpack.c.l.b16 %v3115
    %v3467 = vunpack.c.h.b16 %v3115
    %v3468 = vunpack.c.l.b16 %v3116
    %v3469 = vunpack.c.h.b16 %v3116
    %v3470 = vunpack.c.l.b16 %v3117
    %v3471 = vunpack.c.h.b16 %v3117
    %v3472 = vunpack.c.l.b16 %v3118
    %v3473 = vunpack.c.h.b16 %v3118
    %v3474 = vunpack.c.l.b16 %v3119
    %v3475 = vunpack.c.h.b16 %v3119
    %v3476 = vunpack.c.l.b16 %v3120
    %v3477 = vunpack.c.h.b16 %v3120
    %v3478 = vunpack.c.l.b16 %v3121
    %v3479 = vunpack.c.h.b16 %v3121
    %v3480 = vunpack.c.l.b16 %v3122
    %v3481 = vunpack.c.h.b16 %v3122
    %v3482 = vunpack.c.l.b16 %v3123
    %v3483 = vunpack.c.h.b16 %v3123
    %v3484 = vunpack.c.l.b16 %v3124
    %v3485 = vunpack.c.h.b16 %v3124
    %v3486 = vunpack.c.l.b16 %v3125
    %v3487 = vunpack.c.h.b16 %v3125
    %v3488 = vunpack.c.l.b16 %v3126
    %v3489 = vunpack.c.h.b16 %v3126
    %v3490 = vunpack.c.l.b16 %v3127
    %v3491 = vunpack.c.h.b16 %v3127
    %v3492 = vunpack.c.l.b16 %v3128
    %v3493 = vunpack.c.h.b16 %v3128
    %v3494 = vunpack.c.l.b16 %v3129
    %v3495 = vunpack.c.h.b16 %v3129
    %v3496 = vunpack.c.l.b16 %v3130
    %v3497 = vunpack.c.h.b16 %v3130
    %v3498 = vunpack.c.l.b16 %v3131
    %v3499 = vunpack.c.h.b16 %v3131
    %v3500 = vunpack.c.l.b16 %v3132
    %v3501 = vunpack.c.h.b16 %v3132
    %v3502 = vunpack.c.l.b16 %v3133
    %v3503 = vunpack.c.h.b16 %v3133
    %v3504 = vunpack.c.l.b16 %v3134
    %v3505 = vunpack.c.h.b16 %v3134
    %v3506 = vunpack.c.l.b16 %v3135
    %v3507 = vunpack.c.h.b16 %v3135
    %v3508 = vunpack.c.l.b16 %v3136
    %v3509 = vunpack.c.h.b16 %v3136
    %v3510 = vunpack.c.l.b16 %v3137
    %v3511 = vunpack.c.h.b16 %v3137
    %v3512 = vunpack.c.l.b16 %v3138
    %v3513 = vunpack.c.h.b16 %v3138
    %v3514 = vunpack.c.l.b16 %v3139
    %v3515 = vunpack.c.h.b16 %v3139
    %v3516 = vunpack.c.l.b16 %v3140
    %v3517 = vunpack.c.h.b16 %v3140
    %v3518 = vunpack.c.l.b16 %v3141
    %v3519 = vunpack.c.h.b16 %v3141
    %v3520 = vunpack.c.l.b16 %v3142
    %v3521 = vunpack.c.h.b16 %v3142
    %v3522 = vunpack.c.l.b16 %v3143
    %v3523 = vunpack.c.h.b16 %v3143
    %v3524 = vunpack.c.l.b16 %v3144
    %v3525 = vunpack.c.h.b16 %v3144
    %v3526 = vunpack.c.l.b16 %v3145
    %v3527 = vunpack.c.h.b16 %v3145
    %v3528 = vunpack.c.l.b16 %v3146
    %v3529 = vunpack.c.h.b16 %v3146
    %v3530 = vunpack.c.l.b16 %v3147
    %v3531 = vunpack.c.h.b16 %v3147
    %v3532 = vunpack.c.l.b16 %v3148
    %v3533 = vunpack.c.h.b16 %v3148
    %v3534 = vunpack.c.l.b16 %v3149
    %v3535 = vunpack.c.h.b16 %v3149
    %v3536 = vunpack.c.l.b16 %v3150
    %v3537 = vunpack.c.h.b16 %v3150
    %v3538 = vunpack.c.l.b16 %v3151
    %v3539 = vunpack.c.h.b16 %v3151
    %v3540 = vunpack.c.l.b16 %v3152
    %v3541 = vunpack.c.h.b16 %v3152
    %v3542 = vunpack.c.l.b16 %v3153
    %v3543 = vunpack.c.h.b16 %v3153
    %v3544 = vunpack.c.l.b16 %v3154
    %v3545 = vunpack.c.h.b16 %v3154
    %v3546 = vunpack.c.l.b16 %v3155
    %v3547 = vunpack.c.h.b16 %v3155
    %v3548 = vunpack.c.l.b16 %v3156
    %v3549 = vunpack.c.h.b16 %v3156
    %v3550 = vunpack.c.l.b16 %v3157
    %v3551 = vunpack.c.h.b16 %v3157
    %v3552 = vunpack.c.l.b16 %v3158
    %v3553 = vunpack.c.h.b16 %v3158
    %v3554 = vunpack.c.l.b16 %v3159
    %v3555 = vunpack.c.h.b16 %v3159
    %v3556 = vunpack.c.l.b16 %v3160
    %v3557 = vunpack.c.h.b16 %v3160
    %v3558 = vunpack.c.l.b16 %v3161
    %v3559 = vunpack.c.h.b16 %v3161
    %v3560 = vunpack.c.l.b16 %v3162
    %v3561 = vunpack.c.h.b16 %v3162
    %v3562 = vunpack.c.l.b16 %v3163
    %v3563 = vunpack.c.h.b16 %v3163
    %v3564 = vunpack.c.l.b16 %v3164
    %v3565 = vunpack.c.h.b16 %v3164
    %v3566 = vunpack.c.l.b16 %v3165
    %v3567 = vunpack.c.h.b16 %v3165
    %v3568 = vunpack.c.l.b16 %v3166
    %v3569 = vunpack.c.h.b16 %v3166
    %v3570 = vunpack.c.l.b16 %v3167
    %v3571 = vunpack.c.h.b16 %v3167
    %v3572 = vunpack.c.l.b16 %v3168
    %v3573 = vunpack.c.h.b16 %v3168
    %v3574 = vunpack.c.l.b16 %v3169
    %v3575 = vunpack.c.h.b16 %v3169
    %v3576 = vunpack.c.l.b16 %v3170
    %v3577 = vunpack.c.h.b16 %v3170
    %v3578 = vpack.c.b16 %v3326, %v3322
    %v3579 = vpack.c.b16 %v3327, %v3323
    %v3580 = vpack.c.b16 %v3328, %v3324
    %v3581 = vpack.c.b16 %v3329, %v3325
    %v3582 = vpack.c.b16 %v3334, %v3330
    %v3583 = vpack.c.b16 %v3335, %v3331
    %v3584 = vpack.c.b16 %v3336, %v3332
    %v3585 = vpack.c.b16 %v3337, %v3333
    %v3586 = vpack.c.b16 %v3342, %v3338
    %v3587 = vpack.c.b16 %v3343, %v3339
    %v3588 = vpack.c.b16 %v3344, %v3340
    %v3589 = vpack.c.b16 %v3345, %v3341
    %v3590 = vpack.c.b16 %v3350, %v3346
    %v3591 = vpack.c.b16 %v3351, %v3347
    %v3592 = vpack.c.b16 %v3352, %v3348
    %v3593 = vpack.c.b16 %v3353, %v3349
    %v3594 = vpack.c.b16 %v3358, %v3354
    %v3595 = vpack.c.b16 %v3359, %v3355
    %v3596 = vpack.c.b16 %v3360, %v3356
    %v3597 = vpack.c.b16 %v3361, %v3357
    %v3598 = vpack.c.b16 %v3366, %v3362
    %v3599 = vpack.c.b16 %v3367, %v3363
    %v3600 = vpack.c.b16 %v3368, %v3364
    %v3601 = vpack.c.b16 %v3369, %v3365
    %v3602 = vpack.c.b16 %v3374, %v3370
    %v3603 = vpack.c.b16 %v3375, %v3371
    %v3604 = vpack.c.b16 %v3376, %v3372
    %v3605 = vpack.c.b16 %v3377, %v3373
    %v3606 = vpack.c.b16 %v3382, %v3378
    %v3607 = vpack.c.b16 %v3383, %v3379
    %v3608 = vpack.c.b16 %v3384, %v3380
    %v3609 = vpack.c.b16 %v3385, %v3381
    %v3610 = vpack.c.b16 %v3390, %v3386
    %v3611 = vpack.c.b16 %v3391, %v3387
    %v3612 = vpack.c.b16 %v3392, %v3388
    %v3613 = vpack.c.b16 %v3393, %v3389
    %v3614 = vpack.c.b16 %v3398, %v3394
    %v3615 = vpack.c.b16 %v3399, %v3395
    %v3616 = vpack.c.b16 %v3400, %v3396
    %v3617 = vpack.c.b16 %v3401, %v3397
    %v3618 = vpack.c.b16 %v3406, %v3402
    %v3619 = vpack.c.b16 %v3407, %v3403
    %v3620 = vpack.c.b16 %v3408, %v3404
    %v3621 = vpack.c.b16 %v3409, %v3405
    %v3622 = vpack.c.b16 %v3414, %v3410
    %v3623 = vpack.c.b16 %v3415, %v3411
    %v3624 = vpack.c.b16 %v3416, %v3412
    %v3625 = vpack.c.b16 %v3417, %v3413
    %v3626 = vpack.c.b16 %v3422, %v3418
    %v3627 = vpack.c.b16 %v3423, %v3419
    %v3628 = vpack.c.b16 %v3424, %v3420
    %v3629 = vpack.c.b16 %v3425, %v3421
    %v3630 = vpack.c.b16 %v3430, %v3426
    %v3631 = vpack.c.b16 %v3431, %v3427
    %v3632 = vpack.c.b16 %v3432, %v3428
    %v3633 = vpack.c.b16 %v3433, %v3429
    %v3634 = vpack.c.b16 %v3438, %v3434
    %v3635 = vpack.c.b16 %v3439, %v3435
    %v3636 = vpack.c.b16 %v3440, %v3436
    %v3637 = vpack.c.b16 %v3441, %v3437
    %v3638 = vpack.c.b16 %v3446, %v3442
    %v3639 = vpack.c.b16 %v3447, %v3443
    %v3640 = vpack.c.b16 %v3448, %v3444
    %v3641 = vpack.c.b16 %v3449, %v3445
    %v3642 = vpack.c.b16 %v3454, %v3450
    %v3643 = vpack.c.b16 %v3455, %v3451
    %v3644 = vpack.c.b16 %v3456, %v3452
    %v3645 = vpack.c.b16 %v3457, %v3453
    %v3646 = vpack.c.b16 %v3462, %v3458
    %v3647 = vpack.c.b16 %v3463, %v3459
    %v3648 = vpack.c.b16 %v3464, %v3460
    %v3649 = vpack.c.b16 %v3465, %v3461
    %v3650 = vpack.c.b16 %v3470, %v3466
    %v3651 = vpack.c.b16 %v3471, %v3467
    %v3652 = vpack.c.b16 %v3472, %v3468
    %v3653 = vpack.c.b16 %v3473, %v3469
    %v3654 = vpack.c.b16 %v3478, %v3474
    %v3655 = vpack.c.b16 %v3479, %v3475
    %v3656 = vpack.c.b16 %v3480, %v3476
    %v3657 = vpack.c.b16 %v3481, %v3477
    %v3658 = vpack.c.b16 %v3486, %v3482
    %v3659 = vpack.c.b16 %v3487, %v3483
    %v3660 = vpack.c.b16 %v3488, %v3484
    %v3661 = vpack.c.b16 %v3489, %v3485
    %v3662 = vpack.c.b16 %v3494, %v3490
    %v3663 = vpack.c.b16 %v3495, %v3491
    %v3664 = vpack.c.b16 %v3496, %v3492
    %v3665 = vpack.c.b16 %v3497, %v3493
    %v3666 = vpack.c.b16 %v3502, %v3498
    %v3667 = vpack.c.b16 %v3503, %v3499
    %v3668 = vpack.c.b16 %v3504, %v3500
    %v3669 = vpack.c.b16 %v3505, %v3501
    %v3670 = vpack.c.b16 %v3510, %v3506
    %v3671 = vpack.c.b16 %v3511, %v3507
    %v3672 = vpack.c.b16 %v3512, %v3508
    %v3673 = vpack.c.b16 %v3513, %v3509
    %v3674 = vpack.c.b16 %v3518, %v3514
    %v3675 = vpack.c.b16 %v3519, %v3515
    %v3676 = vpack.c.b16 %v3520, %v3516
    %v3677 = vpack.c.b16 %v3521, %v3517
    %v3678 = vpack.c.b16 %v3526, %v3522
    %v3679 = vpack.c.b16 %v3527, %v3523
    %v3680 = vpack.c.b16 %v3528, %v3524
    %v3681 = vpack.c.b16 %v3529, %v3525
    %v3682 = vpack.c.b16 %v3534, %v3530
    %v3683 = vpack.c.b16 %v3535, %v3531
    %v3684 = vpack.c.b16 %v3536, %v3532
    %v3685 = vpack.c.b16 %v3537, %v3533
    %v3686 = vpack.c.b16 %v3542, %v3538
    %v3687 = vpack.c.b16 %v3543, %v3539
    %v3688 = vpack.c.b16 %v3544, %v3540
    %v3689 = vpack.c.b16 %v3545, %v3541
    %v3690 = vpack.c.b16 %v3550, %v3546
    %v3691 = vpack.c.b16 %v3551, %v3547
    %v3692 = vpack.c.b16 %v3552, %v3548
    %v3693 = vpack.c.b16 %v3553, %v3549
    %v3694 = vpack.c.b16 %v3558, %v3554
    %v3695 = vpack.c.b16 %v3559, %v3555
    %v3696 = vpack.c.b16 %v3560, %v3556
    %v3697 = vpack.c.b16 %v3561, %v3557
    %v3698 = vpack.c.b16 %v3566, %v3562
    %v3699 = vpack.c.b16 %v3567, %v3563
    %v3700 = vpack.c.b16 %v3568, %v3564
    %v3701 = vpack.c.b16 %v3569, %v3565
    %v3702 = vpack.c.b16 %v3574, %v3570
    %v3703 = vpack.c.b16 %v3575, %v3571
    %v3704 = vpack.c.b16 %v3576, %v3572
    %v3705 = vpack.c.b16 %v3577, %v3573
    %3834 = vmatprep.subr.bf16.mxu0 %v3579
    %3835 = vmatpush1.bf16.msra.mxu0 %v3578
    %3836 = vmatprep.subr.bf16.mxu0 %v3583
    %3837 = vmatpush1.bf16.msra.mxu0 %v3582
    %3838 = vmatprep.subr.bf16.mxu0 %v3587
    %3839 = vmatpush1.bf16.msra.mxu0 %v3586
    %3840 = vmatprep.subr.bf16.mxu0 %v3591
    %3841 = vmatpush1.bf16.msra.mxu0 %v3590
    %3842 = vmatprep.subr.bf16.mxu0 %v3595
    %3843 = vmatpush1.bf16.msra.mxu0 %v3594
    %3844 = vmatprep.subr.bf16.mxu0 %v3599
    %3845 = vmatpush1.bf16.msra.mxu0 %v3598
    %3846 = vmatprep.subr.bf16.mxu0 %v3603
    %3847 = vmatpush1.bf16.msra.mxu0 %v3602
    %3848 = vmatprep.subr.bf16.mxu0 %v3607
    %3849 = vmatpush1.bf16.msra.mxu0 %v3606
    %3850 = vmatprep.subr.bf16.mxu0 %v3611
    %3851 = vmatpush1.bf16.msra.mxu0 %v3610
    %3852 = vmatprep.subr.bf16.mxu0 %v3615
    %3853 = vmatpush1.bf16.msra.mxu0 %v3614
    %3854 = vmatprep.subr.bf16.mxu0 %v3619
    %3855 = vmatpush1.bf16.msra.mxu0 %v3618
    %3856 = vmatprep.subr.bf16.mxu0 %v3623
    %3857 = vmatpush1.bf16.msra.mxu0 %v3622
    %3858 = vmatprep.subr.bf16.mxu0 %v3627
    %3859 = vmatpush1.bf16.msra.mxu0 %v3626
    %3860 = vmatprep.subr.bf16.mxu0 %v3631
    %3861 = vmatpush1.bf16.msra.mxu0 %v3630
    %3862 = vmatprep.subr.bf16.mxu0 %v3635
    %3863 = vmatpush1.bf16.msra.mxu0 %v3634
    %3864 = vmatprep.subr.bf16.mxu0 %v3639
    %3865 = vmatpush1.bf16.msra.mxu0 %v3638
    %3866 = vmatprep.mubr.bf16.mxu0 %v3039
    %3867 = vmatmul.mubr.bf16.gmra.mrb[0].mxu0 %v3038
    %v3868 = vpop.f32.mrb[0].mxu0
    %v3869 = vadd.f32 %v3177, %v3868
    %v3870 = vpop.f32.mrb[0].mxu0
    %v3871 = vadd.f32 %v3181, %v3870
    %v3872 = vpop.f32.mrb[0].mxu0
    %v3873 = vpop.f32.mrb[0].mxu0
    %3874 = vdwg.mxu0
    %3875 = vmatprep.subr.bf16.mxu0 %v3643
    %3876 = vmatpush1.bf16.msra.mxu0 %v3642
    %3877 = vmatprep.subr.bf16.mxu0 %v3647
    %3878 = vmatpush1.bf16.msra.mxu0 %v3646
    %3879 = vmatprep.subr.bf16.mxu0 %v3651
    %3880 = vmatpush1.bf16.msra.mxu0 %v3650
    %3881 = vmatprep.subr.bf16.mxu0 %v3655
    %3882 = vmatpush1.bf16.msra.mxu0 %v3654
    %3883 = vmatprep.subr.bf16.mxu0 %v3659
    %3884 = vmatpush1.bf16.msra.mxu0 %v3658
    %3885 = vmatprep.subr.bf16.mxu0 %v3663
    %3886 = vmatpush1.bf16.msra.mxu0 %v3662
    %3887 = vmatprep.subr.bf16.mxu0 %v3667
    %3888 = vmatpush1.bf16.msra.mxu0 %v3666
    %3889 = vmatprep.subr.bf16.mxu0 %v3671
    %3890 = vmatpush1.bf16.msra.mxu0 %v3670
    %3891 = vmatprep.subr.bf16.mxu0 %v3675
    %3892 = vmatpush1.bf16.msra.mxu0 %v3674
    %3893 = vmatprep.subr.bf16.mxu0 %v3679
    %3894 = vmatpush1.bf16.msra.mxu0 %v3678
    %3895 = vmatprep.subr.bf16.mxu0 %v3683
    %3896 = vmatpush1.bf16.msra.mxu0 %v3682
    %3897 = vmatprep.subr.bf16.mxu0 %v3687
    %3898 = vmatpush1.bf16.msra.mxu0 %v3686
    %3899 = vmatprep.subr.bf16.mxu0 %v3691
    %3900 = vmatpush1.bf16.msra.mxu0 %v3690
    %3901 = vmatprep.subr.bf16.mxu0 %v3695
    %3902 = vmatpush1.bf16.msra.mxu0 %v3694
    %3903 = vmatprep.subr.bf16.mxu0 %v3699
    %3904 = vmatpush1.bf16.msra.mxu0 %v3698
    %3905 = vmatprep.subr.bf16.mxu0 %v3703
    %3906 = vmatpush1.bf16.msra.mxu0 %v3702
    %3907 = vmatprep.mubr.bf16.mxu0 %v3041
    %3908 = vmatmul.mubr.bf16.gmra.mrb[0].mxu0 %v3040
    %v3909 = vpop.f32.mrb[0].mxu0
    %v3910 = vadd.f32 %v3869, %v3909
    %v3911 = vpop.f32.mrb[0].mxu0
    %v3912 = vadd.f32 %v3871, %v3911
    %v3913 = vpop.f32.mrb[0].mxu0
    %v3914 = vpop.f32.mrb[0].mxu0
    %3915 = vdwg.mxu0
    %3916 = vmatprep.subr.bf16.mxu0 %v3581
    %3917 = vmatpush1.bf16.msra.mxu0 %v3580
    %3918 = vmatprep.subr.bf16.mxu0 %v3585
    %3919 = vmatpush1.bf16.msra.mxu0 %v3584
    %3920 = vmatprep.subr.bf16.mxu0 %v3589
    %3921 = vmatpush1.bf16.msra.mxu0 %v3588
    %3922 = vmatprep.subr.bf16.mxu0 %v3593
    %3923 = vmatpush1.bf16.msra.mxu0 %v3592
    %3924 = vmatprep.subr.bf16.mxu0 %v3597
    %3925 = vmatpush1.bf16.msra.mxu0 %v3596
    %3926 = vmatprep.subr.bf16.mxu0 %v3601
    %3927 = vmatpush1.bf16.msra.mxu0 %v3600
    %3928 = vmatprep.subr.bf16.mxu0 %v3605
    %3929 = vmatpush1.bf16.msra.mxu0 %v3604
    %3930 = vmatprep.subr.bf16.mxu0 %v3609
    %3931 = vmatpush1.bf16.msra.mxu0 %v3608
    %3932 = vmatprep.subr.bf16.mxu0 %v3613
    %3933 = vmatpush1.bf16.msra.mxu0 %v3612
    %3934 = vmatprep.subr.bf16.mxu0 %v3617
    %3935 = vmatpush1.bf16.msra.mxu0 %v3616
    %3936 = vmatprep.subr.bf16.mxu0 %v3621
    %3937 = vmatpush1.bf16.msra.mxu0 %v3620
    %3938 = vmatprep.subr.bf16.mxu0 %v3625
    %3939 = vmatpush1.bf16.msra.mxu0 %v3624
    %3940 = vmatprep.subr.bf16.mxu0 %v3629
    %3941 = vmatpush1.bf16.msra.mxu0 %v3628
    %3942 = vmatprep.subr.bf16.mxu0 %v3633
    %3943 = vmatpush1.bf16.msra.mxu0 %v3632
    %3944 = vmatprep.subr.bf16.mxu0 %v3637
    %3945 = vmatpush1.bf16.msra.mxu0 %v3636
    %3946 = vmatprep.subr.bf16.mxu0 %v3641
    %3947 = vmatpush1.bf16.msra.mxu0 %v3640
    %3948 = vmatprep.mubr.bf16.mxu0 %v3039
    %3949 = vmatmul.mubr.bf16.gmra.mrb[0].mxu0 %v3038
    %v3950 = vpop.f32.mrb[0].mxu0
    %v3951 = vadd.f32 %v3185, %v3950
    %v3952 = vpop.f32.mrb[0].mxu0
    %v3953 = vadd.f32 %v3189, %v3952
    %v3954 = vpop.f32.mrb[0].mxu0
    %v3955 = vpop.f32.mrb[0].mxu0
    %3956 = vdwg.mxu0
    %3957 = vmatprep.subr.bf16.mxu0 %v3645
    %3958 = vmatpush1.bf16.msra.mxu0 %v3644
    %3959 = vmatprep.subr.bf16.mxu0 %v3649
    %3960 = vmatpush1.bf16.msra.mxu0 %v3648
    %3961 = vmatprep.subr.bf16.mxu0 %v3653
    %3962 = vmatpush1.bf16.msra.mxu0 %v3652
    %3963 = vmatprep.subr.bf16.mxu0 %v3657
    %3964 = vmatpush1.bf16.msra.mxu0 %v3656
    %3965 = vmatprep.subr.bf16.mxu0 %v3661
    %3966 = vmatpush1.bf16.msra.mxu0 %v3660
    %3967 = vmatprep.subr.bf16.mxu0 %v3665
    %3968 = vmatpush1.bf16.msra.mxu0 %v3664
    %3969 = vmatprep.subr.bf16.mxu0 %v3669
    %3970 = vmatpush1.bf16.msra.mxu0 %v3668
    %3971 = vmatprep.subr.bf16.mxu0 %v3673
    %3972 = vmatpush1.bf16.msra.mxu0 %v3672
    %3973 = vmatprep.subr.bf16.mxu0 %v3677
    %3974 = vmatpush1.bf16.msra.mxu0 %v3676
    %3975 = vmatprep.subr.bf16.mxu0 %v3681
    %3976 = vmatpush1.bf16.msra.mxu0 %v3680
    %3977 = vmatprep.subr.bf16.mxu0 %v3685
    %3978 = vmatpush1.bf16.msra.mxu0 %v3684
    %3979 = vmatprep.subr.bf16.mxu0 %v3689
    %3980 = vmatpush1.bf16.msra.mxu0 %v3688
    %3981 = vmatprep.subr.bf16.mxu0 %v3693
    %3982 = vmatpush1.bf16.msra.mxu0 %v3692
    %3983 = vmatprep.subr.bf16.mxu0 %v3697
    %3984 = vmatpush1.bf16.msra.mxu0 %v3696
    %3985 = vmatprep.subr.bf16.mxu0 %v3701
    %3986 = vmatpush1.bf16.msra.mxu0 %v3700
    %3987 = vmatprep.subr.bf16.mxu0 %v3705
    %3988 = vmatpush1.bf16.msra.mxu0 %v3704
    %3989 = vmatprep.mubr.bf16.mxu0 %v3041
    %3990 = vmatmul.mubr.bf16.gmra.mrb[0].mxu0 %v3040
    %v3991 = vpop.f32.mrb[0].mxu0
    %v3992 = vadd.f32 %v3951, %v3991
    %v3993 = vpop.f32.mrb[0].mxu0
    %v3994 = vadd.f32 %v3953, %v3993
    %v3995 = vpop.f32.mrb[0].mxu0
    %v3996 = vpop.f32.mrb[0].mxu0
    %3997 = vdwg.mxu0
    %vm3998 = vcmp.ge.f32.partialorder %v3910, 0.0
    %vm3999 = vcmp.ge.f32.partialorder %v3912, 0.0
    %vm4000 = vcmp.ge.f32.partialorder %v3992, 0.0
    %vm4001 = vcmp.ge.f32.partialorder %v3994, 0.0
    %v4002 = vmul.f32 %v3910, 0.2
    %v4003 = vmul.f32 %v3912, 0.2
    %v4004 = vmul.f32 %v3992, 0.2
    %v4005 = vmul.f32 %v3994, 0.2
    %v4006 = vsel %vm3998, %v3910, %v4002
    %v4007 = vsel %vm3999, %v3912, %v4003
    %v4008 = vsel %vm4000, %v3992, %v4004
    %v4009 = vsel %vm4001, %v3994, %v4005
    %v4010 = vpack.c.bf16 %v4006, %v4006
    %v4011 = vpack.c.bf16 %v4007, %v4007
    %v4012 = vpack.c.bf16 %v4008, %v4008
    %v4013 = vpack.c.bf16 %v4009, %v4009
    %s4014 = scalar_lea.vmem [#allocation5], 4096
    %v4015 = vld [vmem:[%s4014] sm:$0xff]
    %v4016 = vld [vmem:[%s4014 + $0x8] sm:$0xff]
    %v4017 = vld [vmem:[%s4014 + $0x10] sm:$0xff]
    %v4018 = vld [vmem:[%s4014 + $0x18] sm:$0xff]
    %v4019 = vld [vmem:[%s4014 + $0x20] sm:$0xff]
    %v4020 = vld [vmem:[%s4014 + $0x28] sm:$0xff]
    %v4021 = vld [vmem:[%s4014 + $0x30] sm:$0xff]
    %v4022 = vld [vmem:[%s4014 + $0x38] sm:$0xff]
    %v4023 = vld [vmem:[%s4014 + $0x40] sm:$0xff]
    %v4024 = vld [vmem:[%s4014 + $0x48] sm:$0xff]
    %v4025 = vld [vmem:[%s4014 + $0x50] sm:$0xff]
    %v4026 = vld [vmem:[%s4014 + $0x58] sm:$0xff]
    %v4027 = vld [vmem:[%s4014 + $0x60] sm:$0xff]
    %v4028 = vld [vmem:[%s4014 + $0x68] sm:$0xff]
    %v4029 = vld [vmem:[%s4014 + $0x70] sm:$0xff]
    %v4030 = vld [vmem:[%s4014 + $0x78] sm:$0xff]
    %v4031 = vld [vmem:[%s4014 + $0x80] sm:$0xff]
    %v4032 = vld [vmem:[%s4014 + $0x88] sm:$0xff]
    %v4033 = vld [vmem:[%s4014 + $0x90] sm:$0xff]
    %v4034 = vld [vmem:[%s4014 + $0x98] sm:$0xff]
    %v4035 = vld [vmem:[%s4014 + $0xa0] sm:$0xff]
    %v4036 = vld [vmem:[%s4014 + $0xa8] sm:$0xff]
    %v4037 = vld [vmem:[%s4014 + $0xb0] sm:$0xff]
    %v4038 = vld [vmem:[%s4014 + $0xb8] sm:$0xff]
    %v4039 = vld [vmem:[%s4014 + $0xc0] sm:$0xff]
    %v4040 = vld [vmem:[%s4014 + $0xc8] sm:$0xff]
    %v4041 = vld [vmem:[%s4014 + $0xd0] sm:$0xff]
    %v4042 = vld [vmem:[%s4014 + $0xd8] sm:$0xff]
    %v4043 = vld [vmem:[%s4014 + $0xe0] sm:$0xff]
    %v4044 = vld [vmem:[%s4014 + $0xe8] sm:$0xff]
    %v4045 = vld [vmem:[%s4014 + $0xf0] sm:$0xff]
    %v4046 = vld [vmem:[%s4014 + $0xf8] sm:$0xff]
    %v4047 = vld [vmem:[%s4014 + $0x100] sm:$0xff]
    %v4048 = vld [vmem:[%s4014 + $0x108] sm:$0xff]
    %v4049 = vld [vmem:[%s4014 + $0x110] sm:$0xff]
    %v4050 = vld [vmem:[%s4014 + $0x118] sm:$0xff]
    %v4051 = vld [vmem:[%s4014 + $0x120] sm:$0xff]
    %v4052 = vld [vmem:[%s4014 + $0x128] sm:$0xff]
    %v4053 = vld [vmem:[%s4014 + $0x130] sm:$0xff]
    %v4054 = vld [vmem:[%s4014 + $0x138] sm:$0xff]
    %v4055 = vld [vmem:[%s4014 + $0x140] sm:$0xff]
    %v4056 = vld [vmem:[%s4014 + $0x148] sm:$0xff]
    %v4057 = vld [vmem:[%s4014 + $0x150] sm:$0xff]
    %v4058 = vld [vmem:[%s4014 + $0x158] sm:$0xff]
    %v4059 = vld [vmem:[%s4014 + $0x160] sm:$0xff]
    %v4060 = vld [vmem:[%s4014 + $0x168] sm:$0xff]
    %v4061 = vld [vmem:[%s4014 + $0x170] sm:$0xff]
    %v4062 = vld [vmem:[%s4014 + $0x178] sm:$0xff]
    %v4063 = vld [vmem:[%s4014 + $0x180] sm:$0xff]
    %v4064 = vld [vmem:[%s4014 + $0x188] sm:$0xff]
    %v4065 = vld [vmem:[%s4014 + $0x190] sm:$0xff]
    %v4066 = vld [vmem:[%s4014 + $0x198] sm:$0xff]
    %v4067 = vld [vmem:[%s4014 + $0x1a0] sm:$0xff]
    %v4068 = vld [vmem:[%s4014 + $0x1a8] sm:$0xff]
    %v4069 = vld [vmem:[%s4014 + $0x1b0] sm:$0xff]
    %v4070 = vld [vmem:[%s4014 + $0x1b8] sm:$0xff]
    %v4071 = vld [vmem:[%s4014 + $0x1c0] sm:$0xff]
    %v4072 = vld [vmem:[%s4014 + $0x1c8] sm:$0xff]
    %v4073 = vld [vmem:[%s4014 + $0x1d0] sm:$0xff]
    %v4074 = vld [vmem:[%s4014 + $0x1d8] sm:$0xff]
    %v4075 = vld [vmem:[%s4014 + $0x1e0] sm:$0xff]
    %v4076 = vld [vmem:[%s4014 + $0x1e8] sm:$0xff]
    %v4077 = vld [vmem:[%s4014 + $0x1f0] sm:$0xff]
    %v4078 = vld [vmem:[%s4014 + $0x1f8] sm:$0xff]
    %v4079 = vld [vmem:[%s4014 + $0x200] sm:$0xff]
    %v4080 = vld [vmem:[%s4014 + $0x208] sm:$0xff]
    %v4081 = vld [vmem:[%s4014 + $0x210] sm:$0xff]
    %v4082 = vld [vmem:[%s4014 + $0x218] sm:$0xff]
    %v4083 = vld [vmem:[%s4014 + $0x220] sm:$0xff]
    %v4084 = vld [vmem:[%s4014 + $0x228] sm:$0xff]
    %v4085 = vld [vmem:[%s4014 + $0x230] sm:$0xff]
    %v4086 = vld [vmem:[%s4014 + $0x238] sm:$0xff]
    %v4087 = vld [vmem:[%s4014 + $0x240] sm:$0xff]
    %v4088 = vld [vmem:[%s4014 + $0x248] sm:$0xff]
    %v4089 = vld [vmem:[%s4014 + $0x250] sm:$0xff]
    %v4090 = vld [vmem:[%s4014 + $0x258] sm:$0xff]
    %v4091 = vld [vmem:[%s4014 + $0x260] sm:$0xff]
    %v4092 = vld [vmem:[%s4014 + $0x268] sm:$0xff]
    %v4093 = vld [vmem:[%s4014 + $0x270] sm:$0xff]
    %v4094 = vld [vmem:[%s4014 + $0x278] sm:$0xff]
    %v4095 = vld [vmem:[%s4014 + $0x280] sm:$0xff]
    %v4096 = vld [vmem:[%s4014 + $0x288] sm:$0xff]
    %v4097 = vld [vmem:[%s4014 + $0x290] sm:$0xff]
    %v4098 = vld [vmem:[%s4014 + $0x298] sm:$0xff]
    %v4099 = vld [vmem:[%s4014 + $0x2a0] sm:$0xff]
    %v4100 = vld [vmem:[%s4014 + $0x2a8] sm:$0xff]
    %v4101 = vld [vmem:[%s4014 + $0x2b0] sm:$0xff]
    %v4102 = vld [vmem:[%s4014 + $0x2b8] sm:$0xff]
    %v4103 = vld [vmem:[%s4014 + $0x2c0] sm:$0xff]
    %v4104 = vld [vmem:[%s4014 + $0x2c8] sm:$0xff]
    %v4105 = vld [vmem:[%s4014 + $0x2d0] sm:$0xff]
    %v4106 = vld [vmem:[%s4014 + $0x2d8] sm:$0xff]
    %v4107 = vld [vmem:[%s4014 + $0x2e0] sm:$0xff]
    %v4108 = vld [vmem:[%s4014 + $0x2e8] sm:$0xff]
    %v4109 = vld [vmem:[%s4014 + $0x2f0] sm:$0xff]
    %v4110 = vld [vmem:[%s4014 + $0x2f8] sm:$0xff]
    %v4111 = vld [vmem:[%s4014 + $0x300] sm:$0xff]
    %v4112 = vld [vmem:[%s4014 + $0x308] sm:$0xff]
    %v4113 = vld [vmem:[%s4014 + $0x310] sm:$0xff]
    %v4114 = vld [vmem:[%s4014 + $0x318] sm:$0xff]
    %v4115 = vld [vmem:[%s4014 + $0x320] sm:$0xff]
    %v4116 = vld [vmem:[%s4014 + $0x328] sm:$0xff]
    %v4117 = vld [vmem:[%s4014 + $0x330] sm:$0xff]
    %v4118 = vld [vmem:[%s4014 + $0x338] sm:$0xff]
    %v4119 = vld [vmem:[%s4014 + $0x340] sm:$0xff]
    %v4120 = vld [vmem:[%s4014 + $0x348] sm:$0xff]
    %v4121 = vld [vmem:[%s4014 + $0x350] sm:$0xff]
    %v4122 = vld [vmem:[%s4014 + $0x358] sm:$0xff]
    %v4123 = vld [vmem:[%s4014 + $0x360] sm:$0xff]
    %v4124 = vld [vmem:[%s4014 + $0x368] sm:$0xff]
    %v4125 = vld [vmem:[%s4014 + $0x370] sm:$0xff]
    %v4126 = vld [vmem:[%s4014 + $0x378] sm:$0xff]
    %v4127 = vld [vmem:[%s4014 + $0x380] sm:$0xff]
    %v4128 = vld [vmem:[%s4014 + $0x388] sm:$0xff]
    %v4129 = vld [vmem:[%s4014 + $0x390] sm:$0xff]
    %v4130 = vld [vmem:[%s4014 + $0x398] sm:$0xff]
    %v4131 = vld [vmem:[%s4014 + $0x3a0] sm:$0xff]
    %v4132 = vld [vmem:[%s4014 + $0x3a8] sm:$0xff]
    %v4133 = vld [vmem:[%s4014 + $0x3b0] sm:$0xff]
    %v4134 = vld [vmem:[%s4014 + $0x3b8] sm:$0xff]
    %v4135 = vld [vmem:[%s4014 + $0x3c0] sm:$0xff]
    %v4136 = vld [vmem:[%s4014 + $0x3c8] sm:$0xff]
    %v4137 = vld [vmem:[%s4014 + $0x3d0] sm:$0xff]
    %v4138 = vld [vmem:[%s4014 + $0x3d8] sm:$0xff]
    %v4139 = vld [vmem:[%s4014 + $0x3e0] sm:$0xff]
    %v4140 = vld [vmem:[%s4014 + $0x3e8] sm:$0xff]
    %v4141 = vld [vmem:[%s4014 + $0x3f0] sm:$0xff]
    %v4142 = vld [vmem:[%s4014 + $0x3f8] sm:$0xff]
    %s4143 = scalar_lea.vmem [#allocation7], 16
    %v4144 = vld [vmem:[%s4143] sm:$0xf]
    %v4146 = vlaneseq
    %v4147 = vshrl.u32 %v4146, 7
    %v4148 = vsub.s32 0, %v4147
    %v4149 = vrot.slane %v4144, %v4148
    %v4150 = vlaneseq
    %v4151 = vshrl.u32 %v4150, 7
    %v4152 = vsub.s32 1, %v4151
    %v4153 = vrot.slane %v4144, %v4152
    %v4154 = vlaneseq
    %v4155 = vshrl.u32 %v4154, 7
    %v4156 = vsub.s32 2, %v4155
    %v4157 = vrot.slane %v4144, %v4156
    %v4158 = vlaneseq
    %v4159 = vshrl.u32 %v4158, 7
    %v4160 = vsub.s32 3, %v4159
    %v4161 = vrot.slane %v4144, %v4160
    %v4294 = vunpack.c.l.b16 %v4015
    %v4295 = vunpack.c.h.b16 %v4015
    %v4296 = vunpack.c.l.b16 %v4016
    %v4297 = vunpack.c.h.b16 %v4016
    %v4298 = vunpack.c.l.b16 %v4017
    %v4299 = vunpack.c.h.b16 %v4017
    %v4300 = vunpack.c.l.b16 %v4018
    %v4301 = vunpack.c.h.b16 %v4018
    %v4302 = vunpack.c.l.b16 %v4019
    %v4303 = vunpack.c.h.b16 %v4019
    %v4304 = vunpack.c.l.b16 %v4020
    %v4305 = vunpack.c.h.b16 %v4020
    %v4306 = vunpack.c.l.b16 %v4021
    %v4307 = vunpack.c.h.b16 %v4021
    %v4308 = vunpack.c.l.b16 %v4022
    %v4309 = vunpack.c.h.b16 %v4022
    %v4310 = vunpack.c.l.b16 %v4023
    %v4311 = vunpack.c.h.b16 %v4023
    %v4312 = vunpack.c.l.b16 %v4024
    %v4313 = vunpack.c.h.b16 %v4024
    %v4314 = vunpack.c.l.b16 %v4025
    %v4315 = vunpack.c.h.b16 %v4025
    %v4316 = vunpack.c.l.b16 %v4026
    %v4317 = vunpack.c.h.b16 %v4026
    %v4318 = vunpack.c.l.b16 %v4027
    %v4319 = vunpack.c.h.b16 %v4027
    %v4320 = vunpack.c.l.b16 %v4028
    %v4321 = vunpack.c.h.b16 %v4028
    %v4322 = vunpack.c.l.b16 %v4029
    %v4323 = vunpack.c.h.b16 %v4029
    %v4324 = vunpack.c.l.b16 %v4030
    %v4325 = vunpack.c.h.b16 %v4030
    %v4326 = vunpack.c.l.b16 %v4031
    %v4327 = vunpack.c.h.b16 %v4031
    %v4328 = vunpack.c.l.b16 %v4032
    %v4329 = vunpack.c.h.b16 %v4032
    %v4330 = vunpack.c.l.b16 %v4033
    %v4331 = vunpack.c.h.b16 %v4033
    %v4332 = vunpack.c.l.b16 %v4034
    %v4333 = vunpack.c.h.b16 %v4034
    %v4334 = vunpack.c.l.b16 %v4035
    %v4335 = vunpack.c.h.b16 %v4035
    %v4336 = vunpack.c.l.b16 %v4036
    %v4337 = vunpack.c.h.b16 %v4036
    %v4338 = vunpack.c.l.b16 %v4037
    %v4339 = vunpack.c.h.b16 %v4037
    %v4340 = vunpack.c.l.b16 %v4038
    %v4341 = vunpack.c.h.b16 %v4038
    %v4342 = vunpack.c.l.b16 %v4039
    %v4343 = vunpack.c.h.b16 %v4039
    %v4344 = vunpack.c.l.b16 %v4040
    %v4345 = vunpack.c.h.b16 %v4040
    %v4346 = vunpack.c.l.b16 %v4041
    %v4347 = vunpack.c.h.b16 %v4041
    %v4348 = vunpack.c.l.b16 %v4042
    %v4349 = vunpack.c.h.b16 %v4042
    %v4350 = vunpack.c.l.b16 %v4043
    %v4351 = vunpack.c.h.b16 %v4043
    %v4352 = vunpack.c.l.b16 %v4044
    %v4353 = vunpack.c.h.b16 %v4044
    %v4354 = vunpack.c.l.b16 %v4045
    %v4355 = vunpack.c.h.b16 %v4045
    %v4356 = vunpack.c.l.b16 %v4046
    %v4357 = vunpack.c.h.b16 %v4046
    %v4358 = vunpack.c.l.b16 %v4047
    %v4359 = vunpack.c.h.b16 %v4047
    %v4360 = vunpack.c.l.b16 %v4048
    %v4361 = vunpack.c.h.b16 %v4048
    %v4362 = vunpack.c.l.b16 %v4049
    %v4363 = vunpack.c.h.b16 %v4049
    %v4364 = vunpack.c.l.b16 %v4050
    %v4365 = vunpack.c.h.b16 %v4050
    %v4366 = vunpack.c.l.b16 %v4051
    %v4367 = vunpack.c.h.b16 %v4051
    %v4368 = vunpack.c.l.b16 %v4052
    %v4369 = vunpack.c.h.b16 %v4052
    %v4370 = vunpack.c.l.b16 %v4053
    %v4371 = vunpack.c.h.b16 %v4053
    %v4372 = vunpack.c.l.b16 %v4054
    %v4373 = vunpack.c.h.b16 %v4054
    %v4374 = vunpack.c.l.b16 %v4055
    %v4375 = vunpack.c.h.b16 %v4055
    %v4376 = vunpack.c.l.b16 %v4056
    %v4377 = vunpack.c.h.b16 %v4056
    %v4378 = vunpack.c.l.b16 %v4057
    %v4379 = vunpack.c.h.b16 %v4057
    %v4380 = vunpack.c.l.b16 %v4058
    %v4381 = vunpack.c.h.b16 %v4058
    %v4382 = vunpack.c.l.b16 %v4059
    %v4383 = vunpack.c.h.b16 %v4059
    %v4384 = vunpack.c.l.b16 %v4060
    %v4385 = vunpack.c.h.b16 %v4060
    %v4386 = vunpack.c.l.b16 %v4061
    %v4387 = vunpack.c.h.b16 %v4061
    %v4388 = vunpack.c.l.b16 %v4062
    %v4389 = vunpack.c.h.b16 %v4062
    %v4390 = vunpack.c.l.b16 %v4063
    %v4391 = vunpack.c.h.b16 %v4063
    %v4392 = vunpack.c.l.b16 %v4064
    %v4393 = vunpack.c.h.b16 %v4064
    %v4394 = vunpack.c.l.b16 %v4065
    %v4395 = vunpack.c.h.b16 %v4065
    %v4396 = vunpack.c.l.b16 %v4066
    %v4397 = vunpack.c.h.b16 %v4066
    %v4398 = vunpack.c.l.b16 %v4067
    %v4399 = vunpack.c.h.b16 %v4067
    %v4400 = vunpack.c.l.b16 %v4068
    %v4401 = vunpack.c.h.b16 %v4068
    %v4402 = vunpack.c.l.b16 %v4069
    %v4403 = vunpack.c.h.b16 %v4069
    %v4404 = vunpack.c.l.b16 %v4070
    %v4405 = vunpack.c.h.b16 %v4070
    %v4406 = vunpack.c.l.b16 %v4071
    %v4407 = vunpack.c.h.b16 %v4071
    %v4408 = vunpack.c.l.b16 %v4072
    %v4409 = vunpack.c.h.b16 %v4072
    %v4410 = vunpack.c.l.b16 %v4073
    %v4411 = vunpack.c.h.b16 %v4073
    %v4412 = vunpack.c.l.b16 %v4074
    %v4413 = vunpack.c.h.b16 %v4074
    %v4414 = vunpack.c.l.b16 %v4075
    %v4415 = vunpack.c.h.b16 %v4075
    %v4416 = vunpack.c.l.b16 %v4076
    %v4417 = vunpack.c.h.b16 %v4076
    %v4418 = vunpack.c.l.b16 %v4077
    %v4419 = vunpack.c.h.b16 %v4077
    %v4420 = vunpack.c.l.b16 %v4078
    %v4421 = vunpack.c.h.b16 %v4078
    %v4422 = vunpack.c.l.b16 %v4079
    %v4423 = vunpack.c.h.b16 %v4079
    %v4424 = vunpack.c.l.b16 %v4080
    %v4425 = vunpack.c.h.b16 %v4080
    %v4426 = vunpack.c.l.b16 %v4081
    %v4427 = vunpack.c.h.b16 %v4081
    %v4428 = vunpack.c.l.b16 %v4082
    %v4429 = vunpack.c.h.b16 %v4082
    %v4430 = vunpack.c.l.b16 %v4083
    %v4431 = vunpack.c.h.b16 %v4083
    %v4432 = vunpack.c.l.b16 %v4084
    %v4433 = vunpack.c.h.b16 %v4084
    %v4434 = vunpack.c.l.b16 %v4085
    %v4435 = vunpack.c.h.b16 %v4085
    %v4436 = vunpack.c.l.b16 %v4086
    %v4437 = vunpack.c.h.b16 %v4086
    %v4438 = vunpack.c.l.b16 %v4087
    %v4439 = vunpack.c.h.b16 %v4087
    %v4440 = vunpack.c.l.b16 %v4088
    %v4441 = vunpack.c.h.b16 %v4088
    %v4442 = vunpack.c.l.b16 %v4089
    %v4443 = vunpack.c.h.b16 %v4089
    %v4444 = vunpack.c.l.b16 %v4090
    %v4445 = vunpack.c.h.b16 %v4090
    %v4446 = vunpack.c.l.b16 %v4091
    %v4447 = vunpack.c.h.b16 %v4091
    %v4448 = vunpack.c.l.b16 %v4092
    %v4449 = vunpack.c.h.b16 %v4092
    %v4450 = vunpack.c.l.b16 %v4093
    %v4451 = vunpack.c.h.b16 %v4093
    %v4452 = vunpack.c.l.b16 %v4094
    %v4453 = vunpack.c.h.b16 %v4094
    %v4454 = vunpack.c.l.b16 %v4095
    %v4455 = vunpack.c.h.b16 %v4095
    %v4456 = vunpack.c.l.b16 %v4096
    %v4457 = vunpack.c.h.b16 %v4096
    %v4458 = vunpack.c.l.b16 %v4097
    %v4459 = vunpack.c.h.b16 %v4097
    %v4460 = vunpack.c.l.b16 %v4098
    %v4461 = vunpack.c.h.b16 %v4098
    %v4462 = vunpack.c.l.b16 %v4099
    %v4463 = vunpack.c.h.b16 %v4099
    %v4464 = vunpack.c.l.b16 %v4100
    %v4465 = vunpack.c.h.b16 %v4100
    %v4466 = vunpack.c.l.b16 %v4101
    %v4467 = vunpack.c.h.b16 %v4101
    %v4468 = vunpack.c.l.b16 %v4102
    %v4469 = vunpack.c.h.b16 %v4102
    %v4470 = vunpack.c.l.b16 %v4103
    %v4471 = vunpack.c.h.b16 %v4103
    %v4472 = vunpack.c.l.b16 %v4104
    %v4473 = vunpack.c.h.b16 %v4104
    %v4474 = vunpack.c.l.b16 %v4105
    %v4475 = vunpack.c.h.b16 %v4105
    %v4476 = vunpack.c.l.b16 %v4106
    %v4477 = vunpack.c.h.b16 %v4106
    %v4478 = vunpack.c.l.b16 %v4107
    %v4479 = vunpack.c.h.b16 %v4107
    %v4480 = vunpack.c.l.b16 %v4108
    %v4481 = vunpack.c.h.b16 %v4108
    %v4482 = vunpack.c.l.b16 %v4109
    %v4483 = vunpack.c.h.b16 %v4109
    %v4484 = vunpack.c.l.b16 %v4110
    %v4485 = vunpack.c.h.b16 %v4110
    %v4486 = vunpack.c.l.b16 %v4111
    %v4487 = vunpack.c.h.b16 %v4111
    %v4488 = vunpack.c.l.b16 %v4112
    %v4489 = vunpack.c.h.b16 %v4112
    %v4490 = vunpack.c.l.b16 %v4113
    %v4491 = vunpack.c.h.b16 %v4113
    %v4492 = vunpack.c.l.b16 %v4114
    %v4493 = vunpack.c.h.b16 %v4114
    %v4494 = vunpack.c.l.b16 %v4115
    %v4495 = vunpack.c.h.b16 %v4115
    %v4496 = vunpack.c.l.b16 %v4116
    %v4497 = vunpack.c.h.b16 %v4116
    %v4498 = vunpack.c.l.b16 %v4117
    %v4499 = vunpack.c.h.b16 %v4117
    %v4500 = vunpack.c.l.b16 %v4118
    %v4501 = vunpack.c.h.b16 %v4118
    %v4502 = vunpack.c.l.b16 %v4119
    %v4503 = vunpack.c.h.b16 %v4119
    %v4504 = vunpack.c.l.b16 %v4120
    %v4505 = vunpack.c.h.b16 %v4120
    %v4506 = vunpack.c.l.b16 %v4121
    %v4507 = vunpack.c.h.b16 %v4121
    %v4508 = vunpack.c.l.b16 %v4122
    %v4509 = vunpack.c.h.b16 %v4122
    %v4510 = vunpack.c.l.b16 %v4123
    %v4511 = vunpack.c.h.b16 %v4123
    %v4512 = vunpack.c.l.b16 %v4124
    %v4513 = vunpack.c.h.b16 %v4124
    %v4514 = vunpack.c.l.b16 %v4125
    %v4515 = vunpack.c.h.b16 %v4125
    %v4516 = vunpack.c.l.b16 %v4126
    %v4517 = vunpack.c.h.b16 %v4126
    %v4518 = vunpack.c.l.b16 %v4127
    %v4519 = vunpack.c.h.b16 %v4127
    %v4520 = vunpack.c.l.b16 %v4128
    %v4521 = vunpack.c.h.b16 %v4128
    %v4522 = vunpack.c.l.b16 %v4129
    %v4523 = vunpack.c.h.b16 %v4129
    %v4524 = vunpack.c.l.b16 %v4130
    %v4525 = vunpack.c.h.b16 %v4130
    %v4526 = vunpack.c.l.b16 %v4131
    %v4527 = vunpack.c.h.b16 %v4131
    %v4528 = vunpack.c.l.b16 %v4132
    %v4529 = vunpack.c.h.b16 %v4132
    %v4530 = vunpack.c.l.b16 %v4133
    %v4531 = vunpack.c.h.b16 %v4133
    %v4532 = vunpack.c.l.b16 %v4134
    %v4533 = vunpack.c.h.b16 %v4134
    %v4534 = vunpack.c.l.b16 %v4135
    %v4535 = vunpack.c.h.b16 %v4135
    %v4536 = vunpack.c.l.b16 %v4136
    %v4537 = vunpack.c.h.b16 %v4136
    %v4538 = vunpack.c.l.b16 %v4137
    %v4539 = vunpack.c.h.b16 %v4137
    %v4540 = vunpack.c.l.b16 %v4138
    %v4541 = vunpack.c.h.b16 %v4138
    %v4542 = vunpack.c.l.b16 %v4139
    %v4543 = vunpack.c.h.b16 %v4139
    %v4544 = vunpack.c.l.b16 %v4140
    %v4545 = vunpack.c.h.b16 %v4140
    %v4546 = vunpack.c.l.b16 %v4141
    %v4547 = vunpack.c.h.b16 %v4141
    %v4548 = vunpack.c.l.b16 %v4142
    %v4549 = vunpack.c.h.b16 %v4142
    %v4550 = vpack.c.b16 %v4298, %v4294
    %v4551 = vpack.c.b16 %v4299, %v4295
    %v4552 = vpack.c.b16 %v4300, %v4296
    %v4553 = vpack.c.b16 %v4301, %v4297
    %v4554 = vpack.c.b16 %v4306, %v4302
    %v4555 = vpack.c.b16 %v4307, %v4303
    %v4556 = vpack.c.b16 %v4308, %v4304
    %v4557 = vpack.c.b16 %v4309, %v4305
    %v4558 = vpack.c.b16 %v4314, %v4310
    %v4559 = vpack.c.b16 %v4315, %v4311
    %v4560 = vpack.c.b16 %v4316, %v4312
    %v4561 = vpack.c.b16 %v4317, %v4313
    %v4562 = vpack.c.b16 %v4322, %v4318
    %v4563 = vpack.c.b16 %v4323, %v4319
    %v4564 = vpack.c.b16 %v4324, %v4320
    %v4565 = vpack.c.b16 %v4325, %v4321
    %v4566 = vpack.c.b16 %v4330, %v4326
    %v4567 = vpack.c.b16 %v4331, %v4327
    %v4568 = vpack.c.b16 %v4332, %v4328
    %v4569 = vpack.c.b16 %v4333, %v4329
    %v4570 = vpack.c.b16 %v4338, %v4334
    %v4571 = vpack.c.b16 %v4339, %v4335
    %v4572 = vpack.c.b16 %v4340, %v4336
    %v4573 = vpack.c.b16 %v4341, %v4337
    %v4574 = vpack.c.b16 %v4346, %v4342
    %v4575 = vpack.c.b16 %v4347, %v4343
    %v4576 = vpack.c.b16 %v4348, %v4344
    %v4577 = vpack.c.b16 %v4349, %v4345
    %v4578 = vpack.c.b16 %v4354, %v4350
    %v4579 = vpack.c.b16 %v4355, %v4351
    %v4580 = vpack.c.b16 %v4356, %v4352
    %v4581 = vpack.c.b16 %v4357, %v4353
    %v4582 = vpack.c.b16 %v4362, %v4358
    %v4583 = vpack.c.b16 %v4363, %v4359
    %v4584 = vpack.c.b16 %v4364, %v4360
    %v4585 = vpack.c.b16 %v4365, %v4361
    %v4586 = vpack.c.b16 %v4370, %v4366
    %v4587 = vpack.c.b16 %v4371, %v4367
    %v4588 = vpack.c.b16 %v4372, %v4368
    %v4589 = vpack.c.b16 %v4373, %v4369
    %v4590 = vpack.c.b16 %v4378, %v4374
    %v4591 = vpack.c.b16 %v4379, %v4375
    %v4592 = vpack.c.b16 %v4380, %v4376
    %v4593 = vpack.c.b16 %v4381, %v4377
    %v4594 = vpack.c.b16 %v4386, %v4382
    %v4595 = vpack.c.b16 %v4387, %v4383
    %v4596 = vpack.c.b16 %v4388, %v4384
    %v4597 = vpack.c.b16 %v4389, %v4385
    %v4598 = vpack.c.b16 %v4394, %v4390
    %v4599 = vpack.c.b16 %v4395, %v4391
    %v4600 = vpack.c.b16 %v4396, %v4392
    %v4601 = vpack.c.b16 %v4397, %v4393
    %v4602 = vpack.c.b16 %v4402, %v4398
    %v4603 = vpack.c.b16 %v4403, %v4399
    %v4604 = vpack.c.b16 %v4404, %v4400
    %v4605 = vpack.c.b16 %v4405, %v4401
    %v4606 = vpack.c.b16 %v4410, %v4406
    %v4607 = vpack.c.b16 %v4411, %v4407
    %v4608 = vpack.c.b16 %v4412, %v4408
    %v4609 = vpack.c.b16 %v4413, %v4409
    %v4610 = vpack.c.b16 %v4418, %v4414
    %v4611 = vpack.c.b16 %v4419, %v4415
    %v4612 = vpack.c.b16 %v4420, %v4416
    %v4613 = vpack.c.b16 %v4421, %v4417
    %v4614 = vpack.c.b16 %v4426, %v4422
    %v4615 = vpack.c.b16 %v4427, %v4423
    %v4616 = vpack.c.b16 %v4428, %v4424
    %v4617 = vpack.c.b16 %v4429, %v4425
    %v4618 = vpack.c.b16 %v4434, %v4430
    %v4619 = vpack.c.b16 %v4435, %v4431
    %v4620 = vpack.c.b16 %v4436, %v4432
    %v4621 = vpack.c.b16 %v4437, %v4433
    %v4622 = vpack.c.b16 %v4442, %v4438
    %v4623 = vpack.c.b16 %v4443, %v4439
    %v4624 = vpack.c.b16 %v4444, %v4440
    %v4625 = vpack.c.b16 %v4445, %v4441
    %v4626 = vpack.c.b16 %v4450, %v4446
    %v4627 = vpack.c.b16 %v4451, %v4447
    %v4628 = vpack.c.b16 %v4452, %v4448
    %v4629 = vpack.c.b16 %v4453, %v4449
    %v4630 = vpack.c.b16 %v4458, %v4454
    %v4631 = vpack.c.b16 %v4459, %v4455
    %v4632 = vpack.c.b16 %v4460, %v4456
    %v4633 = vpack.c.b16 %v4461, %v4457
    %v4634 = vpack.c.b16 %v4466, %v4462
    %v4635 = vpack.c.b16 %v4467, %v4463
    %v4636 = vpack.c.b16 %v4468, %v4464
    %v4637 = vpack.c.b16 %v4469, %v4465
    %v4638 = vpack.c.b16 %v4474, %v4470
    %v4639 = vpack.c.b16 %v4475, %v4471
    %v4640 = vpack.c.b16 %v4476, %v4472
    %v4641 = vpack.c.b16 %v4477, %v4473
    %v4642 = vpack.c.b16 %v4482, %v4478
    %v4643 = vpack.c.b16 %v4483, %v4479
    %v4644 = vpack.c.b16 %v4484, %v4480
    %v4645 = vpack.c.b16 %v4485, %v4481
    %v4646 = vpack.c.b16 %v4490, %v4486
    %v4647 = vpack.c.b16 %v4491, %v4487
    %v4648 = vpack.c.b16 %v4492, %v4488
    %v4649 = vpack.c.b16 %v4493, %v4489
    %v4650 = vpack.c.b16 %v4498, %v4494
    %v4651 = vpack.c.b16 %v4499, %v4495
    %v4652 = vpack.c.b16 %v4500, %v4496
    %v4653 = vpack.c.b16 %v4501, %v4497
    %v4654 = vpack.c.b16 %v4506, %v4502
    %v4655 = vpack.c.b16 %v4507, %v4503
    %v4656 = vpack.c.b16 %v4508, %v4504
    %v4657 = vpack.c.b16 %v4509, %v4505
    %v4658 = vpack.c.b16 %v4514, %v4510
    %v4659 = vpack.c.b16 %v4515, %v4511
    %v4660 = vpack.c.b16 %v4516, %v4512
    %v4661 = vpack.c.b16 %v4517, %v4513
    %v4662 = vpack.c.b16 %v4522, %v4518
    %v4663 = vpack.c.b16 %v4523, %v4519
    %v4664 = vpack.c.b16 %v4524, %v4520
    %v4665 = vpack.c.b16 %v4525, %v4521
    %v4666 = vpack.c.b16 %v4530, %v4526
    %v4667 = vpack.c.b16 %v4531, %v4527
    %v4668 = vpack.c.b16 %v4532, %v4528
    %v4669 = vpack.c.b16 %v4533, %v4529
    %v4670 = vpack.c.b16 %v4538, %v4534
    %v4671 = vpack.c.b16 %v4539, %v4535
    %v4672 = vpack.c.b16 %v4540, %v4536
    %v4673 = vpack.c.b16 %v4541, %v4537
    %v4674 = vpack.c.b16 %v4546, %v4542
    %v4675 = vpack.c.b16 %v4547, %v4543
    %v4676 = vpack.c.b16 %v4548, %v4544
    %v4677 = vpack.c.b16 %v4549, %v4545
    %4806 = vmatprep.subr.bf16.mxu0 %v4551
    %4807 = vmatpush1.bf16.msra.mxu0 %v4550
    %4808 = vmatprep.subr.bf16.mxu0 %v4555
    %4809 = vmatpush1.bf16.msra.mxu0 %v4554
    %4810 = vmatprep.subr.bf16.mxu0 %v4559
    %4811 = vmatpush1.bf16.msra.mxu0 %v4558
    %4812 = vmatprep.subr.bf16.mxu0 %v4563
    %4813 = vmatpush1.bf16.msra.mxu0 %v4562
    %4814 = vmatprep.subr.bf16.mxu0 %v4567
    %4815 = vmatpush1.bf16.msra.mxu0 %v4566
    %4816 = vmatprep.subr.bf16.mxu0 %v4571
    %4817 = vmatpush1.bf16.msra.mxu0 %v4570
    %4818 = vmatprep.subr.bf16.mxu0 %v4575
    %4819 = vmatpush1.bf16.msra.mxu0 %v4574
    %4820 = vmatprep.subr.bf16.mxu0 %v4579
    %4821 = vmatpush1.bf16.msra.mxu0 %v4578
    %4822 = vmatprep.subr.bf16.mxu0 %v4583
    %4823 = vmatpush1.bf16.msra.mxu0 %v4582
    %4824 = vmatprep.subr.bf16.mxu0 %v4587
    %4825 = vmatpush1.bf16.msra.mxu0 %v4586
    %4826 = vmatprep.subr.bf16.mxu0 %v4591
    %4827 = vmatpush1.bf16.msra.mxu0 %v4590
    %4828 = vmatprep.subr.bf16.mxu0 %v4595
    %4829 = vmatpush1.bf16.msra.mxu0 %v4594
    %4830 = vmatprep.subr.bf16.mxu0 %v4599
    %4831 = vmatpush1.bf16.msra.mxu0 %v4598
    %4832 = vmatprep.subr.bf16.mxu0 %v4603
    %4833 = vmatpush1.bf16.msra.mxu0 %v4602
    %4834 = vmatprep.subr.bf16.mxu0 %v4607
    %4835 = vmatpush1.bf16.msra.mxu0 %v4606
    %4836 = vmatprep.subr.bf16.mxu0 %v4611
    %4837 = vmatpush1.bf16.msra.mxu0 %v4610
    %4838 = vmatprep.mubr.bf16.mxu0 %v4011
    %4839 = vmatmul.mubr.bf16.gmra.mrb[0].mxu0 %v4010
    %v4840 = vpop.f32.mrb[0].mxu0
    %v4841 = vadd.f32 %v4149, %v4840
    %v4842 = vpop.f32.mrb[0].mxu0
    %v4843 = vadd.f32 %v4153, %v4842
    %v4844 = vpop.f32.mrb[0].mxu0
    %v4845 = vpop.f32.mrb[0].mxu0
    %4846 = vdwg.mxu0
    %4847 = vmatprep.subr.bf16.mxu0 %v4615
    %4848 = vmatpush1.bf16.msra.mxu0 %v4614
    %4849 = vmatprep.subr.bf16.mxu0 %v4619
    %4850 = vmatpush1.bf16.msra.mxu0 %v4618
    %4851 = vmatprep.subr.bf16.mxu0 %v4623
    %4852 = vmatpush1.bf16.msra.mxu0 %v4622
    %4853 = vmatprep.subr.bf16.mxu0 %v4627
    %4854 = vmatpush1.bf16.msra.mxu0 %v4626
    %4855 = vmatprep.subr.bf16.mxu0 %v4631
    %4856 = vmatpush1.bf16.msra.mxu0 %v4630
    %4857 = vmatprep.subr.bf16.mxu0 %v4635
    %4858 = vmatpush1.bf16.msra.mxu0 %v4634
    %4859 = vmatprep.subr.bf16.mxu0 %v4639
    %4860 = vmatpush1.bf16.msra.mxu0 %v4638
    %4861 = vmatprep.subr.bf16.mxu0 %v4643
    %4862 = vmatpush1.bf16.msra.mxu0 %v4642
    %4863 = vmatprep.subr.bf16.mxu0 %v4647
    %4864 = vmatpush1.bf16.msra.mxu0 %v4646
    %4865 = vmatprep.subr.bf16.mxu0 %v4651
    %4866 = vmatpush1.bf16.msra.mxu0 %v4650
    %4867 = vmatprep.subr.bf16.mxu0 %v4655
    %4868 = vmatpush1.bf16.msra.mxu0 %v4654
    %4869 = vmatprep.subr.bf16.mxu0 %v4659
    %4870 = vmatpush1.bf16.msra.mxu0 %v4658
    %4871 = vmatprep.subr.bf16.mxu0 %v4663
    %4872 = vmatpush1.bf16.msra.mxu0 %v4662
    %4873 = vmatprep.subr.bf16.mxu0 %v4667
    %4874 = vmatpush1.bf16.msra.mxu0 %v4666
    %4875 = vmatprep.subr.bf16.mxu0 %v4671
    %4876 = vmatpush1.bf16.msra.mxu0 %v4670
    %4877 = vmatprep.subr.bf16.mxu0 %v4675
    %4878 = vmatpush1.bf16.msra.mxu0 %v4674
    %4879 = vmatprep.mubr.bf16.mxu0 %v4013
    %4880 = vmatmul.mubr.bf16.gmra.mrb[0].mxu0 %v4012
    %v4881 = vpop.f32.mrb[0].mxu0
    %v4882 = vadd.f32 %v4841, %v4881
    %v4883 = vpop.f32.mrb[0].mxu0
    %v4884 = vadd.f32 %v4843, %v4883
    %v4885 = vpop.f32.mrb[0].mxu0
    %v4886 = vpop.f32.mrb[0].mxu0
    %4887 = vdwg.mxu0
    %4888 = vmatprep.subr.bf16.mxu0 %v4553
    %4889 = vmatpush1.bf16.msra.mxu0 %v4552
    %4890 = vmatprep.subr.bf16.mxu0 %v4557
    %4891 = vmatpush1.bf16.msra.mxu0 %v4556
    %4892 = vmatprep.subr.bf16.mxu0 %v4561
    %4893 = vmatpush1.bf16.msra.mxu0 %v4560
    %4894 = vmatprep.subr.bf16.mxu0 %v4565
    %4895 = vmatpush1.bf16.msra.mxu0 %v4564
    %4896 = vmatprep.subr.bf16.mxu0 %v4569
    %4897 = vmatpush1.bf16.msra.mxu0 %v4568
    %4898 = vmatprep.subr.bf16.mxu0 %v4573
    %4899 = vmatpush1.bf16.msra.mxu0 %v4572
    %4900 = vmatprep.subr.bf16.mxu0 %v4577
    %4901 = vmatpush1.bf16.msra.mxu0 %v4576
    %4902 = vmatprep.subr.bf16.mxu0 %v4581
    %4903 = vmatpush1.bf16.msra.mxu0 %v4580
    %4904 = vmatprep.subr.bf16.mxu0 %v4585
    %4905 = vmatpush1.bf16.msra.mxu0 %v4584
    %4906 = vmatprep.subr.bf16.mxu0 %v4589
    %4907 = vmatpush1.bf16.msra.mxu0 %v4588
    %4908 = vmatprep.subr.bf16.mxu0 %v4593
    %4909 = vmatpush1.bf16.msra.mxu0 %v4592
    %4910 = vmatprep.subr.bf16.mxu0 %v4597
    %4911 = vmatpush1.bf16.msra.mxu0 %v4596
    %4912 = vmatprep.subr.bf16.mxu0 %v4601
    %4913 = vmatpush1.bf16.msra.mxu0 %v4600
    %4914 = vmatprep.subr.bf16.mxu0 %v4605
    %4915 = vmatpush1.bf16.msra.mxu0 %v4604
    %4916 = vmatprep.subr.bf16.mxu0 %v4609
    %4917 = vmatpush1.bf16.msra.mxu0 %v4608
    %4918 = vmatprep.subr.bf16.mxu0 %v4613
    %4919 = vmatpush1.bf16.msra.mxu0 %v4612
    %4920 = vmatprep.mubr.bf16.mxu0 %v4011
    %4921 = vmatmul.mubr.bf16.gmra.mrb[0].mxu0 %v4010
    %v4922 = vpop.f32.mrb[0].mxu0
    %v4923 = vadd.f32 %v4157, %v4922
    %v4924 = vpop.f32.mrb[0].mxu0
    %v4925 = vadd.f32 %v4161, %v4924
    %v4926 = vpop.f32.mrb[0].mxu0
    %v4927 = vpop.f32.mrb[0].mxu0
    %4928 = vdwg.mxu0
    %4929 = vmatprep.subr.bf16.mxu0 %v4617
    %4930 = vmatpush1.bf16.msra.mxu0 %v4616
    %4931 = vmatprep.subr.bf16.mxu0 %v4621
    %4932 = vmatpush1.bf16.msra.mxu0 %v4620
    %4933 = vmatprep.subr.bf16.mxu0 %v4625
    %4934 = vmatpush1.bf16.msra.mxu0 %v4624
    %4935 = vmatprep.subr.bf16.mxu0 %v4629
    %4936 = vmatpush1.bf16.msra.mxu0 %v4628
    %4937 = vmatprep.subr.bf16.mxu0 %v4633
    %4938 = vmatpush1.bf16.msra.mxu0 %v4632
    %4939 = vmatprep.subr.bf16.mxu0 %v4637
    %4940 = vmatpush1.bf16.msra.mxu0 %v4636
    %4941 = vmatprep.subr.bf16.mxu0 %v4641
    %4942 = vmatpush1.bf16.msra.mxu0 %v4640
    %4943 = vmatprep.subr.bf16.mxu0 %v4645
    %4944 = vmatpush1.bf16.msra.mxu0 %v4644
    %4945 = vmatprep.subr.bf16.mxu0 %v4649
    %4946 = vmatpush1.bf16.msra.mxu0 %v4648
    %4947 = vmatprep.subr.bf16.mxu0 %v4653
    %4948 = vmatpush1.bf16.msra.mxu0 %v4652
    %4949 = vmatprep.subr.bf16.mxu0 %v4657
    %4950 = vmatpush1.bf16.msra.mxu0 %v4656
    %4951 = vmatprep.subr.bf16.mxu0 %v4661
    %4952 = vmatpush1.bf16.msra.mxu0 %v4660
    %4953 = vmatprep.subr.bf16.mxu0 %v4665
    %4954 = vmatpush1.bf16.msra.mxu0 %v4664
    %4955 = vmatprep.subr.bf16.mxu0 %v4669
    %4956 = vmatpush1.bf16.msra.mxu0 %v4668
    %4957 = vmatprep.subr.bf16.mxu0 %v4673
    %4958 = vmatpush1.bf16.msra.mxu0 %v4672
    %4959 = vmatprep.subr.bf16.mxu0 %v4677
    %4960 = vmatpush1.bf16.msra.mxu0 %v4676
    %4961 = vmatprep.mubr.bf16.mxu0 %v4013
    %4962 = vmatmul.mubr.bf16.gmra.mrb[0].mxu0 %v4012
    %v4963 = vpop.f32.mrb[0].mxu0
    %v4964 = vadd.f32 %v4923, %v4963
    %v4965 = vpop.f32.mrb[0].mxu0
    %v4966 = vadd.f32 %v4925, %v4965
    %v4967 = vpop.f32.mrb[0].mxu0
    %v4968 = vpop.f32.mrb[0].mxu0
    %4969 = vdwg.mxu0
    %vm4970 = vcmp.ge.f32.partialorder %v4882, 0.0
    %vm4971 = vcmp.ge.f32.partialorder %v4884, 0.0
    %vm4972 = vcmp.ge.f32.partialorder %v4964, 0.0
    %vm4973 = vcmp.ge.f32.partialorder %v4966, 0.0
    %v4974 = vmul.f32 %v4882, 0.2
    %v4975 = vmul.f32 %v4884, 0.2
    %v4976 = vmul.f32 %v4964, 0.2
    %v4977 = vmul.f32 %v4966, 0.2
    %v4978 = vsel %vm4970, %v4882, %v4974
    %v4979 = vsel %vm4971, %v4884, %v4975
    %v4980 = vsel %vm4972, %v4964, %v4976
    %v4981 = vsel %vm4973, %v4966, %v4977
    %v4982 = vpack.c.bf16 %v4978, %v4978
    %v4983 = vpack.c.bf16 %v4979, %v4979
    %v4984 = vpack.c.bf16 %v4980, %v4980
    %v4985 = vpack.c.bf16 %v4981, %v4981
    %s4986 = scalar_lea.vmem [#allocation5], 5120
    %v4987 = vld [vmem:[%s4986] sm:$0xff]
    %v4988 = vld [vmem:[%s4986 + $0x8] sm:$0xff]
    %v4989 = vld [vmem:[%s4986 + $0x10] sm:$0xff]
    %v4990 = vld [vmem:[%s4986 + $0x18] sm:$0xff]
    %v4991 = vld [vmem:[%s4986 + $0x20] sm:$0xff]
    %v4992 = vld [vmem:[%s4986 + $0x28] sm:$0xff]
    %v4993 = vld [vmem:[%s4986 + $0x30] sm:$0xff]
    %v4994 = vld [vmem:[%s4986 + $0x38] sm:$0xff]
    %v4995 = vld [vmem:[%s4986 + $0x40] sm:$0xff]
    %v4996 = vld [vmem:[%s4986 + $0x48] sm:$0xff]
    %v4997 = vld [vmem:[%s4986 + $0x50] sm:$0xff]
    %v4998 = vld [vmem:[%s4986 + $0x58] sm:$0xff]
    %v4999 = vld [vmem:[%s4986 + $0x60] sm:$0xff]
    %v5000 = vld [vmem:[%s4986 + $0x68] sm:$0xff]
    %v5001 = vld [vmem:[%s4986 + $0x70] sm:$0xff]
    %v5002 = vld [vmem:[%s4986 + $0x78] sm:$0xff]
    %v5003 = vld [vmem:[%s4986 + $0x80] sm:$0xff]
    %v5004 = vld [vmem:[%s4986 + $0x88] sm:$0xff]
    %v5005 = vld [vmem:[%s4986 + $0x90] sm:$0xff]
    %v5006 = vld [vmem:[%s4986 + $0x98] sm:$0xff]
    %v5007 = vld [vmem:[%s4986 + $0xa0] sm:$0xff]
    %v5008 = vld [vmem:[%s4986 + $0xa8] sm:$0xff]
    %v5009 = vld [vmem:[%s4986 + $0xb0] sm:$0xff]
    %v5010 = vld [vmem:[%s4986 + $0xb8] sm:$0xff]
    %v5011 = vld [vmem:[%s4986 + $0xc0] sm:$0xff]
    %v5012 = vld [vmem:[%s4986 + $0xc8] sm:$0xff]
    %v5013 = vld [vmem:[%s4986 + $0xd0] sm:$0xff]
    %v5014 = vld [vmem:[%s4986 + $0xd8] sm:$0xff]
    %v5015 = vld [vmem:[%s4986 + $0xe0] sm:$0xff]
    %v5016 = vld [vmem:[%s4986 + $0xe8] sm:$0xff]
    %v5017 = vld [vmem:[%s4986 + $0xf0] sm:$0xff]
    %v5018 = vld [vmem:[%s4986 + $0xf8] sm:$0xff]
    %v5019 = vld [vmem:[%s4986 + $0x100] sm:$0xff]
    %v5020 = vld [vmem:[%s4986 + $0x108] sm:$0xff]
    %v5021 = vld [vmem:[%s4986 + $0x110] sm:$0xff]
    %v5022 = vld [vmem:[%s4986 + $0x118] sm:$0xff]
    %v5023 = vld [vmem:[%s4986 + $0x120] sm:$0xff]
    %v5024 = vld [vmem:[%s4986 + $0x128] sm:$0xff]
    %v5025 = vld [vmem:[%s4986 + $0x130] sm:$0xff]
    %v5026 = vld [vmem:[%s4986 + $0x138] sm:$0xff]
    %v5027 = vld [vmem:[%s4986 + $0x140] sm:$0xff]
    %v5028 = vld [vmem:[%s4986 + $0x148] sm:$0xff]
    %v5029 = vld [vmem:[%s4986 + $0x150] sm:$0xff]
    %v5030 = vld [vmem:[%s4986 + $0x158] sm:$0xff]
    %v5031 = vld [vmem:[%s4986 + $0x160] sm:$0xff]
    %v5032 = vld [vmem:[%s4986 + $0x168] sm:$0xff]
    %v5033 = vld [vmem:[%s4986 + $0x170] sm:$0xff]
    %v5034 = vld [vmem:[%s4986 + $0x178] sm:$0xff]
    %v5035 = vld [vmem:[%s4986 + $0x180] sm:$0xff]
    %v5036 = vld [vmem:[%s4986 + $0x188] sm:$0xff]
    %v5037 = vld [vmem:[%s4986 + $0x190] sm:$0xff]
    %v5038 = vld [vmem:[%s4986 + $0x198] sm:$0xff]
    %v5039 = vld [vmem:[%s4986 + $0x1a0] sm:$0xff]
    %v5040 = vld [vmem:[%s4986 + $0x1a8] sm:$0xff]
    %v5041 = vld [vmem:[%s4986 + $0x1b0] sm:$0xff]
    %v5042 = vld [vmem:[%s4986 + $0x1b8] sm:$0xff]
    %v5043 = vld [vmem:[%s4986 + $0x1c0] sm:$0xff]
    %v5044 = vld [vmem:[%s4986 + $0x1c8] sm:$0xff]
    %v5045 = vld [vmem:[%s4986 + $0x1d0] sm:$0xff]
    %v5046 = vld [vmem:[%s4986 + $0x1d8] sm:$0xff]
    %v5047 = vld [vmem:[%s4986 + $0x1e0] sm:$0xff]
    %v5048 = vld [vmem:[%s4986 + $0x1e8] sm:$0xff]
    %v5049 = vld [vmem:[%s4986 + $0x1f0] sm:$0xff]
    %v5050 = vld [vmem:[%s4986 + $0x1f8] sm:$0xff]
    %v5051 = vld [vmem:[%s4986 + $0x200] sm:$0xff]
    %v5052 = vld [vmem:[%s4986 + $0x208] sm:$0xff]
    %v5053 = vld [vmem:[%s4986 + $0x210] sm:$0xff]
    %v5054 = vld [vmem:[%s4986 + $0x218] sm:$0xff]
    %v5055 = vld [vmem:[%s4986 + $0x220] sm:$0xff]
    %v5056 = vld [vmem:[%s4986 + $0x228] sm:$0xff]
    %v5057 = vld [vmem:[%s4986 + $0x230] sm:$0xff]
    %v5058 = vld [vmem:[%s4986 + $0x238] sm:$0xff]
    %v5059 = vld [vmem:[%s4986 + $0x240] sm:$0xff]
    %v5060 = vld [vmem:[%s4986 + $0x248] sm:$0xff]
    %v5061 = vld [vmem:[%s4986 + $0x250] sm:$0xff]
    %v5062 = vld [vmem:[%s4986 + $0x258] sm:$0xff]
    %v5063 = vld [vmem:[%s4986 + $0x260] sm:$0xff]
    %v5064 = vld [vmem:[%s4986 + $0x268] sm:$0xff]
    %v5065 = vld [vmem:[%s4986 + $0x270] sm:$0xff]
    %v5066 = vld [vmem:[%s4986 + $0x278] sm:$0xff]
    %v5067 = vld [vmem:[%s4986 + $0x280] sm:$0xff]
    %v5068 = vld [vmem:[%s4986 + $0x288] sm:$0xff]
    %v5069 = vld [vmem:[%s4986 + $0x290] sm:$0xff]
    %v5070 = vld [vmem:[%s4986 + $0x298] sm:$0xff]
    %v5071 = vld [vmem:[%s4986 + $0x2a0] sm:$0xff]
    %v5072 = vld [vmem:[%s4986 + $0x2a8] sm:$0xff]
    %v5073 = vld [vmem:[%s4986 + $0x2b0] sm:$0xff]
    %v5074 = vld [vmem:[%s4986 + $0x2b8] sm:$0xff]
    %v5075 = vld [vmem:[%s4986 + $0x2c0] sm:$0xff]
    %v5076 = vld [vmem:[%s4986 + $0x2c8] sm:$0xff]
    %v5077 = vld [vmem:[%s4986 + $0x2d0] sm:$0xff]
    %v5078 = vld [vmem:[%s4986 + $0x2d8] sm:$0xff]
    %v5079 = vld [vmem:[%s4986 + $0x2e0] sm:$0xff]
    %v5080 = vld [vmem:[%s4986 + $0x2e8] sm:$0xff]
    %v5081 = vld [vmem:[%s4986 + $0x2f0] sm:$0xff]
    %v5082 = vld [vmem:[%s4986 + $0x2f8] sm:$0xff]
    %v5083 = vld [vmem:[%s4986 + $0x300] sm:$0xff]
    %v5084 = vld [vmem:[%s4986 + $0x308] sm:$0xff]
    %v5085 = vld [vmem:[%s4986 + $0x310] sm:$0xff]
    %v5086 = vld [vmem:[%s4986 + $0x318] sm:$0xff]
    %v5087 = vld [vmem:[%s4986 + $0x320] sm:$0xff]
    %v5088 = vld [vmem:[%s4986 + $0x328] sm:$0xff]
    %v5089 = vld [vmem:[%s4986 + $0x330] sm:$0xff]
    %v5090 = vld [vmem:[%s4986 + $0x338] sm:$0xff]
    %v5091 = vld [vmem:[%s4986 + $0x340] sm:$0xff]
    %v5092 = vld [vmem:[%s4986 + $0x348] sm:$0xff]
    %v5093 = vld [vmem:[%s4986 + $0x350] sm:$0xff]
    %v5094 = vld [vmem:[%s4986 + $0x358] sm:$0xff]
    %v5095 = vld [vmem:[%s4986 + $0x360] sm:$0xff]
    %v5096 = vld [vmem:[%s4986 + $0x368] sm:$0xff]
    %v5097 = vld [vmem:[%s4986 + $0x370] sm:$0xff]
    %v5098 = vld [vmem:[%s4986 + $0x378] sm:$0xff]
    %v5099 = vld [vmem:[%s4986 + $0x380] sm:$0xff]
    %v5100 = vld [vmem:[%s4986 + $0x388] sm:$0xff]
    %v5101 = vld [vmem:[%s4986 + $0x390] sm:$0xff]
    %v5102 = vld [vmem:[%s4986 + $0x398] sm:$0xff]
    %v5103 = vld [vmem:[%s4986 + $0x3a0] sm:$0xff]
    %v5104 = vld [vmem:[%s4986 + $0x3a8] sm:$0xff]
    %v5105 = vld [vmem:[%s4986 + $0x3b0] sm:$0xff]
    %v5106 = vld [vmem:[%s4986 + $0x3b8] sm:$0xff]
    %v5107 = vld [vmem:[%s4986 + $0x3c0] sm:$0xff]
    %v5108 = vld [vmem:[%s4986 + $0x3c8] sm:$0xff]
    %v5109 = vld [vmem:[%s4986 + $0x3d0] sm:$0xff]
    %v5110 = vld [vmem:[%s4986 + $0x3d8] sm:$0xff]
    %v5111 = vld [vmem:[%s4986 + $0x3e0] sm:$0xff]
    %v5112 = vld [vmem:[%s4986 + $0x3e8] sm:$0xff]
    %v5113 = vld [vmem:[%s4986 + $0x3f0] sm:$0xff]
    %v5114 = vld [vmem:[%s4986 + $0x3f8] sm:$0xff]
    %s5115 = scalar_lea.vmem [#allocation7], 20
    %v5116 = vld [vmem:[%s5115] sm:$0xf]
    %v5118 = vlaneseq
    %v5119 = vshrl.u32 %v5118, 7
    %v5120 = vsub.s32 0, %v5119
    %v5121 = vrot.slane %v5116, %v5120
    %v5122 = vlaneseq
    %v5123 = vshrl.u32 %v5122, 7
    %v5124 = vsub.s32 1, %v5123
    %v5125 = vrot.slane %v5116, %v5124
    %v5126 = vlaneseq
    %v5127 = vshrl.u32 %v5126, 7
    %v5128 = vsub.s32 2, %v5127
    %v5129 = vrot.slane %v5116, %v5128
    %v5130 = vlaneseq
    %v5131 = vshrl.u32 %v5130, 7
    %v5132 = vsub.s32 3, %v5131
    %v5133 = vrot.slane %v5116, %v5132
    %v5266 = vunpack.c.l.b16 %v4987
    %v5267 = vunpack.c.h.b16 %v4987
    %v5268 = vunpack.c.l.b16 %v4988
    %v5269 = vunpack.c.h.b16 %v4988
    %v5270 = vunpack.c.l.b16 %v4989
    %v5271 = vunpack.c.h.b16 %v4989
    %v5272 = vunpack.c.l.b16 %v4990
    %v5273 = vunpack.c.h.b16 %v4990
    %v5274 = vunpack.c.l.b16 %v4991
    %v5275 = vunpack.c.h.b16 %v4991
    %v5276 = vunpack.c.l.b16 %v4992
    %v5277 = vunpack.c.h.b16 %v4992
    %v5278 = vunpack.c.l.b16 %v4993
    %v5279 = vunpack.c.h.b16 %v4993
    %v5280 = vunpack.c.l.b16 %v4994
    %v5281 = vunpack.c.h.b16 %v4994
    %v5282 = vunpack.c.l.b16 %v4995
    %v5283 = vunpack.c.h.b16 %v4995
    %v5284 = vunpack.c.l.b16 %v4996
    %v5285 = vunpack.c.h.b16 %v4996
    %v5286 = vunpack.c.l.b16 %v4997
    %v5287 = vunpack.c.h.b16 %v4997
    %v5288 = vunpack.c.l.b16 %v4998
    %v5289 = vunpack.c.h.b16 %v4998
    %v5290 = vunpack.c.l.b16 %v4999
    %v5291 = vunpack.c.h.b16 %v4999
    %v5292 = vunpack.c.l.b16 %v5000
    %v5293 = vunpack.c.h.b16 %v5000
    %v5294 = vunpack.c.l.b16 %v5001
    %v5295 = vunpack.c.h.b16 %v5001
    %v5296 = vunpack.c.l.b16 %v5002
    %v5297 = vunpack.c.h.b16 %v5002
    %v5298 = vunpack.c.l.b16 %v5003
    %v5299 = vunpack.c.h.b16 %v5003
    %v5300 = vunpack.c.l.b16 %v5004
    %v5301 = vunpack.c.h.b16 %v5004
    %v5302 = vunpack.c.l.b16 %v5005
    %v5303 = vunpack.c.h.b16 %v5005
    %v5304 = vunpack.c.l.b16 %v5006
    %v5305 = vunpack.c.h.b16 %v5006
    %v5306 = vunpack.c.l.b16 %v5007
    %v5307 = vunpack.c.h.b16 %v5007
    %v5308 = vunpack.c.l.b16 %v5008
    %v5309 = vunpack.c.h.b16 %v5008
    %v5310 = vunpack.c.l.b16 %v5009
    %v5311 = vunpack.c.h.b16 %v5009
    %v5312 = vunpack.c.l.b16 %v5010
    %v5313 = vunpack.c.h.b16 %v5010
    %v5314 = vunpack.c.l.b16 %v5011
    %v5315 = vunpack.c.h.b16 %v5011
    %v5316 = vunpack.c.l.b16 %v5012
    %v5317 = vunpack.c.h.b16 %v5012
    %v5318 = vunpack.c.l.b16 %v5013
    %v5319 = vunpack.c.h.b16 %v5013
    %v5320 = vunpack.c.l.b16 %v5014
    %v5321 = vunpack.c.h.b16 %v5014
    %v5322 = vunpack.c.l.b16 %v5015
    %v5323 = vunpack.c.h.b16 %v5015
    %v5324 = vunpack.c.l.b16 %v5016
    %v5325 = vunpack.c.h.b16 %v5016
    %v5326 = vunpack.c.l.b16 %v5017
    %v5327 = vunpack.c.h.b16 %v5017
    %v5328 = vunpack.c.l.b16 %v5018
    %v5329 = vunpack.c.h.b16 %v5018
    %v5330 = vunpack.c.l.b16 %v5019
    %v5331 = vunpack.c.h.b16 %v5019
    %v5332 = vunpack.c.l.b16 %v5020
    %v5333 = vunpack.c.h.b16 %v5020
    %v5334 = vunpack.c.l.b16 %v5021
    %v5335 = vunpack.c.h.b16 %v5021
    %v5336 = vunpack.c.l.b16 %v5022
    %v5337 = vunpack.c.h.b16 %v5022
    %v5338 = vunpack.c.l.b16 %v5023
    %v5339 = vunpack.c.h.b16 %v5023
    %v5340 = vunpack.c.l.b16 %v5024
    %v5341 = vunpack.c.h.b16 %v5024
    %v5342 = vunpack.c.l.b16 %v5025
    %v5343 = vunpack.c.h.b16 %v5025
    %v5344 = vunpack.c.l.b16 %v5026
    %v5345 = vunpack.c.h.b16 %v5026
    %v5346 = vunpack.c.l.b16 %v5027
    %v5347 = vunpack.c.h.b16 %v5027
    %v5348 = vunpack.c.l.b16 %v5028
    %v5349 = vunpack.c.h.b16 %v5028
    %v5350 = vunpack.c.l.b16 %v5029
    %v5351 = vunpack.c.h.b16 %v5029
    %v5352 = vunpack.c.l.b16 %v5030
    %v5353 = vunpack.c.h.b16 %v5030
    %v5354 = vunpack.c.l.b16 %v5031
    %v5355 = vunpack.c.h.b16 %v5031
    %v5356 = vunpack.c.l.b16 %v5032
    %v5357 = vunpack.c.h.b16 %v5032
    %v5358 = vunpack.c.l.b16 %v5033
    %v5359 = vunpack.c.h.b16 %v5033
    %v5360 = vunpack.c.l.b16 %v5034
    %v5361 = vunpack.c.h.b16 %v5034
    %v5362 = vunpack.c.l.b16 %v5035
    %v5363 = vunpack.c.h.b16 %v5035
    %v5364 = vunpack.c.l.b16 %v5036
    %v5365 = vunpack.c.h.b16 %v5036
    %v5366 = vunpack.c.l.b16 %v5037
    %v5367 = vunpack.c.h.b16 %v5037
    %v5368 = vunpack.c.l.b16 %v5038
    %v5369 = vunpack.c.h.b16 %v5038
    %v5370 = vunpack.c.l.b16 %v5039
    %v5371 = vunpack.c.h.b16 %v5039
    %v5372 = vunpack.c.l.b16 %v5040
    %v5373 = vunpack.c.h.b16 %v5040
    %v5374 = vunpack.c.l.b16 %v5041
    %v5375 = vunpack.c.h.b16 %v5041
    %v5376 = vunpack.c.l.b16 %v5042
    %v5377 = vunpack.c.h.b16 %v5042
    %v5378 = vunpack.c.l.b16 %v5043
    %v5379 = vunpack.c.h.b16 %v5043
    %v5380 = vunpack.c.l.b16 %v5044
    %v5381 = vunpack.c.h.b16 %v5044
    %v5382 = vunpack.c.l.b16 %v5045
    %v5383 = vunpack.c.h.b16 %v5045
    %v5384 = vunpack.c.l.b16 %v5046
    %v5385 = vunpack.c.h.b16 %v5046
    %v5386 = vunpack.c.l.b16 %v5047
    %v5387 = vunpack.c.h.b16 %v5047
    %v5388 = vunpack.c.l.b16 %v5048
    %v5389 = vunpack.c.h.b16 %v5048
    %v5390 = vunpack.c.l.b16 %v5049
    %v5391 = vunpack.c.h.b16 %v5049
    %v5392 = vunpack.c.l.b16 %v5050
    %v5393 = vunpack.c.h.b16 %v5050
    %v5394 = vunpack.c.l.b16 %v5051
    %v5395 = vunpack.c.h.b16 %v5051
    %v5396 = vunpack.c.l.b16 %v5052
    %v5397 = vunpack.c.h.b16 %v5052
    %v5398 = vunpack.c.l.b16 %v5053
    %v5399 = vunpack.c.h.b16 %v5053
    %v5400 = vunpack.c.l.b16 %v5054
    %v5401 = vunpack.c.h.b16 %v5054
    %v5402 = vunpack.c.l.b16 %v5055
    %v5403 = vunpack.c.h.b16 %v5055
    %v5404 = vunpack.c.l.b16 %v5056
    %v5405 = vunpack.c.h.b16 %v5056
    %v5406 = vunpack.c.l.b16 %v5057
    %v5407 = vunpack.c.h.b16 %v5057
    %v5408 = vunpack.c.l.b16 %v5058
    %v5409 = vunpack.c.h.b16 %v5058
    %v5410 = vunpack.c.l.b16 %v5059
    %v5411 = vunpack.c.h.b16 %v5059
    %v5412 = vunpack.c.l.b16 %v5060
    %v5413 = vunpack.c.h.b16 %v5060
    %v5414 = vunpack.c.l.b16 %v5061
    %v5415 = vunpack.c.h.b16 %v5061
    %v5416 = vunpack.c.l.b16 %v5062
    %v5417 = vunpack.c.h.b16 %v5062
    %v5418 = vunpack.c.l.b16 %v5063
    %v5419 = vunpack.c.h.b16 %v5063
    %v5420 = vunpack.c.l.b16 %v5064
    %v5421 = vunpack.c.h.b16 %v5064
    %v5422 = vunpack.c.l.b16 %v5065
    %v5423 = vunpack.c.h.b16 %v5065
    %v5424 = vunpack.c.l.b16 %v5066
    %v5425 = vunpack.c.h.b16 %v5066
    %v5426 = vunpack.c.l.b16 %v5067
    %v5427 = vunpack.c.h.b16 %v5067
    %v5428 = vunpack.c.l.b16 %v5068
    %v5429 = vunpack.c.h.b16 %v5068
    %v5430 = vunpack.c.l.b16 %v5069
    %v5431 = vunpack.c.h.b16 %v5069
    %v5432 = vunpack.c.l.b16 %v5070
    %v5433 = vunpack.c.h.b16 %v5070
    %v5434 = vunpack.c.l.b16 %v5071
    %v5435 = vunpack.c.h.b16 %v5071
    %v5436 = vunpack.c.l.b16 %v5072
    %v5437 = vunpack.c.h.b16 %v5072
    %v5438 = vunpack.c.l.b16 %v5073
    %v5439 = vunpack.c.h.b16 %v5073
    %v5440 = vunpack.c.l.b16 %v5074
    %v5441 = vunpack.c.h.b16 %v5074
    %v5442 = vunpack.c.l.b16 %v5075
    %v5443 = vunpack.c.h.b16 %v5075
    %v5444 = vunpack.c.l.b16 %v5076
    %v5445 = vunpack.c.h.b16 %v5076
    %v5446 = vunpack.c.l.b16 %v5077
    %v5447 = vunpack.c.h.b16 %v5077
    %v5448 = vunpack.c.l.b16 %v5078
    %v5449 = vunpack.c.h.b16 %v5078
    %v5450 = vunpack.c.l.b16 %v5079
    %v5451 = vunpack.c.h.b16 %v5079
    %v5452 = vunpack.c.l.b16 %v5080
    %v5453 = vunpack.c.h.b16 %v5080
    %v5454 = vunpack.c.l.b16 %v5081
    %v5455 = vunpack.c.h.b16 %v5081
    %v5456 = vunpack.c.l.b16 %v5082
    %v5457 = vunpack.c.h.b16 %v5082
    %v5458 = vunpack.c.l.b16 %v5083
    %v5459 = vunpack.c.h.b16 %v5083
    %v5460 = vunpack.c.l.b16 %v5084
    %v5461 = vunpack.c.h.b16 %v5084
    %v5462 = vunpack.c.l.b16 %v5085
    %v5463 = vunpack.c.h.b16 %v5085
    %v5464 = vunpack.c.l.b16 %v5086
    %v5465 = vunpack.c.h.b16 %v5086
    %v5466 = vunpack.c.l.b16 %v5087
    %v5467 = vunpack.c.h.b16 %v5087
    %v5468 = vunpack.c.l.b16 %v5088
    %v5469 = vunpack.c.h.b16 %v5088
    %v5470 = vunpack.c.l.b16 %v5089
    %v5471 = vunpack.c.h.b16 %v5089
    %v5472 = vunpack.c.l.b16 %v5090
    %v5473 = vunpack.c.h.b16 %v5090
    %v5474 = vunpack.c.l.b16 %v5091
    %v5475 = vunpack.c.h.b16 %v5091
    %v5476 = vunpack.c.l.b16 %v5092
    %v5477 = vunpack.c.h.b16 %v5092
    %v5478 = vunpack.c.l.b16 %v5093
    %v5479 = vunpack.c.h.b16 %v5093
    %v5480 = vunpack.c.l.b16 %v5094
    %v5481 = vunpack.c.h.b16 %v5094
    %v5482 = vunpack.c.l.b16 %v5095
    %v5483 = vunpack.c.h.b16 %v5095
    %v5484 = vunpack.c.l.b16 %v5096
    %v5485 = vunpack.c.h.b16 %v5096
    %v5486 = vunpack.c.l.b16 %v5097
    %v5487 = vunpack.c.h.b16 %v5097
    %v5488 = vunpack.c.l.b16 %v5098
    %v5489 = vunpack.c.h.b16 %v5098
    %v5490 = vunpack.c.l.b16 %v5099
    %v5491 = vunpack.c.h.b16 %v5099
    %v5492 = vunpack.c.l.b16 %v5100
    %v5493 = vunpack.c.h.b16 %v5100
    %v5494 = vunpack.c.l.b16 %v5101
    %v5495 = vunpack.c.h.b16 %v5101
    %v5496 = vunpack.c.l.b16 %v5102
    %v5497 = vunpack.c.h.b16 %v5102
    %v5498 = vunpack.c.l.b16 %v5103
    %v5499 = vunpack.c.h.b16 %v5103
    %v5500 = vunpack.c.l.b16 %v5104
    %v5501 = vunpack.c.h.b16 %v5104
    %v5502 = vunpack.c.l.b16 %v5105
    %v5503 = vunpack.c.h.b16 %v5105
    %v5504 = vunpack.c.l.b16 %v5106
    %v5505 = vunpack.c.h.b16 %v5106
    %v5506 = vunpack.c.l.b16 %v5107
    %v5507 = vunpack.c.h.b16 %v5107
    %v5508 = vunpack.c.l.b16 %v5108
    %v5509 = vunpack.c.h.b16 %v5108
    %v5510 = vunpack.c.l.b16 %v5109
    %v5511 = vunpack.c.h.b16 %v5109
    %v5512 = vunpack.c.l.b16 %v5110
    %v5513 = vunpack.c.h.b16 %v5110
    %v5514 = vunpack.c.l.b16 %v5111
    %v5515 = vunpack.c.h.b16 %v5111
    %v5516 = vunpack.c.l.b16 %v5112
    %v5517 = vunpack.c.h.b16 %v5112
    %v5518 = vunpack.c.l.b16 %v5113
    %v5519 = vunpack.c.h.b16 %v5113
    %v5520 = vunpack.c.l.b16 %v5114
    %v5521 = vunpack.c.h.b16 %v5114
    %v5522 = vpack.c.b16 %v5270, %v5266
    %v5523 = vpack.c.b16 %v5271, %v5267
    %v5524 = vpack.c.b16 %v5272, %v5268
    %v5525 = vpack.c.b16 %v5273, %v5269
    %v5526 = vpack.c.b16 %v5278, %v5274
    %v5527 = vpack.c.b16 %v5279, %v5275
    %v5528 = vpack.c.b16 %v5280, %v5276
    %v5529 = vpack.c.b16 %v5281, %v5277
    %v5530 = vpack.c.b16 %v5286, %v5282
    %v5531 = vpack.c.b16 %v5287, %v5283
    %v5532 = vpack.c.b16 %v5288, %v5284
    %v5533 = vpack.c.b16 %v5289, %v5285
    %v5534 = vpack.c.b16 %v5294, %v5290
    %v5535 = vpack.c.b16 %v5295, %v5291
    %v5536 = vpack.c.b16 %v5296, %v5292
    %v5537 = vpack.c.b16 %v5297, %v5293
    %v5538 = vpack.c.b16 %v5302, %v5298
    %v5539 = vpack.c.b16 %v5303, %v5299
    %v5540 = vpack.c.b16 %v5304, %v5300
    %v5541 = vpack.c.b16 %v5305, %v5301
    %v5542 = vpack.c.b16 %v5310, %v5306
    %v5543 = vpack.c.b16 %v5311, %v5307
    %v5544 = vpack.c.b16 %v5312, %v5308
    %v5545 = vpack.c.b16 %v5313, %v5309
    %v5546 = vpack.c.b16 %v5318, %v5314
    %v5547 = vpack.c.b16 %v5319, %v5315
    %v5548 = vpack.c.b16 %v5320, %v5316
    %v5549 = vpack.c.b16 %v5321, %v5317
    %v5550 = vpack.c.b16 %v5326, %v5322
    %v5551 = vpack.c.b16 %v5327, %v5323
    %v5552 = vpack.c.b16 %v5328, %v5324
    %v5553 = vpack.c.b16 %v5329, %v5325
    %v5554 = vpack.c.b16 %v5334, %v5330
    %v5555 = vpack.c.b16 %v5335, %v5331
    %v5556 = vpack.c.b16 %v5336, %v5332
    %v5557 = vpack.c.b16 %v5337, %v5333
    %v5558 = vpack.c.b16 %v5342, %v5338
    %v5559 = vpack.c.b16 %v5343, %v5339
    %v5560 = vpack.c.b16 %v5344, %v5340
    %v5561 = vpack.c.b16 %v5345, %v5341
    %v5562 = vpack.c.b16 %v5350, %v5346
    %v5563 = vpack.c.b16 %v5351, %v5347
    %v5564 = vpack.c.b16 %v5352, %v5348
    %v5565 = vpack.c.b16 %v5353, %v5349
    %v5566 = vpack.c.b16 %v5358, %v5354
    %v5567 = vpack.c.b16 %v5359, %v5355
    %v5568 = vpack.c.b16 %v5360, %v5356
    %v5569 = vpack.c.b16 %v5361, %v5357
    %v5570 = vpack.c.b16 %v5366, %v5362
    %v5571 = vpack.c.b16 %v5367, %v5363
    %v5572 = vpack.c.b16 %v5368, %v5364
    %v5573 = vpack.c.b16 %v5369, %v5365
    %v5574 = vpack.c.b16 %v5374, %v5370
    %v5575 = vpack.c.b16 %v5375, %v5371
    %v5576 = vpack.c.b16 %v5376, %v5372
    %v5577 = vpack.c.b16 %v5377, %v5373
    %v5578 = vpack.c.b16 %v5382, %v5378
    %v5579 = vpack.c.b16 %v5383, %v5379
    %v5580 = vpack.c.b16 %v5384, %v5380
    %v5581 = vpack.c.b16 %v5385, %v5381
    %v5582 = vpack.c.b16 %v5390, %v5386
    %v5583 = vpack.c.b16 %v5391, %v5387
    %v5584 = vpack.c.b16 %v5392, %v5388
    %v5585 = vpack.c.b16 %v5393, %v5389
    %v5586 = vpack.c.b16 %v5398, %v5394
    %v5587 = vpack.c.b16 %v5399, %v5395
    %v5588 = vpack.c.b16 %v5400, %v5396
    %v5589 = vpack.c.b16 %v5401, %v5397
    %v5590 = vpack.c.b16 %v5406, %v5402
    %v5591 = vpack.c.b16 %v5407, %v5403
    %v5592 = vpack.c.b16 %v5408, %v5404
    %v5593 = vpack.c.b16 %v5409, %v5405
    %v5594 = vpack.c.b16 %v5414, %v5410
    %v5595 = vpack.c.b16 %v5415, %v5411
    %v5596 = vpack.c.b16 %v5416, %v5412
    %v5597 = vpack.c.b16 %v5417, %v5413
    %v5598 = vpack.c.b16 %v5422, %v5418
    %v5599 = vpack.c.b16 %v5423, %v5419
    %v5600 = vpack.c.b16 %v5424, %v5420
    %v5601 = vpack.c.b16 %v5425, %v5421
    %v5602 = vpack.c.b16 %v5430, %v5426
    %v5603 = vpack.c.b16 %v5431, %v5427
    %v5604 = vpack.c.b16 %v5432, %v5428
    %v5605 = vpack.c.b16 %v5433, %v5429
    %v5606 = vpack.c.b16 %v5438, %v5434
    %v5607 = vpack.c.b16 %v5439, %v5435
    %v5608 = vpack.c.b16 %v5440, %v5436
    %v5609 = vpack.c.b16 %v5441, %v5437
    %v5610 = vpack.c.b16 %v5446, %v5442
    %v5611 = vpack.c.b16 %v5447, %v5443
    %v5612 = vpack.c.b16 %v5448, %v5444
    %v5613 = vpack.c.b16 %v5449, %v5445
    %v5614 = vpack.c.b16 %v5454, %v5450
    %v5615 = vpack.c.b16 %v5455, %v5451
    %v5616 = vpack.c.b16 %v5456, %v5452
    %v5617 = vpack.c.b16 %v5457, %v5453
    %v5618 = vpack.c.b16 %v5462, %v5458
    %v5619 = vpack.c.b16 %v5463, %v5459
    %v5620 = vpack.c.b16 %v5464, %v5460
    %v5621 = vpack.c.b16 %v5465, %v5461
    %v5622 = vpack.c.b16 %v5470, %v5466
    %v5623 = vpack.c.b16 %v5471, %v5467
    %v5624 = vpack.c.b16 %v5472, %v5468
    %v5625 = vpack.c.b16 %v5473, %v5469
    %v5626 = vpack.c.b16 %v5478, %v5474
    %v5627 = vpack.c.b16 %v5479, %v5475
    %v5628 = vpack.c.b16 %v5480, %v5476
    %v5629 = vpack.c.b16 %v5481, %v5477
    %v5630 = vpack.c.b16 %v5486, %v5482
    %v5631 = vpack.c.b16 %v5487, %v5483
    %v5632 = vpack.c.b16 %v5488, %v5484
    %v5633 = vpack.c.b16 %v5489, %v5485
    %v5634 = vpack.c.b16 %v5494, %v5490
    %v5635 = vpack.c.b16 %v5495, %v5491
    %v5636 = vpack.c.b16 %v5496, %v5492
    %v5637 = vpack.c.b16 %v5497, %v5493
    %v5638 = vpack.c.b16 %v5502, %v5498
    %v5639 = vpack.c.b16 %v5503, %v5499
    %v5640 = vpack.c.b16 %v5504, %v5500
    %v5641 = vpack.c.b16 %v5505, %v5501
    %v5642 = vpack.c.b16 %v5510, %v5506
    %v5643 = vpack.c.b16 %v5511, %v5507
    %v5644 = vpack.c.b16 %v5512, %v5508
    %v5645 = vpack.c.b16 %v5513, %v5509
    %v5646 = vpack.c.b16 %v5518, %v5514
    %v5647 = vpack.c.b16 %v5519, %v5515
    %v5648 = vpack.c.b16 %v5520, %v5516
    %v5649 = vpack.c.b16 %v5521, %v5517
    %5778 = vmatprep.subr.bf16.mxu0 %v5523
    %5779 = vmatpush1.bf16.msra.mxu0 %v5522
    %5780 = vmatprep.subr.bf16.mxu0 %v5527
    %5781 = vmatpush1.bf16.msra.mxu0 %v5526
    %5782 = vmatprep.subr.bf16.mxu0 %v5531
    %5783 = vmatpush1.bf16.msra.mxu0 %v5530
    %5784 = vmatprep.subr.bf16.mxu0 %v5535
    %5785 = vmatpush1.bf16.msra.mxu0 %v5534
    %5786 = vmatprep.subr.bf16.mxu0 %v5539
    %5787 = vmatpush1.bf16.msra.mxu0 %v5538
    %5788 = vmatprep.subr.bf16.mxu0 %v5543
    %5789 = vmatpush1.bf16.msra.mxu0 %v5542
    %5790 = vmatprep.subr.bf16.mxu0 %v5547
    %5791 = vmatpush1.bf16.msra.mxu0 %v5546
    %5792 = vmatprep.subr.bf16.mxu0 %v5551
    %5793 = vmatpush1.bf16.msra.mxu0 %v5550
    %5794 = vmatprep.subr.bf16.mxu0 %v5555
    %5795 = vmatpush1.bf16.msra.mxu0 %v5554
    %5796 = vmatprep.subr.bf16.mxu0 %v5559
    %5797 = vmatpush1.bf16.msra.mxu0 %v5558
    %5798 = vmatprep.subr.bf16.mxu0 %v5563
    %5799 = vmatpush1.bf16.msra.mxu0 %v5562
    %5800 = vmatprep.subr.bf16.mxu0 %v5567
    %5801 = vmatpush1.bf16.msra.mxu0 %v5566
    %5802 = vmatprep.subr.bf16.mxu0 %v5571
    %5803 = vmatpush1.bf16.msra.mxu0 %v5570
    %5804 = vmatprep.subr.bf16.mxu0 %v5575
    %5805 = vmatpush1.bf16.msra.mxu0 %v5574
    %5806 = vmatprep.subr.bf16.mxu0 %v5579
    %5807 = vmatpush1.bf16.msra.mxu0 %v5578
    %5808 = vmatprep.subr.bf16.mxu0 %v5583
    %5809 = vmatpush1.bf16.msra.mxu0 %v5582
    %5810 = vmatprep.mubr.bf16.mxu0 %v4983
    %5811 = vmatmul.mubr.bf16.gmra.mrb[0].mxu0 %v4982
    %v5812 = vpop.f32.mrb[0].mxu0
    %v5813 = vadd.f32 %v5121, %v5812
    %v5814 = vpop.f32.mrb[0].mxu0
    %v5815 = vadd.f32 %v5125, %v5814
    %v5816 = vpop.f32.mrb[0].mxu0
    %v5817 = vpop.f32.mrb[0].mxu0
    %5818 = vdwg.mxu0
    %5819 = vmatprep.subr.bf16.mxu0 %v5587
    %5820 = vmatpush1.bf16.msra.mxu0 %v5586
    %5821 = vmatprep.subr.bf16.mxu0 %v5591
    %5822 = vmatpush1.bf16.msra.mxu0 %v5590
    %5823 = vmatprep.subr.bf16.mxu0 %v5595
    %5824 = vmatpush1.bf16.msra.mxu0 %v5594
    %5825 = vmatprep.subr.bf16.mxu0 %v5599
    %5826 = vmatpush1.bf16.msra.mxu0 %v5598
    %5827 = vmatprep.subr.bf16.mxu0 %v5603
    %5828 = vmatpush1.bf16.msra.mxu0 %v5602
    %5829 = vmatprep.subr.bf16.mxu0 %v5607
    %5830 = vmatpush1.bf16.msra.mxu0 %v5606
    %5831 = vmatprep.subr.bf16.mxu0 %v5611
    %5832 = vmatpush1.bf16.msra.mxu0 %v5610
    %5833 = vmatprep.subr.bf16.mxu0 %v5615
    %5834 = vmatpush1.bf16.msra.mxu0 %v5614
    %5835 = vmatprep.subr.bf16.mxu0 %v5619
    %5836 = vmatpush1.bf16.msra.mxu0 %v5618
    %5837 = vmatprep.subr.bf16.mxu0 %v5623
    %5838 = vmatpush1.bf16.msra.mxu0 %v5622
    %5839 = vmatprep.subr.bf16.mxu0 %v5627
    %5840 = vmatpush1.bf16.msra.mxu0 %v5626
    %5841 = vmatprep.subr.bf16.mxu0 %v5631
    %5842 = vmatpush1.bf16.msra.mxu0 %v5630
    %5843 = vmatprep.subr.bf16.mxu0 %v5635
    %5844 = vmatpush1.bf16.msra.mxu0 %v5634
    %5845 = vmatprep.subr.bf16.mxu0 %v5639
    %5846 = vmatpush1.bf16.msra.mxu0 %v5638
    %5847 = vmatprep.subr.bf16.mxu0 %v5643
    %5848 = vmatpush1.bf16.msra.mxu0 %v5642
    %5849 = vmatprep.subr.bf16.mxu0 %v5647
    %5850 = vmatpush1.bf16.msra.mxu0 %v5646
    %5851 = vmatprep.mubr.bf16.mxu0 %v4985
    %5852 = vmatmul.mubr.bf16.gmra.mrb[0].mxu0 %v4984
    %v5853 = vpop.f32.mrb[0].mxu0
    %v5854 = vadd.f32 %v5813, %v5853
    %v5855 = vpop.f32.mrb[0].mxu0
    %v5856 = vadd.f32 %v5815, %v5855
    %v5857 = vpop.f32.mrb[0].mxu0
    %v5858 = vpop.f32.mrb[0].mxu0
    %5859 = vdwg.mxu0
    %5860 = vmatprep.subr.bf16.mxu0 %v5525
    %5861 = vmatpush1.bf16.msra.mxu0 %v5524
    %5862 = vmatprep.subr.bf16.mxu0 %v5529
    %5863 = vmatpush1.bf16.msra.mxu0 %v5528
    %5864 = vmatprep.subr.bf16.mxu0 %v5533
    %5865 = vmatpush1.bf16.msra.mxu0 %v5532
    %5866 = vmatprep.subr.bf16.mxu0 %v5537
    %5867 = vmatpush1.bf16.msra.mxu0 %v5536
    %5868 = vmatprep.subr.bf16.mxu0 %v5541
    %5869 = vmatpush1.bf16.msra.mxu0 %v5540
    %5870 = vmatprep.subr.bf16.mxu0 %v5545
    %5871 = vmatpush1.bf16.msra.mxu0 %v5544
    %5872 = vmatprep.subr.bf16.mxu0 %v5549
    %5873 = vmatpush1.bf16.msra.mxu0 %v5548
    %5874 = vmatprep.subr.bf16.mxu0 %v5553
    %5875 = vmatpush1.bf16.msra.mxu0 %v5552
    %5876 = vmatprep.subr.bf16.mxu0 %v5557
    %5877 = vmatpush1.bf16.msra.mxu0 %v5556
    %5878 = vmatprep.subr.bf16.mxu0 %v5561
    %5879 = vmatpush1.bf16.msra.mxu0 %v5560
    %5880 = vmatprep.subr.bf16.mxu0 %v5565
    %5881 = vmatpush1.bf16.msra.mxu0 %v5564
    %5882 = vmatprep.subr.bf16.mxu0 %v5569
    %5883 = vmatpush1.bf16.msra.mxu0 %v5568
    %5884 = vmatprep.subr.bf16.mxu0 %v5573
    %5885 = vmatpush1.bf16.msra.mxu0 %v5572
    %5886 = vmatprep.subr.bf16.mxu0 %v5577
    %5887 = vmatpush1.bf16.msra.mxu0 %v5576
    %5888 = vmatprep.subr.bf16.mxu0 %v5581
    %5889 = vmatpush1.bf16.msra.mxu0 %v5580
    %5890 = vmatprep.subr.bf16.mxu0 %v5585
    %5891 = vmatpush1.bf16.msra.mxu0 %v5584
    %5892 = vmatprep.mubr.bf16.mxu0 %v4983
    %5893 = vmatmul.mubr.bf16.gmra.mrb[0].mxu0 %v4982
    %v5894 = vpop.f32.mrb[0].mxu0
    %v5895 = vadd.f32 %v5129, %v5894
    %v5896 = vpop.f32.mrb[0].mxu0
    %v5897 = vadd.f32 %v5133, %v5896
    %v5898 = vpop.f32.mrb[0].mxu0
    %v5899 = vpop.f32.mrb[0].mxu0
    %5900 = vdwg.mxu0
    %5901 = vmatprep.subr.bf16.mxu0 %v5589
    %5902 = vmatpush1.bf16.msra.mxu0 %v5588
    %5903 = vmatprep.subr.bf16.mxu0 %v5593
    %5904 = vmatpush1.bf16.msra.mxu0 %v5592
    %5905 = vmatprep.subr.bf16.mxu0 %v5597
    %5906 = vmatpush1.bf16.msra.mxu0 %v5596
    %5907 = vmatprep.subr.bf16.mxu0 %v5601
    %5908 = vmatpush1.bf16.msra.mxu0 %v5600
    %5909 = vmatprep.subr.bf16.mxu0 %v5605
    %5910 = vmatpush1.bf16.msra.mxu0 %v5604
    %5911 = vmatprep.subr.bf16.mxu0 %v5609
    %5912 = vmatpush1.bf16.msra.mxu0 %v5608
    %5913 = vmatprep.subr.bf16.mxu0 %v5613
    %5914 = vmatpush1.bf16.msra.mxu0 %v5612
    %5915 = vmatprep.subr.bf16.mxu0 %v5617
    %5916 = vmatpush1.bf16.msra.mxu0 %v5616
    %5917 = vmatprep.subr.bf16.mxu0 %v5621
    %5918 = vmatpush1.bf16.msra.mxu0 %v5620
    %5919 = vmatprep.subr.bf16.mxu0 %v5625
    %5920 = vmatpush1.bf16.msra.mxu0 %v5624
    %5921 = vmatprep.subr.bf16.mxu0 %v5629
    %5922 = vmatpush1.bf16.msra.mxu0 %v5628
    %5923 = vmatprep.subr.bf16.mxu0 %v5633
    %5924 = vmatpush1.bf16.msra.mxu0 %v5632
    %5925 = vmatprep.subr.bf16.mxu0 %v5637
    %5926 = vmatpush1.bf16.msra.mxu0 %v5636
    %5927 = vmatprep.subr.bf16.mxu0 %v5641
    %5928 = vmatpush1.bf16.msra.mxu0 %v5640
    %5929 = vmatprep.subr.bf16.mxu0 %v5645
    %5930 = vmatpush1.bf16.msra.mxu0 %v5644
    %5931 = vmatprep.subr.bf16.mxu0 %v5649
    %5932 = vmatpush1.bf16.msra.mxu0 %v5648
    %5933 = vmatprep.mubr.bf16.mxu0 %v4985
    %5934 = vmatmul.mubr.bf16.gmra.mrb[0].mxu0 %v4984
    %v5935 = vpop.f32.mrb[0].mxu0
    %v5936 = vadd.f32 %v5895, %v5935
    %v5937 = vpop.f32.mrb[0].mxu0
    %v5938 = vadd.f32 %v5897, %v5937
    %v5939 = vpop.f32.mrb[0].mxu0
    %v5940 = vpop.f32.mrb[0].mxu0
    %5941 = vdwg.mxu0
    %vm5942 = vcmp.ge.f32.partialorder %v5854, 0.0
    %vm5943 = vcmp.ge.f32.partialorder %v5856, 0.0
    %vm5944 = vcmp.ge.f32.partialorder %v5936, 0.0
    %vm5945 = vcmp.ge.f32.partialorder %v5938, 0.0
    %v5946 = vmul.f32 %v5854, 0.2
    %v5947 = vmul.f32 %v5856, 0.2
    %v5948 = vmul.f32 %v5936, 0.2
    %v5949 = vmul.f32 %v5938, 0.2
    %v5950 = vsel %vm5942, %v5854, %v5946
    %v5951 = vsel %vm5943, %v5856, %v5947
    %v5952 = vsel %vm5944, %v5936, %v5948
    %v5953 = vsel %vm5945, %v5938, %v5949
    %v5954 = vpack.c.bf16 %v5950, %v5950
    %v5955 = vpack.c.bf16 %v5951, %v5951
    %v5956 = vpack.c.bf16 %v5952, %v5952
    %v5957 = vpack.c.bf16 %v5953, %v5953
    %s5958 = scalar_lea.vmem [#allocation5], 6144
    %v5959 = vld [vmem:[%s5958] sm:$0xff]
    %v5960 = vld [vmem:[%s5958 + $0x8] sm:$0xff]
    %v5961 = vld [vmem:[%s5958 + $0x10] sm:$0xff]
    %v5962 = vld [vmem:[%s5958 + $0x18] sm:$0xff]
    %v5963 = vld [vmem:[%s5958 + $0x20] sm:$0xff]
    %v5964 = vld [vmem:[%s5958 + $0x28] sm:$0xff]
    %v5965 = vld [vmem:[%s5958 + $0x30] sm:$0xff]
    %v5966 = vld [vmem:[%s5958 + $0x38] sm:$0xff]
    %v5967 = vld [vmem:[%s5958 + $0x40] sm:$0xff]
    %v5968 = vld [vmem:[%s5958 + $0x48] sm:$0xff]
    %v5969 = vld [vmem:[%s5958 + $0x50] sm:$0xff]
    %v5970 = vld [vmem:[%s5958 + $0x58] sm:$0xff]
    %v5971 = vld [vmem:[%s5958 + $0x60] sm:$0xff]
    %v5972 = vld [vmem:[%s5958 + $0x68] sm:$0xff]
    %v5973 = vld [vmem:[%s5958 + $0x70] sm:$0xff]
    %v5974 = vld [vmem:[%s5958 + $0x78] sm:$0xff]
    %v5975 = vld [vmem:[%s5958 + $0x80] sm:$0xff]
    %v5976 = vld [vmem:[%s5958 + $0x88] sm:$0xff]
    %v5977 = vld [vmem:[%s5958 + $0x90] sm:$0xff]
    %v5978 = vld [vmem:[%s5958 + $0x98] sm:$0xff]
    %v5979 = vld [vmem:[%s5958 + $0xa0] sm:$0xff]
    %v5980 = vld [vmem:[%s5958 + $0xa8] sm:$0xff]
    %v5981 = vld [vmem:[%s5958 + $0xb0] sm:$0xff]
    %v5982 = vld [vmem:[%s5958 + $0xb8] sm:$0xff]
    %v5983 = vld [vmem:[%s5958 + $0xc0] sm:$0xff]
    %v5984 = vld [vmem:[%s5958 + $0xc8] sm:$0xff]
    %v5985 = vld [vmem:[%s5958 + $0xd0] sm:$0xff]
    %v5986 = vld [vmem:[%s5958 + $0xd8] sm:$0xff]
    %v5987 = vld [vmem:[%s5958 + $0xe0] sm:$0xff]
    %v5988 = vld [vmem:[%s5958 + $0xe8] sm:$0xff]
    %v5989 = vld [vmem:[%s5958 + $0xf0] sm:$0xff]
    %v5990 = vld [vmem:[%s5958 + $0xf8] sm:$0xff]
    %v5991 = vld [vmem:[%s5958 + $0x100] sm:$0xff]
    %v5992 = vld [vmem:[%s5958 + $0x108] sm:$0xff]
    %v5993 = vld [vmem:[%s5958 + $0x110] sm:$0xff]
    %v5994 = vld [vmem:[%s5958 + $0x118] sm:$0xff]
    %v5995 = vld [vmem:[%s5958 + $0x120] sm:$0xff]
    %v5996 = vld [vmem:[%s5958 + $0x128] sm:$0xff]
    %v5997 = vld [vmem:[%s5958 + $0x130] sm:$0xff]
    %v5998 = vld [vmem:[%s5958 + $0x138] sm:$0xff]
    %v5999 = vld [vmem:[%s5958 + $0x140] sm:$0xff]
    %v6000 = vld [vmem:[%s5958 + $0x148] sm:$0xff]
    %v6001 = vld [vmem:[%s5958 + $0x150] sm:$0xff]
    %v6002 = vld [vmem:[%s5958 + $0x158] sm:$0xff]
    %v6003 = vld [vmem:[%s5958 + $0x160] sm:$0xff]
    %v6004 = vld [vmem:[%s5958 + $0x168] sm:$0xff]
    %v6005 = vld [vmem:[%s5958 + $0x170] sm:$0xff]
    %v6006 = vld [vmem:[%s5958 + $0x178] sm:$0xff]
    %v6007 = vld [vmem:[%s5958 + $0x180] sm:$0xff]
    %v6008 = vld [vmem:[%s5958 + $0x188] sm:$0xff]
    %v6009 = vld [vmem:[%s5958 + $0x190] sm:$0xff]
    %v6010 = vld [vmem:[%s5958 + $0x198] sm:$0xff]
    %v6011 = vld [vmem:[%s5958 + $0x1a0] sm:$0xff]
    %v6012 = vld [vmem:[%s5958 + $0x1a8] sm:$0xff]
    %v6013 = vld [vmem:[%s5958 + $0x1b0] sm:$0xff]
    %v6014 = vld [vmem:[%s5958 + $0x1b8] sm:$0xff]
    %v6015 = vld [vmem:[%s5958 + $0x1c0] sm:$0xff]
    %v6016 = vld [vmem:[%s5958 + $0x1c8] sm:$0xff]
    %v6017 = vld [vmem:[%s5958 + $0x1d0] sm:$0xff]
    %v6018 = vld [vmem:[%s5958 + $0x1d8] sm:$0xff]
    %v6019 = vld [vmem:[%s5958 + $0x1e0] sm:$0xff]
    %v6020 = vld [vmem:[%s5958 + $0x1e8] sm:$0xff]
    %v6021 = vld [vmem:[%s5958 + $0x1f0] sm:$0xff]
    %v6022 = vld [vmem:[%s5958 + $0x1f8] sm:$0xff]
    %v6023 = vld [vmem:[%s5958 + $0x200] sm:$0xff]
    %v6024 = vld [vmem:[%s5958 + $0x208] sm:$0xff]
    %v6025 = vld [vmem:[%s5958 + $0x210] sm:$0xff]
    %v6026 = vld [vmem:[%s5958 + $0x218] sm:$0xff]
    %v6027 = vld [vmem:[%s5958 + $0x220] sm:$0xff]
    %v6028 = vld [vmem:[%s5958 + $0x228] sm:$0xff]
    %v6029 = vld [vmem:[%s5958 + $0x230] sm:$0xff]
    %v6030 = vld [vmem:[%s5958 + $0x238] sm:$0xff]
    %v6031 = vld [vmem:[%s5958 + $0x240] sm:$0xff]
    %v6032 = vld [vmem:[%s5958 + $0x248] sm:$0xff]
    %v6033 = vld [vmem:[%s5958 + $0x250] sm:$0xff]
    %v6034 = vld [vmem:[%s5958 + $0x258] sm:$0xff]
    %v6035 = vld [vmem:[%s5958 + $0x260] sm:$0xff]
    %v6036 = vld [vmem:[%s5958 + $0x268] sm:$0xff]
    %v6037 = vld [vmem:[%s5958 + $0x270] sm:$0xff]
    %v6038 = vld [vmem:[%s5958 + $0x278] sm:$0xff]
    %v6039 = vld [vmem:[%s5958 + $0x280] sm:$0xff]
    %v6040 = vld [vmem:[%s5958 + $0x288] sm:$0xff]
    %v6041 = vld [vmem:[%s5958 + $0x290] sm:$0xff]
    %v6042 = vld [vmem:[%s5958 + $0x298] sm:$0xff]
    %v6043 = vld [vmem:[%s5958 + $0x2a0] sm:$0xff]
    %v6044 = vld [vmem:[%s5958 + $0x2a8] sm:$0xff]
    %v6045 = vld [vmem:[%s5958 + $0x2b0] sm:$0xff]
    %v6046 = vld [vmem:[%s5958 + $0x2b8] sm:$0xff]
    %v6047 = vld [vmem:[%s5958 + $0x2c0] sm:$0xff]
    %v6048 = vld [vmem:[%s5958 + $0x2c8] sm:$0xff]
    %v6049 = vld [vmem:[%s5958 + $0x2d0] sm:$0xff]
    %v6050 = vld [vmem:[%s5958 + $0x2d8] sm:$0xff]
    %v6051 = vld [vmem:[%s5958 + $0x2e0] sm:$0xff]
    %v6052 = vld [vmem:[%s5958 + $0x2e8] sm:$0xff]
    %v6053 = vld [vmem:[%s5958 + $0x2f0] sm:$0xff]
    %v6054 = vld [vmem:[%s5958 + $0x2f8] sm:$0xff]
    %v6055 = vld [vmem:[%s5958 + $0x300] sm:$0xff]
    %v6056 = vld [vmem:[%s5958 + $0x308] sm:$0xff]
    %v6057 = vld [vmem:[%s5958 + $0x310] sm:$0xff]
    %v6058 = vld [vmem:[%s5958 + $0x318] sm:$0xff]
    %v6059 = vld [vmem:[%s5958 + $0x320] sm:$0xff]
    %v6060 = vld [vmem:[%s5958 + $0x328] sm:$0xff]
    %v6061 = vld [vmem:[%s5958 + $0x330] sm:$0xff]
    %v6062 = vld [vmem:[%s5958 + $0x338] sm:$0xff]
    %v6063 = vld [vmem:[%s5958 + $0x340] sm:$0xff]
    %v6064 = vld [vmem:[%s5958 + $0x348] sm:$0xff]
    %v6065 = vld [vmem:[%s5958 + $0x350] sm:$0xff]
    %v6066 = vld [vmem:[%s5958 + $0x358] sm:$0xff]
    %v6067 = vld [vmem:[%s5958 + $0x360] sm:$0xff]
    %v6068 = vld [vmem:[%s5958 + $0x368] sm:$0xff]
    %v6069 = vld [vmem:[%s5958 + $0x370] sm:$0xff]
    %v6070 = vld [vmem:[%s5958 + $0x378] sm:$0xff]
    %v6071 = vld [vmem:[%s5958 + $0x380] sm:$0xff]
    %v6072 = vld [vmem:[%s5958 + $0x388] sm:$0xff]
    %v6073 = vld [vmem:[%s5958 + $0x390] sm:$0xff]
    %v6074 = vld [vmem:[%s5958 + $0x398] sm:$0xff]
    %v6075 = vld [vmem:[%s5958 + $0x3a0] sm:$0xff]
    %v6076 = vld [vmem:[%s5958 + $0x3a8] sm:$0xff]
    %v6077 = vld [vmem:[%s5958 + $0x3b0] sm:$0xff]
    %v6078 = vld [vmem:[%s5958 + $0x3b8] sm:$0xff]
    %v6079 = vld [vmem:[%s5958 + $0x3c0] sm:$0xff]
    %v6080 = vld [vmem:[%s5958 + $0x3c8] sm:$0xff]
    %v6081 = vld [vmem:[%s5958 + $0x3d0] sm:$0xff]
    %v6082 = vld [vmem:[%s5958 + $0x3d8] sm:$0xff]
    %v6083 = vld [vmem:[%s5958 + $0x3e0] sm:$0xff]
    %v6084 = vld [vmem:[%s5958 + $0x3e8] sm:$0xff]
    %v6085 = vld [vmem:[%s5958 + $0x3f0] sm:$0xff]
    %v6086 = vld [vmem:[%s5958 + $0x3f8] sm:$0xff]
    %s6087 = scalar_lea.vmem [#allocation7], 24
    %v6088 = vld [vmem:[%s6087] sm:$0xf]
    %v6090 = vlaneseq
    %v6091 = vshrl.u32 %v6090, 7
    %v6092 = vsub.s32 0, %v6091
    %v6093 = vrot.slane %v6088, %v6092
    %v6094 = vlaneseq
    %v6095 = vshrl.u32 %v6094, 7
    %v6096 = vsub.s32 1, %v6095
    %v6097 = vrot.slane %v6088, %v6096
    %v6098 = vlaneseq
    %v6099 = vshrl.u32 %v6098, 7
    %v6100 = vsub.s32 2, %v6099
    %v6101 = vrot.slane %v6088, %v6100
    %v6102 = vlaneseq
    %v6103 = vshrl.u32 %v6102, 7
    %v6104 = vsub.s32 3, %v6103
    %v6105 = vrot.slane %v6088, %v6104
    %v6238 = vunpack.c.l.b16 %v5959
    %v6239 = vunpack.c.h.b16 %v5959
    %v6240 = vunpack.c.l.b16 %v5960
    %v6241 = vunpack.c.h.b16 %v5960
    %v6242 = vunpack.c.l.b16 %v5961
    %v6243 = vunpack.c.h.b16 %v5961
    %v6244 = vunpack.c.l.b16 %v5962
    %v6245 = vunpack.c.h.b16 %v5962
    %v6246 = vunpack.c.l.b16 %v5963
    %v6247 = vunpack.c.h.b16 %v5963
    %v6248 = vunpack.c.l.b16 %v5964
    %v6249 = vunpack.c.h.b16 %v5964
    %v6250 = vunpack.c.l.b16 %v5965
    %v6251 = vunpack.c.h.b16 %v5965
    %v6252 = vunpack.c.l.b16 %v5966
    %v6253 = vunpack.c.h.b16 %v5966
    %v6254 = vunpack.c.l.b16 %v5967
    %v6255 = vunpack.c.h.b16 %v5967
    %v6256 = vunpack.c.l.b16 %v5968
    %v6257 = vunpack.c.h.b16 %v5968
    %v6258 = vunpack.c.l.b16 %v5969
    %v6259 = vunpack.c.h.b16 %v5969
    %v6260 = vunpack.c.l.b16 %v5970
    %v6261 = vunpack.c.h.b16 %v5970
    %v6262 = vunpack.c.l.b16 %v5971
    %v6263 = vunpack.c.h.b16 %v5971
    %v6264 = vunpack.c.l.b16 %v5972
    %v6265 = vunpack.c.h.b16 %v5972
    %v6266 = vunpack.c.l.b16 %v5973
    %v6267 = vunpack.c.h.b16 %v5973
    %v6268 = vunpack.c.l.b16 %v5974
    %v6269 = vunpack.c.h.b16 %v5974
    %v6270 = vunpack.c.l.b16 %v5975
    %v6271 = vunpack.c.h.b16 %v5975
    %v6272 = vunpack.c.l.b16 %v5976
    %v6273 = vunpack.c.h.b16 %v5976
    %v6274 = vunpack.c.l.b16 %v5977
    %v6275 = vunpack.c.h.b16 %v5977
    %v6276 = vunpack.c.l.b16 %v5978
    %v6277 = vunpack.c.h.b16 %v5978
    %v6278 = vunpack.c.l.b16 %v5979
    %v6279 = vunpack.c.h.b16 %v5979
    %v6280 = vunpack.c.l.b16 %v5980
    %v6281 = vunpack.c.h.b16 %v5980
    %v6282 = vunpack.c.l.b16 %v5981
    %v6283 = vunpack.c.h.b16 %v5981
    %v6284 = vunpack.c.l.b16 %v5982
    %v6285 = vunpack.c.h.b16 %v5982
    %v6286 = vunpack.c.l.b16 %v5983
    %v6287 = vunpack.c.h.b16 %v5983
    %v6288 = vunpack.c.l.b16 %v5984
    %v6289 = vunpack.c.h.b16 %v5984
    %v6290 = vunpack.c.l.b16 %v5985
    %v6291 = vunpack.c.h.b16 %v5985
    %v6292 = vunpack.c.l.b16 %v5986
    %v6293 = vunpack.c.h.b16 %v5986
    %v6294 = vunpack.c.l.b16 %v5987
    %v6295 = vunpack.c.h.b16 %v5987
    %v6296 = vunpack.c.l.b16 %v5988
    %v6297 = vunpack.c.h.b16 %v5988
    %v6298 = vunpack.c.l.b16 %v5989
    %v6299 = vunpack.c.h.b16 %v5989
    %v6300 = vunpack.c.l.b16 %v5990
    %v6301 = vunpack.c.h.b16 %v5990
    %v6302 = vunpack.c.l.b16 %v5991
    %v6303 = vunpack.c.h.b16 %v5991
    %v6304 = vunpack.c.l.b16 %v5992
    %v6305 = vunpack.c.h.b16 %v5992
    %v6306 = vunpack.c.l.b16 %v5993
    %v6307 = vunpack.c.h.b16 %v5993
    %v6308 = vunpack.c.l.b16 %v5994
    %v6309 = vunpack.c.h.b16 %v5994
    %v6310 = vunpack.c.l.b16 %v5995
    %v6311 = vunpack.c.h.b16 %v5995
    %v6312 = vunpack.c.l.b16 %v5996
    %v6313 = vunpack.c.h.b16 %v5996
    %v6314 = vunpack.c.l.b16 %v5997
    %v6315 = vunpack.c.h.b16 %v5997
    %v6316 = vunpack.c.l.b16 %v5998
    %v6317 = vunpack.c.h.b16 %v5998
    %v6318 = vunpack.c.l.b16 %v5999
    %v6319 = vunpack.c.h.b16 %v5999
    %v6320 = vunpack.c.l.b16 %v6000
    %v6321 = vunpack.c.h.b16 %v6000
    %v6322 = vunpack.c.l.b16 %v6001
    %v6323 = vunpack.c.h.b16 %v6001
    %v6324 = vunpack.c.l.b16 %v6002
    %v6325 = vunpack.c.h.b16 %v6002
    %v6326 = vunpack.c.l.b16 %v6003
    %v6327 = vunpack.c.h.b16 %v6003
    %v6328 = vunpack.c.l.b16 %v6004
    %v6329 = vunpack.c.h.b16 %v6004
    %v6330 = vunpack.c.l.b16 %v6005
    %v6331 = vunpack.c.h.b16 %v6005
    %v6332 = vunpack.c.l.b16 %v6006
    %v6333 = vunpack.c.h.b16 %v6006
    %v6334 = vunpack.c.l.b16 %v6007
    %v6335 = vunpack.c.h.b16 %v6007
    %v6336 = vunpack.c.l.b16 %v6008
    %v6337 = vunpack.c.h.b16 %v6008
    %v6338 = vunpack.c.l.b16 %v6009
    %v6339 = vunpack.c.h.b16 %v6009
    %v6340 = vunpack.c.l.b16 %v6010
    %v6341 = vunpack.c.h.b16 %v6010
    %v6342 = vunpack.c.l.b16 %v6011
    %v6343 = vunpack.c.h.b16 %v6011
    %v6344 = vunpack.c.l.b16 %v6012
    %v6345 = vunpack.c.h.b16 %v6012
    %v6346 = vunpack.c.l.b16 %v6013
    %v6347 = vunpack.c.h.b16 %v6013
    %v6348 = vunpack.c.l.b16 %v6014
    %v6349 = vunpack.c.h.b16 %v6014
    %v6350 = vunpack.c.l.b16 %v6015
    %v6351 = vunpack.c.h.b16 %v6015
    %v6352 = vunpack.c.l.b16 %v6016
    %v6353 = vunpack.c.h.b16 %v6016
    %v6354 = vunpack.c.l.b16 %v6017
    %v6355 = vunpack.c.h.b16 %v6017
    %v6356 = vunpack.c.l.b16 %v6018
    %v6357 = vunpack.c.h.b16 %v6018
    %v6358 = vunpack.c.l.b16 %v6019
    %v6359 = vunpack.c.h.b16 %v6019
    %v6360 = vunpack.c.l.b16 %v6020
    %v6361 = vunpack.c.h.b16 %v6020
    %v6362 = vunpack.c.l.b16 %v6021
    %v6363 = vunpack.c.h.b16 %v6021
    %v6364 = vunpack.c.l.b16 %v6022
    %v6365 = vunpack.c.h.b16 %v6022
    %v6366 = vunpack.c.l.b16 %v6023
    %v6367 = vunpack.c.h.b16 %v6023
    %v6368 = vunpack.c.l.b16 %v6024
    %v6369 = vunpack.c.h.b16 %v6024
    %v6370 = vunpack.c.l.b16 %v6025
    %v6371 = vunpack.c.h.b16 %v6025
    %v6372 = vunpack.c.l.b16 %v6026
    %v6373 = vunpack.c.h.b16 %v6026
    %v6374 = vunpack.c.l.b16 %v6027
    %v6375 = vunpack.c.h.b16 %v6027
    %v6376 = vunpack.c.l.b16 %v6028
    %v6377 = vunpack.c.h.b16 %v6028
    %v6378 = vunpack.c.l.b16 %v6029
    %v6379 = vunpack.c.h.b16 %v6029
    %v6380 = vunpack.c.l.b16 %v6030
    %v6381 = vunpack.c.h.b16 %v6030
    %v6382 = vunpack.c.l.b16 %v6031
    %v6383 = vunpack.c.h.b16 %v6031
    %v6384 = vunpack.c.l.b16 %v6032
    %v6385 = vunpack.c.h.b16 %v6032
    %v6386 = vunpack.c.l.b16 %v6033
    %v6387 = vunpack.c.h.b16 %v6033
    %v6388 = vunpack.c.l.b16 %v6034
    %v6389 = vunpack.c.h.b16 %v6034
    %v6390 = vunpack.c.l.b16 %v6035
    %v6391 = vunpack.c.h.b16 %v6035
    %v6392 = vunpack.c.l.b16 %v6036
    %v6393 = vunpack.c.h.b16 %v6036
    %v6394 = vunpack.c.l.b16 %v6037
    %v6395 = vunpack.c.h.b16 %v6037
    %v6396 = vunpack.c.l.b16 %v6038
    %v6397 = vunpack.c.h.b16 %v6038
    %v6398 = vunpack.c.l.b16 %v6039
    %v6399 = vunpack.c.h.b16 %v6039
    %v6400 = vunpack.c.l.b16 %v6040
    %v6401 = vunpack.c.h.b16 %v6040
    %v6402 = vunpack.c.l.b16 %v6041
    %v6403 = vunpack.c.h.b16 %v6041
    %v6404 = vunpack.c.l.b16 %v6042
    %v6405 = vunpack.c.h.b16 %v6042
    %v6406 = vunpack.c.l.b16 %v6043
    %v6407 = vunpack.c.h.b16 %v6043
    %v6408 = vunpack.c.l.b16 %v6044
    %v6409 = vunpack.c.h.b16 %v6044
    %v6410 = vunpack.c.l.b16 %v6045
    %v6411 = vunpack.c.h.b16 %v6045
    %v6412 = vunpack.c.l.b16 %v6046
    %v6413 = vunpack.c.h.b16 %v6046
    %v6414 = vunpack.c.l.b16 %v6047
    %v6415 = vunpack.c.h.b16 %v6047
    %v6416 = vunpack.c.l.b16 %v6048
    %v6417 = vunpack.c.h.b16 %v6048
    %v6418 = vunpack.c.l.b16 %v6049
    %v6419 = vunpack.c.h.b16 %v6049
    %v6420 = vunpack.c.l.b16 %v6050
    %v6421 = vunpack.c.h.b16 %v6050
    %v6422 = vunpack.c.l.b16 %v6051
    %v6423 = vunpack.c.h.b16 %v6051
    %v6424 = vunpack.c.l.b16 %v6052
    %v6425 = vunpack.c.h.b16 %v6052
    %v6426 = vunpack.c.l.b16 %v6053
    %v6427 = vunpack.c.h.b16 %v6053
    %v6428 = vunpack.c.l.b16 %v6054
    %v6429 = vunpack.c.h.b16 %v6054
    %v6430 = vunpack.c.l.b16 %v6055
    %v6431 = vunpack.c.h.b16 %v6055
    %v6432 = vunpack.c.l.b16 %v6056
    %v6433 = vunpack.c.h.b16 %v6056
    %v6434 = vunpack.c.l.b16 %v6057
    %v6435 = vunpack.c.h.b16 %v6057
    %v6436 = vunpack.c.l.b16 %v6058
    %v6437 = vunpack.c.h.b16 %v6058
    %v6438 = vunpack.c.l.b16 %v6059
    %v6439 = vunpack.c.h.b16 %v6059
    %v6440 = vunpack.c.l.b16 %v6060
    %v6441 = vunpack.c.h.b16 %v6060
    %v6442 = vunpack.c.l.b16 %v6061
    %v6443 = vunpack.c.h.b16 %v6061
    %v6444 = vunpack.c.l.b16 %v6062
    %v6445 = vunpack.c.h.b16 %v6062
    %v6446 = vunpack.c.l.b16 %v6063
    %v6447 = vunpack.c.h.b16 %v6063
    %v6448 = vunpack.c.l.b16 %v6064
    %v6449 = vunpack.c.h.b16 %v6064
    %v6450 = vunpack.c.l.b16 %v6065
    %v6451 = vunpack.c.h.b16 %v6065
    %v6452 = vunpack.c.l.b16 %v6066
    %v6453 = vunpack.c.h.b16 %v6066
    %v6454 = vunpack.c.l.b16 %v6067
    %v6455 = vunpack.c.h.b16 %v6067
    %v6456 = vunpack.c.l.b16 %v6068
    %v6457 = vunpack.c.h.b16 %v6068
    %v6458 = vunpack.c.l.b16 %v6069
    %v6459 = vunpack.c.h.b16 %v6069
    %v6460 = vunpack.c.l.b16 %v6070
    %v6461 = vunpack.c.h.b16 %v6070
    %v6462 = vunpack.c.l.b16 %v6071
    %v6463 = vunpack.c.h.b16 %v6071
    %v6464 = vunpack.c.l.b16 %v6072
    %v6465 = vunpack.c.h.b16 %v6072
    %v6466 = vunpack.c.l.b16 %v6073
    %v6467 = vunpack.c.h.b16 %v6073
    %v6468 = vunpack.c.l.b16 %v6074
    %v6469 = vunpack.c.h.b16 %v6074
    %v6470 = vunpack.c.l.b16 %v6075
    %v6471 = vunpack.c.h.b16 %v6075
    %v6472 = vunpack.c.l.b16 %v6076
    %v6473 = vunpack.c.h.b16 %v6076
    %v6474 = vunpack.c.l.b16 %v6077
    %v6475 = vunpack.c.h.b16 %v6077
    %v6476 = vunpack.c.l.b16 %v6078
    %v6477 = vunpack.c.h.b16 %v6078
    %v6478 = vunpack.c.l.b16 %v6079
    %v6479 = vunpack.c.h.b16 %v6079
    %v6480 = vunpack.c.l.b16 %v6080
    %v6481 = vunpack.c.h.b16 %v6080
    %v6482 = vunpack.c.l.b16 %v6081
    %v6483 = vunpack.c.h.b16 %v6081
    %v6484 = vunpack.c.l.b16 %v6082
    %v6485 = vunpack.c.h.b16 %v6082
    %v6486 = vunpack.c.l.b16 %v6083
    %v6487 = vunpack.c.h.b16 %v6083
    %v6488 = vunpack.c.l.b16 %v6084
    %v6489 = vunpack.c.h.b16 %v6084
    %v6490 = vunpack.c.l.b16 %v6085
    %v6491 = vunpack.c.h.b16 %v6085
    %v6492 = vunpack.c.l.b16 %v6086
    %v6493 = vunpack.c.h.b16 %v6086
    %v6494 = vpack.c.b16 %v6242, %v6238
    %v6495 = vpack.c.b16 %v6243, %v6239
    %v6496 = vpack.c.b16 %v6244, %v6240
    %v6497 = vpack.c.b16 %v6245, %v6241
    %v6498 = vpack.c.b16 %v6250, %v6246
    %v6499 = vpack.c.b16 %v6251, %v6247
    %v6500 = vpack.c.b16 %v6252, %v6248
    %v6501 = vpack.c.b16 %v6253, %v6249
    %v6502 = vpack.c.b16 %v6258, %v6254
    %v6503 = vpack.c.b16 %v6259, %v6255
    %v6504 = vpack.c.b16 %v6260, %v6256
    %v6505 = vpack.c.b16 %v6261, %v6257
    %v6506 = vpack.c.b16 %v6266, %v6262
    %v6507 = vpack.c.b16 %v6267, %v6263
    %v6508 = vpack.c.b16 %v6268, %v6264
    %v6509 = vpack.c.b16 %v6269, %v6265
    %v6510 = vpack.c.b16 %v6274, %v6270
    %v6511 = vpack.c.b16 %v6275, %v6271
    %v6512 = vpack.c.b16 %v6276, %v6272
    %v6513 = vpack.c.b16 %v6277, %v6273
    %v6514 = vpack.c.b16 %v6282, %v6278
    %v6515 = vpack.c.b16 %v6283, %v6279
    %v6516 = vpack.c.b16 %v6284, %v6280
    %v6517 = vpack.c.b16 %v6285, %v6281
    %v6518 = vpack.c.b16 %v6290, %v6286
    %v6519 = vpack.c.b16 %v6291, %v6287
    %v6520 = vpack.c.b16 %v6292, %v6288
    %v6521 = vpack.c.b16 %v6293, %v6289
    %v6522 = vpack.c.b16 %v6298, %v6294
    %v6523 = vpack.c.b16 %v6299, %v6295
    %v6524 = vpack.c.b16 %v6300, %v6296
    %v6525 = vpack.c.b16 %v6301, %v6297
    %v6526 = vpack.c.b16 %v6306, %v6302
    %v6527 = vpack.c.b16 %v6307, %v6303
    %v6528 = vpack.c.b16 %v6308, %v6304
    %v6529 = vpack.c.b16 %v6309, %v6305
    %v6530 = vpack.c.b16 %v6314, %v6310
    %v6531 = vpack.c.b16 %v6315, %v6311
    %v6532 = vpack.c.b16 %v6316, %v6312
    %v6533 = vpack.c.b16 %v6317, %v6313
    %v6534 = vpack.c.b16 %v6322, %v6318
    %v6535 = vpack.c.b16 %v6323, %v6319
    %v6536 = vpack.c.b16 %v6324, %v6320
    %v6537 = vpack.c.b16 %v6325, %v6321
    %v6538 = vpack.c.b16 %v6330, %v6326
    %v6539 = vpack.c.b16 %v6331, %v6327
    %v6540 = vpack.c.b16 %v6332, %v6328
    %v6541 = vpack.c.b16 %v6333, %v6329
    %v6542 = vpack.c.b16 %v6338, %v6334
    %v6543 = vpack.c.b16 %v6339, %v6335
    %v6544 = vpack.c.b16 %v6340, %v6336
    %v6545 = vpack.c.b16 %v6341, %v6337
    %v6546 = vpack.c.b16 %v6346, %v6342
    %v6547 = vpack.c.b16 %v6347, %v6343
    %v6548 = vpack.c.b16 %v6348, %v6344
    %v6549 = vpack.c.b16 %v6349, %v6345
    %v6550 = vpack.c.b16 %v6354, %v6350
    %v6551 = vpack.c.b16 %v6355, %v6351
    %v6552 = vpack.c.b16 %v6356, %v6352
    %v6553 = vpack.c.b16 %v6357, %v6353
    %v6554 = vpack.c.b16 %v6362, %v6358
    %v6555 = vpack.c.b16 %v6363, %v6359
    %v6556 = vpack.c.b16 %v6364, %v6360
    %v6557 = vpack.c.b16 %v6365, %v6361
    %v6558 = vpack.c.b16 %v6370, %v6366
    %v6559 = vpack.c.b16 %v6371, %v6367
    %v6560 = vpack.c.b16 %v6372, %v6368
    %v6561 = vpack.c.b16 %v6373, %v6369
    %v6562 = vpack.c.b16 %v6378, %v6374
    %v6563 = vpack.c.b16 %v6379, %v6375
    %v6564 = vpack.c.b16 %v6380, %v6376
    %v6565 = vpack.c.b16 %v6381, %v6377
    %v6566 = vpack.c.b16 %v6386, %v6382
    %v6567 = vpack.c.b16 %v6387, %v6383
    %v6568 = vpack.c.b16 %v6388, %v6384
    %v6569 = vpack.c.b16 %v6389, %v6385
    %v6570 = vpack.c.b16 %v6394, %v6390
    %v6571 = vpack.c.b16 %v6395, %v6391
    %v6572 = vpack.c.b16 %v6396, %v6392
    %v6573 = vpack.c.b16 %v6397, %v6393
    %v6574 = vpack.c.b16 %v6402, %v6398
    %v6575 = vpack.c.b16 %v6403, %v6399
    %v6576 = vpack.c.b16 %v6404, %v6400
    %v6577 = vpack.c.b16 %v6405, %v6401
    %v6578 = vpack.c.b16 %v6410, %v6406
    %v6579 = vpack.c.b16 %v6411, %v6407
    %v6580 = vpack.c.b16 %v6412, %v6408
    %v6581 = vpack.c.b16 %v6413, %v6409
    %v6582 = vpack.c.b16 %v6418, %v6414
    %v6583 = vpack.c.b16 %v6419, %v6415
    %v6584 = vpack.c.b16 %v6420, %v6416
    %v6585 = vpack.c.b16 %v6421, %v6417
    %v6586 = vpack.c.b16 %v6426, %v6422
    %v6587 = vpack.c.b16 %v6427, %v6423
    %v6588 = vpack.c.b16 %v6428, %v6424
    %v6589 = vpack.c.b16 %v6429, %v6425
    %v6590 = vpack.c.b16 %v6434, %v6430
    %v6591 = vpack.c.b16 %v6435, %v6431
    %v6592 = vpack.c.b16 %v6436, %v6432
    %v6593 = vpack.c.b16 %v6437, %v6433
    %v6594 = vpack.c.b16 %v6442, %v6438
    %v6595 = vpack.c.b16 %v6443, %v6439
    %v6596 = vpack.c.b16 %v6444, %v6440
    %v6597 = vpack.c.b16 %v6445, %v6441
    %v6598 = vpack.c.b16 %v6450, %v6446
    %v6599 = vpack.c.b16 %v6451, %v6447
    %v6600 = vpack.c.b16 %v6452, %v6448
    %v6601 = vpack.c.b16 %v6453, %v6449
    %v6602 = vpack.c.b16 %v6458, %v6454
    %v6603 = vpack.c.b16 %v6459, %v6455
    %v6604 = vpack.c.b16 %v6460, %v6456
    %v6605 = vpack.c.b16 %v6461, %v6457
    %v6606 = vpack.c.b16 %v6466, %v6462
    %v6607 = vpack.c.b16 %v6467, %v6463
    %v6608 = vpack.c.b16 %v6468, %v6464
    %v6609 = vpack.c.b16 %v6469, %v6465
    %v6610 = vpack.c.b16 %v6474, %v6470
    %v6611 = vpack.c.b16 %v6475, %v6471
    %v6612 = vpack.c.b16 %v6476, %v6472
    %v6613 = vpack.c.b16 %v6477, %v6473
    %v6614 = vpack.c.b16 %v6482, %v6478
    %v6615 = vpack.c.b16 %v6483, %v6479
    %v6616 = vpack.c.b16 %v6484, %v6480
    %v6617 = vpack.c.b16 %v6485, %v6481
    %v6618 = vpack.c.b16 %v6490, %v6486
    %v6619 = vpack.c.b16 %v6491, %v6487
    %v6620 = vpack.c.b16 %v6492, %v6488
    %v6621 = vpack.c.b16 %v6493, %v6489
    %6750 = vmatprep.subr.bf16.mxu0 %v6495
    %6751 = vmatpush1.bf16.msra.mxu0 %v6494
    %6752 = vmatprep.subr.bf16.mxu0 %v6499
    %6753 = vmatpush1.bf16.msra.mxu0 %v6498
    %6754 = vmatprep.subr.bf16.mxu0 %v6503
    %6755 = vmatpush1.bf16.msra.mxu0 %v6502
    %6756 = vmatprep.subr.bf16.mxu0 %v6507
    %6757 = vmatpush1.bf16.msra.mxu0 %v6506
    %6758 = vmatprep.subr.bf16.mxu0 %v6511
    %6759 = vmatpush1.bf16.msra.mxu0 %v6510
    %6760 = vmatprep.subr.bf16.mxu0 %v6515
    %6761 = vmatpush1.bf16.msra.mxu0 %v6514
    %6762 = vmatprep.subr.bf16.mxu0 %v6519
    %6763 = vmatpush1.bf16.msra.mxu0 %v6518
    %6764 = vmatprep.subr.bf16.mxu0 %v6523
    %6765 = vmatpush1.bf16.msra.mxu0 %v6522
    %6766 = vmatprep.subr.bf16.mxu0 %v6527
    %6767 = vmatpush1.bf16.msra.mxu0 %v6526
    %6768 = vmatprep.subr.bf16.mxu0 %v6531
    %6769 = vmatpush1.bf16.msra.mxu0 %v6530
    %6770 = vmatprep.subr.bf16.mxu0 %v6535
    %6771 = vmatpush1.bf16.msra.mxu0 %v6534
    %6772 = vmatprep.subr.bf16.mxu0 %v6539
    %6773 = vmatpush1.bf16.msra.mxu0 %v6538
    %6774 = vmatprep.subr.bf16.mxu0 %v6543
    %6775 = vmatpush1.bf16.msra.mxu0 %v6542
    %6776 = vmatprep.subr.bf16.mxu0 %v6547
    %6777 = vmatpush1.bf16.msra.mxu0 %v6546
    %6778 = vmatprep.subr.bf16.mxu0 %v6551
    %6779 = vmatpush1.bf16.msra.mxu0 %v6550
    %6780 = vmatprep.subr.bf16.mxu0 %v6555
    %6781 = vmatpush1.bf16.msra.mxu0 %v6554
    %6782 = vmatprep.mubr.bf16.mxu0 %v5955
    %6783 = vmatmul.mubr.bf16.gmra.mrb[0].mxu0 %v5954
    %v6784 = vpop.f32.mrb[0].mxu0
    %v6785 = vadd.f32 %v6093, %v6784
    %v6786 = vpop.f32.mrb[0].mxu0
    %v6787 = vadd.f32 %v6097, %v6786
    %v6788 = vpop.f32.mrb[0].mxu0
    %v6789 = vpop.f32.mrb[0].mxu0
    %6790 = vdwg.mxu0
    %6791 = vmatprep.subr.bf16.mxu0 %v6559
    %6792 = vmatpush1.bf16.msra.mxu0 %v6558
    %6793 = vmatprep.subr.bf16.mxu0 %v6563
    %6794 = vmatpush1.bf16.msra.mxu0 %v6562
    %6795 = vmatprep.subr.bf16.mxu0 %v6567
    %6796 = vmatpush1.bf16.msra.mxu0 %v6566
    %6797 = vmatprep.subr.bf16.mxu0 %v6571
    %6798 = vmatpush1.bf16.msra.mxu0 %v6570
    %6799 = vmatprep.subr.bf16.mxu0 %v6575
    %6800 = vmatpush1.bf16.msra.mxu0 %v6574
    %6801 = vmatprep.subr.bf16.mxu0 %v6579
    %6802 = vmatpush1.bf16.msra.mxu0 %v6578
    %6803 = vmatprep.subr.bf16.mxu0 %v6583
    %6804 = vmatpush1.bf16.msra.mxu0 %v6582
    %6805 = vmatprep.subr.bf16.mxu0 %v6587
    %6806 = vmatpush1.bf16.msra.mxu0 %v6586
    %6807 = vmatprep.subr.bf16.mxu0 %v6591
    %6808 = vmatpush1.bf16.msra.mxu0 %v6590
    %6809 = vmatprep.subr.bf16.mxu0 %v6595
    %6810 = vmatpush1.bf16.msra.mxu0 %v6594
    %6811 = vmatprep.subr.bf16.mxu0 %v6599
    %6812 = vmatpush1.bf16.msra.mxu0 %v6598
    %6813 = vmatprep.subr.bf16.mxu0 %v6603
    %6814 = vmatpush1.bf16.msra.mxu0 %v6602
    %6815 = vmatprep.subr.bf16.mxu0 %v6607
    %6816 = vmatpush1.bf16.msra.mxu0 %v6606
    %6817 = vmatprep.subr.bf16.mxu0 %v6611
    %6818 = vmatpush1.bf16.msra.mxu0 %v6610
    %6819 = vmatprep.subr.bf16.mxu0 %v6615
    %6820 = vmatpush1.bf16.msra.mxu0 %v6614
    %6821 = vmatprep.subr.bf16.mxu0 %v6619
    %6822 = vmatpush1.bf16.msra.mxu0 %v6618
    %6823 = vmatprep.mubr.bf16.mxu0 %v5957
    %6824 = vmatmul.mubr.bf16.gmra.mrb[0].mxu0 %v5956
    %v6825 = vpop.f32.mrb[0].mxu0
    %v6826 = vadd.f32 %v6785, %v6825
    %v6827 = vpop.f32.mrb[0].mxu0
    %v6828 = vadd.f32 %v6787, %v6827
    %v6829 = vpop.f32.mrb[0].mxu0
    %v6830 = vpop.f32.mrb[0].mxu0
    %6831 = vdwg.mxu0
    %6832 = vmatprep.subr.bf16.mxu0 %v6497
    %6833 = vmatpush1.bf16.msra.mxu0 %v6496
    %6834 = vmatprep.subr.bf16.mxu0 %v6501
    %6835 = vmatpush1.bf16.msra.mxu0 %v6500
    %6836 = vmatprep.subr.bf16.mxu0 %v6505
    %6837 = vmatpush1.bf16.msra.mxu0 %v6504
    %6838 = vmatprep.subr.bf16.mxu0 %v6509
    %6839 = vmatpush1.bf16.msra.mxu0 %v6508
    %6840 = vmatprep.subr.bf16.mxu0 %v6513
    %6841 = vmatpush1.bf16.msra.mxu0 %v6512
    %6842 = vmatprep.subr.bf16.mxu0 %v6517
    %6843 = vmatpush1.bf16.msra.mxu0 %v6516
    %6844 = vmatprep.subr.bf16.mxu0 %v6521
    %6845 = vmatpush1.bf16.msra.mxu0 %v6520
    %6846 = vmatprep.subr.bf16.mxu0 %v6525
    %6847 = vmatpush1.bf16.msra.mxu0 %v6524
    %6848 = vmatprep.subr.bf16.mxu0 %v6529
    %6849 = vmatpush1.bf16.msra.mxu0 %v6528
    %6850 = vmatprep.subr.bf16.mxu0 %v6533
    %6851 = vmatpush1.bf16.msra.mxu0 %v6532
    %6852 = vmatprep.subr.bf16.mxu0 %v6537
    %6853 = vmatpush1.bf16.msra.mxu0 %v6536
    %6854 = vmatprep.subr.bf16.mxu0 %v6541
    %6855 = vmatpush1.bf16.msra.mxu0 %v6540
    %6856 = vmatprep.subr.bf16.mxu0 %v6545
    %6857 = vmatpush1.bf16.msra.mxu0 %v6544
    %6858 = vmatprep.subr.bf16.mxu0 %v6549
    %6859 = vmatpush1.bf16.msra.mxu0 %v6548
    %6860 = vmatprep.subr.bf16.mxu0 %v6553
    %6861 = vmatpush1.bf16.msra.mxu0 %v6552
    %6862 = vmatprep.subr.bf16.mxu0 %v6557
    %6863 = vmatpush1.bf16.msra.mxu0 %v6556
    %6864 = vmatprep.mubr.bf16.mxu0 %v5955
    %6865 = vmatmul.mubr.bf16.gmra.mrb[0].mxu0 %v5954
    %v6866 = vpop.f32.mrb[0].mxu0
    %v6867 = vadd.f32 %v6101, %v6866
    %v6868 = vpop.f32.mrb[0].mxu0
    %v6869 = vadd.f32 %v6105, %v6868
    %v6870 = vpop.f32.mrb[0].mxu0
    %v6871 = vpop.f32.mrb[0].mxu0
    %6872 = vdwg.mxu0
    %6873 = vmatprep.subr.bf16.mxu0 %v6561
    %6874 = vmatpush1.bf16.msra.mxu0 %v6560
    %6875 = vmatprep.subr.bf16.mxu0 %v6565
    %6876 = vmatpush1.bf16.msra.mxu0 %v6564
    %6877 = vmatprep.subr.bf16.mxu0 %v6569
    %6878 = vmatpush1.bf16.msra.mxu0 %v6568
    %6879 = vmatprep.subr.bf16.mxu0 %v6573
    %6880 = vmatpush1.bf16.msra.mxu0 %v6572
    %6881 = vmatprep.subr.bf16.mxu0 %v6577
    %6882 = vmatpush1.bf16.msra.mxu0 %v6576
    %6883 = vmatprep.subr.bf16.mxu0 %v6581
    %6884 = vmatpush1.bf16.msra.mxu0 %v6580
    %6885 = vmatprep.subr.bf16.mxu0 %v6585
    %6886 = vmatpush1.bf16.msra.mxu0 %v6584
    %6887 = vmatprep.subr.bf16.mxu0 %v6589
    %6888 = vmatpush1.bf16.msra.mxu0 %v6588
    %6889 = vmatprep.subr.bf16.mxu0 %v6593
    %6890 = vmatpush1.bf16.msra.mxu0 %v6592
    %6891 = vmatprep.subr.bf16.mxu0 %v6597
    %6892 = vmatpush1.bf16.msra.mxu0 %v6596
    %6893 = vmatprep.subr.bf16.mxu0 %v6601
    %6894 = vmatpush1.bf16.msra.mxu0 %v6600
    %6895 = vmatprep.subr.bf16.mxu0 %v6605
    %6896 = vmatpush1.bf16.msra.mxu0 %v6604
    %6897 = vmatprep.subr.bf16.mxu0 %v6609
    %6898 = vmatpush1.bf16.msra.mxu0 %v6608
    %6899 = vmatprep.subr.bf16.mxu0 %v6613
    %6900 = vmatpush1.bf16.msra.mxu0 %v6612
    %6901 = vmatprep.subr.bf16.mxu0 %v6617
    %6902 = vmatpush1.bf16.msra.mxu0 %v6616
    %6903 = vmatprep.subr.bf16.mxu0 %v6621
    %6904 = vmatpush1.bf16.msra.mxu0 %v6620
    %6905 = vmatprep.mubr.bf16.mxu0 %v5957
    %6906 = vmatmul.mubr.bf16.gmra.mrb[0].mxu0 %v5956
    %v6907 = vpop.f32.mrb[0].mxu0
    %v6908 = vadd.f32 %v6867, %v6907
    %v6909 = vpop.f32.mrb[0].mxu0
    %v6910 = vadd.f32 %v6869, %v6909
    %v6911 = vpop.f32.mrb[0].mxu0
    %v6912 = vpop.f32.mrb[0].mxu0
    %6913 = vdwg.mxu0
    %vm6914 = vcmp.ge.f32.partialorder %v6826, 0.0
    %vm6915 = vcmp.ge.f32.partialorder %v6828, 0.0
    %vm6916 = vcmp.ge.f32.partialorder %v6908, 0.0
    %vm6917 = vcmp.ge.f32.partialorder %v6910, 0.0
    %v6918 = vmul.f32 %v6826, 0.2
    %v6919 = vmul.f32 %v6828, 0.2
    %v6920 = vmul.f32 %v6908, 0.2
    %v6921 = vmul.f32 %v6910, 0.2
    %v6922 = vsel %vm6914, %v6826, %v6918
    %v6923 = vsel %vm6915, %v6828, %v6919
    %v6924 = vsel %vm6916, %v6908, %v6920
    %v6925 = vsel %vm6917, %v6910, %v6921
    %v6926 = vpack.c.bf16 %v6922, %v6922
    %v6927 = vpack.c.bf16 %v6923, %v6923
    %v6928 = vpack.c.bf16 %v6924, %v6924
    %v6929 = vpack.c.bf16 %v6925, %v6925
    %s6930 = scalar_lea.vmem [#allocation5], 7168
    %v6931 = vld [vmem:[%s6930] sm:$0xff]
    %v6932 = vld [vmem:[%s6930 + $0x8] sm:$0xff]
    %v6933 = vld [vmem:[%s6930 + $0x10] sm:$0xff]
    %v6934 = vld [vmem:[%s6930 + $0x18] sm:$0xff]
    %v6935 = vld [vmem:[%s6930 + $0x20] sm:$0xff]
    %v6936 = vld [vmem:[%s6930 + $0x28] sm:$0xff]
    %v6937 = vld [vmem:[%s6930 + $0x30] sm:$0xff]
    %v6938 = vld [vmem:[%s6930 + $0x38] sm:$0xff]
    %v6939 = vld [vmem:[%s6930 + $0x40] sm:$0xff]
    %v6940 = vld [vmem:[%s6930 + $0x48] sm:$0xff]
    %v6941 = vld [vmem:[%s6930 + $0x50] sm:$0xff]
    %v6942 = vld [vmem:[%s6930 + $0x58] sm:$0xff]
    %v6943 = vld [vmem:[%s6930 + $0x60] sm:$0xff]
    %v6944 = vld [vmem:[%s6930 + $0x68] sm:$0xff]
    %v6945 = vld [vmem:[%s6930 + $0x70] sm:$0xff]
    %v6946 = vld [vmem:[%s6930 + $0x78] sm:$0xff]
    %v6947 = vld [vmem:[%s6930 + $0x80] sm:$0xff]
    %v6948 = vld [vmem:[%s6930 + $0x88] sm:$0xff]
    %v6949 = vld [vmem:[%s6930 + $0x90] sm:$0xff]
    %v6950 = vld [vmem:[%s6930 + $0x98] sm:$0xff]
    %v6951 = vld [vmem:[%s6930 + $0xa0] sm:$0xff]
    %v6952 = vld [vmem:[%s6930 + $0xa8] sm:$0xff]
    %v6953 = vld [vmem:[%s6930 + $0xb0] sm:$0xff]
    %v6954 = vld [vmem:[%s6930 + $0xb8] sm:$0xff]
    %v6955 = vld [vmem:[%s6930 + $0xc0] sm:$0xff]
    %v6956 = vld [vmem:[%s6930 + $0xc8] sm:$0xff]
    %v6957 = vld [vmem:[%s6930 + $0xd0] sm:$0xff]
    %v6958 = vld [vmem:[%s6930 + $0xd8] sm:$0xff]
    %v6959 = vld [vmem:[%s6930 + $0xe0] sm:$0xff]
    %v6960 = vld [vmem:[%s6930 + $0xe8] sm:$0xff]
    %v6961 = vld [vmem:[%s6930 + $0xf0] sm:$0xff]
    %v6962 = vld [vmem:[%s6930 + $0xf8] sm:$0xff]
    %v6963 = vld [vmem:[%s6930 + $0x100] sm:$0xff]
    %v6964 = vld [vmem:[%s6930 + $0x108] sm:$0xff]
    %v6965 = vld [vmem:[%s6930 + $0x110] sm:$0xff]
    %v6966 = vld [vmem:[%s6930 + $0x118] sm:$0xff]
    %v6967 = vld [vmem:[%s6930 + $0x120] sm:$0xff]
    %v6968 = vld [vmem:[%s6930 + $0x128] sm:$0xff]
    %v6969 = vld [vmem:[%s6930 + $0x130] sm:$0xff]
    %v6970 = vld [vmem:[%s6930 + $0x138] sm:$0xff]
    %v6971 = vld [vmem:[%s6930 + $0x140] sm:$0xff]
    %v6972 = vld [vmem:[%s6930 + $0x148] sm:$0xff]
    %v6973 = vld [vmem:[%s6930 + $0x150] sm:$0xff]
    %v6974 = vld [vmem:[%s6930 + $0x158] sm:$0xff]
    %v6975 = vld [vmem:[%s6930 + $0x160] sm:$0xff]
    %v6976 = vld [vmem:[%s6930 + $0x168] sm:$0xff]
    %v6977 = vld [vmem:[%s6930 + $0x170] sm:$0xff]
    %v6978 = vld [vmem:[%s6930 + $0x178] sm:$0xff]
    %v6979 = vld [vmem:[%s6930 + $0x180] sm:$0xff]
    %v6980 = vld [vmem:[%s6930 + $0x188] sm:$0xff]
    %v6981 = vld [vmem:[%s6930 + $0x190] sm:$0xff]
    %v6982 = vld [vmem:[%s6930 + $0x198] sm:$0xff]
    %v6983 = vld [vmem:[%s6930 + $0x1a0] sm:$0xff]
    %v6984 = vld [vmem:[%s6930 + $0x1a8] sm:$0xff]
    %v6985 = vld [vmem:[%s6930 + $0x1b0] sm:$0xff]
    %v6986 = vld [vmem:[%s6930 + $0x1b8] sm:$0xff]
    %v6987 = vld [vmem:[%s6930 + $0x1c0] sm:$0xff]
    %v6988 = vld [vmem:[%s6930 + $0x1c8] sm:$0xff]
    %v6989 = vld [vmem:[%s6930 + $0x1d0] sm:$0xff]
    %v6990 = vld [vmem:[%s6930 + $0x1d8] sm:$0xff]
    %v6991 = vld [vmem:[%s6930 + $0x1e0] sm:$0xff]
    %v6992 = vld [vmem:[%s6930 + $0x1e8] sm:$0xff]
    %v6993 = vld [vmem:[%s6930 + $0x1f0] sm:$0xff]
    %v6994 = vld [vmem:[%s6930 + $0x1f8] sm:$0xff]
    %v6995 = vld [vmem:[%s6930 + $0x200] sm:$0xff]
    %v6996 = vld [vmem:[%s6930 + $0x208] sm:$0xff]
    %v6997 = vld [vmem:[%s6930 + $0x210] sm:$0xff]
    %v6998 = vld [vmem:[%s6930 + $0x218] sm:$0xff]
    %v6999 = vld [vmem:[%s6930 + $0x220] sm:$0xff]
    %v7000 = vld [vmem:[%s6930 + $0x228] sm:$0xff]
    %v7001 = vld [vmem:[%s6930 + $0x230] sm:$0xff]
    %v7002 = vld [vmem:[%s6930 + $0x238] sm:$0xff]
    %v7003 = vld [vmem:[%s6930 + $0x240] sm:$0xff]
    %v7004 = vld [vmem:[%s6930 + $0x248] sm:$0xff]
    %v7005 = vld [vmem:[%s6930 + $0x250] sm:$0xff]
    %v7006 = vld [vmem:[%s6930 + $0x258] sm:$0xff]
    %v7007 = vld [vmem:[%s6930 + $0x260] sm:$0xff]
    %v7008 = vld [vmem:[%s6930 + $0x268] sm:$0xff]
    %v7009 = vld [vmem:[%s6930 + $0x270] sm:$0xff]
    %v7010 = vld [vmem:[%s6930 + $0x278] sm:$0xff]
    %v7011 = vld [vmem:[%s6930 + $0x280] sm:$0xff]
    %v7012 = vld [vmem:[%s6930 + $0x288] sm:$0xff]
    %v7013 = vld [vmem:[%s6930 + $0x290] sm:$0xff]
    %v7014 = vld [vmem:[%s6930 + $0x298] sm:$0xff]
    %v7015 = vld [vmem:[%s6930 + $0x2a0] sm:$0xff]
    %v7016 = vld [vmem:[%s6930 + $0x2a8] sm:$0xff]
    %v7017 = vld [vmem:[%s6930 + $0x2b0] sm:$0xff]
    %v7018 = vld [vmem:[%s6930 + $0x2b8] sm:$0xff]
    %v7019 = vld [vmem:[%s6930 + $0x2c0] sm:$0xff]
    %v7020 = vld [vmem:[%s6930 + $0x2c8] sm:$0xff]
    %v7021 = vld [vmem:[%s6930 + $0x2d0] sm:$0xff]
    %v7022 = vld [vmem:[%s6930 + $0x2d8] sm:$0xff]
    %v7023 = vld [vmem:[%s6930 + $0x2e0] sm:$0xff]
    %v7024 = vld [vmem:[%s6930 + $0x2e8] sm:$0xff]
    %v7025 = vld [vmem:[%s6930 + $0x2f0] sm:$0xff]
    %v7026 = vld [vmem:[%s6930 + $0x2f8] sm:$0xff]
    %v7027 = vld [vmem:[%s6930 + $0x300] sm:$0xff]
    %v7028 = vld [vmem:[%s6930 + $0x308] sm:$0xff]
    %v7029 = vld [vmem:[%s6930 + $0x310] sm:$0xff]
    %v7030 = vld [vmem:[%s6930 + $0x318] sm:$0xff]
    %v7031 = vld [vmem:[%s6930 + $0x320] sm:$0xff]
    %v7032 = vld [vmem:[%s6930 + $0x328] sm:$0xff]
    %v7033 = vld [vmem:[%s6930 + $0x330] sm:$0xff]
    %v7034 = vld [vmem:[%s6930 + $0x338] sm:$0xff]
    %v7035 = vld [vmem:[%s6930 + $0x340] sm:$0xff]
    %v7036 = vld [vmem:[%s6930 + $0x348] sm:$0xff]
    %v7037 = vld [vmem:[%s6930 + $0x350] sm:$0xff]
    %v7038 = vld [vmem:[%s6930 + $0x358] sm:$0xff]
    %v7039 = vld [vmem:[%s6930 + $0x360] sm:$0xff]
    %v7040 = vld [vmem:[%s6930 + $0x368] sm:$0xff]
    %v7041 = vld [vmem:[%s6930 + $0x370] sm:$0xff]
    %v7042 = vld [vmem:[%s6930 + $0x378] sm:$0xff]
    %v7043 = vld [vmem:[%s6930 + $0x380] sm:$0xff]
    %v7044 = vld [vmem:[%s6930 + $0x388] sm:$0xff]
    %v7045 = vld [vmem:[%s6930 + $0x390] sm:$0xff]
    %v7046 = vld [vmem:[%s6930 + $0x398] sm:$0xff]
    %v7047 = vld [vmem:[%s6930 + $0x3a0] sm:$0xff]
    %v7048 = vld [vmem:[%s6930 + $0x3a8] sm:$0xff]
    %v7049 = vld [vmem:[%s6930 + $0x3b0] sm:$0xff]
    %v7050 = vld [vmem:[%s6930 + $0x3b8] sm:$0xff]
    %v7051 = vld [vmem:[%s6930 + $0x3c0] sm:$0xff]
    %v7052 = vld [vmem:[%s6930 + $0x3c8] sm:$0xff]
    %v7053 = vld [vmem:[%s6930 + $0x3d0] sm:$0xff]
    %v7054 = vld [vmem:[%s6930 + $0x3d8] sm:$0xff]
    %v7055 = vld [vmem:[%s6930 + $0x3e0] sm:$0xff]
    %v7056 = vld [vmem:[%s6930 + $0x3e8] sm:$0xff]
    %v7057 = vld [vmem:[%s6930 + $0x3f0] sm:$0xff]
    %v7058 = vld [vmem:[%s6930 + $0x3f8] sm:$0xff]
    %s7059 = scalar_lea.vmem [#allocation7], 28
    %v7060 = vld [vmem:[%s7059] sm:$0xf]
    %v7062 = vlaneseq
    %v7063 = vshrl.u32 %v7062, 7
    %v7064 = vsub.s32 0, %v7063
    %v7065 = vrot.slane %v7060, %v7064
    %v7066 = vlaneseq
    %v7067 = vshrl.u32 %v7066, 7
    %v7068 = vsub.s32 1, %v7067
    %v7069 = vrot.slane %v7060, %v7068
    %v7070 = vlaneseq
    %v7071 = vshrl.u32 %v7070, 7
    %v7072 = vsub.s32 2, %v7071
    %v7073 = vrot.slane %v7060, %v7072
    %v7074 = vlaneseq
    %v7075 = vshrl.u32 %v7074, 7
    %v7076 = vsub.s32 3, %v7075
    %v7077 = vrot.slane %v7060, %v7076
    %v7210 = vunpack.c.l.b16 %v6931
    %v7211 = vunpack.c.h.b16 %v6931
    %v7212 = vunpack.c.l.b16 %v6932
    %v7213 = vunpack.c.h.b16 %v6932
    %v7214 = vunpack.c.l.b16 %v6933
    %v7215 = vunpack.c.h.b16 %v6933
    %v7216 = vunpack.c.l.b16 %v6934
    %v7217 = vunpack.c.h.b16 %v6934
    %v7218 = vunpack.c.l.b16 %v6935
    %v7219 = vunpack.c.h.b16 %v6935
    %v7220 = vunpack.c.l.b16 %v6936
    %v7221 = vunpack.c.h.b16 %v6936
    %v7222 = vunpack.c.l.b16 %v6937
    %v7223 = vunpack.c.h.b16 %v6937
    %v7224 = vunpack.c.l.b16 %v6938
    %v7225 = vunpack.c.h.b16 %v6938
    %v7226 = vunpack.c.l.b16 %v6939
    %v7227 = vunpack.c.h.b16 %v6939
    %v7228 = vunpack.c.l.b16 %v6940
    %v7229 = vunpack.c.h.b16 %v6940
    %v7230 = vunpack.c.l.b16 %v6941
    %v7231 = vunpack.c.h.b16 %v6941
    %v7232 = vunpack.c.l.b16 %v6942
    %v7233 = vunpack.c.h.b16 %v6942
    %v7234 = vunpack.c.l.b16 %v6943
    %v7235 = vunpack.c.h.b16 %v6943
    %v7236 = vunpack.c.l.b16 %v6944
    %v7237 = vunpack.c.h.b16 %v6944
    %v7238 = vunpack.c.l.b16 %v6945
    %v7239 = vunpack.c.h.b16 %v6945
    %v7240 = vunpack.c.l.b16 %v6946
    %v7241 = vunpack.c.h.b16 %v6946
    %v7242 = vunpack.c.l.b16 %v6947
    %v7243 = vunpack.c.h.b16 %v6947
    %v7244 = vunpack.c.l.b16 %v6948
    %v7245 = vunpack.c.h.b16 %v6948
    %v7246 = vunpack.c.l.b16 %v6949
    %v7247 = vunpack.c.h.b16 %v6949
    %v7248 = vunpack.c.l.b16 %v6950
    %v7249 = vunpack.c.h.b16 %v6950
    %v7250 = vunpack.c.l.b16 %v6951
    %v7251 = vunpack.c.h.b16 %v6951
    %v7252 = vunpack.c.l.b16 %v6952
    %v7253 = vunpack.c.h.b16 %v6952
    %v7254 = vunpack.c.l.b16 %v6953
    %v7255 = vunpack.c.h.b16 %v6953
    %v7256 = vunpack.c.l.b16 %v6954
    %v7257 = vunpack.c.h.b16 %v6954
    %v7258 = vunpack.c.l.b16 %v6955
    %v7259 = vunpack.c.h.b16 %v6955
    %v7260 = vunpack.c.l.b16 %v6956
    %v7261 = vunpack.c.h.b16 %v6956
    %v7262 = vunpack.c.l.b16 %v6957
    %v7263 = vunpack.c.h.b16 %v6957
    %v7264 = vunpack.c.l.b16 %v6958
    %v7265 = vunpack.c.h.b16 %v6958
    %v7266 = vunpack.c.l.b16 %v6959
    %v7267 = vunpack.c.h.b16 %v6959
    %v7268 = vunpack.c.l.b16 %v6960
    %v7269 = vunpack.c.h.b16 %v6960
    %v7270 = vunpack.c.l.b16 %v6961
    %v7271 = vunpack.c.h.b16 %v6961
    %v7272 = vunpack.c.l.b16 %v6962
    %v7273 = vunpack.c.h.b16 %v6962
    %v7274 = vunpack.c.l.b16 %v6963
    %v7275 = vunpack.c.h.b16 %v6963
    %v7276 = vunpack.c.l.b16 %v6964
    %v7277 = vunpack.c.h.b16 %v6964
    %v7278 = vunpack.c.l.b16 %v6965
    %v7279 = vunpack.c.h.b16 %v6965
    %v7280 = vunpack.c.l.b16 %v6966
    %v7281 = vunpack.c.h.b16 %v6966
    %v7282 = vunpack.c.l.b16 %v6967
    %v7283 = vunpack.c.h.b16 %v6967
    %v7284 = vunpack.c.l.b16 %v6968
    %v7285 = vunpack.c.h.b16 %v6968
    %v7286 = vunpack.c.l.b16 %v6969
    %v7287 = vunpack.c.h.b16 %v6969
    %v7288 = vunpack.c.l.b16 %v6970
    %v7289 = vunpack.c.h.b16 %v6970
    %v7290 = vunpack.c.l.b16 %v6971
    %v7291 = vunpack.c.h.b16 %v6971
    %v7292 = vunpack.c.l.b16 %v6972
    %v7293 = vunpack.c.h.b16 %v6972
    %v7294 = vunpack.c.l.b16 %v6973
    %v7295 = vunpack.c.h.b16 %v6973
    %v7296 = vunpack.c.l.b16 %v6974
    %v7297 = vunpack.c.h.b16 %v6974
    %v7298 = vunpack.c.l.b16 %v6975
    %v7299 = vunpack.c.h.b16 %v6975
    %v7300 = vunpack.c.l.b16 %v6976
    %v7301 = vunpack.c.h.b16 %v6976
    %v7302 = vunpack.c.l.b16 %v6977
    %v7303 = vunpack.c.h.b16 %v6977
    %v7304 = vunpack.c.l.b16 %v6978
    %v7305 = vunpack.c.h.b16 %v6978
    %v7306 = vunpack.c.l.b16 %v6979
    %v7307 = vunpack.c.h.b16 %v6979
    %v7308 = vunpack.c.l.b16 %v6980
    %v7309 = vunpack.c.h.b16 %v6980
    %v7310 = vunpack.c.l.b16 %v6981
    %v7311 = vunpack.c.h.b16 %v6981
    %v7312 = vunpack.c.l.b16 %v6982
    %v7313 = vunpack.c.h.b16 %v6982
    %v7314 = vunpack.c.l.b16 %v6983
    %v7315 = vunpack.c.h.b16 %v6983
    %v7316 = vunpack.c.l.b16 %v6984
    %v7317 = vunpack.c.h.b16 %v6984
    %v7318 = vunpack.c.l.b16 %v6985
    %v7319 = vunpack.c.h.b16 %v6985
    %v7320 = vunpack.c.l.b16 %v6986
    %v7321 = vunpack.c.h.b16 %v6986
    %v7322 = vunpack.c.l.b16 %v6987
    %v7323 = vunpack.c.h.b16 %v6987
    %v7324 = vunpack.c.l.b16 %v6988
    %v7325 = vunpack.c.h.b16 %v6988
    %v7326 = vunpack.c.l.b16 %v6989
    %v7327 = vunpack.c.h.b16 %v6989
    %v7328 = vunpack.c.l.b16 %v6990
    %v7329 = vunpack.c.h.b16 %v6990
    %v7330 = vunpack.c.l.b16 %v6991
    %v7331 = vunpack.c.h.b16 %v6991
    %v7332 = vunpack.c.l.b16 %v6992
    %v7333 = vunpack.c.h.b16 %v6992
    %v7334 = vunpack.c.l.b16 %v6993
    %v7335 = vunpack.c.h.b16 %v6993
    %v7336 = vunpack.c.l.b16 %v6994
    %v7337 = vunpack.c.h.b16 %v6994
    %v7338 = vunpack.c.l.b16 %v6995
    %v7339 = vunpack.c.h.b16 %v6995
    %v7340 = vunpack.c.l.b16 %v6996
    %v7341 = vunpack.c.h.b16 %v6996
    %v7342 = vunpack.c.l.b16 %v6997
    %v7343 = vunpack.c.h.b16 %v6997
    %v7344 = vunpack.c.l.b16 %v6998
    %v7345 = vunpack.c.h.b16 %v6998
    %v7346 = vunpack.c.l.b16 %v6999
    %v7347 = vunpack.c.h.b16 %v6999
    %v7348 = vunpack.c.l.b16 %v7000
    %v7349 = vunpack.c.h.b16 %v7000
    %v7350 = vunpack.c.l.b16 %v7001
    %v7351 = vunpack.c.h.b16 %v7001
    %v7352 = vunpack.c.l.b16 %v7002
    %v7353 = vunpack.c.h.b16 %v7002
    %v7354 = vunpack.c.l.b16 %v7003
    %v7355 = vunpack.c.h.b16 %v7003
    %v7356 = vunpack.c.l.b16 %v7004
    %v7357 = vunpack.c.h.b16 %v7004
    %v7358 = vunpack.c.l.b16 %v7005
    %v7359 = vunpack.c.h.b16 %v7005
    %v7360 = vunpack.c.l.b16 %v7006
    %v7361 = vunpack.c.h.b16 %v7006
    %v7362 = vunpack.c.l.b16 %v7007
    %v7363 = vunpack.c.h.b16 %v7007
    %v7364 = vunpack.c.l.b16 %v7008
    %v7365 = vunpack.c.h.b16 %v7008
    %v7366 = vunpack.c.l.b16 %v7009
    %v7367 = vunpack.c.h.b16 %v7009
    %v7368 = vunpack.c.l.b16 %v7010
    %v7369 = vunpack.c.h.b16 %v7010
    %v7370 = vunpack.c.l.b16 %v7011
    %v7371 = vunpack.c.h.b16 %v7011
    %v7372 = vunpack.c.l.b16 %v7012
    %v7373 = vunpack.c.h.b16 %v7012
    %v7374 = vunpack.c.l.b16 %v7013
    %v7375 = vunpack.c.h.b16 %v7013
    %v7376 = vunpack.c.l.b16 %v7014
    %v7377 = vunpack.c.h.b16 %v7014
    %v7378 = vunpack.c.l.b16 %v7015
    %v7379 = vunpack.c.h.b16 %v7015
    %v7380 = vunpack.c.l.b16 %v7016
    %v7381 = vunpack.c.h.b16 %v7016
    %v7382 = vunpack.c.l.b16 %v7017
    %v7383 = vunpack.c.h.b16 %v7017
    %v7384 = vunpack.c.l.b16 %v7018
    %v7385 = vunpack.c.h.b16 %v7018
    %v7386 = vunpack.c.l.b16 %v7019
    %v7387 = vunpack.c.h.b16 %v7019
    %v7388 = vunpack.c.l.b16 %v7020
    %v7389 = vunpack.c.h.b16 %v7020
    %v7390 = vunpack.c.l.b16 %v7021
    %v7391 = vunpack.c.h.b16 %v7021
    %v7392 = vunpack.c.l.b16 %v7022
    %v7393 = vunpack.c.h.b16 %v7022
    %v7394 = vunpack.c.l.b16 %v7023
    %v7395 = vunpack.c.h.b16 %v7023
    %v7396 = vunpack.c.l.b16 %v7024
    %v7397 = vunpack.c.h.b16 %v7024
    %v7398 = vunpack.c.l.b16 %v7025
    %v7399 = vunpack.c.h.b16 %v7025
    %v7400 = vunpack.c.l.b16 %v7026
    %v7401 = vunpack.c.h.b16 %v7026
    %v7402 = vunpack.c.l.b16 %v7027
    %v7403 = vunpack.c.h.b16 %v7027
    %v7404 = vunpack.c.l.b16 %v7028
    %v7405 = vunpack.c.h.b16 %v7028
    %v7406 = vunpack.c.l.b16 %v7029
    %v7407 = vunpack.c.h.b16 %v7029
    %v7408 = vunpack.c.l.b16 %v7030
    %v7409 = vunpack.c.h.b16 %v7030
    %v7410 = vunpack.c.l.b16 %v7031
    %v7411 = vunpack.c.h.b16 %v7031
    %v7412 = vunpack.c.l.b16 %v7032
    %v7413 = vunpack.c.h.b16 %v7032
    %v7414 = vunpack.c.l.b16 %v7033
    %v7415 = vunpack.c.h.b16 %v7033
    %v7416 = vunpack.c.l.b16 %v7034
    %v7417 = vunpack.c.h.b16 %v7034
    %v7418 = vunpack.c.l.b16 %v7035
    %v7419 = vunpack.c.h.b16 %v7035
    %v7420 = vunpack.c.l.b16 %v7036
    %v7421 = vunpack.c.h.b16 %v7036
    %v7422 = vunpack.c.l.b16 %v7037
    %v7423 = vunpack.c.h.b16 %v7037
    %v7424 = vunpack.c.l.b16 %v7038
    %v7425 = vunpack.c.h.b16 %v7038
    %v7426 = vunpack.c.l.b16 %v7039
    %v7427 = vunpack.c.h.b16 %v7039
    %v7428 = vunpack.c.l.b16 %v7040
    %v7429 = vunpack.c.h.b16 %v7040
    %v7430 = vunpack.c.l.b16 %v7041
    %v7431 = vunpack.c.h.b16 %v7041
    %v7432 = vunpack.c.l.b16 %v7042
    %v7433 = vunpack.c.h.b16 %v7042
    %v7434 = vunpack.c.l.b16 %v7043
    %v7435 = vunpack.c.h.b16 %v7043
    %v7436 = vunpack.c.l.b16 %v7044
    %v7437 = vunpack.c.h.b16 %v7044
    %v7438 = vunpack.c.l.b16 %v7045
    %v7439 = vunpack.c.h.b16 %v7045
    %v7440 = vunpack.c.l.b16 %v7046
    %v7441 = vunpack.c.h.b16 %v7046
    %v7442 = vunpack.c.l.b16 %v7047
    %v7443 = vunpack.c.h.b16 %v7047
    %v7444 = vunpack.c.l.b16 %v7048
    %v7445 = vunpack.c.h.b16 %v7048
    %v7446 = vunpack.c.l.b16 %v7049
    %v7447 = vunpack.c.h.b16 %v7049
    %v7448 = vunpack.c.l.b16 %v7050
    %v7449 = vunpack.c.h.b16 %v7050
    %v7450 = vunpack.c.l.b16 %v7051
    %v7451 = vunpack.c.h.b16 %v7051
    %v7452 = vunpack.c.l.b16 %v7052
    %v7453 = vunpack.c.h.b16 %v7052
    %v7454 = vunpack.c.l.b16 %v7053
    %v7455 = vunpack.c.h.b16 %v7053
    %v7456 = vunpack.c.l.b16 %v7054
    %v7457 = vunpack.c.h.b16 %v7054
    %v7458 = vunpack.c.l.b16 %v7055
    %v7459 = vunpack.c.h.b16 %v7055
    %v7460 = vunpack.c.l.b16 %v7056
    %v7461 = vunpack.c.h.b16 %v7056
    %v7462 = vunpack.c.l.b16 %v7057
    %v7463 = vunpack.c.h.b16 %v7057
    %v7464 = vunpack.c.l.b16 %v7058
    %v7465 = vunpack.c.h.b16 %v7058
    %v7466 = vpack.c.b16 %v7214, %v7210
    %v7467 = vpack.c.b16 %v7215, %v7211
    %v7468 = vpack.c.b16 %v7216, %v7212
    %v7469 = vpack.c.b16 %v7217, %v7213
    %v7470 = vpack.c.b16 %v7222, %v7218
    %v7471 = vpack.c.b16 %v7223, %v7219
    %v7472 = vpack.c.b16 %v7224, %v7220
    %v7473 = vpack.c.b16 %v7225, %v7221
    %v7474 = vpack.c.b16 %v7230, %v7226
    %v7475 = vpack.c.b16 %v7231, %v7227
    %v7476 = vpack.c.b16 %v7232, %v7228
    %v7477 = vpack.c.b16 %v7233, %v7229
    %v7478 = vpack.c.b16 %v7238, %v7234
    %v7479 = vpack.c.b16 %v7239, %v7235
    %v7480 = vpack.c.b16 %v7240, %v7236
    %v7481 = vpack.c.b16 %v7241, %v7237
    %v7482 = vpack.c.b16 %v7246, %v7242
    %v7483 = vpack.c.b16 %v7247, %v7243
    %v7484 = vpack.c.b16 %v7248, %v7244
    %v7485 = vpack.c.b16 %v7249, %v7245
    %v7486 = vpack.c.b16 %v7254, %v7250
    %v7487 = vpack.c.b16 %v7255, %v7251
    %v7488 = vpack.c.b16 %v7256, %v7252
    %v7489 = vpack.c.b16 %v7257, %v7253
    %v7490 = vpack.c.b16 %v7262, %v7258
    %v7491 = vpack.c.b16 %v7263, %v7259
    %v7492 = vpack.c.b16 %v7264, %v7260
    %v7493 = vpack.c.b16 %v7265, %v7261
    %v7494 = vpack.c.b16 %v7270, %v7266
    %v7495 = vpack.c.b16 %v7271, %v7267
    %v7496 = vpack.c.b16 %v7272, %v7268
    %v7497 = vpack.c.b16 %v7273, %v7269
    %v7498 = vpack.c.b16 %v7278, %v7274
    %v7499 = vpack.c.b16 %v7279, %v7275
    %v7500 = vpack.c.b16 %v7280, %v7276
    %v7501 = vpack.c.b16 %v7281, %v7277
    %v7502 = vpack.c.b16 %v7286, %v7282
    %v7503 = vpack.c.b16 %v7287, %v7283
    %v7504 = vpack.c.b16 %v7288, %v7284
    %v7505 = vpack.c.b16 %v7289, %v7285
    %v7506 = vpack.c.b16 %v7294, %v7290
    %v7507 = vpack.c.b16 %v7295, %v7291
    %v7508 = vpack.c.b16 %v7296, %v7292
    %v7509 = vpack.c.b16 %v7297, %v7293
    %v7510 = vpack.c.b16 %v7302, %v7298
    %v7511 = vpack.c.b16 %v7303, %v7299
    %v7512 = vpack.c.b16 %v7304, %v7300
    %v7513 = vpack.c.b16 %v7305, %v7301
    %v7514 = vpack.c.b16 %v7310, %v7306
    %v7515 = vpack.c.b16 %v7311, %v7307
    %v7516 = vpack.c.b16 %v7312, %v7308
    %v7517 = vpack.c.b16 %v7313, %v7309
    %v7518 = vpack.c.b16 %v7318, %v7314
    %v7519 = vpack.c.b16 %v7319, %v7315
    %v7520 = vpack.c.b16 %v7320, %v7316
    %v7521 = vpack.c.b16 %v7321, %v7317
    %v7522 = vpack.c.b16 %v7326, %v7322
    %v7523 = vpack.c.b16 %v7327, %v7323
    %v7524 = vpack.c.b16 %v7328, %v7324
    %v7525 = vpack.c.b16 %v7329, %v7325
    %v7526 = vpack.c.b16 %v7334, %v7330
    %v7527 = vpack.c.b16 %v7335, %v7331
    %v7528 = vpack.c.b16 %v7336, %v7332
    %v7529 = vpack.c.b16 %v7337, %v7333
    %v7530 = vpack.c.b16 %v7342, %v7338
    %v7531 = vpack.c.b16 %v7343, %v7339
    %v7532 = vpack.c.b16 %v7344, %v7340
    %v7533 = vpack.c.b16 %v7345, %v7341
    %v7534 = vpack.c.b16 %v7350, %v7346
    %v7535 = vpack.c.b16 %v7351, %v7347
    %v7536 = vpack.c.b16 %v7352, %v7348
    %v7537 = vpack.c.b16 %v7353, %v7349
    %v7538 = vpack.c.b16 %v7358, %v7354
    %v7539 = vpack.c.b16 %v7359, %v7355
    %v7540 = vpack.c.b16 %v7360, %v7356
    %v7541 = vpack.c.b16 %v7361, %v7357
    %v7542 = vpack.c.b16 %v7366, %v7362
    %v7543 = vpack.c.b16 %v7367, %v7363
    %v7544 = vpack.c.b16 %v7368, %v7364
    %v7545 = vpack.c.b16 %v7369, %v7365
    %v7546 = vpack.c.b16 %v7374, %v7370
    %v7547 = vpack.c.b16 %v7375, %v7371
    %v7548 = vpack.c.b16 %v7376, %v7372
    %v7549 = vpack.c.b16 %v7377, %v7373
    %v7550 = vpack.c.b16 %v7382, %v7378
    %v7551 = vpack.c.b16 %v7383, %v7379
    %v7552 = vpack.c.b16 %v7384, %v7380
    %v7553 = vpack.c.b16 %v7385, %v7381
    %v7554 = vpack.c.b16 %v7390, %v7386
    %v7555 = vpack.c.b16 %v7391, %v7387
    %v7556 = vpack.c.b16 %v7392, %v7388
    %v7557 = vpack.c.b16 %v7393, %v7389
    %v7558 = vpack.c.b16 %v7398, %v7394
    %v7559 = vpack.c.b16 %v7399, %v7395
    %v7560 = vpack.c.b16 %v7400, %v7396
    %v7561 = vpack.c.b16 %v7401, %v7397
    %v7562 = vpack.c.b16 %v7406, %v7402
    %v7563 = vpack.c.b16 %v7407, %v7403
    %v7564 = vpack.c.b16 %v7408, %v7404
    %v7565 = vpack.c.b16 %v7409, %v7405
    %v7566 = vpack.c.b16 %v7414, %v7410
    %v7567 = vpack.c.b16 %v7415, %v7411
    %v7568 = vpack.c.b16 %v7416, %v7412
    %v7569 = vpack.c.b16 %v7417, %v7413
    %v7570 = vpack.c.b16 %v7422, %v7418
    %v7571 = vpack.c.b16 %v7423, %v7419
    %v7572 = vpack.c.b16 %v7424, %v7420
    %v7573 = vpack.c.b16 %v7425, %v7421
    %v7574 = vpack.c.b16 %v7430, %v7426
    %v7575 = vpack.c.b16 %v7431, %v7427
    %v7576 = vpack.c.b16 %v7432, %v7428
    %v7577 = vpack.c.b16 %v7433, %v7429
    %v7578 = vpack.c.b16 %v7438, %v7434
    %v7579 = vpack.c.b16 %v7439, %v7435
    %v7580 = vpack.c.b16 %v7440, %v7436
    %v7581 = vpack.c.b16 %v7441, %v7437
    %v7582 = vpack.c.b16 %v7446, %v7442
    %v7583 = vpack.c.b16 %v7447, %v7443
    %v7584 = vpack.c.b16 %v7448, %v7444
    %v7585 = vpack.c.b16 %v7449, %v7445
    %v7586 = vpack.c.b16 %v7454, %v7450
    %v7587 = vpack.c.b16 %v7455, %v7451
    %v7588 = vpack.c.b16 %v7456, %v7452
    %v7589 = vpack.c.b16 %v7457, %v7453
    %v7590 = vpack.c.b16 %v7462, %v7458
    %v7591 = vpack.c.b16 %v7463, %v7459
    %v7592 = vpack.c.b16 %v7464, %v7460
    %v7593 = vpack.c.b16 %v7465, %v7461
    %7722 = vmatprep.subr.bf16.mxu0 %v7467
    %7723 = vmatpush1.bf16.msra.mxu0 %v7466
    %7724 = vmatprep.subr.bf16.mxu0 %v7471
    %7725 = vmatpush1.bf16.msra.mxu0 %v7470
    %7726 = vmatprep.subr.bf16.mxu0 %v7475
    %7727 = vmatpush1.bf16.msra.mxu0 %v7474
    %7728 = vmatprep.subr.bf16.mxu0 %v7479
    %7729 = vmatpush1.bf16.msra.mxu0 %v7478
    %7730 = vmatprep.subr.bf16.mxu0 %v7483
    %7731 = vmatpush1.bf16.msra.mxu0 %v7482
    %7732 = vmatprep.subr.bf16.mxu0 %v7487
    %7733 = vmatpush1.bf16.msra.mxu0 %v7486
    %7734 = vmatprep.subr.bf16.mxu0 %v7491
    %7735 = vmatpush1.bf16.msra.mxu0 %v7490
    %7736 = vmatprep.subr.bf16.mxu0 %v7495
    %7737 = vmatpush1.bf16.msra.mxu0 %v7494
    %7738 = vmatprep.subr.bf16.mxu0 %v7499
    %7739 = vmatpush1.bf16.msra.mxu0 %v7498
    %7740 = vmatprep.subr.bf16.mxu0 %v7503
    %7741 = vmatpush1.bf16.msra.mxu0 %v7502
    %7742 = vmatprep.subr.bf16.mxu0 %v7507
    %7743 = vmatpush1.bf16.msra.mxu0 %v7506
    %7744 = vmatprep.subr.bf16.mxu0 %v7511
    %7745 = vmatpush1.bf16.msra.mxu0 %v7510
    %7746 = vmatprep.subr.bf16.mxu0 %v7515
    %7747 = vmatpush1.bf16.msra.mxu0 %v7514
    %7748 = vmatprep.subr.bf16.mxu0 %v7519
    %7749 = vmatpush1.bf16.msra.mxu0 %v7518
    %7750 = vmatprep.subr.bf16.mxu0 %v7523
    %7751 = vmatpush1.bf16.msra.mxu0 %v7522
    %7752 = vmatprep.subr.bf16.mxu0 %v7527
    %7753 = vmatpush1.bf16.msra.mxu0 %v7526
    %7754 = vmatprep.mubr.bf16.mxu0 %v6927
    %7755 = vmatmul.mubr.bf16.gmra.mrb[0].mxu0 %v6926
    %v7756 = vpop.f32.mrb[0].mxu0
    %v7757 = vadd.f32 %v7065, %v7756
    %v7758 = vpop.f32.mrb[0].mxu0
    %v7759 = vadd.f32 %v7069, %v7758
    %v7760 = vpop.f32.mrb[0].mxu0
    %v7761 = vpop.f32.mrb[0].mxu0
    %7762 = vdwg.mxu0
    %7763 = vmatprep.subr.bf16.mxu0 %v7531
    %7764 = vmatpush1.bf16.msra.mxu0 %v7530
    %7765 = vmatprep.subr.bf16.mxu0 %v7535
    %7766 = vmatpush1.bf16.msra.mxu0 %v7534
    %7767 = vmatprep.subr.bf16.mxu0 %v7539
    %7768 = vmatpush1.bf16.msra.mxu0 %v7538
    %7769 = vmatprep.subr.bf16.mxu0 %v7543
    %7770 = vmatpush1.bf16.msra.mxu0 %v7542
    %7771 = vmatprep.subr.bf16.mxu0 %v7547
    %7772 = vmatpush1.bf16.msra.mxu0 %v7546
    %7773 = vmatprep.subr.bf16.mxu0 %v7551
    %7774 = vmatpush1.bf16.msra.mxu0 %v7550
    %7775 = vmatprep.subr.bf16.mxu0 %v7555
    %7776 = vmatpush1.bf16.msra.mxu0 %v7554
    %7777 = vmatprep.subr.bf16.mxu0 %v7559
    %7778 = vmatpush1.bf16.msra.mxu0 %v7558
    %7779 = vmatprep.subr.bf16.mxu0 %v7563
    %7780 = vmatpush1.bf16.msra.mxu0 %v7562
    %7781 = vmatprep.subr.bf16.mxu0 %v7567
    %7782 = vmatpush1.bf16.msra.mxu0 %v7566
    %7783 = vmatprep.subr.bf16.mxu0 %v7571
    %7784 = vmatpush1.bf16.msra.mxu0 %v7570
    %7785 = vmatprep.subr.bf16.mxu0 %v7575
    %7786 = vmatpush1.bf16.msra.mxu0 %v7574
    %7787 = vmatprep.subr.bf16.mxu0 %v7579
    %7788 = vmatpush1.bf16.msra.mxu0 %v7578
    %7789 = vmatprep.subr.bf16.mxu0 %v7583
    %7790 = vmatpush1.bf16.msra.mxu0 %v7582
    %7791 = vmatprep.subr.bf16.mxu0 %v7587
    %7792 = vmatpush1.bf16.msra.mxu0 %v7586
    %7793 = vmatprep.subr.bf16.mxu0 %v7591
    %7794 = vmatpush1.bf16.msra.mxu0 %v7590
    %7795 = vmatprep.mubr.bf16.mxu0 %v6929
    %7796 = vmatmul.mubr.bf16.gmra.mrb[0].mxu0 %v6928
    %v7797 = vpop.f32.mrb[0].mxu0
    %v7798 = vadd.f32 %v7757, %v7797
    %v7799 = vpop.f32.mrb[0].mxu0
    %v7800 = vadd.f32 %v7759, %v7799
    %v7801 = vpop.f32.mrb[0].mxu0
    %v7802 = vpop.f32.mrb[0].mxu0
    %7803 = vdwg.mxu0
    %7804 = vmatprep.subr.bf16.mxu0 %v7469
    %7805 = vmatpush1.bf16.msra.mxu0 %v7468
    %7806 = vmatprep.subr.bf16.mxu0 %v7473
    %7807 = vmatpush1.bf16.msra.mxu0 %v7472
    %7808 = vmatprep.subr.bf16.mxu0 %v7477
    %7809 = vmatpush1.bf16.msra.mxu0 %v7476
    %7810 = vmatprep.subr.bf16.mxu0 %v7481
    %7811 = vmatpush1.bf16.msra.mxu0 %v7480
    %7812 = vmatprep.subr.bf16.mxu0 %v7485
    %7813 = vmatpush1.bf16.msra.mxu0 %v7484
    %7814 = vmatprep.subr.bf16.mxu0 %v7489
    %7815 = vmatpush1.bf16.msra.mxu0 %v7488
    %7816 = vmatprep.subr.bf16.mxu0 %v7493
    %7817 = vmatpush1.bf16.msra.mxu0 %v7492
    %7818 = vmatprep.subr.bf16.mxu0 %v7497
    %7819 = vmatpush1.bf16.msra.mxu0 %v7496
    %7820 = vmatprep.subr.bf16.mxu0 %v7501
    %7821 = vmatpush1.bf16.msra.mxu0 %v7500
    %7822 = vmatprep.subr.bf16.mxu0 %v7505
    %7823 = vmatpush1.bf16.msra.mxu0 %v7504
    %7824 = vmatprep.subr.bf16.mxu0 %v7509
    %7825 = vmatpush1.bf16.msra.mxu0 %v7508
    %7826 = vmatprep.subr.bf16.mxu0 %v7513
    %7827 = vmatpush1.bf16.msra.mxu0 %v7512
    %7828 = vmatprep.subr.bf16.mxu0 %v7517
    %7829 = vmatpush1.bf16.msra.mxu0 %v7516
    %7830 = vmatprep.subr.bf16.mxu0 %v7521
    %7831 = vmatpush1.bf16.msra.mxu0 %v7520
    %7832 = vmatprep.subr.bf16.mxu0 %v7525
    %7833 = vmatpush1.bf16.msra.mxu0 %v7524
    %7834 = vmatprep.subr.bf16.mxu0 %v7529
    %7835 = vmatpush1.bf16.msra.mxu0 %v7528
    %7836 = vmatprep.mubr.bf16.mxu0 %v6927
    %7837 = vmatmul.mubr.bf16.gmra.mrb[0].mxu0 %v6926
    %v7838 = vpop.f32.mrb[0].mxu0
    %v7839 = vadd.f32 %v7073, %v7838
    %v7840 = vpop.f32.mrb[0].mxu0
    %v7841 = vadd.f32 %v7077, %v7840
    %v7842 = vpop.f32.mrb[0].mxu0
    %v7843 = vpop.f32.mrb[0].mxu0
    %7844 = vdwg.mxu0
    %7845 = vmatprep.subr.bf16.mxu0 %v7533
    %7846 = vmatpush1.bf16.msra.mxu0 %v7532
    %7847 = vmatprep.subr.bf16.mxu0 %v7537
    %7848 = vmatpush1.bf16.msra.mxu0 %v7536
    %7849 = vmatprep.subr.bf16.mxu0 %v7541
    %7850 = vmatpush1.bf16.msra.mxu0 %v7540
    %7851 = vmatprep.subr.bf16.mxu0 %v7545
    %7852 = vmatpush1.bf16.msra.mxu0 %v7544
    %7853 = vmatprep.subr.bf16.mxu0 %v7549
    %7854 = vmatpush1.bf16.msra.mxu0 %v7548
    %7855 = vmatprep.subr.bf16.mxu0 %v7553
    %7856 = vmatpush1.bf16.msra.mxu0 %v7552
    %7857 = vmatprep.subr.bf16.mxu0 %v7557
    %7858 = vmatpush1.bf16.msra.mxu0 %v7556
    %7859 = vmatprep.subr.bf16.mxu0 %v7561
    %7860 = vmatpush1.bf16.msra.mxu0 %v7560
    %7861 = vmatprep.subr.bf16.mxu0 %v7565
    %7862 = vmatpush1.bf16.msra.mxu0 %v7564
    %7863 = vmatprep.subr.bf16.mxu0 %v7569
    %7864 = vmatpush1.bf16.msra.mxu0 %v7568
    %7865 = vmatprep.subr.bf16.mxu0 %v7573
    %7866 = vmatpush1.bf16.msra.mxu0 %v7572
    %7867 = vmatprep.subr.bf16.mxu0 %v7577
    %7868 = vmatpush1.bf16.msra.mxu0 %v7576
    %7869 = vmatprep.subr.bf16.mxu0 %v7581
    %7870 = vmatpush1.bf16.msra.mxu0 %v7580
    %7871 = vmatprep.subr.bf16.mxu0 %v7585
    %7872 = vmatpush1.bf16.msra.mxu0 %v7584
    %7873 = vmatprep.subr.bf16.mxu0 %v7589
    %7874 = vmatpush1.bf16.msra.mxu0 %v7588
    %7875 = vmatprep.subr.bf16.mxu0 %v7593
    %7876 = vmatpush1.bf16.msra.mxu0 %v7592
    %7877 = vmatprep.mubr.bf16.mxu0 %v6929
    %7878 = vmatmul.mubr.bf16.gmra.mrb[0].mxu0 %v6928
    %v7879 = vpop.f32.mrb[0].mxu0
    %v7880 = vadd.f32 %v7839, %v7879
    %v7881 = vpop.f32.mrb[0].mxu0
    %v7882 = vadd.f32 %v7841, %v7881
    %v7883 = vpop.f32.mrb[0].mxu0
    %v7884 = vpop.f32.mrb[0].mxu0
    %7885 = vdwg.mxu0
    %vm7886 = vcmp.ge.f32.partialorder %v7798, 0.0
    %vm7887 = vcmp.ge.f32.partialorder %v7800, 0.0
    %vm7888 = vcmp.ge.f32.partialorder %v7880, 0.0
    %vm7889 = vcmp.ge.f32.partialorder %v7882, 0.0
    %v7890 = vmul.f32 %v7798, 0.2
    %v7891 = vmul.f32 %v7800, 0.2
    %v7892 = vmul.f32 %v7880, 0.2
    %v7893 = vmul.f32 %v7882, 0.2
    %v7894 = vsel %vm7886, %v7798, %v7890
    %v7895 = vsel %vm7887, %v7800, %v7891
    %v7896 = vsel %vm7888, %v7880, %v7892
    %v7897 = vsel %vm7889, %v7882, %v7893
    %v7902 = vcombine.low %v7894, %v7895
    %v7903 = vcombine.low %v7896, %v7897
    %v7905 = vunpack.c.l.s4 1983009808
    %v7906 = vunpack.c.0.s8 %v7905
    %v7907 = vlaneseq
    %v7908 = vshrl.u32 %v7907, 7
    %v7909 = vsub.s32 %v7906, %v7908
    %v7910 = vrot.slane %v7902, %v7909
    %v7912 = vunpack.c.l.s4 1983009808
    %v7913 = vunpack.c.0.s8 %v7912
    %v7914 = vlaneseq
    %v7915 = vshrl.u32 %v7914, 7
    %v7916 = vsub.s32 %v7913, %v7915
    %v7917 = vrot.slane %v7903, %v7916
    %v7918 = vcombine.low %v7910, %v7917
    %7920 = vst [vmem:[#allocation8] sm:$0xff] %v7918
    // Predicated region
    $region26: #{tpu_custom_call.1} parent=1 // pred_check
      _
    $region27: #{tpu_custom_call.1} parent=1 // pred_check_branch
      %7922 = sbr.rel (0) target = $region29
    $region28: #{tpu_custom_call.1} parent=1 // pred_region
      %s7924 = ssub.s32 128, 128
      %7925 = vsyncadd [#allocation4], %s7924
      %s7927 = sshll.u32 [#allocation8], 4
      %s7928 = int_to_ptr.vmem [resolvable:$true] %s7927
      %7930 = dma.vmem_to_hbm [thread:$0]  %s7928, 128, %s3, [#allocation4]
    $region29: #{tpu_custom_call.1} parent=1 // pred_fallthru
      _
    // Predicated region
    $region30: #{tpu_custom_call.1} parent=1 // pred_check
      _
    $region31: #{tpu_custom_call.1} parent=1 // pred_check_branch
      %7932 = sbr.rel (0) target = $region33
    $region32: #{tpu_custom_call.1} parent=1 // pred_region
      %7933 = dma.done [#allocation4], 128
    $region33: #{tpu_custom_call.1} parent=1 // pred_fallthru
      _
    %7934 = vsyncpa [#allocation3], 1
    %7935 = vsyncpa [#allocation6], 1
    %7936 = vsyncpa [#allocation4], 1

</llo_original>
